<compile_context>
chip_gen: v5e
topology: v5e:2x2
jax: 0.10.0
libtpu: 0.0.40
codegen_flags: <defaults>
</compile_context>

<pallas_src>
import functools

import jax
import jax.numpy as jnp
from jax.experimental import pallas as pl
from jax.experimental.pallas import tpu as pltpu


def _round_up(x, m):
    return (x + m - 1) // m * m


def _pick_tm(m, cap=1024):
    """Largest multiple-of-8 divisor of m that is <= cap; small/ragged m -> m."""
    if m <= cap or m % 8 != 0:
        # Block equal to the full dim is always legal; for the shapes in this
        # network m <= cap whenever m is ragged.
        return m
    tm = 8
    for d in range(8, cap + 1, 8):
        if m % d == 0:
            tm = d
    return tm


def _pick_tn(n):
    return 256 if n % 256 == 0 else 128


# ----------------------------------------------------------------------------
# Pallas kernels
# ----------------------------------------------------------------------------
def _mm_kernel(x_ref, w_ref, o_ref):
    o_ref[...] = jnp.dot(x_ref[...], w_ref[...],
                         preferred_element_type=jnp.float32).astype(o_ref.dtype)


def _mm_bias_relu_kernel(x_ref, w_ref, b_ref, o_ref):
    acc = jnp.dot(x_ref[...], w_ref[...], preferred_element_type=jnp.float32)
    o_ref[...] = jnp.maximum(acc + b_ref[...], 0.0).astype(o_ref.dtype)


def _bias_relu_kernel(x_ref, b_ref, o_ref):
    o_ref[...] = jnp.maximum(x_ref[...] + b_ref[...], 0.0).astype(o_ref.dtype)


# ----------------------------------------------------------------------------
# Pallas wrappers
# ----------------------------------------------------------------------------
def pallas_matmul(x, w, *, out_dtype=jnp.float32):
    """(M,K)@(K,N) -> (M,N).  bf16 inputs, f32 accumulate.  No padding copies;
    K uses full-extent blocks, N must be a multiple of 128 (pre-padded weight)."""
    M, K = x.shape
    K2, N = w.shape
    assert K == K2
    tm = _pick_tm(M)
    tn = _pick_tn(N)
    return pl.pallas_call(
        _mm_kernel,
        out_shape=jax.ShapeDtypeStruct((M, N), out_dtype),
        grid=(M // tm, N // tn),
        in_specs=[
            pl.BlockSpec((tm, K), lambda i, j: (i, 0)),
            pl.BlockSpec((K, tn), lambda i, j: (0, j)),
        ],
        out_specs=pl.BlockSpec((tm, tn), lambda i, j: (i, j)),
        compiler_params=pltpu.CompilerParams(
            dimension_semantics=("parallel", "parallel")),
    )(x.astype(jnp.bfloat16), w.astype(jnp.bfloat16))


def pallas_matmul_bias_relu(x, w, b_rep, *, out_dtype):
    """Fused (M,K)@(K,N) + bias + ReLU.  b_rep: (1, N) f32 (bias replicated
    per (co,kh,kw) column, zero in padded columns)."""
    M, K = x.shape
    K2, N = w.shape
    assert K == K2 and b_rep.shape == (1, N)
    tm = _pick_tm(M)
    tn = _pick_tn(N)
    return pl.pallas_call(
        _mm_bias_relu_kernel,
        out_shape=jax.ShapeDtypeStruct((M, N), out_dtype),
        grid=(M // tm, N // tn),
        in_specs=[
            pl.BlockSpec((tm, K), lambda i, j: (i, 0)),
            pl.BlockSpec((K, tn), lambda i, j: (0, j)),
            pl.BlockSpec((1, tn), lambda i, j: (0, j)),
        ],
        out_specs=pl.BlockSpec((tm, tn), lambda i, j: (i, j)),
        compiler_params=pltpu.CompilerParams(
            dimension_semantics=("parallel", "parallel")),
    )(x.astype(jnp.bfloat16), w.astype(jnp.bfloat16), b_rep)


def pallas_bias_relu(x, b_row, *, out_dtype=jnp.bfloat16):
    """x: (R, C) f32, b_row: (1, C) f32 -> relu(x + b).  C must be a multiple
    of 128 (true for layer 1's Cout=512); no padding copies."""
    R, C = x.shape
    tm = _pick_tm(R)
    return pl.pallas_call(
        _bias_relu_kernel,
        out_shape=jax.ShapeDtypeStruct((R, C), out_dtype),
        grid=(R // tm,),
        in_specs=[
            pl.BlockSpec((tm, C), lambda i: (i, 0)),
            pl.BlockSpec((1, C), lambda i: (0, 0)),
        ],
        out_specs=pl.BlockSpec((tm, C), lambda i: (i, 0)),
        compiler_params=pltpu.CompilerParams(dimension_semantics=("parallel",)),
    )(x, b_row)


# ----------------------------------------------------------------------------
# Per-layer deconv implementations
# ----------------------------------------------------------------------------
def deconv_fused_layer(x_nhwc, w_mat, b_rep, cout, kh, kw, out_dtype):
    """stride == kernel (no overlap): fused matmul+bias+relu, then a pure
    depth-to-space rearrangement (no scatter-add, no extra HBM pass)."""
    N, H, W, Cin = x_nhwc.shape
    n_real = cout * kh * kw
    y = pallas_matmul_bias_relu(x_nhwc.reshape(N * H * W, Cin), w_mat, b_rep,
                                out_dtype=out_dtype)          # (M, Npad)
    y = y[:, :n_real].reshape(N, H, W, cout, kh, kw)
    # out[n, h*kh + ih, w*kw + iw, co] = y[n, h, w, co, ih, iw]
    y = jnp.transpose(y, (0, 1, 4, 2, 5, 3)).reshape(N, H * kh, W * kw, cout)
    return y


def deconv_overlap_layer(x_nhwc, w_mat, b_row, cout, kh, kw, stride):
    """kernel > stride (layer 1): matmul, overlap scatter-add (tiny XLA glue),
    then fused bias+ReLU kernel (bias must come after the overlap sum)."""
    N, H, W, Cin = x_nhwc.shape
    Hout = (H - 1) * stride + kh
    Wout = (W - 1) * stride + kw
    n_real = cout * kh * kw
    y = pallas_matmul(x_nhwc.reshape(N * H * W, Cin), w_mat)  # (M, Npad) f32
    y = y[:, :n_real].reshape(N, H, W, cout, kh, kw)

    # TODO(synk): the 9-term overlap scatter-add stays in XLA (data volume here
    # is (2,5,5,512) -- negligible); a dedicated Pallas col2im is not worth it.
    out = jnp.zeros((N, Hout, Wout, cout), jnp.float32)
    for ih in range(kh):
        for iw in range(kw):
            out = out.at[:, ih:ih + stride * H:stride,
                         iw:iw + stride * W:stride, :].add(y[:, :, :, :, ih, iw])

    flat = pallas_bias_relu(out.reshape(N * Hout * Wout, cout), b_row,
                            out_dtype=jnp.bfloat16)
    return flat.reshape(N, Hout, Wout, cout)


# ----------------------------------------------------------------------------
# ConvDecoder parameters + forward
# ----------------------------------------------------------------------------
_LAYER_CFG = [
    # (Cin, Cout, KH, KW, stride)
    (1024, 512, 3, 3, 2),
    (512, 512, 2, 2, 2),
    (512, 256, 2, 2, 2),
    (256, 128, 2, 2, 2),
    (128, 64, 2, 2, 2),
    (64, 3, 2, 2, 2),
]


def init_params(key):
    """Raw PyTorch-layout params: weight (Cin, Cout, KH, KW), bias (Cout,)."""
    params = []
    for cin, cout, kh, kw, _ in _LAYER_CFG:
        key, wk, bk = jax.random.split(key, 3)
        # (PyTorch's kaiming_uniform fan uses Cout*KH*KW for this layout; exact
        # init values don't affect kernel semantics.)
        fan = cout * kh * kw
        w = jax.random.normal(wk, (cin, cout, kh, kw), jnp.float32) / jnp.sqrt(fan)
        b = jax.random.normal(bk, (cout,), jnp.float32) * 0.01
        params.append((w, b))
    return params


def prepare_params(params):
    """One-time packing: reshape weights to (Cin, Cout*KH*KW), lane-pad N to a
    multiple of 128, cast to bf16; pre-replicate/pad biases.  Done OUTSIDE the
    jitted forward so no per-call padding copies happen."""
    prepped = []
    for (w, b), (cin, cout, kh, kw, stride) in zip(params, _LAYER_CFG):
        n_real = cout * kh * kw
        n_pad = _round_up(n_real, 128)
        wm = jnp.zeros((cin, n_pad), jnp.bfloat16)
        wm = wm.at[:, :n_real].set(w.reshape(cin, n_real).astype(jnp.bfloat16))
        if kh == stride and kw == stride:
            # fused-epilogue bias: column index = co*KH*KW + ih*KW + iw
            b_rep = jnp.zeros((1, n_pad), jnp.float32)
            b_rep = b_rep.at[0, :n_real].set(
                jnp.repeat(b.astype(jnp.float32), kh * kw))
            prepped.append((wm, b_rep))
        else:
            prepped.append((wm, b.astype(jnp.float32).reshape(1, cout)))
    return prepped


@jax.jit
def conv_decoder_forward(x_nchw, prepped_params):
    # NCHW (PyTorch convention) -> NHWC for the kernels.
    x = jnp.transpose(x_nchw, (0, 2, 3, 1)).astype(jnp.float32)
    n_layers = len(_LAYER_CFG)
    for li, ((w_mat, b_arr), (cin, cout, kh, kw, stride)) in enumerate(
            zip(prepped_params, _LAYER_CFG)):
        if kh == stride and kw == stride:
            out_dtype = jnp.float32 if li == n_layers - 1 else jnp.bfloat16
            x = deconv_fused_layer(x, w_mat, b_arr, cout, kh, kw, out_dtype)
        else:
            x = deconv_overlap_layer(x, w_mat, b_arr, cout, kh, kw, stride)
    # back to NCHW
    return jnp.transpose(x, (0, 3, 1, 2)).astype(jnp.float32)


if __name__ == "__main__":
    key = jax.random.PRNGKey(0)
    pkey, xkey = jax.random.split(key)
    params = init_params(pkey)
    prepped = prepare_params(params)

    # small input: batch=2, 1024 channels (fixed by the module), 2x2 spatial
    x = jax.random.normal(xkey, (2, 1024, 2, 2), jnp.float32)

    out = conv_decoder_forward(x, prepped)
    out = jax.block_until_ready(out)

    # spatial chain: 2 -> 5 -> 10 -> 20 -> 40 -> 80 -> 160
    assert out.shape == (2, 3, 160, 160), out.shape
    assert bool(jnp.all(out >= 0.0)) and bool(jnp.all(jnp.isfinite(out)))
    print("KERNEL_OK")
</pallas_src>

<mosaic_0001>
module attributes {stable_mosaic.version = 11 : i64} {
  func.func @_mm_kernel(%arg0: i32, %arg1: i32, %arg2: memref<8x1024xbf16, #tpu.memory_space<vmem>>, %arg3: memref<1024x256xbf16, #tpu.memory_space<vmem>>, %arg4: memref<8x256xf32, #tpu.memory_space<vmem>>) attributes {dimension_semantics = [#tpu.dimension_semantics<parallel>, #tpu.dimension_semantics<parallel>], iteration_bounds = array<i64: 1, 18>, scalar_prefetch = 0 : i64, scratch_operands = 0 : i64, tpu.core_type = #tpu.core_type<tc>, window_params = [{transform_indices = @transform_0, window_bounds = array<i64: 8, 1024>}, {transform_indices = @transform_1, window_bounds = array<i64: 1024, 256>}, {transform_indices = @transform_2, window_bounds = array<i64: 8, 256>}]} {
    %c0 = arith.constant 0 : index
    %c0_0 = arith.constant 0 : index
    %0 = vector.load %arg2[%c0, %c0_0] : memref<8x1024xbf16, #tpu.memory_space<vmem>>, vector<8x1024xbf16>
    %c0_1 = arith.constant 0 : index
    %c0_2 = arith.constant 0 : index
    %1 = vector.load %arg3[%c0_1, %c0_2] : memref<1024x256xbf16, #tpu.memory_space<vmem>>, vector<1024x256xbf16>
    %cst = arith.constant dense<0.000000e+00> : vector<8x256xf32>
    %2 = tpu.matmul %0, %1, %cst {dimension_numbers = #tpu.dot_dimension_numbers<[1], [0], [0], [1], [0, 0, 1, 1], [], []>} : vector<8x1024xbf16>, vector<1024x256xbf16>, vector<8x256xf32> -> vector<8x256xf32>
    %c0_3 = arith.constant 0 : index
    %c0_4 = arith.constant 0 : index
    %3 = vector.load %arg4[%c0_3, %c0_4] : memref<8x256xf32, #tpu.memory_space<vmem>>, vector<8x256xf32>
    tpu.vector_store %arg4[%c0_3, %c0_4], %2 {strides = array<i32>} : memref<8x256xf32, #tpu.memory_space<vmem>>, vector<8x256xf32>,
    return
  }
  func.func @transform_0(%arg0: i32, %arg1: i32) -> (i32, i32) {
    %c0_i32 = arith.constant 0 : i32
    %c0_i32_0 = arith.constant 0 : i32
    return %arg0, %c0_i32 : i32, i32
  }
  func.func @transform_1(%arg0: i32, %arg1: i32) -> (i32, i32) {
    %c0_i32 = arith.constant 0 : i32
    %c0_i32_0 = arith.constant 0 : i32
    return %c0_i32, %arg1 : i32, i32
  }
  func.func @transform_2(%arg0: i32, %arg1: i32) -> (i32, i32) {
    %c0_i32 = arith.constant 0 : i32
    return %arg0, %arg1 : i32, i32
  }
}

module attributes {stable_mosaic.version = 11 : i64} {
  func.func @_bias_relu_kernel(%arg0: i32, %arg1: memref<50x512xf32, #tpu.memory_space<vmem>>, %arg2: memref<1x512xf32, #tpu.memory_space<vmem>>, %arg3: memref<50x512xbf16, #tpu.memory_space<vmem>>) attributes {dimension_semantics = [#tpu.dimension_semantics<parallel>], iteration_bounds = array<i64: 1>, scalar_prefetch = 0 : i64, scratch_operands = 0 : i64, tpu.core_type = #tpu.core_type<tc>, window_params = [{transform_indices = @transform_0, window_bounds = array<i64: 50, 512>}, {pipeline_mode = #tpu.pipeline_mode<synchronous>, transform_indices = @transform_1, window_bounds = array<i64: 1, 512>}, {transform_indices = @transform_2, window_bounds = array<i64: 50, 512>}]} {
    %c0 = arith.constant 0 : index
    %c0_0 = arith.constant 0 : index
    %0 = vector.load %arg1[%c0, %c0_0] : memref<50x512xf32, #tpu.memory_space<vmem>>, vector<50x512xf32>
    %c0_1 = arith.constant 0 : index
    %c0_2 = arith.constant 0 : index
    %1 = vector.load %arg2[%c0_1, %c0_2] : memref<1x512xf32, #tpu.memory_space<vmem>>, vector<1x512xf32>
    %2 = vector.broadcast %1 : vector<1x512xf32> to vector<50x512xf32>
    %3 = arith.addf %0, %2 : vector<50x512xf32>
    %cst = arith.constant 0.000000e+00 : f32
    %4 = vector.broadcast %cst : f32 to vector<50x512xf32>
    %5 = arith.maximumf %3, %4 : vector<50x512xf32>
    %6 = arith.truncf %5 : vector<50x512xf32> to vector<50x512xbf16>
    %c0_3 = arith.constant 0 : index
    %c0_4 = arith.constant 0 : index
    %7 = vector.load %arg3[%c0_3, %c0_4] : memref<50x512xbf16, #tpu.memory_space<vmem>>, vector<50x512xbf16>
    tpu.vector_store %arg3[%c0_3, %c0_4], %6 {strides = array<i32>} : memref<50x512xbf16, #tpu.memory_space<vmem>>, vector<50x512xbf16>,
    return
  }
  func.func @transform_0(%arg0: i32) -> (i32, i32) {
    %c0_i32 = arith.constant 0 : i32
    %c0_i32_0 = arith.constant 0 : i32
    return %arg0, %c0_i32 : i32, i32
  }
  func.func @transform_1(%arg0: i32) -> (i32, i32) {
    %c0_i32 = arith.constant 0 : i32
    %c0_i32_0 = arith.constant 0 : i32
    %c0_i32_1 = arith.constant 0 : i32
    return %c0_i32, %c0_i32_0 : i32, i32
  }
  func.func @transform_2(%arg0: i32) -> (i32, i32) {
    %c0_i32 = arith.constant 0 : i32
    %c0_i32_0 = arith.constant 0 : i32
    return %arg0, %c0_i32 : i32, i32
  }
}

module attributes {stable_mosaic.version = 11 : i64} {
  func.func @_mm_bias_relu_kernel(%arg0: i32, %arg1: i32, %arg2: memref<50x512xbf16, #tpu.memory_space<vmem>>, %arg3: memref<512x256xbf16, #tpu.memory_space<vmem>>, %arg4: memref<1x256xf32, #tpu.memory_space<vmem>>, %arg5: memref<50x256xbf16, #tpu.memory_space<vmem>>) attributes {dimension_semantics = [#tpu.dimension_semantics<parallel>, #tpu.dimension_semantics<parallel>], iteration_bounds = array<i64: 1, 8>, scalar_prefetch = 0 : i64, scratch_operands = 0 : i64, tpu.core_type = #tpu.core_type<tc>, window_params = [{transform_indices = @transform_0, window_bounds = array<i64: 50, 512>}, {transform_indices = @transform_1, window_bounds = array<i64: 512, 256>}, {transform_indices = @transform_2, window_bounds = array<i64: 1, 256>}, {transform_indices = @transform_3, window_bounds = array<i64: 50, 256>}]} {
    %c0 = arith.constant 0 : index
    %c0_0 = arith.constant 0 : index
    %0 = vector.load %arg2[%c0, %c0_0] : memref<50x512xbf16, #tpu.memory_space<vmem>>, vector<50x512xbf16>
    %c0_1 = arith.constant 0 : index
    %c0_2 = arith.constant 0 : index
    %1 = vector.load %arg3[%c0_1, %c0_2] : memref<512x256xbf16, #tpu.memory_space<vmem>>, vector<512x256xbf16>
    %cst = arith.constant dense<0.000000e+00> : vector<50x256xf32>
    %2 = tpu.matmul %0, %1, %cst {dimension_numbers = #tpu.dot_dimension_numbers<[1], [0], [0], [1], [0, 0, 1, 1], [], []>} : vector<50x512xbf16>, vector<512x256xbf16>, vector<50x256xf32> -> vector<50x256xf32>
    %c0_3 = arith.constant 0 : index
    %c0_4 = arith.constant 0 : index
    %3 = vector.load %arg4[%c0_3, %c0_4] : memref<1x256xf32, #tpu.memory_space<vmem>>, vector<1x256xf32>
    %4 = vector.broadcast %3 : vector<1x256xf32> to vector<50x256xf32>
    %5 = arith.addf %2, %4 : vector<50x256xf32>
    %cst_5 = arith.constant 0.000000e+00 : f32
    %6 = vector.broadcast %cst_5 : f32 to vector<50x256xf32>
    %7 = arith.maximumf %5, %6 : vector<50x256xf32>
    %8 = arith.truncf %7 : vector<50x256xf32> to vector<50x256xbf16>
    %c0_6 = arith.constant 0 : index
    %c0_7 = arith.constant 0 : index
    %9 = vector.load %arg5[%c0_6, %c0_7] : memref<50x256xbf16, #tpu.memory_space<vmem>>, vector<50x256xbf16>
    tpu.vector_store %arg5[%c0_6, %c0_7], %8 {strides = array<i32>} : memref<50x256xbf16, #tpu.memory_space<vmem>>, vector<50x256xbf16>,
    return
  }
  func.func @transform_0(%arg0: i32, %arg1: i32) -> (i32, i32) {
    %c0_i32 = arith.constant 0 : i32
    %c0_i32_0 = arith.constant 0 : i32
    return %arg0, %c0_i32 : i32, i32
  }
  func.func @transform_1(%arg0: i32, %arg1: i32) -> (i32, i32) {
    %c0_i32 = arith.constant 0 : i32
    %c0_i32_0 = arith.constant 0 : i32
    return %c0_i32, %arg1 : i32, i32
  }
  func.func @transform_2(%arg0: i32, %arg1: i32) -> (i32, i32) {
    %c0_i32 = arith.constant 0 : i32
    %c0_i32_0 = arith.constant 0 : i32
    return %c0_i32, %arg1 : i32, i32
  }
  func.func @transform_3(%arg0: i32, %arg1: i32) -> (i32, i32) {
    %c0_i32 = arith.constant 0 : i32
    return %arg0, %arg1 : i32, i32
  }
}

module attributes {stable_mosaic.version = 11 : i64} {
  func.func @_mm_bias_relu_kernel(%arg0: i32, %arg1: i32, %arg2: memref<200x512xbf16, #tpu.memory_space<vmem>>, %arg3: memref<512x256xbf16, #tpu.memory_space<vmem>>, %arg4: memref<1x256xf32, #tpu.memory_space<vmem>>, %arg5: memref<200x256xbf16, #tpu.memory_space<vmem>>) attributes {dimension_semantics = [#tpu.dimension_semantics<parallel>, #tpu.dimension_semantics<parallel>], iteration_bounds = array<i64: 1, 4>, scalar_prefetch = 0 : i64, scratch_operands = 0 : i64, tpu.core_type = #tpu.core_type<tc>, window_params = [{transform_indices = @transform_0, window_bounds = array<i64: 200, 512>}, {transform_indices = @transform_1, window_bounds = array<i64: 512, 256>}, {transform_indices = @transform_2, window_bounds = array<i64: 1, 256>}, {transform_indices = @transform_3, window_bounds = array<i64: 200, 256>}]} {
    %c0 = arith.constant 0 : index
    %c0_0 = arith.constant 0 : index
    %0 = vector.load %arg2[%c0, %c0_0] : memref<200x512xbf16, #tpu.memory_space<vmem>>, vector<200x512xbf16>
    %c0_1 = arith.constant 0 : index
    %c0_2 = arith.constant 0 : index
    %1 = vector.load %arg3[%c0_1, %c0_2] : memref<512x256xbf16, #tpu.memory_space<vmem>>, vector<512x256xbf16>
    %cst = arith.constant dense<0.000000e+00> : vector<200x256xf32>
    %2 = tpu.matmul %0, %1, %cst {dimension_numbers = #tpu.dot_dimension_numbers<[1], [0], [0], [1], [0, 0, 1, 1], [], []>} : vector<200x512xbf16>, vector<512x256xbf16>, vector<200x256xf32> -> vector<200x256xf32>
    %c0_3 = arith.constant 0 : index
    %c0_4 = arith.constant 0 : index
    %3 = vector.load %arg4[%c0_3, %c0_4] : memref<1x256xf32, #tpu.memory_space<vmem>>, vector<1x256xf32>
    %4 = vector.broadcast %3 : vector<1x256xf32> to vector<200x256xf32>
    %5 = arith.addf %2, %4 : vector<200x256xf32>
    %cst_5 = arith.constant 0.000000e+00 : f32
    %6 = vector.broadcast %cst_5 : f32 to vector<200x256xf32>
    %7 = arith.maximumf %5, %6 : vector<200x256xf32>
    %8 = arith.truncf %7 : vector<200x256xf32> to vector<200x256xbf16>
    %c0_6 = arith.constant 0 : index
    %c0_7 = arith.constant 0 : index
    %9 = vector.load %arg5[%c0_6, %c0_7] : memref<200x256xbf16, #tpu.memory_space<vmem>>, vector<200x256xbf16>
    tpu.vector_store %arg5[%c0_6, %c0_7], %8 {strides = array<i32>} : memref<200x256xbf16, #tpu.memory_space<vmem>>, vector<200x256xbf16>,
    return
  }
  func.func @transform_0(%arg0: i32, %arg1: i32) -> (i32, i32) {
    %c0_i32 = arith.constant 0 : i32
    %c0_i32_0 = arith.constant 0 : i32
    return %arg0, %c0_i32 : i32, i32
  }
  func.func @transform_1(%arg0: i32, %arg1: i32) -> (i32, i32) {
    %c0_i32 = arith.constant 0 : i32
    %c0_i32_0 = arith.constant 0 : i32
    return %c0_i32, %arg1 : i32, i32
  }
  func.func @transform_2(%arg0: i32, %arg1: i32) -> (i32, i32) {
    %c0_i32 = arith.constant 0 : i32
    %c0_i32_0 = arith.constant 0 : i32
    return %c0_i32, %arg1 : i32, i32
  }
  func.func @transform_3(%arg0: i32, %arg1: i32) -> (i32, i32) {
    %c0_i32 = arith.constant 0 : i32
    return %arg0, %arg1 : i32, i32
  }
}

module attributes {stable_mosaic.version = 11 : i64} {
  func.func @_mm_bias_relu_kernel(%arg0: i32, %arg1: i32, %arg2: memref<800x256xbf16, #tpu.memory_space<vmem>>, %arg3: memref<256x256xbf16, #tpu.memory_space<vmem>>, %arg4: memref<1x256xf32, #tpu.memory_space<vmem>>, %arg5: memref<800x256xbf16, #tpu.memory_space<vmem>>) attributes {dimension_semantics = [#tpu.dimension_semantics<parallel>, #tpu.dimension_semantics<parallel>], iteration_bounds = array<i64: 1, 2>, scalar_prefetch = 0 : i64, scratch_operands = 0 : i64, tpu.core_type = #tpu.core_type<tc>, window_params = [{transform_indices = @transform_0, window_bounds = array<i64: 800, 256>}, {transform_indices = @transform_1, window_bounds = array<i64: 256, 256>}, {transform_indices = @transform_2, window_bounds = array<i64: 1, 256>}, {transform_indices = @transform_3, window_bounds = array<i64: 800, 256>}]} {
    %c0 = arith.constant 0 : index
    %c0_0 = arith.constant 0 : index
    %0 = vector.load %arg2[%c0, %c0_0] : memref<800x256xbf16, #tpu.memory_space<vmem>>, vector<800x256xbf16>
    %c0_1 = arith.constant 0 : index
    %c0_2 = arith.constant 0 : index
    %1 = vector.load %arg3[%c0_1, %c0_2] : memref<256x256xbf16, #tpu.memory_space<vmem>>, vector<256x256xbf16>
    %cst = arith.constant dense<0.000000e+00> : vector<800x256xf32>
    %2 = tpu.matmul %0, %1, %cst {dimension_numbers = #tpu.dot_dimension_numbers<[1], [0], [0], [1], [0, 0, 1, 1], [], []>} : vector<800x256xbf16>, vector<256x256xbf16>, vector<800x256xf32> -> vector<800x256xf32>
    %c0_3 = arith.constant 0 : index
    %c0_4 = arith.constant 0 : index
    %3 = vector.load %arg4[%c0_3, %c0_4] : memref<1x256xf32, #tpu.memory_space<vmem>>, vector<1x256xf32>
    %4 = vector.broadcast %3 : vector<1x256xf32> to vector<800x256xf32>
    %5 = arith.addf %2, %4 : vector<800x256xf32>
    %cst_5 = arith.constant 0.000000e+00 : f32
    %6 = vector.broadcast %cst_5 : f32 to vector<800x256xf32>
    %7 = arith.maximumf %5, %6 : vector<800x256xf32>
    %8 = arith.truncf %7 : vector<800x256xf32> to vector<800x256xbf16>
    %c0_6 = arith.constant 0 : index
    %c0_7 = arith.constant 0 : index
    %9 = vector.load %arg5[%c0_6, %c0_7] : memref<800x256xbf16, #tpu.memory_space<vmem>>, vector<800x256xbf16>
    tpu.vector_store %arg5[%c0_6, %c0_7], %8 {strides = array<i32>} : memref<800x256xbf16, #tpu.memory_space<vmem>>, vector<800x256xbf16>,
    return
  }
  func.func @transform_0(%arg0: i32, %arg1: i32) -> (i32, i32) {
    %c0_i32 = arith.constant 0 : i32
    %c0_i32_0 = arith.constant 0 : i32
    return %arg0, %c0_i32 : i32, i32
  }
  func.func @transform_1(%arg0: i32, %arg1: i32) -> (i32, i32) {
    %c0_i32 = arith.constant 0 : i32
    %c0_i32_0 = arith.constant 0 : i32
    return %c0_i32, %arg1 : i32, i32
  }
  func.func @transform_2(%arg0: i32, %arg1: i32) -> (i32, i32) {
    %c0_i32 = arith.constant 0 : i32
    %c0_i32_0 = arith.constant 0 : i32
    return %c0_i32, %arg1 : i32, i32
  }
  func.func @transform_3(%arg0: i32, %arg1: i32) -> (i32, i32) {
    %c0_i32 = arith.constant 0 : i32
    return %arg0, %arg1 : i32, i32
  }
}

module attributes {stable_mosaic.version = 11 : i64} {
  func.func @_mm_bias_relu_kernel(%arg0: i32, %arg1: i32, %arg2: memref<800x128xbf16, #tpu.memory_space<vmem>>, %arg3: memref<128x256xbf16, #tpu.memory_space<vmem>>, %arg4: memref<1x256xf32, #tpu.memory_space<vmem>>, %arg5: memref<800x256xbf16, #tpu.memory_space<vmem>>) attributes {dimension_semantics = [#tpu.dimension_semantics<parallel>, #tpu.dimension_semantics<parallel>], iteration_bounds = array<i64: 4, 1>, scalar_prefetch = 0 : i64, scratch_operands = 0 : i64, tpu.core_type = #tpu.core_type<tc>, window_params = [{transform_indices = @transform_0, window_bounds = array<i64: 800, 128>}, {transform_indices = @transform_1, window_bounds = array<i64: 128, 256>}, {transform_indices = @transform_2, window_bounds = array<i64: 1, 256>}, {transform_indices = @transform_3, window_bounds = array<i64: 800, 256>}]} {
    %c0 = arith.constant 0 : index
    %c0_0 = arith.constant 0 : index
    %0 = vector.load %arg2[%c0, %c0_0] : memref<800x128xbf16, #tpu.memory_space<vmem>>, vector<800x128xbf16>
    %c0_1 = arith.constant 0 : index
    %c0_2 = arith.constant 0 : index
    %1 = vector.load %arg3[%c0_1, %c0_2] : memref<128x256xbf16, #tpu.memory_space<vmem>>, vector<128x256xbf16>
    %cst = arith.constant dense<0.000000e+00> : vector<800x256xf32>
    %2 = tpu.matmul %0, %1, %cst {dimension_numbers = #tpu.dot_dimension_numbers<[1], [0], [0], [1], [0, 0, 1, 1], [], []>} : vector<800x128xbf16>, vector<128x256xbf16>, vector<800x256xf32> -> vector<800x256xf32>
    %c0_3 = arith.constant 0 : index
    %c0_4 = arith.constant 0 : index
    %3 = vector.load %arg4[%c0_3, %c0_4] : memref<1x256xf32, #tpu.memory_space<vmem>>, vector<1x256xf32>
    %4 = vector.broadcast %3 : vector<1x256xf32> to vector<800x256xf32>
    %5 = arith.addf %2, %4 : vector<800x256xf32>
    %cst_5 = arith.constant 0.000000e+00 : f32
    %6 = vector.broadcast %cst_5 : f32 to vector<800x256xf32>
    %7 = arith.maximumf %5, %6 : vector<800x256xf32>
    %8 = arith.truncf %7 : vector<800x256xf32> to vector<800x256xbf16>
    %c0_6 = arith.constant 0 : index
    %c0_7 = arith.constant 0 : index
    %9 = vector.load %arg5[%c0_6, %c0_7] : memref<800x256xbf16, #tpu.memory_space<vmem>>, vector<800x256xbf16>
    tpu.vector_store %arg5[%c0_6, %c0_7], %8 {strides = array<i32>} : memref<800x256xbf16, #tpu.memory_space<vmem>>, vector<800x256xbf16>,
    return
  }
  func.func @transform_0(%arg0: i32, %arg1: i32) -> (i32, i32) {
    %c0_i32 = arith.constant 0 : i32
    %c0_i32_0 = arith.constant 0 : i32
    return %arg0, %c0_i32 : i32, i32
  }
  func.func @transform_1(%arg0: i32, %arg1: i32) -> (i32, i32) {
    %c0_i32 = arith.constant 0 : i32
    %c0_i32_0 = arith.constant 0 : i32
    return %c0_i32, %arg1 : i32, i32
  }
  func.func @transform_2(%arg0: i32, %arg1: i32) -> (i32, i32) {
    %c0_i32 = arith.constant 0 : i32
    %c0_i32_0 = arith.constant 0 : i32
    return %c0_i32, %arg1 : i32, i32
  }
  func.func @transform_3(%arg0: i32, %arg1: i32) -> (i32, i32) {
    %c0_i32 = arith.constant 0 : i32
    return %arg0, %arg1 : i32, i32
  }
}

module attributes {stable_mosaic.version = 11 : i64} {
  func.func @_mm_bias_relu_kernel(%arg0: i32, %arg1: i32, %arg2: memref<800x64xbf16, #tpu.memory_space<vmem>>, %arg3: memref<64x128xbf16, #tpu.memory_space<vmem>>, %arg4: memref<1x128xf32, #tpu.memory_space<vmem>>, %arg5: memref<800x128xf32, #tpu.memory_space<vmem>>) attributes {dimension_semantics = [#tpu.dimension_semantics<parallel>, #tpu.dimension_semantics<parallel>], iteration_bounds = array<i64: 16, 1>, scalar_prefetch = 0 : i64, scratch_operands = 0 : i64, tpu.core_type = #tpu.core_type<tc>, window_params = [{transform_indices = @transform_0, window_bounds = array<i64: 800, 64>}, {transform_indices = @transform_1, window_bounds = array<i64: 64, 128>}, {transform_indices = @transform_2, window_bounds = array<i64: 1, 128>}, {transform_indices = @transform_3, window_bounds = array<i64: 800, 128>}]} {
    %c0 = arith.constant 0 : index
    %c0_0 = arith.constant 0 : index
    %0 = vector.load %arg2[%c0, %c0_0] : memref<800x64xbf16, #tpu.memory_space<vmem>>, vector<800x64xbf16>
    %c0_1 = arith.constant 0 : index
    %c0_2 = arith.constant 0 : index
    %1 = vector.load %arg3[%c0_1, %c0_2] : memref<64x128xbf16, #tpu.memory_space<vmem>>, vector<64x128xbf16>
    %cst = arith.constant dense<0.000000e+00> : vector<800x128xf32>
    %2 = tpu.matmul %0, %1, %cst {dimension_numbers = #tpu.dot_dimension_numbers<[1], [0], [0], [1], [0, 0, 1, 1], [], []>} : vector<800x64xbf16>, vector<64x128xbf16>, vector<800x128xf32> -> vector<800x128xf32>
    %c0_3 = arith.constant 0 : index
    %c0_4 = arith.constant 0 : index
    %3 = vector.load %arg4[%c0_3, %c0_4] : memref<1x128xf32, #tpu.memory_space<vmem>>, vector<1x128xf32>
    %4 = vector.broadcast %3 : vector<1x128xf32> to vector<800x128xf32>
    %5 = arith.addf %2, %4 : vector<800x128xf32>
    %cst_5 = arith.constant 0.000000e+00 : f32
    %6 = vector.broadcast %cst_5 : f32 to vector<800x128xf32>
    %7 = arith.maximumf %5, %6 : vector<800x128xf32>
    %c0_6 = arith.constant 0 : index
    %c0_7 = arith.constant 0 : index
    %8 = vector.load %arg5[%c0_6, %c0_7] : memref<800x128xf32, #tpu.memory_space<vmem>>, vector<800x128xf32>
    tpu.vector_store %arg5[%c0_6, %c0_7], %7 {strides = array<i32>} : memref<800x128xf32, #tpu.memory_space<vmem>>, vector<800x128xf32>,
    return
  }
  func.func @transform_0(%arg0: i32, %arg1: i32) -> (i32, i32) {
    %c0_i32 = arith.constant 0 : i32
    %c0_i32_0 = arith.constant 0 : i32
    return %arg0, %c0_i32 : i32, i32
  }
  func.func @transform_1(%arg0: i32, %arg1: i32) -> (i32, i32) {
    %c0_i32 = arith.constant 0 : i32
    %c0_i32_0 = arith.constant 0 : i32
    return %c0_i32, %arg1 : i32, i32
  }
  func.func @transform_2(%arg0: i32, %arg1: i32) -> (i32, i32) {
    %c0_i32 = arith.constant 0 : i32
    %c0_i32_0 = arith.constant 0 : i32
    return %c0_i32, %arg1 : i32, i32
  }
  func.func @transform_3(%arg0: i32, %arg1: i32) -> (i32, i32) {
    %c0_i32 = arith.constant 0 : i32
    return %arg0, %arg1 : i32, i32
  }
}

</mosaic_0001>

<llo_original>
// kernel: conv_decoder_forward.7
$region0: #{conv_decoder_forward.7}
  #allocation0 [shape = 'u32[]', space=smem, size = 0x4, offset = 0x4, fixed_abs, tag = 'smem constant byte address 0x4 - core index']
  #allocation1 [shape = 'u32[72,128]{1,0:T(1,128)}', space=vmem, size = 0x9000, scoped, tag = 'internal scratch']
  %s0 = inlined_call_operand.vmem [shape: bf16[8,1024], index: 0, kind: input, shape index: {}]
  %s1 = inlined_call_operand.hbm [shape: bf16[1024,4608], index: 1, kind: input, shape index: {}]
  %s2 = inlined_call_operand.vmem [shape: f32[8,4608], index: 2, kind: output, shape index: {}]
  %s3 = sld [smem:[#allocation0]]
  $region45: #{conv_decoder_forward.7} parent=0
    _
  %s5 = ssub.s32 1, %s3
  %s6 = scalar_select 0, %s5, %s3
  $region1: #{conv_decoder_forward.7} parent=0
    #allocation2 [shape = 'u8[1048576]{0}', space=vmem, size = 0x100000, scoped, tag = 'input window, operand 1']
    #allocation3 [shape = 's32[2]{0}', space=sflag, size = 0x8, scoped, tag = 'scoped memory for conv_decoder_forward.7']
    %7 = vsyncpa [#allocation3], 0
    %s8 = scalar_lea.sflag [#allocation3], 1
    %9 = vsyncpa %s8, 0
    loop: start=0, step=1, limit=20
    $region2: #{conv_decoder_forward.7} parent=1 // loop_pre_header
      _
    $region3: #{conv_decoder_forward.7} parent=1 // loop_header
      %s11 = sphi 0, %s15
      %p12 = scmp.ge.s32.totalorder %s11, 20
      %s18 = sphi 0, %s30
      %s19 = sphi 0, %s26
      %s20 = sphi 0, %s18
      %s21 = sphi 0, %s19
      %s22 = sphi 0, %s20
      %s23 = sphi 0, %s21
      %s33 = sphi 0, %s35
      %s36 = sphi 0, %s33
      %s37 = sphi 0, %s36
      %s53 = sphi 0, %s37
      %s59 = sphi 0, %s61
      %s62 = sphi 0, %s59
      %s63 = sphi 0, %s62
      %s79 = sphi 0, %s63
      %s87 = sphi 0, %s89
      %s90 = sphi 0, %s87
      %s91 = sphi 0, %s90
      %s107 = sphi 0, %s91
    $region4: #{conv_decoder_forward.7} parent=1 // loop_header_branch
      %14 = sbr.rel (%p12) target = $region8
    $region5: #{conv_decoder_forward.7} parent=1 // loop_body
      %s16 = ssub.s32 %s11, 1
      %s17 = ssub.s32 %s11, 2
      %s24 = sadd.s32 1, %s19
      %p25 = scmp.ge.s32.totalorder %s24, 18
      %s26 = scalar_select %p25, 0, %s24
      %s27 = sadd.s32 1, %s18
      %s28 = scalar_select %p25, %s27, %s18
      %p29 = scmp.ge.s32.totalorder %s28, 1
      %s30 = scalar_select %p29, 0, %s28
      %s31 = ssub.s32 %s18, %s30
      %p32 = scmp.eq.s32.totalorder %s31, 0
      %s34 = sadd.s32 %s33, 1
      %s35 = scalar_select %p32, %s33, %s34
      %p38 = pneg %p32
      %p39 = scmp.eq.s32.totalorder %s11, 17
      %p40 = por %p38, %p39
      %p41 = scmp.ne.s32.totalorder %s33, %s36
      %p42 = scmp.eq.s32.totalorder %s11, 0
      %p43 = por %p41, %p42
      %p44 = scmp.ne.s32.totalorder %s33, %s36
      %p45 = scmp.eq.s32.totalorder %s16, 17
      %p46 = por %p44, %p45
      %p47 = scmp.ne.s32.totalorder %s36, %s37
      %p48 = scmp.eq.s32.totalorder %s16, 0
      %p49 = por %p47, %p48
      %p50 = scmp.ne.s32.totalorder %s36, %s37
      %p51 = scmp.eq.s32.totalorder %s17, 17
      %p52 = por %p50, %p51
      %p54 = scmp.ne.s32.totalorder %s37, %s53
      %p55 = scmp.eq.s32.totalorder %s17, 0
      %p56 = por %p54, %p55
      %s57 = ssub.s32 %s19, %s26
      %p58 = scmp.eq.s32.totalorder %s57, 0
      %s60 = sadd.s32 %s59, 1
      %s61 = scalar_select %p58, %s59, %s60
      %p64 = pneg %p58
      %p65 = scmp.eq.s32.totalorder %s11, 17
      %p66 = por %p64, %p65
      %p67 = scmp.ne.s32.totalorder %s59, %s62
      %p68 = scmp.eq.s32.totalorder %s11, 0
      %p69 = por %p67, %p68
      %p70 = scmp.ne.s32.totalorder %s59, %s62
      %p71 = scmp.eq.s32.totalorder %s16, 17
      %p72 = por %p70, %p71
      %p73 = scmp.ne.s32.totalorder %s62, %s63
      %p74 = scmp.eq.s32.totalorder %s16, 0
      %p75 = por %p73, %p74
      %p76 = scmp.ne.s32.totalorder %s62, %s63
      %p77 = scmp.eq.s32.totalorder %s17, 17
      %p78 = por %p76, %p77
      %p80 = scmp.ne.s32.totalorder %s63, %s79
      %p81 = scmp.eq.s32.totalorder %s17, 0
      %p82 = por %p80, %p81
      %s83 = ssub.s32 %s18, %s30
      %s84 = ssub.s32 %s19, %s26
      %s85 = sor.u32 %s83, %s84
      %p86 = scmp.eq.s32.totalorder %s85, 0
      %s88 = sadd.s32 %s87, 1
      %s89 = scalar_select %p86, %s87, %s88
      %p92 = pneg %p86
      %p93 = scmp.eq.s32.totalorder %s11, 17
      %p94 = por %p92, %p93
      %p95 = scmp.ne.s32.totalorder %s87, %s90
      %p96 = scmp.eq.s32.totalorder %s11, 0
      %p97 = por %p95, %p96
      %p98 = scmp.ne.s32.totalorder %s87, %s90
      %p99 = scmp.eq.s32.totalorder %s16, 17
      %p100 = por %p98, %p99
      %p101 = scmp.ne.s32.totalorder %s90, %s91
      %p102 = scmp.eq.s32.totalorder %s16, 0
      %p103 = por %p101, %p102
      %p104 = scmp.ne.s32.totalorder %s90, %s91
      %p105 = scmp.eq.s32.totalorder %s17, 17
      %p106 = por %p104, %p105
      %p108 = scmp.ne.s32.totalorder %s91, %s107
      %p109 = scmp.eq.s32.totalorder %s17, 0
      %p110 = por %p108, %p109
      %p111 = scmp.le.s32.totalorder 1, %s11
      %p112 = scmp.lt.s32.totalorder %s11, 19
      %p113 = pnand %p111, %p112
      %p114 = pneg %p113
      // Predicated region
      $region9: #{conv_decoder_forward.7} parent=5 // pred_check
        _
      $region10: #{conv_decoder_forward.7} parent=5 // pred_check_branch
        %116 = sbr.rel (%p113) target = $region12
      $region11: #{conv_decoder_forward.7} parent=5 // pred_region
        %s117 = ssub.s32 %s11, 1
        // Predicated region
        $region13: #{conv_decoder_forward.7} parent=11 // pred_check
          %p118 = pneg %p49
        $region14: #{conv_decoder_forward.7} parent=11 // pred_check_branch
          %120 = sbr.rel (%p118) target = $region16
        $region15: #{conv_decoder_forward.7} parent=11 // pred_region
          %p121 = scmp.lt.s32.totalorder %s20, 0
          %s122 = scalar_select %p121, %s20, 0
          %s123 = smul.addr %s122, 8
          %s124 = smul.addr %s123, 4
          %s125 = scalar_lea.vmem %s0, %s124
        $region16: #{conv_decoder_forward.7} parent=11 // pred_fallthru
          _
      $region12: #{conv_decoder_forward.7} parent=5 // pred_fallthru
        _
      %p126 = scmp.lt.s32.totalorder %s11, 18
      // Predicated region
      $region17: #{conv_decoder_forward.7} parent=5 // pred_check
        %p127 = pneg %p126
      $region18: #{conv_decoder_forward.7} parent=5 // pred_check_branch
        %129 = sbr.rel (%p127) target = $region20
      $region19: #{conv_decoder_forward.7} parent=5 // pred_region
        // Predicated region
        $region21: #{conv_decoder_forward.7} parent=19 // pred_check
          %p130 = pneg %p69
        $region22: #{conv_decoder_forward.7} parent=19 // pred_check_branch
          %132 = sbr.rel (%p130) target = $region24
        $region23: #{conv_decoder_forward.7} parent=19 // pred_region
          %s133 = sand.u32 %s59, 1
          %s134 = scalar_lea.sflag [#allocation3], %s133
          %s135 = sand.u32 %s59, 1
          %s136 = smul.addr %s135, 1024
          %s137 = scalar_lea.vmem [#allocation2], %s136
          %s138 = smul.u32 2, %s19
          %140 = vsyncadd %s134, 0
          %s141 = smul.addr %s138, 4
          %s142 = scalar_lea.hbm %s1, %s141
          %s143 = sshll.u32 %s142, 4
          %s144 = int_to_ptr.hbm [resolvable:$true] %s143
          %s145 = sshll.u32 %s137, 4
          %s146 = int_to_ptr.vmem [resolvable:$true] %s145
          %151 = dma.hbm_to_vmem [thread:$0]  %s144, 16384, %s146, %s134, 2304, 128, 8
        $region24: #{conv_decoder_forward.7} parent=19 // pred_fallthru
          _
      $region20: #{conv_decoder_forward.7} parent=5 // pred_fallthru
        _
      %p152 = scmp.le.s32.totalorder 1, %s11
      %p153 = scmp.lt.s32.totalorder %s11, 19
      %p154 = pnand %p152, %p153
      %p155 = pneg %p154
      // Predicated region
      $region25: #{conv_decoder_forward.7} parent=5 // pred_check
        _
      $region26: #{conv_decoder_forward.7} parent=5 // pred_check_branch
        %157 = sbr.rel (%p154) target = $region28
      $region27: #{conv_decoder_forward.7} parent=5 // pred_region
        %s158 = ssub.s32 %s11, 1
        %s159 = sand.u32 %s62, 1
        %s160 = scalar_lea.sflag [#allocation3], %s159
        %s161 = sand.u32 %s62, 1
        %s162 = smul.addr %s161, 1024
        %s163 = scalar_lea.vmem [#allocation2], %s162
        // Predicated region
        $region29: #{conv_decoder_forward.7} parent=27 // pred_check
          %p164 = pneg %p75
        $region30: #{conv_decoder_forward.7} parent=27 // pred_check_branch
          %166 = sbr.rel (%p164) target = $region32
        $region31: #{conv_decoder_forward.7} parent=27 // pred_region
          %168 = dma.done %s160, 16384
        $region32: #{conv_decoder_forward.7} parent=27 // pred_fallthru
          _
        %p169 = scmp.lt.s32.totalorder %s20, 0
        %s170 = scalar_select %p169, %s20, 0
        %s171 = smul.addr %s170, 8
        %s172 = smul.addr %s171, 4
        %s173 = scalar_lea.vmem %s0, %s172
        %p174 = pneg %p49
        %p175 = pneg %p46
        %s176 = sand.u32 %s62, 1
        %s177 = scalar_lea.sflag [#allocation3], %s176
        %s178 = sand.u32 %s62, 1
        %s179 = smul.addr %s178, 1024
        %s180 = scalar_lea.vmem [#allocation2], %s179
        %p181 = pneg %p75
        %p182 = pneg %p72
        %p183 = pneg %p103
        %p184 = pneg %p100
        %s185 = smul.u32 2, %s21
        %p186 = scmp.lt.s32.totalorder %s20, 0
        %s187 = scalar_select %p186, %s20, 0
        %p188 = scmp.lt.s32.totalorder %s185, 35
        %s189 = scalar_select %p188, %s185, 35
        %s190 = smul.addr %s187, 36
        %s191 = sadd.s32 %s189, %s190
        %s192 = smul.addr %s191, 8
        %s193 = scalar_lea.vmem %s2, %s192
        %p194 = scmp.lt.s32.totalorder %s20, 0
        %s195 = scalar_select %p194, %s20, 0
        %s196 = smul.addr %s195, 8
        %s197 = smul.addr %s196, 4
        %s198 = scalar_lea.vmem %s0, %s197
        %s199 = smul.u32 2, %s21
        %s200 = smul.u32 2, %s21
        %p201 = scmp.lt.s32.totalorder %s20, 0
        %s202 = scalar_select %p201, %s20, 0
        %p203 = scmp.lt.s32.totalorder %s200, 35
        %s204 = scalar_select %p203, %s200, 35
        %s205 = smul.addr %s202, 36
        %s206 = sadd.s32 %s204, %s205
        %s207 = smul.addr %s206, 8
        %s208 = scalar_lea.vmem %s2, %s207
        %s209 = smul.u32 2, %s21
        %v210 = vld [vmem:[%s198] sm:$0xff]
        %v211 = vld [vmem:[%s198 + $0x8] sm:$0xff]
        %v212 = vld [vmem:[%s198 + $0x10] sm:$0xff]
        %v213 = vld [vmem:[%s198 + $0x18] sm:$0xff]
        %v214 = vld [vmem:[%s163] sm:$0xff]
        %v215 = vld [vmem:[%s163 + $0x8] sm:$0xff]
        %v216 = vld [vmem:[%s163 + $0x10] sm:$0xff]
        %v217 = vld [vmem:[%s163 + $0x18] sm:$0xff]
        %v218 = vld [vmem:[%s163 + $0x20] sm:$0xff]
        %v219 = vld [vmem:[%s163 + $0x28] sm:$0xff]
        %v220 = vld [vmem:[%s163 + $0x30] sm:$0xff]
        %v221 = vld [vmem:[%s163 + $0x38] sm:$0xff]
        %v222 = vld [vmem:[%s163 + $0x40] sm:$0xff]
        %v223 = vld [vmem:[%s163 + $0x48] sm:$0xff]
        %v224 = vld [vmem:[%s163 + $0x50] sm:$0xff]
        %v225 = vld [vmem:[%s163 + $0x58] sm:$0xff]
        %v226 = vld [vmem:[%s163 + $0x60] sm:$0xff]
        %v227 = vld [vmem:[%s163 + $0x68] sm:$0xff]
        %v228 = vld [vmem:[%s163 + $0x70] sm:$0xff]
        %v229 = vld [vmem:[%s163 + $0x78] sm:$0xff]
        %v230 = vld [vmem:[%s163 + $0x80] sm:$0xff]
        %v231 = vld [vmem:[%s163 + $0x88] sm:$0xff]
        %v232 = vld [vmem:[%s163 + $0x90] sm:$0xff]
        %v233 = vld [vmem:[%s163 + $0x98] sm:$0xff]
        %v234 = vld [vmem:[%s163 + $0xa0] sm:$0xff]
        %v235 = vld [vmem:[%s163 + $0xa8] sm:$0xff]
        %v236 = vld [vmem:[%s163 + $0xb0] sm:$0xff]
        %v237 = vld [vmem:[%s163 + $0xb8] sm:$0xff]
        %v238 = vld [vmem:[%s163 + $0xc0] sm:$0xff]
        %v239 = vld [vmem:[%s163 + $0xc8] sm:$0xff]
        %v240 = vld [vmem:[%s163 + $0xd0] sm:$0xff]
        %v241 = vld [vmem:[%s163 + $0xd8] sm:$0xff]
        %v242 = vld [vmem:[%s163 + $0xe0] sm:$0xff]
        %v243 = vld [vmem:[%s163 + $0xe8] sm:$0xff]
        %v244 = vld [vmem:[%s163 + $0xf0] sm:$0xff]
        %v245 = vld [vmem:[%s163 + $0xf8] sm:$0xff]
        %v246 = vld [vmem:[%s163 + $0x100] sm:$0xff]
        %v247 = vld [vmem:[%s163 + $0x108] sm:$0xff]
        %v248 = vld [vmem:[%s163 + $0x110] sm:$0xff]
        %v249 = vld [vmem:[%s163 + $0x118] sm:$0xff]
        %v250 = vld [vmem:[%s163 + $0x120] sm:$0xff]
        %v251 = vld [vmem:[%s163 + $0x128] sm:$0xff]
        %v252 = vld [vmem:[%s163 + $0x130] sm:$0xff]
        %v253 = vld [vmem:[%s163 + $0x138] sm:$0xff]
        %v254 = vld [vmem:[%s163 + $0x140] sm:$0xff]
        %v255 = vld [vmem:[%s163 + $0x148] sm:$0xff]
        %v256 = vld [vmem:[%s163 + $0x150] sm:$0xff]
        %v257 = vld [vmem:[%s163 + $0x158] sm:$0xff]
        %v258 = vld [vmem:[%s163 + $0x160] sm:$0xff]
        %v259 = vld [vmem:[%s163 + $0x168] sm:$0xff]
        %v260 = vld [vmem:[%s163 + $0x170] sm:$0xff]
        %v261 = vld [vmem:[%s163 + $0x178] sm:$0xff]
        %v262 = vld [vmem:[%s163 + $0x180] sm:$0xff]
        %v263 = vld [vmem:[%s163 + $0x188] sm:$0xff]
        %v264 = vld [vmem:[%s163 + $0x190] sm:$0xff]
        %v265 = vld [vmem:[%s163 + $0x198] sm:$0xff]
        %v266 = vld [vmem:[%s163 + $0x1a0] sm:$0xff]
        %v267 = vld [vmem:[%s163 + $0x1a8] sm:$0xff]
        %v268 = vld [vmem:[%s163 + $0x1b0] sm:$0xff]
        %v269 = vld [vmem:[%s163 + $0x1b8] sm:$0xff]
        %v270 = vld [vmem:[%s163 + $0x1c0] sm:$0xff]
        %v271 = vld [vmem:[%s163 + $0x1c8] sm:$0xff]
        %v272 = vld [vmem:[%s163 + $0x1d0] sm:$0xff]
        %v273 = vld [vmem:[%s163 + $0x1d8] sm:$0xff]
        %v274 = vld [vmem:[%s163 + $0x1e0] sm:$0xff]
        %v275 = vld [vmem:[%s163 + $0x1e8] sm:$0xff]
        %v276 = vld [vmem:[%s163 + $0x1f0] sm:$0xff]
        %v277 = vld [vmem:[%s163 + $0x1f8] sm:$0xff]
        %v278 = vld [vmem:[%s163 + $0x200] sm:$0xff]
        %v279 = vld [vmem:[%s163 + $0x208] sm:$0xff]
        %v280 = vld [vmem:[%s163 + $0x210] sm:$0xff]
        %v281 = vld [vmem:[%s163 + $0x218] sm:$0xff]
        %v282 = vld [vmem:[%s163 + $0x220] sm:$0xff]
        %v283 = vld [vmem:[%s163 + $0x228] sm:$0xff]
        %v284 = vld [vmem:[%s163 + $0x230] sm:$0xff]
        %v285 = vld [vmem:[%s163 + $0x238] sm:$0xff]
        %v286 = vld [vmem:[%s163 + $0x240] sm:$0xff]
        %v287 = vld [vmem:[%s163 + $0x248] sm:$0xff]
        %v288 = vld [vmem:[%s163 + $0x250] sm:$0xff]
        %v289 = vld [vmem:[%s163 + $0x258] sm:$0xff]
        %v290 = vld [vmem:[%s163 + $0x260] sm:$0xff]
        %v291 = vld [vmem:[%s163 + $0x268] sm:$0xff]
        %v292 = vld [vmem:[%s163 + $0x270] sm:$0xff]
        %v293 = vld [vmem:[%s163 + $0x278] sm:$0xff]
        %v294 = vld [vmem:[%s163 + $0x280] sm:$0xff]
        %v295 = vld [vmem:[%s163 + $0x288] sm:$0xff]
        %v296 = vld [vmem:[%s163 + $0x290] sm:$0xff]
        %v297 = vld [vmem:[%s163 + $0x298] sm:$0xff]
        %v298 = vld [vmem:[%s163 + $0x2a0] sm:$0xff]
        %v299 = vld [vmem:[%s163 + $0x2a8] sm:$0xff]
        %v300 = vld [vmem:[%s163 + $0x2b0] sm:$0xff]
        %v301 = vld [vmem:[%s163 + $0x2b8] sm:$0xff]
        %v302 = vld [vmem:[%s163 + $0x2c0] sm:$0xff]
        %v303 = vld [vmem:[%s163 + $0x2c8] sm:$0xff]
        %v304 = vld [vmem:[%s163 + $0x2d0] sm:$0xff]
        %v305 = vld [vmem:[%s163 + $0x2d8] sm:$0xff]
        %v306 = vld [vmem:[%s163 + $0x2e0] sm:$0xff]
        %v307 = vld [vmem:[%s163 + $0x2e8] sm:$0xff]
        %v308 = vld [vmem:[%s163 + $0x2f0] sm:$0xff]
        %v309 = vld [vmem:[%s163 + $0x2f8] sm:$0xff]
        %v310 = vld [vmem:[%s163 + $0x300] sm:$0xff]
        %v311 = vld [vmem:[%s163 + $0x308] sm:$0xff]
        %v312 = vld [vmem:[%s163 + $0x310] sm:$0xff]
        %v313 = vld [vmem:[%s163 + $0x318] sm:$0xff]
        %v314 = vld [vmem:[%s163 + $0x320] sm:$0xff]
        %v315 = vld [vmem:[%s163 + $0x328] sm:$0xff]
        %v316 = vld [vmem:[%s163 + $0x330] sm:$0xff]
        %v317 = vld [vmem:[%s163 + $0x338] sm:$0xff]
        %v318 = vld [vmem:[%s163 + $0x340] sm:$0xff]
        %v319 = vld [vmem:[%s163 + $0x348] sm:$0xff]
        %v320 = vld [vmem:[%s163 + $0x350] sm:$0xff]
        %v321 = vld [vmem:[%s163 + $0x358] sm:$0xff]
        %v322 = vld [vmem:[%s163 + $0x360] sm:$0xff]
        %v323 = vld [vmem:[%s163 + $0x368] sm:$0xff]
        %v324 = vld [vmem:[%s163 + $0x370] sm:$0xff]
        %v325 = vld [vmem:[%s163 + $0x378] sm:$0xff]
        %v326 = vld [vmem:[%s163 + $0x380] sm:$0xff]
        %v327 = vld [vmem:[%s163 + $0x388] sm:$0xff]
        %v328 = vld [vmem:[%s163 + $0x390] sm:$0xff]
        %v329 = vld [vmem:[%s163 + $0x398] sm:$0xff]
        %v330 = vld [vmem:[%s163 + $0x3a0] sm:$0xff]
        %v331 = vld [vmem:[%s163 + $0x3a8] sm:$0xff]
        %v332 = vld [vmem:[%s163 + $0x3b0] sm:$0xff]
        %v333 = vld [vmem:[%s163 + $0x3b8] sm:$0xff]
        %v334 = vld [vmem:[%s163 + $0x3c0] sm:$0xff]
        %v335 = vld [vmem:[%s163 + $0x3c8] sm:$0xff]
        %v336 = vld [vmem:[%s163 + $0x3d0] sm:$0xff]
        %v337 = vld [vmem:[%s163 + $0x3d8] sm:$0xff]
        %v338 = vld [vmem:[%s163 + $0x3e0] sm:$0xff]
        %v339 = vld [vmem:[%s163 + $0x3e8] sm:$0xff]
        %v340 = vld [vmem:[%s163 + $0x3f0] sm:$0xff]
        %v341 = vld [vmem:[%s163 + $0x3f8] sm:$0xff]
        %v346 = vunpack.c.l.b16 %v210
        %v347 = vunpack.c.h.b16 %v210
        %v348 = vunpack.c.l.b16 %v211
        %v349 = vunpack.c.h.b16 %v211
        %v350 = vunpack.c.l.b16 %v212
        %v351 = vunpack.c.h.b16 %v212
        %v352 = vunpack.c.l.b16 %v213
        %v353 = vunpack.c.h.b16 %v213
        %v354 = vpack.c.b16 %v346, %v346
        %v355 = vpack.c.b16 %v347, %v347
        %v356 = vpack.c.b16 %v348, %v348
        %v357 = vpack.c.b16 %v349, %v349
        %v358 = vpack.c.b16 %v350, %v350
        %v359 = vpack.c.b16 %v351, %v351
        %v360 = vpack.c.b16 %v352, %v352
        %v361 = vpack.c.b16 %v353, %v353
        %v498 = vunpack.c.l.b16 %v214
        %v499 = vunpack.c.h.b16 %v214
        %v500 = vunpack.c.l.b16 %v215
        %v501 = vunpack.c.h.b16 %v215
        %v502 = vunpack.c.l.b16 %v216
        %v503 = vunpack.c.h.b16 %v216
        %v504 = vunpack.c.l.b16 %v217
        %v505 = vunpack.c.h.b16 %v217
        %v506 = vunpack.c.l.b16 %v218
        %v507 = vunpack.c.h.b16 %v218
        %v508 = vunpack.c.l.b16 %v219
        %v509 = vunpack.c.h.b16 %v219
        %v510 = vunpack.c.l.b16 %v220
        %v511 = vunpack.c.h.b16 %v220
        %v512 = vunpack.c.l.b16 %v221
        %v513 = vunpack.c.h.b16 %v221
        %v514 = vunpack.c.l.b16 %v222
        %v515 = vunpack.c.h.b16 %v222
        %v516 = vunpack.c.l.b16 %v223
        %v517 = vunpack.c.h.b16 %v223
        %v518 = vunpack.c.l.b16 %v224
        %v519 = vunpack.c.h.b16 %v224
        %v520 = vunpack.c.l.b16 %v225
        %v521 = vunpack.c.h.b16 %v225
        %v522 = vunpack.c.l.b16 %v226
        %v523 = vunpack.c.h.b16 %v226
        %v524 = vunpack.c.l.b16 %v227
        %v525 = vunpack.c.h.b16 %v227
        %v526 = vunpack.c.l.b16 %v228
        %v527 = vunpack.c.h.b16 %v228
        %v528 = vunpack.c.l.b16 %v229
        %v529 = vunpack.c.h.b16 %v229
        %v530 = vunpack.c.l.b16 %v230
        %v531 = vunpack.c.h.b16 %v230
        %v532 = vunpack.c.l.b16 %v231
        %v533 = vunpack.c.h.b16 %v231
        %v534 = vunpack.c.l.b16 %v232
        %v535 = vunpack.c.h.b16 %v232
        %v536 = vunpack.c.l.b16 %v233
        %v537 = vunpack.c.h.b16 %v233
        %v538 = vunpack.c.l.b16 %v234
        %v539 = vunpack.c.h.b16 %v234
        %v540 = vunpack.c.l.b16 %v235
        %v541 = vunpack.c.h.b16 %v235
        %v542 = vunpack.c.l.b16 %v236
        %v543 = vunpack.c.h.b16 %v236
        %v544 = vunpack.c.l.b16 %v237
        %v545 = vunpack.c.h.b16 %v237
        %v546 = vunpack.c.l.b16 %v238
        %v547 = vunpack.c.h.b16 %v238
        %v548 = vunpack.c.l.b16 %v239
        %v549 = vunpack.c.h.b16 %v239
        %v550 = vunpack.c.l.b16 %v240
        %v551 = vunpack.c.h.b16 %v240
        %v552 = vunpack.c.l.b16 %v241
        %v553 = vunpack.c.h.b16 %v241
        %v554 = vunpack.c.l.b16 %v242
        %v555 = vunpack.c.h.b16 %v242
        %v556 = vunpack.c.l.b16 %v243
        %v557 = vunpack.c.h.b16 %v243
        %v558 = vunpack.c.l.b16 %v244
        %v559 = vunpack.c.h.b16 %v244
        %v560 = vunpack.c.l.b16 %v245
        %v561 = vunpack.c.h.b16 %v245
        %v562 = vunpack.c.l.b16 %v246
        %v563 = vunpack.c.h.b16 %v246
        %v564 = vunpack.c.l.b16 %v247
        %v565 = vunpack.c.h.b16 %v247
        %v566 = vunpack.c.l.b16 %v248
        %v567 = vunpack.c.h.b16 %v248
        %v568 = vunpack.c.l.b16 %v249
        %v569 = vunpack.c.h.b16 %v249
        %v570 = vunpack.c.l.b16 %v250
        %v571 = vunpack.c.h.b16 %v250
        %v572 = vunpack.c.l.b16 %v251
        %v573 = vunpack.c.h.b16 %v251
        %v574 = vunpack.c.l.b16 %v252
        %v575 = vunpack.c.h.b16 %v252
        %v576 = vunpack.c.l.b16 %v253
        %v577 = vunpack.c.h.b16 %v253
        %v578 = vunpack.c.l.b16 %v254
        %v579 = vunpack.c.h.b16 %v254
        %v580 = vunpack.c.l.b16 %v255
        %v581 = vunpack.c.h.b16 %v255
        %v582 = vunpack.c.l.b16 %v256
        %v583 = vunpack.c.h.b16 %v256
        %v584 = vunpack.c.l.b16 %v257
        %v585 = vunpack.c.h.b16 %v257
        %v586 = vunpack.c.l.b16 %v258
        %v587 = vunpack.c.h.b16 %v258
        %v588 = vunpack.c.l.b16 %v259
        %v589 = vunpack.c.h.b16 %v259
        %v590 = vunpack.c.l.b16 %v260
        %v591 = vunpack.c.h.b16 %v260
        %v592 = vunpack.c.l.b16 %v261
        %v593 = vunpack.c.h.b16 %v261
        %v594 = vunpack.c.l.b16 %v262
        %v595 = vunpack.c.h.b16 %v262
        %v596 = vunpack.c.l.b16 %v263
        %v597 = vunpack.c.h.b16 %v263
        %v598 = vunpack.c.l.b16 %v264
        %v599 = vunpack.c.h.b16 %v264
        %v600 = vunpack.c.l.b16 %v265
        %v601 = vunpack.c.h.b16 %v265
        %v602 = vunpack.c.l.b16 %v266
        %v603 = vunpack.c.h.b16 %v266
        %v604 = vunpack.c.l.b16 %v267
        %v605 = vunpack.c.h.b16 %v267
        %v606 = vunpack.c.l.b16 %v268
        %v607 = vunpack.c.h.b16 %v268
        %v608 = vunpack.c.l.b16 %v269
        %v609 = vunpack.c.h.b16 %v269
        %v610 = vunpack.c.l.b16 %v270
        %v611 = vunpack.c.h.b16 %v270
        %v612 = vunpack.c.l.b16 %v271
        %v613 = vunpack.c.h.b16 %v271
        %v614 = vunpack.c.l.b16 %v272
        %v615 = vunpack.c.h.b16 %v272
        %v616 = vunpack.c.l.b16 %v273
        %v617 = vunpack.c.h.b16 %v273
        %v618 = vunpack.c.l.b16 %v274
        %v619 = vunpack.c.h.b16 %v274
        %v620 = vunpack.c.l.b16 %v275
        %v621 = vunpack.c.h.b16 %v275
        %v622 = vunpack.c.l.b16 %v276
        %v623 = vunpack.c.h.b16 %v276
        %v624 = vunpack.c.l.b16 %v277
        %v625 = vunpack.c.h.b16 %v277
        %v626 = vunpack.c.l.b16 %v278
        %v627 = vunpack.c.h.b16 %v278
        %v628 = vunpack.c.l.b16 %v279
        %v629 = vunpack.c.h.b16 %v279
        %v630 = vunpack.c.l.b16 %v280
        %v631 = vunpack.c.h.b16 %v280
        %v632 = vunpack.c.l.b16 %v281
        %v633 = vunpack.c.h.b16 %v281
        %v634 = vunpack.c.l.b16 %v282
        %v635 = vunpack.c.h.b16 %v282
        %v636 = vunpack.c.l.b16 %v283
        %v637 = vunpack.c.h.b16 %v283
        %v638 = vunpack.c.l.b16 %v284
        %v639 = vunpack.c.h.b16 %v284
        %v640 = vunpack.c.l.b16 %v285
        %v641 = vunpack.c.h.b16 %v285
        %v642 = vunpack.c.l.b16 %v286
        %v643 = vunpack.c.h.b16 %v286
        %v644 = vunpack.c.l.b16 %v287
        %v645 = vunpack.c.h.b16 %v287
        %v646 = vunpack.c.l.b16 %v288
        %v647 = vunpack.c.h.b16 %v288
        %v648 = vunpack.c.l.b16 %v289
        %v649 = vunpack.c.h.b16 %v289
        %v650 = vunpack.c.l.b16 %v290
        %v651 = vunpack.c.h.b16 %v290
        %v652 = vunpack.c.l.b16 %v291
        %v653 = vunpack.c.h.b16 %v291
        %v654 = vunpack.c.l.b16 %v292
        %v655 = vunpack.c.h.b16 %v292
        %v656 = vunpack.c.l.b16 %v293
        %v657 = vunpack.c.h.b16 %v293
        %v658 = vunpack.c.l.b16 %v294
        %v659 = vunpack.c.h.b16 %v294
        %v660 = vunpack.c.l.b16 %v295
        %v661 = vunpack.c.h.b16 %v295
        %v662 = vunpack.c.l.b16 %v296
        %v663 = vunpack.c.h.b16 %v296
        %v664 = vunpack.c.l.b16 %v297
        %v665 = vunpack.c.h.b16 %v297
        %v666 = vunpack.c.l.b16 %v298
        %v667 = vunpack.c.h.b16 %v298
        %v668 = vunpack.c.l.b16 %v299
        %v669 = vunpack.c.h.b16 %v299
        %v670 = vunpack.c.l.b16 %v300
        %v671 = vunpack.c.h.b16 %v300
        %v672 = vunpack.c.l.b16 %v301
        %v673 = vunpack.c.h.b16 %v301
        %v674 = vunpack.c.l.b16 %v302
        %v675 = vunpack.c.h.b16 %v302
        %v676 = vunpack.c.l.b16 %v303
        %v677 = vunpack.c.h.b16 %v303
        %v678 = vunpack.c.l.b16 %v304
        %v679 = vunpack.c.h.b16 %v304
        %v680 = vunpack.c.l.b16 %v305
        %v681 = vunpack.c.h.b16 %v305
        %v682 = vunpack.c.l.b16 %v306
        %v683 = vunpack.c.h.b16 %v306
        %v684 = vunpack.c.l.b16 %v307
        %v685 = vunpack.c.h.b16 %v307
        %v686 = vunpack.c.l.b16 %v308
        %v687 = vunpack.c.h.b16 %v308
        %v688 = vunpack.c.l.b16 %v309
        %v689 = vunpack.c.h.b16 %v309
        %v690 = vunpack.c.l.b16 %v310
        %v691 = vunpack.c.h.b16 %v310
        %v692 = vunpack.c.l.b16 %v311
        %v693 = vunpack.c.h.b16 %v311
        %v694 = vunpack.c.l.b16 %v312
        %v695 = vunpack.c.h.b16 %v312
        %v696 = vunpack.c.l.b16 %v313
        %v697 = vunpack.c.h.b16 %v313
        %v698 = vunpack.c.l.b16 %v314
        %v699 = vunpack.c.h.b16 %v314
        %v700 = vunpack.c.l.b16 %v315
        %v701 = vunpack.c.h.b16 %v315
        %v702 = vunpack.c.l.b16 %v316
        %v703 = vunpack.c.h.b16 %v316
        %v704 = vunpack.c.l.b16 %v317
        %v705 = vunpack.c.h.b16 %v317
        %v706 = vunpack.c.l.b16 %v318
        %v707 = vunpack.c.h.b16 %v318
        %v708 = vunpack.c.l.b16 %v319
        %v709 = vunpack.c.h.b16 %v319
        %v710 = vunpack.c.l.b16 %v320
        %v711 = vunpack.c.h.b16 %v320
        %v712 = vunpack.c.l.b16 %v321
        %v713 = vunpack.c.h.b16 %v321
        %v714 = vunpack.c.l.b16 %v322
        %v715 = vunpack.c.h.b16 %v322
        %v716 = vunpack.c.l.b16 %v323
        %v717 = vunpack.c.h.b16 %v323
        %v718 = vunpack.c.l.b16 %v324
        %v719 = vunpack.c.h.b16 %v324
        %v720 = vunpack.c.l.b16 %v325
        %v721 = vunpack.c.h.b16 %v325
        %v722 = vunpack.c.l.b16 %v326
        %v723 = vunpack.c.h.b16 %v326
        %v724 = vunpack.c.l.b16 %v327
        %v725 = vunpack.c.h.b16 %v327
        %v726 = vunpack.c.l.b16 %v328
        %v727 = vunpack.c.h.b16 %v328
        %v728 = vunpack.c.l.b16 %v329
        %v729 = vunpack.c.h.b16 %v329
        %v730 = vunpack.c.l.b16 %v330
        %v731 = vunpack.c.h.b16 %v330
        %v732 = vunpack.c.l.b16 %v331
        %v733 = vunpack.c.h.b16 %v331
        %v734 = vunpack.c.l.b16 %v332
        %v735 = vunpack.c.h.b16 %v332
        %v736 = vunpack.c.l.b16 %v333
        %v737 = vunpack.c.h.b16 %v333
        %v738 = vunpack.c.l.b16 %v334
        %v739 = vunpack.c.h.b16 %v334
        %v740 = vunpack.c.l.b16 %v335
        %v741 = vunpack.c.h.b16 %v335
        %v742 = vunpack.c.l.b16 %v336
        %v743 = vunpack.c.h.b16 %v336
        %v744 = vunpack.c.l.b16 %v337
        %v745 = vunpack.c.h.b16 %v337
        %v746 = vunpack.c.l.b16 %v338
        %v747 = vunpack.c.h.b16 %v338
        %v748 = vunpack.c.l.b16 %v339
        %v749 = vunpack.c.h.b16 %v339
        %v750 = vunpack.c.l.b16 %v340
        %v751 = vunpack.c.h.b16 %v340
        %v752 = vunpack.c.l.b16 %v341
        %v753 = vunpack.c.h.b16 %v341
        %v754 = vpack.c.b16 %v500, %v498
        %v755 = vpack.c.b16 %v501, %v499
        %v756 = vpack.c.b16 %v504, %v502
        %v757 = vpack.c.b16 %v505, %v503
        %v758 = vpack.c.b16 %v508, %v506
        %v759 = vpack.c.b16 %v509, %v507
        %v760 = vpack.c.b16 %v512, %v510
        %v761 = vpack.c.b16 %v513, %v511
        %v762 = vpack.c.b16 %v516, %v514
        %v763 = vpack.c.b16 %v517, %v515
        %v764 = vpack.c.b16 %v520, %v518
        %v765 = vpack.c.b16 %v521, %v519
        %v766 = vpack.c.b16 %v524, %v522
        %v767 = vpack.c.b16 %v525, %v523
        %v768 = vpack.c.b16 %v528, %v526
        %v769 = vpack.c.b16 %v529, %v527
        %v770 = vpack.c.b16 %v532, %v530
        %v771 = vpack.c.b16 %v533, %v531
        %v772 = vpack.c.b16 %v536, %v534
        %v773 = vpack.c.b16 %v537, %v535
        %v774 = vpack.c.b16 %v540, %v538
        %v775 = vpack.c.b16 %v541, %v539
        %v776 = vpack.c.b16 %v544, %v542
        %v777 = vpack.c.b16 %v545, %v543
        %v778 = vpack.c.b16 %v548, %v546
        %v779 = vpack.c.b16 %v549, %v547
        %v780 = vpack.c.b16 %v552, %v550
        %v781 = vpack.c.b16 %v553, %v551
        %v782 = vpack.c.b16 %v556, %v554
        %v783 = vpack.c.b16 %v557, %v555
        %v784 = vpack.c.b16 %v560, %v558
        %v785 = vpack.c.b16 %v561, %v559
        %v786 = vpack.c.b16 %v564, %v562
        %v787 = vpack.c.b16 %v565, %v563
        %v788 = vpack.c.b16 %v568, %v566
        %v789 = vpack.c.b16 %v569, %v567
        %v790 = vpack.c.b16 %v572, %v570
        %v791 = vpack.c.b16 %v573, %v571
        %v792 = vpack.c.b16 %v576, %v574
        %v793 = vpack.c.b16 %v577, %v575
        %v794 = vpack.c.b16 %v580, %v578
        %v795 = vpack.c.b16 %v581, %v579
        %v796 = vpack.c.b16 %v584, %v582
        %v797 = vpack.c.b16 %v585, %v583
        %v798 = vpack.c.b16 %v588, %v586
        %v799 = vpack.c.b16 %v589, %v587
        %v800 = vpack.c.b16 %v592, %v590
        %v801 = vpack.c.b16 %v593, %v591
        %v802 = vpack.c.b16 %v596, %v594
        %v803 = vpack.c.b16 %v597, %v595
        %v804 = vpack.c.b16 %v600, %v598
        %v805 = vpack.c.b16 %v601, %v599
        %v806 = vpack.c.b16 %v604, %v602
        %v807 = vpack.c.b16 %v605, %v603
        %v808 = vpack.c.b16 %v608, %v606
        %v809 = vpack.c.b16 %v609, %v607
        %v810 = vpack.c.b16 %v612, %v610
        %v811 = vpack.c.b16 %v613, %v611
        %v812 = vpack.c.b16 %v616, %v614
        %v813 = vpack.c.b16 %v617, %v615
        %v814 = vpack.c.b16 %v620, %v618
        %v815 = vpack.c.b16 %v621, %v619
        %v816 = vpack.c.b16 %v624, %v622
        %v817 = vpack.c.b16 %v625, %v623
        %v818 = vpack.c.b16 %v628, %v626
        %v819 = vpack.c.b16 %v629, %v627
        %v820 = vpack.c.b16 %v632, %v630
        %v821 = vpack.c.b16 %v633, %v631
        %v822 = vpack.c.b16 %v636, %v634
        %v823 = vpack.c.b16 %v637, %v635
        %v824 = vpack.c.b16 %v640, %v638
        %v825 = vpack.c.b16 %v641, %v639
        %v826 = vpack.c.b16 %v644, %v642
        %v827 = vpack.c.b16 %v645, %v643
        %v828 = vpack.c.b16 %v648, %v646
        %v829 = vpack.c.b16 %v649, %v647
        %v830 = vpack.c.b16 %v652, %v650
        %v831 = vpack.c.b16 %v653, %v651
        %v832 = vpack.c.b16 %v656, %v654
        %v833 = vpack.c.b16 %v657, %v655
        %v834 = vpack.c.b16 %v660, %v658
        %v835 = vpack.c.b16 %v661, %v659
        %v836 = vpack.c.b16 %v664, %v662
        %v837 = vpack.c.b16 %v665, %v663
        %v838 = vpack.c.b16 %v668, %v666
        %v839 = vpack.c.b16 %v669, %v667
        %v840 = vpack.c.b16 %v672, %v670
        %v841 = vpack.c.b16 %v673, %v671
        %v842 = vpack.c.b16 %v676, %v674
        %v843 = vpack.c.b16 %v677, %v675
        %v844 = vpack.c.b16 %v680, %v678
        %v845 = vpack.c.b16 %v681, %v679
        %v846 = vpack.c.b16 %v684, %v682
        %v847 = vpack.c.b16 %v685, %v683
        %v848 = vpack.c.b16 %v688, %v686
        %v849 = vpack.c.b16 %v689, %v687
        %v850 = vpack.c.b16 %v692, %v690
        %v851 = vpack.c.b16 %v693, %v691
        %v852 = vpack.c.b16 %v696, %v694
        %v853 = vpack.c.b16 %v697, %v695
        %v854 = vpack.c.b16 %v700, %v698
        %v855 = vpack.c.b16 %v701, %v699
        %v856 = vpack.c.b16 %v704, %v702
        %v857 = vpack.c.b16 %v705, %v703
        %v858 = vpack.c.b16 %v708, %v706
        %v859 = vpack.c.b16 %v709, %v707
        %v860 = vpack.c.b16 %v712, %v710
        %v861 = vpack.c.b16 %v713, %v711
        %v862 = vpack.c.b16 %v716, %v714
        %v863 = vpack.c.b16 %v717, %v715
        %v864 = vpack.c.b16 %v720, %v718
        %v865 = vpack.c.b16 %v721, %v719
        %v866 = vpack.c.b16 %v724, %v722
        %v867 = vpack.c.b16 %v725, %v723
        %v868 = vpack.c.b16 %v728, %v726
        %v869 = vpack.c.b16 %v729, %v727
        %v870 = vpack.c.b16 %v732, %v730
        %v871 = vpack.c.b16 %v733, %v731
        %v872 = vpack.c.b16 %v736, %v734
        %v873 = vpack.c.b16 %v737, %v735
        %v874 = vpack.c.b16 %v740, %v738
        %v875 = vpack.c.b16 %v741, %v739
        %v876 = vpack.c.b16 %v744, %v742
        %v877 = vpack.c.b16 %v745, %v743
        %v878 = vpack.c.b16 %v748, %v746
        %v879 = vpack.c.b16 %v749, %v747
        %v880 = vpack.c.b16 %v752, %v750
        %v881 = vpack.c.b16 %v753, %v751
        %1010 = vmatpush.bf16.msra.mxu0 %v768
        %1011 = vmatpush.bf16.msra.mxu0 %v766
        %1012 = vmatpush.bf16.msra.mxu0 %v764
        %1013 = vmatpush.bf16.msra.mxu0 %v762
        %1014 = vmatpush.bf16.msra.mxu0 %v760
        %1015 = vmatpush.bf16.msra.mxu0 %v758
        %1016 = vmatpush.bf16.msra.mxu0 %v756
        %1017 = vmatpush.bf16.msra.mxu0 %v754
        %1018 = vmatmul.bf16.gmra.mxu0 %v354
        %v1019 = vpop.f32.mrf.mxu0
        %v1020 = vadd.f32 0.0, %v1019
        %v1021 = vpop.f32.mrf.mxu0
        %1022 = vdwg.mxu0
        %1023 = vmatpush.bf16.msra.mxu0 %v784
        %1024 = vmatpush.bf16.msra.mxu0 %v782
        %1025 = vmatpush.bf16.msra.mxu0 %v780
        %1026 = vmatpush.bf16.msra.mxu0 %v778
        %1027 = vmatpush.bf16.msra.mxu0 %v776
        %1028 = vmatpush.bf16.msra.mxu0 %v774
        %1029 = vmatpush.bf16.msra.mxu0 %v772
        %1030 = vmatpush.bf16.msra.mxu0 %v770
        %1031 = vmatmul.bf16.gmra.mxu0 %v355
        %v1032 = vpop.f32.mrf.mxu0
        %v1033 = vadd.f32 %v1020, %v1032
        %v1034 = vpop.f32.mrf.mxu0
        %1035 = vdwg.mxu0
        %1036 = vmatpush.bf16.msra.mxu0 %v800
        %1037 = vmatpush.bf16.msra.mxu0 %v798
        %1038 = vmatpush.bf16.msra.mxu0 %v796
        %1039 = vmatpush.bf16.msra.mxu0 %v794
        %1040 = vmatpush.bf16.msra.mxu0 %v792
        %1041 = vmatpush.bf16.msra.mxu0 %v790
        %1042 = vmatpush.bf16.msra.mxu0 %v788
        %1043 = vmatpush.bf16.msra.mxu0 %v786
        %1044 = vmatmul.bf16.gmra.mxu0 %v356
        %v1045 = vpop.f32.mrf.mxu0
        %v1046 = vadd.f32 %v1033, %v1045
        %v1047 = vpop.f32.mrf.mxu0
        %1048 = vdwg.mxu0
        %1049 = vmatpush.bf16.msra.mxu0 %v816
        %1050 = vmatpush.bf16.msra.mxu0 %v814
        %1051 = vmatpush.bf16.msra.mxu0 %v812
        %1052 = vmatpush.bf16.msra.mxu0 %v810
        %1053 = vmatpush.bf16.msra.mxu0 %v808
        %1054 = vmatpush.bf16.msra.mxu0 %v806
        %1055 = vmatpush.bf16.msra.mxu0 %v804
        %1056 = vmatpush.bf16.msra.mxu0 %v802
        %1057 = vmatmul.bf16.gmra.mxu0 %v357
        %v1058 = vpop.f32.mrf.mxu0
        %v1059 = vadd.f32 %v1046, %v1058
        %v1060 = vpop.f32.mrf.mxu0
        %1061 = vdwg.mxu0
        %1062 = vmatpush.bf16.msra.mxu0 %v832
        %1063 = vmatpush.bf16.msra.mxu0 %v830
        %1064 = vmatpush.bf16.msra.mxu0 %v828
        %1065 = vmatpush.bf16.msra.mxu0 %v826
        %1066 = vmatpush.bf16.msra.mxu0 %v824
        %1067 = vmatpush.bf16.msra.mxu0 %v822
        %1068 = vmatpush.bf16.msra.mxu0 %v820
        %1069 = vmatpush.bf16.msra.mxu0 %v818
        %1070 = vmatmul.bf16.gmra.mxu0 %v358
        %v1071 = vpop.f32.mrf.mxu0
        %v1072 = vadd.f32 %v1059, %v1071
        %v1073 = vpop.f32.mrf.mxu0
        %1074 = vdwg.mxu0
        %1075 = vmatpush.bf16.msra.mxu0 %v848
        %1076 = vmatpush.bf16.msra.mxu0 %v846
        %1077 = vmatpush.bf16.msra.mxu0 %v844
        %1078 = vmatpush.bf16.msra.mxu0 %v842
        %1079 = vmatpush.bf16.msra.mxu0 %v840
        %1080 = vmatpush.bf16.msra.mxu0 %v838
        %1081 = vmatpush.bf16.msra.mxu0 %v836
        %1082 = vmatpush.bf16.msra.mxu0 %v834
        %1083 = vmatmul.bf16.gmra.mxu0 %v359
        %v1084 = vpop.f32.mrf.mxu0
        %v1085 = vadd.f32 %v1072, %v1084
        %v1086 = vpop.f32.mrf.mxu0
        %1087 = vdwg.mxu0
        %1088 = vmatpush.bf16.msra.mxu0 %v864
        %1089 = vmatpush.bf16.msra.mxu0 %v862
        %1090 = vmatpush.bf16.msra.mxu0 %v860
        %1091 = vmatpush.bf16.msra.mxu0 %v858
        %1092 = vmatpush.bf16.msra.mxu0 %v856
        %1093 = vmatpush.bf16.msra.mxu0 %v854
        %1094 = vmatpush.bf16.msra.mxu0 %v852
        %1095 = vmatpush.bf16.msra.mxu0 %v850
        %1096 = vmatmul.bf16.gmra.mxu0 %v360
        %v1097 = vpop.f32.mrf.mxu0
        %v1098 = vadd.f32 %v1085, %v1097
        %v1099 = vpop.f32.mrf.mxu0
        %1100 = vdwg.mxu0
        %1101 = vmatpush.bf16.msra.mxu0 %v880
        %1102 = vmatpush.bf16.msra.mxu0 %v878
        %1103 = vmatpush.bf16.msra.mxu0 %v876
        %1104 = vmatpush.bf16.msra.mxu0 %v874
        %1105 = vmatpush.bf16.msra.mxu0 %v872
        %1106 = vmatpush.bf16.msra.mxu0 %v870
        %1107 = vmatpush.bf16.msra.mxu0 %v868
        %1108 = vmatpush.bf16.msra.mxu0 %v866
        %1109 = vmatmul.bf16.gmra.mxu0 %v361
        %v1110 = vpop.f32.mrf.mxu0
        %v1111 = vadd.f32 %v1098, %v1110
        %v1112 = vpop.f32.mrf.mxu0
        %1113 = vdwg.mxu0
        %1114 = vmatpush.bf16.msra.mxu0 %v769
        %1115 = vmatpush.bf16.msra.mxu0 %v767
        %1116 = vmatpush.bf16.msra.mxu0 %v765
        %1117 = vmatpush.bf16.msra.mxu0 %v763
        %1118 = vmatpush.bf16.msra.mxu0 %v761
        %1119 = vmatpush.bf16.msra.mxu0 %v759
        %1120 = vmatpush.bf16.msra.mxu0 %v757
        %1121 = vmatpush.bf16.msra.mxu0 %v755
        %1122 = vmatmul.bf16.gmra.mxu0 %v354
        %v1123 = vpop.f32.mrf.mxu0
        %v1124 = vadd.f32 0.0, %v1123
        %v1125 = vpop.f32.mrf.mxu0
        %1126 = vdwg.mxu0
        %1127 = vmatpush.bf16.msra.mxu0 %v785
        %1128 = vmatpush.bf16.msra.mxu0 %v783
        %1129 = vmatpush.bf16.msra.mxu0 %v781
        %1130 = vmatpush.bf16.msra.mxu0 %v779
        %1131 = vmatpush.bf16.msra.mxu0 %v777
        %1132 = vmatpush.bf16.msra.mxu0 %v775
        %1133 = vmatpush.bf16.msra.mxu0 %v773
        %1134 = vmatpush.bf16.msra.mxu0 %v771
        %1135 = vmatmul.bf16.gmra.mxu0 %v355
        %v1136 = vpop.f32.mrf.mxu0
        %v1137 = vadd.f32 %v1124, %v1136
        %v1138 = vpop.f32.mrf.mxu0
        %1139 = vdwg.mxu0
        %1140 = vmatpush.bf16.msra.mxu0 %v801
        %1141 = vmatpush.bf16.msra.mxu0 %v799
        %1142 = vmatpush.bf16.msra.mxu0 %v797
        %1143 = vmatpush.bf16.msra.mxu0 %v795
        %1144 = vmatpush.bf16.msra.mxu0 %v793
        %1145 = vmatpush.bf16.msra.mxu0 %v791
        %1146 = vmatpush.bf16.msra.mxu0 %v789
        %1147 = vmatpush.bf16.msra.mxu0 %v787
        %1148 = vmatmul.bf16.gmra.mxu0 %v356
        %v1149 = vpop.f32.mrf.mxu0
        %v1150 = vadd.f32 %v1137, %v1149
        %v1151 = vpop.f32.mrf.mxu0
        %1152 = vdwg.mxu0
        %1153 = vmatpush.bf16.msra.mxu0 %v817
        %1154 = vmatpush.bf16.msra.mxu0 %v815
        %1155 = vmatpush.bf16.msra.mxu0 %v813
        %1156 = vmatpush.bf16.msra.mxu0 %v811
        %1157 = vmatpush.bf16.msra.mxu0 %v809
        %1158 = vmatpush.bf16.msra.mxu0 %v807
        %1159 = vmatpush.bf16.msra.mxu0 %v805
        %1160 = vmatpush.bf16.msra.mxu0 %v803
        %1161 = vmatmul.bf16.gmra.mxu0 %v357
        %v1162 = vpop.f32.mrf.mxu0
        %v1163 = vadd.f32 %v1150, %v1162
        %v1164 = vpop.f32.mrf.mxu0
        %1165 = vdwg.mxu0
        %1166 = vmatpush.bf16.msra.mxu0 %v833
        %1167 = vmatpush.bf16.msra.mxu0 %v831
        %1168 = vmatpush.bf16.msra.mxu0 %v829
        %1169 = vmatpush.bf16.msra.mxu0 %v827
        %1170 = vmatpush.bf16.msra.mxu0 %v825
        %1171 = vmatpush.bf16.msra.mxu0 %v823
        %1172 = vmatpush.bf16.msra.mxu0 %v821
        %1173 = vmatpush.bf16.msra.mxu0 %v819
        %1174 = vmatmul.bf16.gmra.mxu0 %v358
        %v1175 = vpop.f32.mrf.mxu0
        %v1176 = vadd.f32 %v1163, %v1175
        %v1177 = vpop.f32.mrf.mxu0
        %1178 = vdwg.mxu0
        %1179 = vmatpush.bf16.msra.mxu0 %v849
        %1180 = vmatpush.bf16.msra.mxu0 %v847
        %1181 = vmatpush.bf16.msra.mxu0 %v845
        %1182 = vmatpush.bf16.msra.mxu0 %v843
        %1183 = vmatpush.bf16.msra.mxu0 %v841
        %1184 = vmatpush.bf16.msra.mxu0 %v839
        %1185 = vmatpush.bf16.msra.mxu0 %v837
        %1186 = vmatpush.bf16.msra.mxu0 %v835
        %1187 = vmatmul.bf16.gmra.mxu0 %v359
        %v1188 = vpop.f32.mrf.mxu0
        %v1189 = vadd.f32 %v1176, %v1188
        %v1190 = vpop.f32.mrf.mxu0
        %1191 = vdwg.mxu0
        %1192 = vmatpush.bf16.msra.mxu0 %v865
        %1193 = vmatpush.bf16.msra.mxu0 %v863
        %1194 = vmatpush.bf16.msra.mxu0 %v861
        %1195 = vmatpush.bf16.msra.mxu0 %v859
        %1196 = vmatpush.bf16.msra.mxu0 %v857
        %1197 = vmatpush.bf16.msra.mxu0 %v855
        %1198 = vmatpush.bf16.msra.mxu0 %v853
        %1199 = vmatpush.bf16.msra.mxu0 %v851
        %1200 = vmatmul.bf16.gmra.mxu0 %v360
        %v1201 = vpop.f32.mrf.mxu0
        %v1202 = vadd.f32 %v1189, %v1201
        %v1203 = vpop.f32.mrf.mxu0
        %1204 = vdwg.mxu0
        %1205 = vmatpush.bf16.msra.mxu0 %v881
        %1206 = vmatpush.bf16.msra.mxu0 %v879
        %1207 = vmatpush.bf16.msra.mxu0 %v877
        %1208 = vmatpush.bf16.msra.mxu0 %v875
        %1209 = vmatpush.bf16.msra.mxu0 %v873
        %1210 = vmatpush.bf16.msra.mxu0 %v871
        %1211 = vmatpush.bf16.msra.mxu0 %v869
        %1212 = vmatpush.bf16.msra.mxu0 %v867
        %1213 = vmatmul.bf16.gmra.mxu0 %v361
        %v1214 = vpop.f32.mrf.mxu0
        %v1215 = vadd.f32 %v1202, %v1214
        %v1216 = vpop.f32.mrf.mxu0
        %1217 = vdwg.mxu0
        %1218 = vst [vmem:[%s208] sm:$0xff] %v1111
        %1219 = vst [vmem:[%s208 + $0x8] sm:$0xff] %v1215
        %s1220 = smul.u32 2, %s21
        %p1221 = scmp.lt.s32.totalorder %s20, 0
        %s1222 = scalar_select %p1221, %s20, 0
        %p1223 = scmp.lt.s32.totalorder %s1220, 35
        %s1224 = scalar_select %p1223, %s1220, 35
        %s1225 = smul.addr %s1222, 36
        %s1226 = sadd.s32 %s1224, %s1225
        %s1227 = smul.addr %s1226, 8
        %s1228 = scalar_lea.vmem %s2, %s1227
        // Predicated region
        $region33: #{conv_decoder_forward.7} parent=27 // pred_check
          %p1229 = pneg %p100
        $region34: #{conv_decoder_forward.7} parent=27 // pred_check_branch
          %1231 = sbr.rel (%p1229) target = $region36
        $region35: #{conv_decoder_forward.7} parent=27 // pred_region
          %s1232 = smul.u32 2, %s21
        $region36: #{conv_decoder_forward.7} parent=27 // pred_fallthru
          _
      $region28: #{conv_decoder_forward.7} parent=5 // pred_fallthru
        _
      %p1233 = scmp.le.s32.totalorder 2, %s11
      // Predicated region
      $region37: #{conv_decoder_forward.7} parent=5 // pred_check
        %p1234 = pneg %p1233
      $region38: #{conv_decoder_forward.7} parent=5 // pred_check_branch
        %1236 = sbr.rel (%p1234) target = $region40
      $region39: #{conv_decoder_forward.7} parent=5 // pred_region
        %s1237 = ssub.s32 %s11, 2
        // Predicated region
        $region41: #{conv_decoder_forward.7} parent=39 // pred_check
          %p1238 = pneg %p106
        $region42: #{conv_decoder_forward.7} parent=39 // pred_check_branch
          %1240 = sbr.rel (%p1238) target = $region44
        $region43: #{conv_decoder_forward.7} parent=39 // pred_region
          %s1241 = smul.u32 2, %s23
          %p1242 = scmp.lt.s32.totalorder %s22, 0
          %s1243 = scalar_select %p1242, %s22, 0
          %p1244 = scmp.lt.s32.totalorder %s1241, 35
          %s1245 = scalar_select %p1244, %s1241, 35
          %s1246 = smul.addr %s1243, 36
          %s1247 = sadd.s32 %s1245, %s1246
          %s1248 = smul.addr %s1247, 8
          %s1249 = scalar_lea.vmem %s2, %s1248
        $region44: #{conv_decoder_forward.7} parent=39 // pred_fallthru
          _
      $region40: #{conv_decoder_forward.7} parent=5 // pred_fallthru
        _
    $region6: #{conv_decoder_forward.7} parent=1 // loop_footer
      %s15 = sadd.s32 1, %s11
    $region7: #{conv_decoder_forward.7} parent=1 // loop_footer_branch
      %10 = sbr.rel target = $region3
    $region8: #{conv_decoder_forward.7} parent=1 // loop_exit
      _
    %1250 = vsyncpa [#allocation3], 1
    %s1251 = scalar_lea.sflag [#allocation3], 1
    %1252 = vsyncpa %s1251, 1

// kernel: conv_decoder_forward.8
$region0: #{conv_decoder_forward.8}
  #allocation0 [shape = 'u32[]', space=smem, size = 0x4, offset = 0x4, fixed_abs, tag = 'smem constant byte address 0x4 - core index']
  #allocation1 [shape = 'u32[72,128]{1,0:T(1,128)}', space=vmem, size = 0x9000, scoped, tag = 'internal scratch']
  %s0 = inlined_call_operand.vmem [shape: f32[50,512], index: 0, kind: input, shape index: {}]
  %s1 = inlined_call_operand.vmem [shape: f32[1,512], index: 1, kind: input, shape index: {}]
  %s2 = inlined_call_operand.vmem [shape: bf16[50,512], index: 2, kind: output, shape index: {}]
  %s3 = sld [smem:[#allocation0]]
  $region18: #{conv_decoder_forward.8} parent=0
    _
  %s5 = ssub.s32 1, %s3
  %s6 = scalar_select 0, %s5, %s3
  // Predicated region
  $region2: #{conv_decoder_forward.8} parent=0 // pred_check
    _
  $region3: #{conv_decoder_forward.8} parent=0 // pred_check_branch
    %8 = sbr.rel (0) target = $region5
  $region4: #{conv_decoder_forward.8} parent=0 // pred_region
    _
  $region5: #{conv_decoder_forward.8} parent=0 // pred_fallthru
    _
  // Predicated region
  $region6: #{conv_decoder_forward.8} parent=0 // pred_check
    _
  $region7: #{conv_decoder_forward.8} parent=0 // pred_check_branch
    %10 = sbr.rel (0) target = $region9
  $region8: #{conv_decoder_forward.8} parent=0 // pred_region
    _
  $region9: #{conv_decoder_forward.8} parent=0 // pred_fallthru
    _
  %v11 = vld [vmem:[%s0] sm:$0xff]
  %v12 = vld [vmem:[%s0 + $0x8] sm:$0xff]
  %v13 = vld [vmem:[%s0 + $0x10] sm:$0xff]
  %v14 = vld [vmem:[%s0 + $0x18] sm:$0xff]
  %v15 = vld [vmem:[%s0 + $0x20] sm:$0xff]
  %v16 = vld [vmem:[%s0 + $0x28] sm:$0xff]
  %v17 = vld [vmem:[%s0 + $0x30] sm:$0xff]
  %v18 = vld [vmem:[%s0 + $0x38] sm:$0xff]
  %v19 = vld [vmem:[%s0 + $0x40] sm:$0xff]
  %v20 = vld [vmem:[%s0 + $0x48] sm:$0xff]
  %v21 = vld [vmem:[%s0 + $0x50] sm:$0xff]
  %v22 = vld [vmem:[%s0 + $0x58] sm:$0xff]
  %v23 = vld [vmem:[%s0 + $0x60] sm:$0xff]
  %v24 = vld [vmem:[%s0 + $0x68] sm:$0xff]
  %v25 = vld [vmem:[%s0 + $0x70] sm:$0xff]
  %v26 = vld [vmem:[%s0 + $0x78] sm:$0xff]
  %v27 = vld [vmem:[%s0 + $0x80] sm:$0xff]
  %v28 = vld [vmem:[%s0 + $0x88] sm:$0xff]
  %v29 = vld [vmem:[%s0 + $0x90] sm:$0xff]
  %v30 = vld [vmem:[%s0 + $0x98] sm:$0xff]
  %v31 = vld [vmem:[%s0 + $0xa0] sm:$0xff]
  %v32 = vld [vmem:[%s0 + $0xa8] sm:$0xff]
  %v33 = vld [vmem:[%s0 + $0xb0] sm:$0xff]
  %v34 = vld [vmem:[%s0 + $0xb8] sm:$0xff]
  %v35 = vld [vmem:[%s0 + $0xc0] sm:$0x3]
  %v36 = vld [vmem:[%s0 + $0xc8] sm:$0x3]
  %v37 = vld [vmem:[%s0 + $0xd0] sm:$0x3]
  %v38 = vld [vmem:[%s0 + $0xd8] sm:$0x3]
  %v39 = vld [vmem:[%s1] sm:$0xf]
  %v41 = vperm.slane %v39, 0
  %v42 = vperm.slane %v39, 1
  %v43 = vperm.slane %v39, 2
  %v44 = vperm.slane %v39, 3
  %v49 = vadd.f32 %v11, %v41
  %v50 = vadd.f32 %v12, %v42
  %v51 = vadd.f32 %v13, %v43
  %v52 = vadd.f32 %v14, %v44
  %v53 = vadd.f32 %v15, %v41
  %v54 = vadd.f32 %v16, %v42
  %v55 = vadd.f32 %v17, %v43
  %v56 = vadd.f32 %v18, %v44
  %v57 = vadd.f32 %v19, %v41
  %v58 = vadd.f32 %v20, %v42
  %v59 = vadd.f32 %v21, %v43
  %v60 = vadd.f32 %v22, %v44
  %v61 = vadd.f32 %v23, %v41
  %v62 = vadd.f32 %v24, %v42
  %v63 = vadd.f32 %v25, %v43
  %v64 = vadd.f32 %v26, %v44
  %v65 = vadd.f32 %v27, %v41
  %v66 = vadd.f32 %v28, %v42
  %v67 = vadd.f32 %v29, %v43
  %v68 = vadd.f32 %v30, %v44
  %v69 = vadd.f32 %v31, %v41
  %v70 = vadd.f32 %v32, %v42
  %v71 = vadd.f32 %v33, %v43
  %v72 = vadd.f32 %v34, %v44
  %v73 = vadd.f32 %v35, %v41
  %v74 = vadd.f32 %v36, %v42
  %v75 = vadd.f32 %v37, %v43
  %v76 = vadd.f32 %v38, %v44
  %v77 = vmax.f32 %v49, 0.0
  %v78 = vmax.f32 %v50, 0.0
  %v79 = vmax.f32 %v51, 0.0
  %v80 = vmax.f32 %v52, 0.0
  %v81 = vmax.f32 %v53, 0.0
  %v82 = vmax.f32 %v54, 0.0
  %v83 = vmax.f32 %v55, 0.0
  %v84 = vmax.f32 %v56, 0.0
  %v85 = vmax.f32 %v57, 0.0
  %v86 = vmax.f32 %v58, 0.0
  %v87 = vmax.f32 %v59, 0.0
  %v88 = vmax.f32 %v60, 0.0
  %v89 = vmax.f32 %v61, 0.0
  %v90 = vmax.f32 %v62, 0.0
  %v91 = vmax.f32 %v63, 0.0
  %v92 = vmax.f32 %v64, 0.0
  %v93 = vmax.f32 %v65, 0.0
  %v94 = vmax.f32 %v66, 0.0
  %v95 = vmax.f32 %v67, 0.0
  %v96 = vmax.f32 %v68, 0.0
  %v97 = vmax.f32 %v69, 0.0
  %v98 = vmax.f32 %v70, 0.0
  %v99 = vmax.f32 %v71, 0.0
  %v100 = vmax.f32 %v72, 0.0
  %v101 = vmax.f32 %v73, 0.0
  %v102 = vmax.f32 %v74, 0.0
  %v103 = vmax.f32 %v75, 0.0
  %v104 = vmax.f32 %v76, 0.0
  %v105 = vpack.c.bf16 %v78, %v77
  %v106 = vpack.c.bf16 %v80, %v79
  %v107 = vpack.c.bf16 %v82, %v81
  %v108 = vpack.c.bf16 %v84, %v83
  %v109 = vpack.c.bf16 %v86, %v85
  %v110 = vpack.c.bf16 %v88, %v87
  %v111 = vpack.c.bf16 %v90, %v89
  %v112 = vpack.c.bf16 %v92, %v91
  %v113 = vpack.c.bf16 %v94, %v93
  %v114 = vpack.c.bf16 %v96, %v95
  %v115 = vpack.c.bf16 %v98, %v97
  %v116 = vpack.c.bf16 %v100, %v99
  %v117 = vpack.c.bf16 %v102, %v101
  %v118 = vpack.c.bf16 %v104, %v103
  %119 = vst [vmem:[%s2] sm:$0xff] %v105
  %120 = vst [vmem:[%s2 + $0x8] sm:$0xff] %v106
  %121 = vst [vmem:[%s2 + $0x10] sm:$0xff] %v107
  %122 = vst [vmem:[%s2 + $0x18] sm:$0xff] %v108
  %123 = vst [vmem:[%s2 + $0x20] sm:$0xff] %v109
  %124 = vst [vmem:[%s2 + $0x28] sm:$0xff] %v110
  %125 = vst [vmem:[%s2 + $0x30] sm:$0xff] %v111
  %126 = vst [vmem:[%s2 + $0x38] sm:$0xff] %v112
  %127 = vst [vmem:[%s2 + $0x40] sm:$0xff] %v113
  %128 = vst [vmem:[%s2 + $0x48] sm:$0xff] %v114
  %129 = vst [vmem:[%s2 + $0x50] sm:$0xff] %v115
  %130 = vst [vmem:[%s2 + $0x58] sm:$0xff] %v116
  %131 = vst [vmem:[%s2 + $0x60] sm:$0x11] %v117
  %132 = vst [vmem:[%s2 + $0x68] sm:$0x11] %v118
  // Predicated region
  $region10: #{conv_decoder_forward.8} parent=0 // pred_check
    _
  $region11: #{conv_decoder_forward.8} parent=0 // pred_check_branch
    %134 = sbr.rel (0) target = $region13
  $region12: #{conv_decoder_forward.8} parent=0 // pred_region
    _
  $region13: #{conv_decoder_forward.8} parent=0 // pred_fallthru
    _
  // Predicated region
  $region14: #{conv_decoder_forward.8} parent=0 // pred_check
    _
  $region15: #{conv_decoder_forward.8} parent=0 // pred_check_branch
    %136 = sbr.rel (0) target = $region17
  $region16: #{conv_decoder_forward.8} parent=0 // pred_region
    _
  $region17: #{conv_decoder_forward.8} parent=0 // pred_fallthru
    _

// kernel: conv_decoder_forward.9
$region0: #{conv_decoder_forward.9}
  #allocation0 [shape = 'u32[]', space=smem, size = 0x4, offset = 0x4, fixed_abs, tag = 'smem constant byte address 0x4 - core index']
  #allocation1 [shape = 'u32[72,128]{1,0:T(1,128)}', space=vmem, size = 0x9000, scoped, tag = 'internal scratch']
  %s0 = inlined_call_operand.vmem [shape: bf16[50,512], index: 0, kind: input, shape index: {}]
  %s1 = inlined_call_operand.vmem [shape: bf16[512,2048], index: 1, kind: input, shape index: {}]
  %s2 = inlined_call_operand.vmem [shape: f32[1,2048], index: 2, kind: input, shape index: {}]
  %s3 = inlined_call_operand.vmem [shape: bf16[50,2048], index: 3, kind: output, shape index: {}]
  %s4 = sld [smem:[#allocation0]]
  $region117: #{conv_decoder_forward.9} parent=0
    _
  %s6 = ssub.s32 1, %s4
  %s7 = scalar_select 0, %s6, %s4
  $region1: #{conv_decoder_forward.9} parent=0
    #allocation2 [shape = 'u8[524288]{0}', space=vmem, size = 0x80000, scoped, tag = 'input window, operand 1']
    #allocation3 [shape = 'u8[57344]{0}', space=vmem, size = 0xe000, scoped, tag = 'output window, operand 0']
    loop: start=0, step=1, limit=10
    $region2: #{conv_decoder_forward.9} parent=1 // loop_pre_header
      _
    $region3: #{conv_decoder_forward.9} parent=1 // loop_header
      %s9 = sphi 0, %s13
      %p10 = scmp.ge.s32.totalorder %s9, 10
      %s16 = sphi 0, %s28
      %s17 = sphi 0, %s24
      %s18 = sphi 0, %s16
      %s19 = sphi 0, %s17
      %s20 = sphi 0, %s18
      %s21 = sphi 0, %s19
      %s31 = sphi 0, %s33
      %s34 = sphi 0, %s31
      %s35 = sphi 0, %s34
      %s51 = sphi 0, %s35
      %s57 = sphi 0, %s59
      %s60 = sphi 0, %s57
      %s61 = sphi 0, %s60
      %s77 = sphi 0, %s61
      %s83 = sphi 0, %s85
      %s86 = sphi 0, %s83
      %s87 = sphi 0, %s86
      %s103 = sphi 0, %s87
      %s111 = sphi 0, %s113
      %s114 = sphi 0, %s111
      %s115 = sphi 0, %s114
      %s131 = sphi 0, %s115
    $region4: #{conv_decoder_forward.9} parent=1 // loop_header_branch
      %12 = sbr.rel (%p10) target = $region8
    $region5: #{conv_decoder_forward.9} parent=1 // loop_body
      %s14 = ssub.s32 %s9, 1
      %s15 = ssub.s32 %s9, 2
      %s22 = sadd.s32 1, %s17
      %p23 = scmp.ge.s32.totalorder %s22, 8
      %s24 = scalar_select %p23, 0, %s22
      %s25 = sadd.s32 1, %s16
      %s26 = scalar_select %p23, %s25, %s16
      %p27 = scmp.ge.s32.totalorder %s26, 1
      %s28 = scalar_select %p27, 0, %s26
      %s29 = ssub.s32 %s16, %s28
      %p30 = scmp.eq.s32.totalorder %s29, 0
      %s32 = sadd.s32 %s31, 1
      %s33 = scalar_select %p30, %s31, %s32
      %p36 = pneg %p30
      %p37 = scmp.eq.s32.totalorder %s9, 7
      %p38 = por %p36, %p37
      %p39 = scmp.ne.s32.totalorder %s31, %s34
      %p40 = scmp.eq.s32.totalorder %s9, 0
      %p41 = por %p39, %p40
      %p42 = scmp.ne.s32.totalorder %s31, %s34
      %p43 = scmp.eq.s32.totalorder %s14, 7
      %p44 = por %p42, %p43
      %p45 = scmp.ne.s32.totalorder %s34, %s35
      %p46 = scmp.eq.s32.totalorder %s14, 0
      %p47 = por %p45, %p46
      %p48 = scmp.ne.s32.totalorder %s34, %s35
      %p49 = scmp.eq.s32.totalorder %s15, 7
      %p50 = por %p48, %p49
      %p52 = scmp.ne.s32.totalorder %s35, %s51
      %p53 = scmp.eq.s32.totalorder %s15, 0
      %p54 = por %p52, %p53
      %s55 = ssub.s32 %s17, %s24
      %p56 = scmp.eq.s32.totalorder %s55, 0
      %s58 = sadd.s32 %s57, 1
      %s59 = scalar_select %p56, %s57, %s58
      %p62 = pneg %p56
      %p63 = scmp.eq.s32.totalorder %s9, 7
      %p64 = por %p62, %p63
      %p65 = scmp.ne.s32.totalorder %s57, %s60
      %p66 = scmp.eq.s32.totalorder %s9, 0
      %p67 = por %p65, %p66
      %p68 = scmp.ne.s32.totalorder %s57, %s60
      %p69 = scmp.eq.s32.totalorder %s14, 7
      %p70 = por %p68, %p69
      %p71 = scmp.ne.s32.totalorder %s60, %s61
      %p72 = scmp.eq.s32.totalorder %s14, 0
      %p73 = por %p71, %p72
      %p74 = scmp.ne.s32.totalorder %s60, %s61
      %p75 = scmp.eq.s32.totalorder %s15, 7
      %p76 = por %p74, %p75
      %p78 = scmp.ne.s32.totalorder %s61, %s77
      %p79 = scmp.eq.s32.totalorder %s15, 0
      %p80 = por %p78, %p79
      %s81 = ssub.s32 %s17, %s24
      %p82 = scmp.eq.s32.totalorder %s81, 0
      %s84 = sadd.s32 %s83, 1
      %s85 = scalar_select %p82, %s83, %s84
      %p88 = pneg %p82
      %p89 = scmp.eq.s32.totalorder %s9, 7
      %p90 = por %p88, %p89
      %p91 = scmp.ne.s32.totalorder %s83, %s86
      %p92 = scmp.eq.s32.totalorder %s9, 0
      %p93 = por %p91, %p92
      %p94 = scmp.ne.s32.totalorder %s83, %s86
      %p95 = scmp.eq.s32.totalorder %s14, 7
      %p96 = por %p94, %p95
      %p97 = scmp.ne.s32.totalorder %s86, %s87
      %p98 = scmp.eq.s32.totalorder %s14, 0
      %p99 = por %p97, %p98
      %p100 = scmp.ne.s32.totalorder %s86, %s87
      %p101 = scmp.eq.s32.totalorder %s15, 7
      %p102 = por %p100, %p101
      %p104 = scmp.ne.s32.totalorder %s87, %s103
      %p105 = scmp.eq.s32.totalorder %s15, 0
      %p106 = por %p104, %p105
      %s107 = ssub.s32 %s16, %s28
      %s108 = ssub.s32 %s17, %s24
      %s109 = sor.u32 %s107, %s108
      %p110 = scmp.eq.s32.totalorder %s109, 0
      %s112 = sadd.s32 %s111, 1
      %s113 = scalar_select %p110, %s111, %s112
      %p116 = pneg %p110
      %p117 = scmp.eq.s32.totalorder %s9, 7
      %p118 = por %p116, %p117
      %p119 = scmp.ne.s32.totalorder %s111, %s114
      %p120 = scmp.eq.s32.totalorder %s9, 0
      %p121 = por %p119, %p120
      %p122 = scmp.ne.s32.totalorder %s111, %s114
      %p123 = scmp.eq.s32.totalorder %s14, 7
      %p124 = por %p122, %p123
      %p125 = scmp.ne.s32.totalorder %s114, %s115
      %p126 = scmp.eq.s32.totalorder %s14, 0
      %p127 = por %p125, %p126
      %p128 = scmp.ne.s32.totalorder %s114, %s115
      %p129 = scmp.eq.s32.totalorder %s15, 7
      %p130 = por %p128, %p129
      %p132 = scmp.ne.s32.totalorder %s115, %s131
      %p133 = scmp.eq.s32.totalorder %s15, 0
      %p134 = por %p132, %p133
      %p135 = scmp.le.s32.totalorder 1, %s9
      %p136 = scmp.lt.s32.totalorder %s9, 9
      %p137 = pnand %p135, %p136
      %p138 = pneg %p137
      // Predicated region
      $region9: #{conv_decoder_forward.9} parent=5 // pred_check
        _
      $region10: #{conv_decoder_forward.9} parent=5 // pred_check_branch
        %140 = sbr.rel (%p137) target = $region12
      $region11: #{conv_decoder_forward.9} parent=5 // pred_region
        %s141 = ssub.s32 %s9, 1
        // Predicated region
        $region13: #{conv_decoder_forward.9} parent=11 // pred_check
          %p142 = pneg %p47
        $region14: #{conv_decoder_forward.9} parent=11 // pred_check_branch
          %144 = sbr.rel (%p142) target = $region16
        $region15: #{conv_decoder_forward.9} parent=11 // pred_region
          %s145 = smul.u32 7, %s18
          %p146 = scmp.lt.s32.totalorder %s145, 6
          %s147 = scalar_select %p146, %s145, 6
          %s148 = smul.addr %s147, 4
          %s149 = smul.addr %s148, 4
          %s150 = scalar_lea.vmem %s0, %s149
          %s151 = smul.u32 7, %s18
        $region16: #{conv_decoder_forward.9} parent=11 // pred_fallthru
          _
      $region12: #{conv_decoder_forward.9} parent=5 // pred_fallthru
        _
      %p152 = scmp.lt.s32.totalorder %s9, 8
      // Predicated region
      $region17: #{conv_decoder_forward.9} parent=5 // pred_check
        %p153 = pneg %p152
      $region18: #{conv_decoder_forward.9} parent=5 // pred_check_branch
        %155 = sbr.rel (%p153) target = $region20
      $region19: #{conv_decoder_forward.9} parent=5 // pred_region
        // Predicated region
        $region21: #{conv_decoder_forward.9} parent=19 // pred_check
          %p156 = pneg %p67
        $region22: #{conv_decoder_forward.9} parent=19 // pred_check_branch
          %158 = sbr.rel (%p156) target = $region24
        $region23: #{conv_decoder_forward.9} parent=19 // pred_region
          %s159 = sand.u32 %s57, 1
          %s160 = sand.u32 %s57, 1
          %s161 = smul.addr %s160, 512
          %s162 = scalar_lea.vmem [#allocation2], %s161
          %s163 = smul.u32 2, %s17
          %s164 = smul.addr %s163, 4
          %s165 = scalar_lea.vmem %s1, %s164
          // Predicated region
          $region25: #{conv_decoder_forward.9} parent=23 // pred_check
            _
          $region26: #{conv_decoder_forward.9} parent=23 // pred_check_branch
            %167 = sbr.rel (0) target = $region28
          $region27: #{conv_decoder_forward.9} parent=23 // pred_region
            // Predicated region
            $region29: #{conv_decoder_forward.9} parent=27 // pred_check
              _
            $region30: #{conv_decoder_forward.9} parent=27 // pred_check_branch
              %169 = sbr.rel (0) target = $region32
            $region31: #{conv_decoder_forward.9} parent=27 // pred_region
              // Predicated region
              $region44: #{conv_decoder_forward.9} parent=31 // pred_check
                _
              $region45: #{conv_decoder_forward.9} parent=31 // pred_check_branch
                %311 = sbr.rel (0) target = $region47
              $region46: #{conv_decoder_forward.9} parent=31 // pred_region
                loop: start=0, step=1, limit=1
                $region48: #{conv_decoder_forward.9} parent=46 // loop_pre_header
                  _
                $region49: #{conv_decoder_forward.9} parent=46 // loop_header
                  %s313 = sphi 0, %s317
                  %p314 = scmp.ge.s32.totalorder %s313, 1
                  %s318 = sphi %s165, %s165
                  %s319 = sphi %s162, %s162
                $region50: #{conv_decoder_forward.9} parent=46 // loop_header_branch
                  %316 = sbr.rel (%p314) target = $region54
                $region51: #{conv_decoder_forward.9} parent=46 // loop_body
                  %v320 = vld [vmem:[%s318] sm:$0xff]
                  %321 = vst [vmem:[%s319] sm:$0xff] %v320
                  %v322 = vld [vmem:[%s318 + $0x40] sm:$0xff]
                  %323 = vst [vmem:[%s319 + $0x8] sm:$0xff] %v322
                  %v324 = vld [vmem:[%s318 + $0x80] sm:$0xff]
                  %325 = vst [vmem:[%s319 + $0x10] sm:$0xff] %v324
                  %v326 = vld [vmem:[%s318 + $0xc0] sm:$0xff]
                  %327 = vst [vmem:[%s319 + $0x18] sm:$0xff] %v326
                  %v328 = vld [vmem:[%s318 + $0x100] sm:$0xff]
                  %329 = vst [vmem:[%s319 + $0x20] sm:$0xff] %v328
                  %v330 = vld [vmem:[%s318 + $0x140] sm:$0xff]
                  %331 = vst [vmem:[%s319 + $0x28] sm:$0xff] %v330
                  %v332 = vld [vmem:[%s318 + $0x180] sm:$0xff]
                  %333 = vst [vmem:[%s319 + $0x30] sm:$0xff] %v332
                  %v334 = vld [vmem:[%s318 + $0x1c0] sm:$0xff]
                  %335 = vst [vmem:[%s319 + $0x38] sm:$0xff] %v334
                  %v336 = vld [vmem:[%s318 + $0x200] sm:$0xff]
                  %337 = vst [vmem:[%s319 + $0x40] sm:$0xff] %v336
                  %v338 = vld [vmem:[%s318 + $0x240] sm:$0xff]
                  %339 = vst [vmem:[%s319 + $0x48] sm:$0xff] %v338
                  %v340 = vld [vmem:[%s318 + $0x280] sm:$0xff]
                  %341 = vst [vmem:[%s319 + $0x50] sm:$0xff] %v340
                  %v342 = vld [vmem:[%s318 + $0x2c0] sm:$0xff]
                  %343 = vst [vmem:[%s319 + $0x58] sm:$0xff] %v342
                  %v344 = vld [vmem:[%s318 + $0x300] sm:$0xff]
                  %345 = vst [vmem:[%s319 + $0x60] sm:$0xff] %v344
                  %v346 = vld [vmem:[%s318 + $0x340] sm:$0xff]
                  %347 = vst [vmem:[%s319 + $0x68] sm:$0xff] %v346
                  %v348 = vld [vmem:[%s318 + $0x380] sm:$0xff]
                  %349 = vst [vmem:[%s319 + $0x70] sm:$0xff] %v348
                  %v350 = vld [vmem:[%s318 + $0x3c0] sm:$0xff]
                  %351 = vst [vmem:[%s319 + $0x78] sm:$0xff] %v350
                  %v352 = vld [vmem:[%s318 + $0x400] sm:$0xff]
                  %353 = vst [vmem:[%s319 + $0x80] sm:$0xff] %v352
                  %v354 = vld [vmem:[%s318 + $0x440] sm:$0xff]
                  %355 = vst [vmem:[%s319 + $0x88] sm:$0xff] %v354
                  %v356 = vld [vmem:[%s318 + $0x480] sm:$0xff]
                  %357 = vst [vmem:[%s319 + $0x90] sm:$0xff] %v356
                  %v358 = vld [vmem:[%s318 + $0x4c0] sm:$0xff]
                  %359 = vst [vmem:[%s319 + $0x98] sm:$0xff] %v358
                  %v360 = vld [vmem:[%s318 + $0x500] sm:$0xff]
                  %361 = vst [vmem:[%s319 + $0xa0] sm:$0xff] %v360
                  %v362 = vld [vmem:[%s318 + $0x540] sm:$0xff]
                  %363 = vst [vmem:[%s319 + $0xa8] sm:$0xff] %v362
                  %v364 = vld [vmem:[%s318 + $0x580] sm:$0xff]
                  %365 = vst [vmem:[%s319 + $0xb0] sm:$0xff] %v364
                  %v366 = vld [vmem:[%s318 + $0x5c0] sm:$0xff]
                  %367 = vst [vmem:[%s319 + $0xb8] sm:$0xff] %v366
                  %v368 = vld [vmem:[%s318 + $0x600] sm:$0xff]
                  %369 = vst [vmem:[%s319 + $0xc0] sm:$0xff] %v368
                  %v370 = vld [vmem:[%s318 + $0x640] sm:$0xff]
                  %371 = vst [vmem:[%s319 + $0xc8] sm:$0xff] %v370
                  %v372 = vld [vmem:[%s318 + $0x680] sm:$0xff]
                  %373 = vst [vmem:[%s319 + $0xd0] sm:$0xff] %v372
                  %v374 = vld [vmem:[%s318 + $0x6c0] sm:$0xff]
                  %375 = vst [vmem:[%s319 + $0xd8] sm:$0xff] %v374
                  %v376 = vld [vmem:[%s318 + $0x700] sm:$0xff]
                  %377 = vst [vmem:[%s319 + $0xe0] sm:$0xff] %v376
                  %v378 = vld [vmem:[%s318 + $0x740] sm:$0xff]
                  %379 = vst [vmem:[%s319 + $0xe8] sm:$0xff] %v378
                  %v380 = vld [vmem:[%s318 + $0x780] sm:$0xff]
                  %381 = vst [vmem:[%s319 + $0xf0] sm:$0xff] %v380
                  %v382 = vld [vmem:[%s318 + $0x7c0] sm:$0xff]
                  %383 = vst [vmem:[%s319 + $0xf8] sm:$0xff] %v382
                  %v384 = vld [vmem:[%s318 + $0x800] sm:$0xff]
                  %385 = vst [vmem:[%s319 + $0x100] sm:$0xff] %v384
                  %v386 = vld [vmem:[%s318 + $0x840] sm:$0xff]
                  %387 = vst [vmem:[%s319 + $0x108] sm:$0xff] %v386
                  %v388 = vld [vmem:[%s318 + $0x880] sm:$0xff]
                  %389 = vst [vmem:[%s319 + $0x110] sm:$0xff] %v388
                  %v390 = vld [vmem:[%s318 + $0x8c0] sm:$0xff]
                  %391 = vst [vmem:[%s319 + $0x118] sm:$0xff] %v390
                  %v392 = vld [vmem:[%s318 + $0x900] sm:$0xff]
                  %393 = vst [vmem:[%s319 + $0x120] sm:$0xff] %v392
                  %v394 = vld [vmem:[%s318 + $0x940] sm:$0xff]
                  %395 = vst [vmem:[%s319 + $0x128] sm:$0xff] %v394
                  %v396 = vld [vmem:[%s318 + $0x980] sm:$0xff]
                  %397 = vst [vmem:[%s319 + $0x130] sm:$0xff] %v396
                  %v398 = vld [vmem:[%s318 + $0x9c0] sm:$0xff]
                  %399 = vst [vmem:[%s319 + $0x138] sm:$0xff] %v398
                  %v400 = vld [vmem:[%s318 + $0xa00] sm:$0xff]
                  %401 = vst [vmem:[%s319 + $0x140] sm:$0xff] %v400
                  %v402 = vld [vmem:[%s318 + $0xa40] sm:$0xff]
                  %403 = vst [vmem:[%s319 + $0x148] sm:$0xff] %v402
                  %v404 = vld [vmem:[%s318 + $0xa80] sm:$0xff]
                  %405 = vst [vmem:[%s319 + $0x150] sm:$0xff] %v404
                  %v406 = vld [vmem:[%s318 + $0xac0] sm:$0xff]
                  %407 = vst [vmem:[%s319 + $0x158] sm:$0xff] %v406
                  %v408 = vld [vmem:[%s318 + $0xb00] sm:$0xff]
                  %409 = vst [vmem:[%s319 + $0x160] sm:$0xff] %v408
                  %v410 = vld [vmem:[%s318 + $0xb40] sm:$0xff]
                  %411 = vst [vmem:[%s319 + $0x168] sm:$0xff] %v410
                  %v412 = vld [vmem:[%s318 + $0xb80] sm:$0xff]
                  %413 = vst [vmem:[%s319 + $0x170] sm:$0xff] %v412
                  %v414 = vld [vmem:[%s318 + $0xbc0] sm:$0xff]
                  %415 = vst [vmem:[%s319 + $0x178] sm:$0xff] %v414
                  %v416 = vld [vmem:[%s318 + $0xc00] sm:$0xff]
                  %417 = vst [vmem:[%s319 + $0x180] sm:$0xff] %v416
                  %v418 = vld [vmem:[%s318 + $0xc40] sm:$0xff]
                  %419 = vst [vmem:[%s319 + $0x188] sm:$0xff] %v418
                  %v420 = vld [vmem:[%s318 + $0xc80] sm:$0xff]
                  %421 = vst [vmem:[%s319 + $0x190] sm:$0xff] %v420
                  %v422 = vld [vmem:[%s318 + $0xcc0] sm:$0xff]
                  %423 = vst [vmem:[%s319 + $0x198] sm:$0xff] %v422
                  %v424 = vld [vmem:[%s318 + $0xd00] sm:$0xff]
                  %425 = vst [vmem:[%s319 + $0x1a0] sm:$0xff] %v424
                  %v426 = vld [vmem:[%s318 + $0xd40] sm:$0xff]
                  %427 = vst [vmem:[%s319 + $0x1a8] sm:$0xff] %v426
                  %v428 = vld [vmem:[%s318 + $0xd80] sm:$0xff]
                  %429 = vst [vmem:[%s319 + $0x1b0] sm:$0xff] %v428
                  %v430 = vld [vmem:[%s318 + $0xdc0] sm:$0xff]
                  %431 = vst [vmem:[%s319 + $0x1b8] sm:$0xff] %v430
                  %v432 = vld [vmem:[%s318 + $0xe00] sm:$0xff]
                  %433 = vst [vmem:[%s319 + $0x1c0] sm:$0xff] %v432
                  %v434 = vld [vmem:[%s318 + $0xe40] sm:$0xff]
                  %435 = vst [vmem:[%s319 + $0x1c8] sm:$0xff] %v434
                  %v436 = vld [vmem:[%s318 + $0xe80] sm:$0xff]
                  %437 = vst [vmem:[%s319 + $0x1d0] sm:$0xff] %v436
                  %v438 = vld [vmem:[%s318 + $0xec0] sm:$0xff]
                  %439 = vst [vmem:[%s319 + $0x1d8] sm:$0xff] %v438
                  %v440 = vld [vmem:[%s318 + $0xf00] sm:$0xff]
                  %441 = vst [vmem:[%s319 + $0x1e0] sm:$0xff] %v440
                  %v442 = vld [vmem:[%s318 + $0xf40] sm:$0xff]
                  %443 = vst [vmem:[%s319 + $0x1e8] sm:$0xff] %v442
                  %v444 = vld [vmem:[%s318 + $0xf80] sm:$0xff]
                  %445 = vst [vmem:[%s319 + $0x1f0] sm:$0xff] %v444
                  %v446 = vld [vmem:[%s318 + $0xfc0] sm:$0xff]
                  %447 = vst [vmem:[%s319 + $0x1f8] sm:$0xff] %v446
                $region52: #{conv_decoder_forward.9} parent=46 // loop_footer
                  %s317 = sadd.s32 1, %s313
                $region53: #{conv_decoder_forward.9} parent=46 // loop_footer_branch
                  %312 = sbr.rel target = $region49
                $region54: #{conv_decoder_forward.9} parent=46 // loop_exit
                  _
              $region47: #{conv_decoder_forward.9} parent=31 // pred_fallthru
                _
              // Predicated region
              $region55: #{conv_decoder_forward.9} parent=31 // pred_check
                _
              $region56: #{conv_decoder_forward.9} parent=31 // pred_check_branch
                %449 = sbr.rel target = $region58
              $region57: #{conv_decoder_forward.9} parent=31 // pred_region
                _
              $region58: #{conv_decoder_forward.9} parent=31 // pred_fallthru
                _
            $region32: #{conv_decoder_forward.9} parent=27 // pred_fallthru
              _
            // Predicated region
            $region33: #{conv_decoder_forward.9} parent=27 // pred_check
              _
            $region34: #{conv_decoder_forward.9} parent=27 // pred_check_branch
              %171 = sbr.rel target = $region36
            $region35: #{conv_decoder_forward.9} parent=27 // pred_region
              %s173 = ssub.s32 256, 1
              loop: start=0, step=1, limit=1
              $region37: #{conv_decoder_forward.9} parent=35 // loop_pre_header
                _
              $region38: #{conv_decoder_forward.9} parent=35 // loop_header
                %s175 = sphi 0, %s179
                %p176 = scmp.ge.s32.totalorder %s175, 1
                %s180 = sphi %s165, %s165
                %s181 = sphi %s162, %s162
              $region39: #{conv_decoder_forward.9} parent=35 // loop_header_branch
                %178 = sbr.rel (%p176) target = $region43
              $region40: #{conv_decoder_forward.9} parent=35 // loop_body
                %v182 = vld [vmem:[%s180] sm:%s173]
                %183 = vst [vmem:[%s181] sm:%s173] %v182
                %v184 = vld [vmem:[%s180 + $0x40] sm:%s173]
                %185 = vst [vmem:[%s181 + $0x8] sm:%s173] %v184
                %v186 = vld [vmem:[%s180 + $0x80] sm:%s173]
                %187 = vst [vmem:[%s181 + $0x10] sm:%s173] %v186
                %v188 = vld [vmem:[%s180 + $0xc0] sm:%s173]
                %189 = vst [vmem:[%s181 + $0x18] sm:%s173] %v188
                %v190 = vld [vmem:[%s180 + $0x100] sm:%s173]
                %191 = vst [vmem:[%s181 + $0x20] sm:%s173] %v190
                %v192 = vld [vmem:[%s180 + $0x140] sm:%s173]
                %193 = vst [vmem:[%s181 + $0x28] sm:%s173] %v192
                %v194 = vld [vmem:[%s180 + $0x180] sm:%s173]
                %195 = vst [vmem:[%s181 + $0x30] sm:%s173] %v194
                %v196 = vld [vmem:[%s180 + $0x1c0] sm:%s173]
                %197 = vst [vmem:[%s181 + $0x38] sm:%s173] %v196
                %v198 = vld [vmem:[%s180 + $0x200] sm:%s173]
                %199 = vst [vmem:[%s181 + $0x40] sm:%s173] %v198
                %v200 = vld [vmem:[%s180 + $0x240] sm:%s173]
                %201 = vst [vmem:[%s181 + $0x48] sm:%s173] %v200
                %v202 = vld [vmem:[%s180 + $0x280] sm:%s173]
                %203 = vst [vmem:[%s181 + $0x50] sm:%s173] %v202
                %v204 = vld [vmem:[%s180 + $0x2c0] sm:%s173]
                %205 = vst [vmem:[%s181 + $0x58] sm:%s173] %v204
                %v206 = vld [vmem:[%s180 + $0x300] sm:%s173]
                %207 = vst [vmem:[%s181 + $0x60] sm:%s173] %v206
                %v208 = vld [vmem:[%s180 + $0x340] sm:%s173]
                %209 = vst [vmem:[%s181 + $0x68] sm:%s173] %v208
                %v210 = vld [vmem:[%s180 + $0x380] sm:%s173]
                %211 = vst [vmem:[%s181 + $0x70] sm:%s173] %v210
                %v212 = vld [vmem:[%s180 + $0x3c0] sm:%s173]
                %213 = vst [vmem:[%s181 + $0x78] sm:%s173] %v212
                %v214 = vld [vmem:[%s180 + $0x400] sm:%s173]
                %215 = vst [vmem:[%s181 + $0x80] sm:%s173] %v214
                %v216 = vld [vmem:[%s180 + $0x440] sm:%s173]
                %217 = vst [vmem:[%s181 + $0x88] sm:%s173] %v216
                %v218 = vld [vmem:[%s180 + $0x480] sm:%s173]
                %219 = vst [vmem:[%s181 + $0x90] sm:%s173] %v218
                %v220 = vld [vmem:[%s180 + $0x4c0] sm:%s173]
                %221 = vst [vmem:[%s181 + $0x98] sm:%s173] %v220
                %v222 = vld [vmem:[%s180 + $0x500] sm:%s173]
                %223 = vst [vmem:[%s181 + $0xa0] sm:%s173] %v222
                %v224 = vld [vmem:[%s180 + $0x540] sm:%s173]
                %225 = vst [vmem:[%s181 + $0xa8] sm:%s173] %v224
                %v226 = vld [vmem:[%s180 + $0x580] sm:%s173]
                %227 = vst [vmem:[%s181 + $0xb0] sm:%s173] %v226
                %v228 = vld [vmem:[%s180 + $0x5c0] sm:%s173]
                %229 = vst [vmem:[%s181 + $0xb8] sm:%s173] %v228
                %v230 = vld [vmem:[%s180 + $0x600] sm:%s173]
                %231 = vst [vmem:[%s181 + $0xc0] sm:%s173] %v230
                %v232 = vld [vmem:[%s180 + $0x640] sm:%s173]
                %233 = vst [vmem:[%s181 + $0xc8] sm:%s173] %v232
                %v234 = vld [vmem:[%s180 + $0x680] sm:%s173]
                %235 = vst [vmem:[%s181 + $0xd0] sm:%s173] %v234
                %v236 = vld [vmem:[%s180 + $0x6c0] sm:%s173]
                %237 = vst [vmem:[%s181 + $0xd8] sm:%s173] %v236
                %v238 = vld [vmem:[%s180 + $0x700] sm:%s173]
                %239 = vst [vmem:[%s181 + $0xe0] sm:%s173] %v238
                %v240 = vld [vmem:[%s180 + $0x740] sm:%s173]
                %241 = vst [vmem:[%s181 + $0xe8] sm:%s173] %v240
                %v242 = vld [vmem:[%s180 + $0x780] sm:%s173]
                %243 = vst [vmem:[%s181 + $0xf0] sm:%s173] %v242
                %v244 = vld [vmem:[%s180 + $0x7c0] sm:%s173]
                %245 = vst [vmem:[%s181 + $0xf8] sm:%s173] %v244
                %v246 = vld [vmem:[%s180 + $0x800] sm:%s173]
                %247 = vst [vmem:[%s181 + $0x100] sm:%s173] %v246
                %v248 = vld [vmem:[%s180 + $0x840] sm:%s173]
                %249 = vst [vmem:[%s181 + $0x108] sm:%s173] %v248
                %v250 = vld [vmem:[%s180 + $0x880] sm:%s173]
                %251 = vst [vmem:[%s181 + $0x110] sm:%s173] %v250
                %v252 = vld [vmem:[%s180 + $0x8c0] sm:%s173]
                %253 = vst [vmem:[%s181 + $0x118] sm:%s173] %v252
                %v254 = vld [vmem:[%s180 + $0x900] sm:%s173]
                %255 = vst [vmem:[%s181 + $0x120] sm:%s173] %v254
                %v256 = vld [vmem:[%s180 + $0x940] sm:%s173]
                %257 = vst [vmem:[%s181 + $0x128] sm:%s173] %v256
                %v258 = vld [vmem:[%s180 + $0x980] sm:%s173]
                %259 = vst [vmem:[%s181 + $0x130] sm:%s173] %v258
                %v260 = vld [vmem:[%s180 + $0x9c0] sm:%s173]
                %261 = vst [vmem:[%s181 + $0x138] sm:%s173] %v260
                %v262 = vld [vmem:[%s180 + $0xa00] sm:%s173]
                %263 = vst [vmem:[%s181 + $0x140] sm:%s173] %v262
                %v264 = vld [vmem:[%s180 + $0xa40] sm:%s173]
                %265 = vst [vmem:[%s181 + $0x148] sm:%s173] %v264
                %v266 = vld [vmem:[%s180 + $0xa80] sm:%s173]
                %267 = vst [vmem:[%s181 + $0x150] sm:%s173] %v266
                %v268 = vld [vmem:[%s180 + $0xac0] sm:%s173]
                %269 = vst [vmem:[%s181 + $0x158] sm:%s173] %v268
                %v270 = vld [vmem:[%s180 + $0xb00] sm:%s173]
                %271 = vst [vmem:[%s181 + $0x160] sm:%s173] %v270
                %v272 = vld [vmem:[%s180 + $0xb40] sm:%s173]
                %273 = vst [vmem:[%s181 + $0x168] sm:%s173] %v272
                %v274 = vld [vmem:[%s180 + $0xb80] sm:%s173]
                %275 = vst [vmem:[%s181 + $0x170] sm:%s173] %v274
                %v276 = vld [vmem:[%s180 + $0xbc0] sm:%s173]
                %277 = vst [vmem:[%s181 + $0x178] sm:%s173] %v276
                %v278 = vld [vmem:[%s180 + $0xc00] sm:%s173]
                %279 = vst [vmem:[%s181 + $0x180] sm:%s173] %v278
                %v280 = vld [vmem:[%s180 + $0xc40] sm:%s173]
                %281 = vst [vmem:[%s181 + $0x188] sm:%s173] %v280
                %v282 = vld [vmem:[%s180 + $0xc80] sm:%s173]
                %283 = vst [vmem:[%s181 + $0x190] sm:%s173] %v282
                %v284 = vld [vmem:[%s180 + $0xcc0] sm:%s173]
                %285 = vst [vmem:[%s181 + $0x198] sm:%s173] %v284
                %v286 = vld [vmem:[%s180 + $0xd00] sm:%s173]
                %287 = vst [vmem:[%s181 + $0x1a0] sm:%s173] %v286
                %v288 = vld [vmem:[%s180 + $0xd40] sm:%s173]
                %289 = vst [vmem:[%s181 + $0x1a8] sm:%s173] %v288
                %v290 = vld [vmem:[%s180 + $0xd80] sm:%s173]
                %291 = vst [vmem:[%s181 + $0x1b0] sm:%s173] %v290
                %v292 = vld [vmem:[%s180 + $0xdc0] sm:%s173]
                %293 = vst [vmem:[%s181 + $0x1b8] sm:%s173] %v292
                %v294 = vld [vmem:[%s180 + $0xe00] sm:%s173]
                %295 = vst [vmem:[%s181 + $0x1c0] sm:%s173] %v294
                %v296 = vld [vmem:[%s180 + $0xe40] sm:%s173]
                %297 = vst [vmem:[%s181 + $0x1c8] sm:%s173] %v296
                %v298 = vld [vmem:[%s180 + $0xe80] sm:%s173]
                %299 = vst [vmem:[%s181 + $0x1d0] sm:%s173] %v298
                %v300 = vld [vmem:[%s180 + $0xec0] sm:%s173]
                %301 = vst [vmem:[%s181 + $0x1d8] sm:%s173] %v300
                %v302 = vld [vmem:[%s180 + $0xf00] sm:%s173]
                %303 = vst [vmem:[%s181 + $0x1e0] sm:%s173] %v302
                %v304 = vld [vmem:[%s180 + $0xf40] sm:%s173]
                %305 = vst [vmem:[%s181 + $0x1e8] sm:%s173] %v304
                %v306 = vld [vmem:[%s180 + $0xf80] sm:%s173]
                %307 = vst [vmem:[%s181 + $0x1f0] sm:%s173] %v306
                %v308 = vld [vmem:[%s180 + $0xfc0] sm:%s173]
                %309 = vst [vmem:[%s181 + $0x1f8] sm:%s173] %v308
              $region41: #{conv_decoder_forward.9} parent=35 // loop_footer
                %s179 = sadd.s32 1, %s175
              $region42: #{conv_decoder_forward.9} parent=35 // loop_footer_branch
                %174 = sbr.rel target = $region38
              $region43: #{conv_decoder_forward.9} parent=35 // loop_exit
                _
            $region36: #{conv_decoder_forward.9} parent=27 // pred_fallthru
              _
          $region28: #{conv_decoder_forward.9} parent=23 // pred_fallthru
            _
          %450 = vnop
        $region24: #{conv_decoder_forward.9} parent=19 // pred_fallthru
          _
        // Predicated region
        $region59: #{conv_decoder_forward.9} parent=19 // pred_check
          %p451 = pneg %p93
        $region60: #{conv_decoder_forward.9} parent=19 // pred_check_branch
          %453 = sbr.rel (%p451) target = $region62
        $region61: #{conv_decoder_forward.9} parent=19 // pred_region
          %s454 = smul.u32 2, %s17
          %p455 = scmp.lt.s32.totalorder %s454, 15
          %s456 = scalar_select %p455, %s454, 15
          %s457 = scalar_lea.vmem %s2, %s456
          %s458 = smul.u32 2, %s17
        $region62: #{conv_decoder_forward.9} parent=19 // pred_fallthru
          _
      $region20: #{conv_decoder_forward.9} parent=5 // pred_fallthru
        _
      %p459 = scmp.le.s32.totalorder 1, %s9
      %p460 = scmp.lt.s32.totalorder %s9, 9
      %p461 = pnand %p459, %p460
      %p462 = pneg %p461
      // Predicated region
      $region63: #{conv_decoder_forward.9} parent=5 // pred_check
        _
      $region64: #{conv_decoder_forward.9} parent=5 // pred_check_branch
        %464 = sbr.rel (%p461) target = $region66
      $region65: #{conv_decoder_forward.9} parent=5 // pred_region
        %s465 = ssub.s32 %s9, 1
        %s466 = sand.u32 %s60, 1
        %s467 = sand.u32 %s60, 1
        %s468 = smul.addr %s467, 512
        %s469 = scalar_lea.vmem [#allocation2], %s468
        // Predicated region
        $region67: #{conv_decoder_forward.9} parent=65 // pred_check
          %p470 = pneg %p73
        $region68: #{conv_decoder_forward.9} parent=65 // pred_check_branch
          %472 = sbr.rel (%p470) target = $region70
        $region69: #{conv_decoder_forward.9} parent=65 // pred_region
          _
        $region70: #{conv_decoder_forward.9} parent=65 // pred_fallthru
          _
        %s473 = smul.u32 7, %s18
        %p474 = scmp.lt.s32.totalorder %s473, 6
        %s475 = scalar_select %p474, %s473, 6
        %s476 = smul.addr %s475, 4
        %s477 = smul.addr %s476, 4
        %s478 = scalar_lea.vmem %s0, %s477
        %p479 = pneg %p47
        %p480 = pneg %p44
        %s481 = sand.u32 %s60, 1
        %s482 = sand.u32 %s60, 1
        %s483 = smul.addr %s482, 512
        %s484 = scalar_lea.vmem [#allocation2], %s483
        %p485 = pneg %p73
        %p486 = pneg %p70
        %s487 = smul.u32 2, %s19
        %p488 = scmp.lt.s32.totalorder %s487, 15
        %s489 = scalar_select %p488, %s487, 15
        %s490 = scalar_lea.vmem %s2, %s489
        %p491 = pneg %p99
        %p492 = pneg %p96
        %p493 = pneg %p127
        %p494 = pneg %p124
        %s495 = sand.u32 %s114, 1
        %s496 = sand.u32 %s114, 1
        %s497 = smul.addr %s496, 56
        %s498 = scalar_lea.vmem [#allocation3], %s497
        %s499 = smul.u32 7, %s18
        %p500 = scmp.lt.s32.totalorder %s499, 6
        %s501 = scalar_select %p500, %s499, 6
        %s502 = smul.addr %s501, 4
        %s503 = smul.addr %s502, 4
        %s504 = scalar_lea.vmem %s0, %s503
        %s505 = smul.u32 7, %s18
        %s506 = smul.u32 2, %s19
        %s507 = smul.u32 2, %s19
        %p508 = scmp.lt.s32.totalorder %s507, 15
        %s509 = scalar_select %p508, %s507, 15
        %s510 = scalar_lea.vmem %s2, %s509
        %s511 = smul.u32 2, %s19
        %s512 = smul.u32 7, %s18
        %s513 = smul.u32 2, %s19
        %v514 = vld [vmem:[%s504] sm:$0xff]
        %v515 = vld [vmem:[%s504 + $0x8] sm:$0xff]
        %v516 = vld [vmem:[%s504 + $0x10] sm:$0xff]
        %v517 = vld [vmem:[%s504 + $0x18] sm:$0xff]
        %v518 = vld [vmem:[%s504 + $0x20] sm:$0xff]
        %v519 = vld [vmem:[%s504 + $0x28] sm:$0xff]
        %v520 = vld [vmem:[%s504 + $0x30] sm:$0xff]
        %v521 = vld [vmem:[%s504 + $0x38] sm:$0xff]
        %v522 = vld [vmem:[%s504 + $0x40] sm:$0xff]
        %v523 = vld [vmem:[%s504 + $0x48] sm:$0xff]
        %v524 = vld [vmem:[%s504 + $0x50] sm:$0xff]
        %v525 = vld [vmem:[%s504 + $0x58] sm:$0xff]
        %v526 = vld [vmem:[%s504 + $0x60] sm:$0x11]
        %v527 = vld [vmem:[%s504 + $0x68] sm:$0x11]
        %v528 = vld [vmem:[%s469] sm:$0xff]
        %v529 = vld [vmem:[%s469 + $0x8] sm:$0xff]
        %v530 = vld [vmem:[%s469 + $0x10] sm:$0xff]
        %v531 = vld [vmem:[%s469 + $0x18] sm:$0xff]
        %v532 = vld [vmem:[%s469 + $0x20] sm:$0xff]
        %v533 = vld [vmem:[%s469 + $0x28] sm:$0xff]
        %v534 = vld [vmem:[%s469 + $0x30] sm:$0xff]
        %v535 = vld [vmem:[%s469 + $0x38] sm:$0xff]
        %v536 = vld [vmem:[%s469 + $0x40] sm:$0xff]
        %v537 = vld [vmem:[%s469 + $0x48] sm:$0xff]
        %v538 = vld [vmem:[%s469 + $0x50] sm:$0xff]
        %v539 = vld [vmem:[%s469 + $0x58] sm:$0xff]
        %v540 = vld [vmem:[%s469 + $0x60] sm:$0xff]
        %v541 = vld [vmem:[%s469 + $0x68] sm:$0xff]
        %v542 = vld [vmem:[%s469 + $0x70] sm:$0xff]
        %v543 = vld [vmem:[%s469 + $0x78] sm:$0xff]
        %v544 = vld [vmem:[%s469 + $0x80] sm:$0xff]
        %v545 = vld [vmem:[%s469 + $0x88] sm:$0xff]
        %v546 = vld [vmem:[%s469 + $0x90] sm:$0xff]
        %v547 = vld [vmem:[%s469 + $0x98] sm:$0xff]
        %v548 = vld [vmem:[%s469 + $0xa0] sm:$0xff]
        %v549 = vld [vmem:[%s469 + $0xa8] sm:$0xff]
        %v550 = vld [vmem:[%s469 + $0xb0] sm:$0xff]
        %v551 = vld [vmem:[%s469 + $0xb8] sm:$0xff]
        %v552 = vld [vmem:[%s469 + $0xc0] sm:$0xff]
        %v553 = vld [vmem:[%s469 + $0xc8] sm:$0xff]
        %v554 = vld [vmem:[%s469 + $0xd0] sm:$0xff]
        %v555 = vld [vmem:[%s469 + $0xd8] sm:$0xff]
        %v556 = vld [vmem:[%s469 + $0xe0] sm:$0xff]
        %v557 = vld [vmem:[%s469 + $0xe8] sm:$0xff]
        %v558 = vld [vmem:[%s469 + $0xf0] sm:$0xff]
        %v559 = vld [vmem:[%s469 + $0xf8] sm:$0xff]
        %v560 = vld [vmem:[%s469 + $0x100] sm:$0xff]
        %v561 = vld [vmem:[%s469 + $0x108] sm:$0xff]
        %v562 = vld [vmem:[%s469 + $0x110] sm:$0xff]
        %v563 = vld [vmem:[%s469 + $0x118] sm:$0xff]
        %v564 = vld [vmem:[%s469 + $0x120] sm:$0xff]
        %v565 = vld [vmem:[%s469 + $0x128] sm:$0xff]
        %v566 = vld [vmem:[%s469 + $0x130] sm:$0xff]
        %v567 = vld [vmem:[%s469 + $0x138] sm:$0xff]
        %v568 = vld [vmem:[%s469 + $0x140] sm:$0xff]
        %v569 = vld [vmem:[%s469 + $0x148] sm:$0xff]
        %v570 = vld [vmem:[%s469 + $0x150] sm:$0xff]
        %v571 = vld [vmem:[%s469 + $0x158] sm:$0xff]
        %v572 = vld [vmem:[%s469 + $0x160] sm:$0xff]
        %v573 = vld [vmem:[%s469 + $0x168] sm:$0xff]
        %v574 = vld [vmem:[%s469 + $0x170] sm:$0xff]
        %v575 = vld [vmem:[%s469 + $0x178] sm:$0xff]
        %v576 = vld [vmem:[%s469 + $0x180] sm:$0xff]
        %v577 = vld [vmem:[%s469 + $0x188] sm:$0xff]
        %v578 = vld [vmem:[%s469 + $0x190] sm:$0xff]
        %v579 = vld [vmem:[%s469 + $0x198] sm:$0xff]
        %v580 = vld [vmem:[%s469 + $0x1a0] sm:$0xff]
        %v581 = vld [vmem:[%s469 + $0x1a8] sm:$0xff]
        %v582 = vld [vmem:[%s469 + $0x1b0] sm:$0xff]
        %v583 = vld [vmem:[%s469 + $0x1b8] sm:$0xff]
        %v584 = vld [vmem:[%s469 + $0x1c0] sm:$0xff]
        %v585 = vld [vmem:[%s469 + $0x1c8] sm:$0xff]
        %v586 = vld [vmem:[%s469 + $0x1d0] sm:$0xff]
        %v587 = vld [vmem:[%s469 + $0x1d8] sm:$0xff]
        %v588 = vld [vmem:[%s469 + $0x1e0] sm:$0xff]
        %v589 = vld [vmem:[%s469 + $0x1e8] sm:$0xff]
        %v590 = vld [vmem:[%s469 + $0x1f0] sm:$0xff]
        %v591 = vld [vmem:[%s469 + $0x1f8] sm:$0xff]
        %v592 = vld [vmem:[%s510] sm:$0x3]
        %v594 = vperm.slane %v592, 0
        %v595 = vperm.slane %v592, 1
        %v612 = vunpack.c.l.b16 %v514
        %v613 = vunpack.c.h.b16 %v514
        %v614 = vunpack.c.l.b16 %v515
        %v615 = vunpack.c.h.b16 %v515
        %v616 = vunpack.c.l.b16 %v516
        %v617 = vunpack.c.h.b16 %v516
        %v618 = vunpack.c.l.b16 %v517
        %v619 = vunpack.c.h.b16 %v517
        %v620 = vunpack.c.l.b16 %v518
        %v621 = vunpack.c.h.b16 %v518
        %v622 = vunpack.c.l.b16 %v519
        %v623 = vunpack.c.h.b16 %v519
        %v624 = vunpack.c.l.b16 %v520
        %v625 = vunpack.c.h.b16 %v520
        %v626 = vunpack.c.l.b16 %v521
        %v627 = vunpack.c.h.b16 %v521
        %v628 = vunpack.c.l.b16 %v522
        %v629 = vunpack.c.h.b16 %v522
        %v630 = vunpack.c.l.b16 %v523
        %v631 = vunpack.c.h.b16 %v523
        %v632 = vunpack.c.l.b16 %v524
        %v633 = vunpack.c.h.b16 %v524
        %v634 = vunpack.c.l.b16 %v525
        %v635 = vunpack.c.h.b16 %v525
        %v636 = vunpack.c.l.b16 %v526
        %v637 = vunpack.c.h.b16 %v526
        %v638 = vunpack.c.l.b16 %v527
        %v639 = vunpack.c.h.b16 %v527
        %v640 = vpack.c.b16 %v616, %v612
        %v641 = vpack.c.b16 %v617, %v613
        %v642 = vpack.c.b16 %v618, %v614
        %v643 = vpack.c.b16 %v619, %v615
        %v644 = vpack.c.b16 %v624, %v620
        %v645 = vpack.c.b16 %v625, %v621
        %v646 = vpack.c.b16 %v626, %v622
        %v647 = vpack.c.b16 %v627, %v623
        %v648 = vpack.c.b16 %v632, %v628
        %v649 = vpack.c.b16 %v633, %v629
        %v650 = vpack.c.b16 %v634, %v630
        %v651 = vpack.c.b16 %v635, %v631
        %v652 = vpack.c.b16 %v636, %v636
        %v653 = vpack.c.b16 %v637, %v637
        %v654 = vpack.c.b16 %v638, %v638
        %v655 = vpack.c.b16 %v639, %v639
        %v736 = vunpack.c.l.b16 %v528
        %v737 = vunpack.c.h.b16 %v528
        %v738 = vunpack.c.l.b16 %v529
        %v739 = vunpack.c.h.b16 %v529
        %v740 = vunpack.c.l.b16 %v530
        %v741 = vunpack.c.h.b16 %v530
        %v742 = vunpack.c.l.b16 %v531
        %v743 = vunpack.c.h.b16 %v531
        %v744 = vunpack.c.l.b16 %v532
        %v745 = vunpack.c.h.b16 %v532
        %v746 = vunpack.c.l.b16 %v533
        %v747 = vunpack.c.h.b16 %v533
        %v748 = vunpack.c.l.b16 %v534
        %v749 = vunpack.c.h.b16 %v534
        %v750 = vunpack.c.l.b16 %v535
        %v751 = vunpack.c.h.b16 %v535
        %v752 = vunpack.c.l.b16 %v536
        %v753 = vunpack.c.h.b16 %v536
        %v754 = vunpack.c.l.b16 %v537
        %v755 = vunpack.c.h.b16 %v537
        %v756 = vunpack.c.l.b16 %v538
        %v757 = vunpack.c.h.b16 %v538
        %v758 = vunpack.c.l.b16 %v539
        %v759 = vunpack.c.h.b16 %v539
        %v760 = vunpack.c.l.b16 %v540
        %v761 = vunpack.c.h.b16 %v540
        %v762 = vunpack.c.l.b16 %v541
        %v763 = vunpack.c.h.b16 %v541
        %v764 = vunpack.c.l.b16 %v542
        %v765 = vunpack.c.h.b16 %v542
        %v766 = vunpack.c.l.b16 %v543
        %v767 = vunpack.c.h.b16 %v543
        %v768 = vunpack.c.l.b16 %v544
        %v769 = vunpack.c.h.b16 %v544
        %v770 = vunpack.c.l.b16 %v545
        %v771 = vunpack.c.h.b16 %v545
        %v772 = vunpack.c.l.b16 %v546
        %v773 = vunpack.c.h.b16 %v546
        %v774 = vunpack.c.l.b16 %v547
        %v775 = vunpack.c.h.b16 %v547
        %v776 = vunpack.c.l.b16 %v548
        %v777 = vunpack.c.h.b16 %v548
        %v778 = vunpack.c.l.b16 %v549
        %v779 = vunpack.c.h.b16 %v549
        %v780 = vunpack.c.l.b16 %v550
        %v781 = vunpack.c.h.b16 %v550
        %v782 = vunpack.c.l.b16 %v551
        %v783 = vunpack.c.h.b16 %v551
        %v784 = vunpack.c.l.b16 %v552
        %v785 = vunpack.c.h.b16 %v552
        %v786 = vunpack.c.l.b16 %v553
        %v787 = vunpack.c.h.b16 %v553
        %v788 = vunpack.c.l.b16 %v554
        %v789 = vunpack.c.h.b16 %v554
        %v790 = vunpack.c.l.b16 %v555
        %v791 = vunpack.c.h.b16 %v555
        %v792 = vunpack.c.l.b16 %v556
        %v793 = vunpack.c.h.b16 %v556
        %v794 = vunpack.c.l.b16 %v557
        %v795 = vunpack.c.h.b16 %v557
        %v796 = vunpack.c.l.b16 %v558
        %v797 = vunpack.c.h.b16 %v558
        %v798 = vunpack.c.l.b16 %v559
        %v799 = vunpack.c.h.b16 %v559
        %v800 = vunpack.c.l.b16 %v560
        %v801 = vunpack.c.h.b16 %v560
        %v802 = vunpack.c.l.b16 %v561
        %v803 = vunpack.c.h.b16 %v561
        %v804 = vunpack.c.l.b16 %v562
        %v805 = vunpack.c.h.b16 %v562
        %v806 = vunpack.c.l.b16 %v563
        %v807 = vunpack.c.h.b16 %v563
        %v808 = vunpack.c.l.b16 %v564
        %v809 = vunpack.c.h.b16 %v564
        %v810 = vunpack.c.l.b16 %v565
        %v811 = vunpack.c.h.b16 %v565
        %v812 = vunpack.c.l.b16 %v566
        %v813 = vunpack.c.h.b16 %v566
        %v814 = vunpack.c.l.b16 %v567
        %v815 = vunpack.c.h.b16 %v567
        %v816 = vunpack.c.l.b16 %v568
        %v817 = vunpack.c.h.b16 %v568
        %v818 = vunpack.c.l.b16 %v569
        %v819 = vunpack.c.h.b16 %v569
        %v820 = vunpack.c.l.b16 %v570
        %v821 = vunpack.c.h.b16 %v570
        %v822 = vunpack.c.l.b16 %v571
        %v823 = vunpack.c.h.b16 %v571
        %v824 = vunpack.c.l.b16 %v572
        %v825 = vunpack.c.h.b16 %v572
        %v826 = vunpack.c.l.b16 %v573
        %v827 = vunpack.c.h.b16 %v573
        %v828 = vunpack.c.l.b16 %v574
        %v829 = vunpack.c.h.b16 %v574
        %v830 = vunpack.c.l.b16 %v575
        %v831 = vunpack.c.h.b16 %v575
        %v832 = vunpack.c.l.b16 %v576
        %v833 = vunpack.c.h.b16 %v576
        %v834 = vunpack.c.l.b16 %v577
        %v835 = vunpack.c.h.b16 %v577
        %v836 = vunpack.c.l.b16 %v578
        %v837 = vunpack.c.h.b16 %v578
        %v838 = vunpack.c.l.b16 %v579
        %v839 = vunpack.c.h.b16 %v579
        %v840 = vunpack.c.l.b16 %v580
        %v841 = vunpack.c.h.b16 %v580
        %v842 = vunpack.c.l.b16 %v581
        %v843 = vunpack.c.h.b16 %v581
        %v844 = vunpack.c.l.b16 %v582
        %v845 = vunpack.c.h.b16 %v582
        %v846 = vunpack.c.l.b16 %v583
        %v847 = vunpack.c.h.b16 %v583
        %v848 = vunpack.c.l.b16 %v584
        %v849 = vunpack.c.h.b16 %v584
        %v850 = vunpack.c.l.b16 %v585
        %v851 = vunpack.c.h.b16 %v585
        %v852 = vunpack.c.l.b16 %v586
        %v853 = vunpack.c.h.b16 %v586
        %v854 = vunpack.c.l.b16 %v587
        %v855 = vunpack.c.h.b16 %v587
        %v856 = vunpack.c.l.b16 %v588
        %v857 = vunpack.c.h.b16 %v588
        %v858 = vunpack.c.l.b16 %v589
        %v859 = vunpack.c.h.b16 %v589
        %v860 = vunpack.c.l.b16 %v590
        %v861 = vunpack.c.h.b16 %v590
        %v862 = vunpack.c.l.b16 %v591
        %v863 = vunpack.c.h.b16 %v591
        %v864 = vpack.c.b16 %v738, %v736
        %v865 = vpack.c.b16 %v739, %v737
        %v866 = vpack.c.b16 %v742, %v740
        %v867 = vpack.c.b16 %v743, %v741
        %v868 = vpack.c.b16 %v746, %v744
        %v869 = vpack.c.b16 %v747, %v745
        %v870 = vpack.c.b16 %v750, %v748
        %v871 = vpack.c.b16 %v751, %v749
        %v872 = vpack.c.b16 %v754, %v752
        %v873 = vpack.c.b16 %v755, %v753
        %v874 = vpack.c.b16 %v758, %v756
        %v875 = vpack.c.b16 %v759, %v757
        %v876 = vpack.c.b16 %v762, %v760
        %v877 = vpack.c.b16 %v763, %v761
        %v878 = vpack.c.b16 %v766, %v764
        %v879 = vpack.c.b16 %v767, %v765
        %v880 = vpack.c.b16 %v770, %v768
        %v881 = vpack.c.b16 %v771, %v769
        %v882 = vpack.c.b16 %v774, %v772
        %v883 = vpack.c.b16 %v775, %v773
        %v884 = vpack.c.b16 %v778, %v776
        %v885 = vpack.c.b16 %v779, %v777
        %v886 = vpack.c.b16 %v782, %v780
        %v887 = vpack.c.b16 %v783, %v781
        %v888 = vpack.c.b16 %v786, %v784
        %v889 = vpack.c.b16 %v787, %v785
        %v890 = vpack.c.b16 %v790, %v788
        %v891 = vpack.c.b16 %v791, %v789
        %v892 = vpack.c.b16 %v794, %v792
        %v893 = vpack.c.b16 %v795, %v793
        %v894 = vpack.c.b16 %v798, %v796
        %v895 = vpack.c.b16 %v799, %v797
        %v896 = vpack.c.b16 %v802, %v800
        %v897 = vpack.c.b16 %v803, %v801
        %v898 = vpack.c.b16 %v806, %v804
        %v899 = vpack.c.b16 %v807, %v805
        %v900 = vpack.c.b16 %v810, %v808
        %v901 = vpack.c.b16 %v811, %v809
        %v902 = vpack.c.b16 %v814, %v812
        %v903 = vpack.c.b16 %v815, %v813
        %v904 = vpack.c.b16 %v818, %v816
        %v905 = vpack.c.b16 %v819, %v817
        %v906 = vpack.c.b16 %v822, %v820
        %v907 = vpack.c.b16 %v823, %v821
        %v908 = vpack.c.b16 %v826, %v824
        %v909 = vpack.c.b16 %v827, %v825
        %v910 = vpack.c.b16 %v830, %v828
        %v911 = vpack.c.b16 %v831, %v829
        %v912 = vpack.c.b16 %v834, %v832
        %v913 = vpack.c.b16 %v835, %v833
        %v914 = vpack.c.b16 %v838, %v836
        %v915 = vpack.c.b16 %v839, %v837
        %v916 = vpack.c.b16 %v842, %v840
        %v917 = vpack.c.b16 %v843, %v841
        %v918 = vpack.c.b16 %v846, %v844
        %v919 = vpack.c.b16 %v847, %v845
        %v920 = vpack.c.b16 %v850, %v848
        %v921 = vpack.c.b16 %v851, %v849
        %v922 = vpack.c.b16 %v854, %v852
        %v923 = vpack.c.b16 %v855, %v853
        %v924 = vpack.c.b16 %v858, %v856
        %v925 = vpack.c.b16 %v859, %v857
        %v926 = vpack.c.b16 %v862, %v860
        %v927 = vpack.c.b16 %v863, %v861
        %992 = vmatpush.bf16.msra.mxu0 %v878
        %993 = vmatpush.bf16.msra.mxu0 %v876
        %994 = vmatpush.bf16.msra.mxu0 %v874
        %995 = vmatpush.bf16.msra.mxu0 %v872
        %996 = vmatpush.bf16.msra.mxu0 %v870
        %997 = vmatpush.bf16.msra.mxu0 %v868
        %998 = vmatpush.bf16.msra.mxu0 %v866
        %999 = vmatpush.bf16.msra.mxu0 %v864
        %1000 = vmatmul.bf16.gmra.mxu0 %v640
        %v1001 = vpop.f32.mrf.mxu0
        %v1002 = vadd.f32 %v594, %v1001
        %v1003 = vpop.f32.mrf.mxu0
        %v1004 = vadd.f32 %v594, %v1003
        %1005 = vmatmul.bf16.gmra.mxu0 %v644
        %v1006 = vpop.f32.mrf.mxu0
        %v1007 = vadd.f32 %v594, %v1006
        %v1008 = vpop.f32.mrf.mxu0
        %v1009 = vadd.f32 %v594, %v1008
        %1010 = vmatmul.bf16.gmra.mxu0 %v648
        %v1011 = vpop.f32.mrf.mxu0
        %v1012 = vadd.f32 %v594, %v1011
        %v1013 = vpop.f32.mrf.mxu0
        %v1014 = vadd.f32 %v594, %v1013
        %1015 = vmatmul.bf16.gmra.mxu0 %v652
        %v1016 = vpop.f32.mrf.mxu0
        %v1017 = vadd.f32 %v594, %v1016
        %v1018 = vpop.f32.mrf.mxu0
        %1019 = vdwg.mxu0
        %1020 = vmatpush.bf16.msra.mxu0 %v894
        %1021 = vmatpush.bf16.msra.mxu0 %v892
        %1022 = vmatpush.bf16.msra.mxu0 %v890
        %1023 = vmatpush.bf16.msra.mxu0 %v888
        %1024 = vmatpush.bf16.msra.mxu0 %v886
        %1025 = vmatpush.bf16.msra.mxu0 %v884
        %1026 = vmatpush.bf16.msra.mxu0 %v882
        %1027 = vmatpush.bf16.msra.mxu0 %v880
        %1028 = vmatmul.bf16.gmra.mxu0 %v641
        %v1029 = vpop.f32.mrf.mxu0
        %v1030 = vadd.f32 %v1002, %v1029
        %v1031 = vpop.f32.mrf.mxu0
        %v1032 = vadd.f32 %v1004, %v1031
        %1033 = vmatmul.bf16.gmra.mxu0 %v645
        %v1034 = vpop.f32.mrf.mxu0
        %v1035 = vadd.f32 %v1007, %v1034
        %v1036 = vpop.f32.mrf.mxu0
        %v1037 = vadd.f32 %v1009, %v1036
        %1038 = vmatmul.bf16.gmra.mxu0 %v649
        %v1039 = vpop.f32.mrf.mxu0
        %v1040 = vadd.f32 %v1012, %v1039
        %v1041 = vpop.f32.mrf.mxu0
        %v1042 = vadd.f32 %v1014, %v1041
        %1043 = vmatmul.bf16.gmra.mxu0 %v653
        %v1044 = vpop.f32.mrf.mxu0
        %v1045 = vadd.f32 %v1017, %v1044
        %v1046 = vpop.f32.mrf.mxu0
        %1047 = vdwg.mxu0
        %1048 = vmatpush.bf16.msra.mxu0 %v910
        %1049 = vmatpush.bf16.msra.mxu0 %v908
        %1050 = vmatpush.bf16.msra.mxu0 %v906
        %1051 = vmatpush.bf16.msra.mxu0 %v904
        %1052 = vmatpush.bf16.msra.mxu0 %v902
        %1053 = vmatpush.bf16.msra.mxu0 %v900
        %1054 = vmatpush.bf16.msra.mxu0 %v898
        %1055 = vmatpush.bf16.msra.mxu0 %v896
        %1056 = vmatmul.bf16.gmra.mxu0 %v642
        %v1057 = vpop.f32.mrf.mxu0
        %v1058 = vadd.f32 %v1030, %v1057
        %v1059 = vpop.f32.mrf.mxu0
        %v1060 = vadd.f32 %v1032, %v1059
        %1061 = vmatmul.bf16.gmra.mxu0 %v646
        %v1062 = vpop.f32.mrf.mxu0
        %v1063 = vadd.f32 %v1035, %v1062
        %v1064 = vpop.f32.mrf.mxu0
        %v1065 = vadd.f32 %v1037, %v1064
        %1066 = vmatmul.bf16.gmra.mxu0 %v650
        %v1067 = vpop.f32.mrf.mxu0
        %v1068 = vadd.f32 %v1040, %v1067
        %v1069 = vpop.f32.mrf.mxu0
        %v1070 = vadd.f32 %v1042, %v1069
        %1071 = vmatmul.bf16.gmra.mxu0 %v654
        %v1072 = vpop.f32.mrf.mxu0
        %v1073 = vadd.f32 %v1045, %v1072
        %v1074 = vpop.f32.mrf.mxu0
        %1075 = vdwg.mxu0
        %1076 = vmatpush.bf16.msra.mxu0 %v926
        %1077 = vmatpush.bf16.msra.mxu0 %v924
        %1078 = vmatpush.bf16.msra.mxu0 %v922
        %1079 = vmatpush.bf16.msra.mxu0 %v920
        %1080 = vmatpush.bf16.msra.mxu0 %v918
        %1081 = vmatpush.bf16.msra.mxu0 %v916
        %1082 = vmatpush.bf16.msra.mxu0 %v914
        %1083 = vmatpush.bf16.msra.mxu0 %v912
        %1084 = vmatmul.bf16.gmra.mxu0 %v643
        %v1085 = vpop.f32.mrf.mxu0
        %v1086 = vadd.f32 %v1058, %v1085
        %v1087 = vpop.f32.mrf.mxu0
        %v1088 = vadd.f32 %v1060, %v1087
        %1089 = vmatmul.bf16.gmra.mxu0 %v647
        %v1090 = vpop.f32.mrf.mxu0
        %v1091 = vadd.f32 %v1063, %v1090
        %v1092 = vpop.f32.mrf.mxu0
        %v1093 = vadd.f32 %v1065, %v1092
        %1094 = vmatmul.bf16.gmra.mxu0 %v651
        %v1095 = vpop.f32.mrf.mxu0
        %v1096 = vadd.f32 %v1068, %v1095
        %v1097 = vpop.f32.mrf.mxu0
        %v1098 = vadd.f32 %v1070, %v1097
        %1099 = vmatmul.bf16.gmra.mxu0 %v655
        %v1100 = vpop.f32.mrf.mxu0
        %v1101 = vadd.f32 %v1073, %v1100
        %v1102 = vpop.f32.mrf.mxu0
        %1103 = vdwg.mxu0
        %1104 = vmatpush.bf16.msra.mxu0 %v879
        %1105 = vmatpush.bf16.msra.mxu0 %v877
        %1106 = vmatpush.bf16.msra.mxu0 %v875
        %1107 = vmatpush.bf16.msra.mxu0 %v873
        %1108 = vmatpush.bf16.msra.mxu0 %v871
        %1109 = vmatpush.bf16.msra.mxu0 %v869
        %1110 = vmatpush.bf16.msra.mxu0 %v867
        %1111 = vmatpush.bf16.msra.mxu0 %v865
        %1112 = vmatmul.bf16.gmra.mxu0 %v640
        %v1113 = vpop.f32.mrf.mxu0
        %v1114 = vadd.f32 %v595, %v1113
        %v1115 = vpop.f32.mrf.mxu0
        %v1116 = vadd.f32 %v595, %v1115
        %1117 = vmatmul.bf16.gmra.mxu0 %v644
        %v1118 = vpop.f32.mrf.mxu0
        %v1119 = vadd.f32 %v595, %v1118
        %v1120 = vpop.f32.mrf.mxu0
        %v1121 = vadd.f32 %v595, %v1120
        %1122 = vmatmul.bf16.gmra.mxu0 %v648
        %v1123 = vpop.f32.mrf.mxu0
        %v1124 = vadd.f32 %v595, %v1123
        %v1125 = vpop.f32.mrf.mxu0
        %v1126 = vadd.f32 %v595, %v1125
        %1127 = vmatmul.bf16.gmra.mxu0 %v652
        %v1128 = vpop.f32.mrf.mxu0
        %v1129 = vadd.f32 %v595, %v1128
        %v1130 = vpop.f32.mrf.mxu0
        %1131 = vdwg.mxu0
        %1132 = vmatpush.bf16.msra.mxu0 %v895
        %1133 = vmatpush.bf16.msra.mxu0 %v893
        %1134 = vmatpush.bf16.msra.mxu0 %v891
        %1135 = vmatpush.bf16.msra.mxu0 %v889
        %1136 = vmatpush.bf16.msra.mxu0 %v887
        %1137 = vmatpush.bf16.msra.mxu0 %v885
        %1138 = vmatpush.bf16.msra.mxu0 %v883
        %1139 = vmatpush.bf16.msra.mxu0 %v881
        %1140 = vmatmul.bf16.gmra.mxu0 %v641
        %v1141 = vpop.f32.mrf.mxu0
        %v1142 = vadd.f32 %v1114, %v1141
        %v1143 = vpop.f32.mrf.mxu0
        %v1144 = vadd.f32 %v1116, %v1143
        %1145 = vmatmul.bf16.gmra.mxu0 %v645
        %v1146 = vpop.f32.mrf.mxu0
        %v1147 = vadd.f32 %v1119, %v1146
        %v1148 = vpop.f32.mrf.mxu0
        %v1149 = vadd.f32 %v1121, %v1148
        %1150 = vmatmul.bf16.gmra.mxu0 %v649
        %v1151 = vpop.f32.mrf.mxu0
        %v1152 = vadd.f32 %v1124, %v1151
        %v1153 = vpop.f32.mrf.mxu0
        %v1154 = vadd.f32 %v1126, %v1153
        %1155 = vmatmul.bf16.gmra.mxu0 %v653
        %v1156 = vpop.f32.mrf.mxu0
        %v1157 = vadd.f32 %v1129, %v1156
        %v1158 = vpop.f32.mrf.mxu0
        %1159 = vdwg.mxu0
        %1160 = vmatpush.bf16.msra.mxu0 %v911
        %1161 = vmatpush.bf16.msra.mxu0 %v909
        %1162 = vmatpush.bf16.msra.mxu0 %v907
        %1163 = vmatpush.bf16.msra.mxu0 %v905
        %1164 = vmatpush.bf16.msra.mxu0 %v903
        %1165 = vmatpush.bf16.msra.mxu0 %v901
        %1166 = vmatpush.bf16.msra.mxu0 %v899
        %1167 = vmatpush.bf16.msra.mxu0 %v897
        %1168 = vmatmul.bf16.gmra.mxu0 %v642
        %v1169 = vpop.f32.mrf.mxu0
        %v1170 = vadd.f32 %v1142, %v1169
        %v1171 = vpop.f32.mrf.mxu0
        %v1172 = vadd.f32 %v1144, %v1171
        %1173 = vmatmul.bf16.gmra.mxu0 %v646
        %v1174 = vpop.f32.mrf.mxu0
        %v1175 = vadd.f32 %v1147, %v1174
        %v1176 = vpop.f32.mrf.mxu0
        %v1177 = vadd.f32 %v1149, %v1176
        %1178 = vmatmul.bf16.gmra.mxu0 %v650
        %v1179 = vpop.f32.mrf.mxu0
        %v1180 = vadd.f32 %v1152, %v1179
        %v1181 = vpop.f32.mrf.mxu0
        %v1182 = vadd.f32 %v1154, %v1181
        %1183 = vmatmul.bf16.gmra.mxu0 %v654
        %v1184 = vpop.f32.mrf.mxu0
        %v1185 = vadd.f32 %v1157, %v1184
        %v1186 = vpop.f32.mrf.mxu0
        %1187 = vdwg.mxu0
        %1188 = vmatpush.bf16.msra.mxu0 %v927
        %1189 = vmatpush.bf16.msra.mxu0 %v925
        %1190 = vmatpush.bf16.msra.mxu0 %v923
        %1191 = vmatpush.bf16.msra.mxu0 %v921
        %1192 = vmatpush.bf16.msra.mxu0 %v919
        %1193 = vmatpush.bf16.msra.mxu0 %v917
        %1194 = vmatpush.bf16.msra.mxu0 %v915
        %1195 = vmatpush.bf16.msra.mxu0 %v913
        %1196 = vmatmul.bf16.gmra.mxu0 %v643
        %v1197 = vpop.f32.mrf.mxu0
        %v1198 = vadd.f32 %v1170, %v1197
        %v1199 = vpop.f32.mrf.mxu0
        %v1200 = vadd.f32 %v1172, %v1199
        %1201 = vmatmul.bf16.gmra.mxu0 %v647
        %v1202 = vpop.f32.mrf.mxu0
        %v1203 = vadd.f32 %v1175, %v1202
        %v1204 = vpop.f32.mrf.mxu0
        %v1205 = vadd.f32 %v1177, %v1204
        %1206 = vmatmul.bf16.gmra.mxu0 %v651
        %v1207 = vpop.f32.mrf.mxu0
        %v1208 = vadd.f32 %v1180, %v1207
        %v1209 = vpop.f32.mrf.mxu0
        %v1210 = vadd.f32 %v1182, %v1209
        %1211 = vmatmul.bf16.gmra.mxu0 %v655
        %v1212 = vpop.f32.mrf.mxu0
        %v1213 = vadd.f32 %v1185, %v1212
        %v1214 = vpop.f32.mrf.mxu0
        %1215 = vdwg.mxu0
        %v1216 = vmax.f32 %v1086, 0.0
        %v1217 = vmax.f32 %v1198, 0.0
        %v1218 = vmax.f32 %v1088, 0.0
        %v1219 = vmax.f32 %v1200, 0.0
        %v1220 = vmax.f32 %v1091, 0.0
        %v1221 = vmax.f32 %v1203, 0.0
        %v1222 = vmax.f32 %v1093, 0.0
        %v1223 = vmax.f32 %v1205, 0.0
        %v1224 = vmax.f32 %v1096, 0.0
        %v1225 = vmax.f32 %v1208, 0.0
        %v1226 = vmax.f32 %v1098, 0.0
        %v1227 = vmax.f32 %v1210, 0.0
        %v1228 = vmax.f32 %v1101, 0.0
        %v1229 = vmax.f32 %v1213, 0.0
        %v1230 = vpack.c.bf16 %v1217, %v1216
        %v1231 = vpack.c.bf16 %v1219, %v1218
        %v1232 = vpack.c.bf16 %v1221, %v1220
        %v1233 = vpack.c.bf16 %v1223, %v1222
        %v1234 = vpack.c.bf16 %v1225, %v1224
        %v1235 = vpack.c.bf16 %v1227, %v1226
        %v1236 = vpack.c.bf16 %v1229, %v1228
        %1237 = vst [vmem:[%s498] sm:$0xff] %v1230
        %1238 = vst [vmem:[%s498 + $0x8] sm:$0xff] %v1231
        %1239 = vst [vmem:[%s498 + $0x10] sm:$0xff] %v1232
        %1240 = vst [vmem:[%s498 + $0x18] sm:$0xff] %v1233
        %1241 = vst [vmem:[%s498 + $0x20] sm:$0xff] %v1234
        %1242 = vst [vmem:[%s498 + $0x28] sm:$0xff] %v1235
        %1243 = vst [vmem:[%s498 + $0x30] sm:$0x11] %v1236
        %s1244 = sand.u32 %s114, 1
        %s1245 = sand.u32 %s114, 1
        %s1246 = smul.addr %s1245, 56
        %s1247 = scalar_lea.vmem [#allocation3], %s1246
        // Predicated region
        $region71: #{conv_decoder_forward.9} parent=65 // pred_check
          %p1248 = pneg %p124
        $region72: #{conv_decoder_forward.9} parent=65 // pred_check_branch
          %1250 = sbr.rel (%p1248) target = $region74
        $region73: #{conv_decoder_forward.9} parent=65 // pred_region
          %s1251 = smul.u32 7, %s18
          %s1252 = smul.u32 2, %s19
          %s1253 = smul.addr %s1251, 16
          %s1254 = sadd.s32 %s1252, %s1253
          %s1255 = smul.addr %s1254, 4
          %s1256 = scalar_lea.vmem %s3, %s1255
          // Predicated region
          $region75: #{conv_decoder_forward.9} parent=73 // pred_check
            _
          $region76: #{conv_decoder_forward.9} parent=73 // pred_check_branch
            %1258 = sbr.rel (0) target = $region78
          $region77: #{conv_decoder_forward.9} parent=73 // pred_region
            // Predicated region
            $region79: #{conv_decoder_forward.9} parent=77 // pred_check
              _
            $region80: #{conv_decoder_forward.9} parent=77 // pred_check_branch
              %1260 = sbr.rel (0) target = $region82
            $region81: #{conv_decoder_forward.9} parent=77 // pred_region
              // Predicated region
              $region94: #{conv_decoder_forward.9} parent=81 // pred_check
                _
              $region95: #{conv_decoder_forward.9} parent=81 // pred_check_branch
                %1288 = sbr.rel (0) target = $region97
              $region96: #{conv_decoder_forward.9} parent=81 // pred_region
                loop: start=0, step=1, limit=1
                $region98: #{conv_decoder_forward.9} parent=96 // loop_pre_header
                  _
                $region99: #{conv_decoder_forward.9} parent=96 // loop_header
                  %s1290 = sphi 0, %s1294
                  %p1291 = scmp.ge.s32.totalorder %s1290, 1
                  %s1295 = sphi %s1247, %s1247
                  %s1296 = sphi %s1256, %s1256
                $region100: #{conv_decoder_forward.9} parent=96 // loop_header_branch
                  %1293 = sbr.rel (%p1291) target = $region104
                $region101: #{conv_decoder_forward.9} parent=96 // loop_body
                  %v1297 = vld [vmem:[%s1295] sm:$0xff]
                  %1298 = vst [vmem:[%s1296] sm:$0xff] %v1297
                  %v1299 = vld [vmem:[%s1295 + $0x8] sm:$0xff]
                  %1300 = vst [vmem:[%s1296 + $0x40] sm:$0xff] %v1299
                  %v1301 = vld [vmem:[%s1295 + $0x10] sm:$0xff]
                  %1302 = vst [vmem:[%s1296 + $0x80] sm:$0xff] %v1301
                  %v1303 = vld [vmem:[%s1295 + $0x18] sm:$0xff]
                  %1304 = vst [vmem:[%s1296 + $0xc0] sm:$0xff] %v1303
                  %v1305 = vld [vmem:[%s1295 + $0x20] sm:$0xff]
                  %1306 = vst [vmem:[%s1296 + $0x100] sm:$0xff] %v1305
                  %v1307 = vld [vmem:[%s1295 + $0x28] sm:$0xff]
                  %1308 = vst [vmem:[%s1296 + $0x140] sm:$0xff] %v1307
                  %v1309 = vld [vmem:[%s1295 + $0x30] sm:$0xff]
                  %1310 = vst [vmem:[%s1296 + $0x180] sm:$0xff] %v1309
                $region102: #{conv_decoder_forward.9} parent=96 // loop_footer
                  %s1294 = sadd.s32 1, %s1290
                $region103: #{conv_decoder_forward.9} parent=96 // loop_footer_branch
                  %1289 = sbr.rel target = $region99
                $region104: #{conv_decoder_forward.9} parent=96 // loop_exit
                  _
              $region97: #{conv_decoder_forward.9} parent=81 // pred_fallthru
                _
              // Predicated region
              $region105: #{conv_decoder_forward.9} parent=81 // pred_check
                _
              $region106: #{conv_decoder_forward.9} parent=81 // pred_check_branch
                %1312 = sbr.rel target = $region108
              $region107: #{conv_decoder_forward.9} parent=81 // pred_region
                _
              $region108: #{conv_decoder_forward.9} parent=81 // pred_fallthru
                _
            $region82: #{conv_decoder_forward.9} parent=77 // pred_fallthru
              _
            // Predicated region
            $region83: #{conv_decoder_forward.9} parent=77 // pred_check
              _
            $region84: #{conv_decoder_forward.9} parent=77 // pred_check_branch
              %1262 = sbr.rel target = $region86
            $region85: #{conv_decoder_forward.9} parent=77 // pred_region
              %s1264 = ssub.s32 256, 1
              loop: start=0, step=1, limit=1
              $region87: #{conv_decoder_forward.9} parent=85 // loop_pre_header
                _
              $region88: #{conv_decoder_forward.9} parent=85 // loop_header
                %s1266 = sphi 0, %s1270
                %p1267 = scmp.ge.s32.totalorder %s1266, 1
                %s1271 = sphi %s1247, %s1247
                %s1272 = sphi %s1256, %s1256
              $region89: #{conv_decoder_forward.9} parent=85 // loop_header_branch
                %1269 = sbr.rel (%p1267) target = $region93
              $region90: #{conv_decoder_forward.9} parent=85 // loop_body
                %v1273 = vld [vmem:[%s1271] sm:%s1264]
                %1274 = vst [vmem:[%s1272] sm:%s1264] %v1273
                %v1275 = vld [vmem:[%s1271 + $0x8] sm:%s1264]
                %1276 = vst [vmem:[%s1272 + $0x40] sm:%s1264] %v1275
                %v1277 = vld [vmem:[%s1271 + $0x10] sm:%s1264]
                %1278 = vst [vmem:[%s1272 + $0x80] sm:%s1264] %v1277
                %v1279 = vld [vmem:[%s1271 + $0x18] sm:%s1264]
                %1280 = vst [vmem:[%s1272 + $0xc0] sm:%s1264] %v1279
                %v1281 = vld [vmem:[%s1271 + $0x20] sm:%s1264]
                %1282 = vst [vmem:[%s1272 + $0x100] sm:%s1264] %v1281
                %v1283 = vld [vmem:[%s1271 + $0x28] sm:%s1264]
                %1284 = vst [vmem:[%s1272 + $0x140] sm:%s1264] %v1283
                %v1285 = vld [vmem:[%s1271 + $0x30] sm:%s1264]
                %1286 = vst [vmem:[%s1272 + $0x180] sm:%s1264] %v1285
              $region91: #{conv_decoder_forward.9} parent=85 // loop_footer
                %s1270 = sadd.s32 1, %s1266
              $region92: #{conv_decoder_forward.9} parent=85 // loop_footer_branch
                %1265 = sbr.rel target = $region88
              $region93: #{conv_decoder_forward.9} parent=85 // loop_exit
                _
            $region86: #{conv_decoder_forward.9} parent=77 // pred_fallthru
              _
          $region78: #{conv_decoder_forward.9} parent=73 // pred_fallthru
            _
          %1313 = vnop
        $region74: #{conv_decoder_forward.9} parent=65 // pred_fallthru
          _
      $region66: #{conv_decoder_forward.9} parent=5 // pred_fallthru
        _
      %p1314 = scmp.le.s32.totalorder 2, %s9
      // Predicated region
      $region109: #{conv_decoder_forward.9} parent=5 // pred_check
        %p1315 = pneg %p1314
      $region110: #{conv_decoder_forward.9} parent=5 // pred_check_branch
        %1317 = sbr.rel (%p1315) target = $region112
      $region111: #{conv_decoder_forward.9} parent=5 // pred_region
        %s1318 = ssub.s32 %s9, 2
        // Predicated region
        $region113: #{conv_decoder_forward.9} parent=111 // pred_check
          %p1319 = pneg %p130
        $region114: #{conv_decoder_forward.9} parent=111 // pred_check_branch
          %1321 = sbr.rel (%p1319) target = $region116
        $region115: #{conv_decoder_forward.9} parent=111 // pred_region
          %s1322 = sand.u32 %s115, 1
          %s1323 = sand.u32 %s115, 1
          %s1324 = smul.addr %s1323, 56
          %s1325 = scalar_lea.vmem [#allocation3], %s1324
        $region116: #{conv_decoder_forward.9} parent=111 // pred_fallthru
          _
      $region112: #{conv_decoder_forward.9} parent=5 // pred_fallthru
        _
    $region6: #{conv_decoder_forward.9} parent=1 // loop_footer
      %s13 = sadd.s32 1, %s9
    $region7: #{conv_decoder_forward.9} parent=1 // loop_footer_branch
      %8 = sbr.rel target = $region3
    $region8: #{conv_decoder_forward.9} parent=1 // loop_exit
      _

// kernel: conv_decoder_forward.10
$region0: #{conv_decoder_forward.10}
  #allocation0 [shape = 'u32[]', space=smem, size = 0x4, offset = 0x4, fixed_abs, tag = 'smem constant byte address 0x4 - core index']
  #allocation1 [shape = 'u32[72,128]{1,0:T(1,128)}', space=vmem, size = 0x9000, scoped, tag = 'internal scratch']
  %s0 = inlined_call_operand.vmem [shape: bf16[200,512], index: 0, kind: input, shape index: {}]
  %s1 = inlined_call_operand.vmem [shape: bf16[512,1024], index: 1, kind: input, shape index: {}]
  %s2 = inlined_call_operand.vmem [shape: f32[1,1024], index: 2, kind: input, shape index: {}]
  %s3 = inlined_call_operand.vmem [shape: bf16[200,1024], index: 3, kind: output, shape index: {}]
  %s4 = sld [smem:[#allocation0]]
  $region117: #{conv_decoder_forward.10} parent=0
    _
  %s6 = ssub.s32 1, %s4
  %s7 = scalar_select 0, %s6, %s4
  $region1: #{conv_decoder_forward.10} parent=0
    #allocation2 [shape = 'u8[524288]{0}', space=vmem, size = 0x80000, scoped, tag = 'input window, operand 1']
    #allocation3 [shape = 'u8[204800]{0}', space=vmem, size = 0x32000, scoped, tag = 'output window, operand 0']
    loop: start=0, step=1, limit=6
    $region2: #{conv_decoder_forward.10} parent=1 // loop_pre_header
      _
    $region3: #{conv_decoder_forward.10} parent=1 // loop_header
      %s9 = sphi 0, %s13
      %p10 = scmp.ge.s32.totalorder %s9, 6
      %s16 = sphi 0, %s28
      %s17 = sphi 0, %s24
      %s18 = sphi 0, %s16
      %s19 = sphi 0, %s17
      %s20 = sphi 0, %s18
      %s21 = sphi 0, %s19
      %s31 = sphi 0, %s33
      %s34 = sphi 0, %s31
      %s35 = sphi 0, %s34
      %s51 = sphi 0, %s35
      %s57 = sphi 0, %s59
      %s60 = sphi 0, %s57
      %s61 = sphi 0, %s60
      %s77 = sphi 0, %s61
      %s83 = sphi 0, %s85
      %s86 = sphi 0, %s83
      %s87 = sphi 0, %s86
      %s103 = sphi 0, %s87
      %s111 = sphi 0, %s113
      %s114 = sphi 0, %s111
      %s115 = sphi 0, %s114
      %s131 = sphi 0, %s115
    $region4: #{conv_decoder_forward.10} parent=1 // loop_header_branch
      %12 = sbr.rel (%p10) target = $region8
    $region5: #{conv_decoder_forward.10} parent=1 // loop_body
      %s14 = ssub.s32 %s9, 1
      %s15 = ssub.s32 %s9, 2
      %s22 = sadd.s32 1, %s17
      %p23 = scmp.ge.s32.totalorder %s22, 4
      %s24 = scalar_select %p23, 0, %s22
      %s25 = sadd.s32 1, %s16
      %s26 = scalar_select %p23, %s25, %s16
      %p27 = scmp.ge.s32.totalorder %s26, 1
      %s28 = scalar_select %p27, 0, %s26
      %s29 = ssub.s32 %s16, %s28
      %p30 = scmp.eq.s32.totalorder %s29, 0
      %s32 = sadd.s32 %s31, 1
      %s33 = scalar_select %p30, %s31, %s32
      %p36 = pneg %p30
      %p37 = scmp.eq.s32.totalorder %s9, 3
      %p38 = por %p36, %p37
      %p39 = scmp.ne.s32.totalorder %s31, %s34
      %p40 = scmp.eq.s32.totalorder %s9, 0
      %p41 = por %p39, %p40
      %p42 = scmp.ne.s32.totalorder %s31, %s34
      %p43 = scmp.eq.s32.totalorder %s14, 3
      %p44 = por %p42, %p43
      %p45 = scmp.ne.s32.totalorder %s34, %s35
      %p46 = scmp.eq.s32.totalorder %s14, 0
      %p47 = por %p45, %p46
      %p48 = scmp.ne.s32.totalorder %s34, %s35
      %p49 = scmp.eq.s32.totalorder %s15, 3
      %p50 = por %p48, %p49
      %p52 = scmp.ne.s32.totalorder %s35, %s51
      %p53 = scmp.eq.s32.totalorder %s15, 0
      %p54 = por %p52, %p53
      %s55 = ssub.s32 %s17, %s24
      %p56 = scmp.eq.s32.totalorder %s55, 0
      %s58 = sadd.s32 %s57, 1
      %s59 = scalar_select %p56, %s57, %s58
      %p62 = pneg %p56
      %p63 = scmp.eq.s32.totalorder %s9, 3
      %p64 = por %p62, %p63
      %p65 = scmp.ne.s32.totalorder %s57, %s60
      %p66 = scmp.eq.s32.totalorder %s9, 0
      %p67 = por %p65, %p66
      %p68 = scmp.ne.s32.totalorder %s57, %s60
      %p69 = scmp.eq.s32.totalorder %s14, 3
      %p70 = por %p68, %p69
      %p71 = scmp.ne.s32.totalorder %s60, %s61
      %p72 = scmp.eq.s32.totalorder %s14, 0
      %p73 = por %p71, %p72
      %p74 = scmp.ne.s32.totalorder %s60, %s61
      %p75 = scmp.eq.s32.totalorder %s15, 3
      %p76 = por %p74, %p75
      %p78 = scmp.ne.s32.totalorder %s61, %s77
      %p79 = scmp.eq.s32.totalorder %s15, 0
      %p80 = por %p78, %p79
      %s81 = ssub.s32 %s17, %s24
      %p82 = scmp.eq.s32.totalorder %s81, 0
      %s84 = sadd.s32 %s83, 1
      %s85 = scalar_select %p82, %s83, %s84
      %p88 = pneg %p82
      %p89 = scmp.eq.s32.totalorder %s9, 3
      %p90 = por %p88, %p89
      %p91 = scmp.ne.s32.totalorder %s83, %s86
      %p92 = scmp.eq.s32.totalorder %s9, 0
      %p93 = por %p91, %p92
      %p94 = scmp.ne.s32.totalorder %s83, %s86
      %p95 = scmp.eq.s32.totalorder %s14, 3
      %p96 = por %p94, %p95
      %p97 = scmp.ne.s32.totalorder %s86, %s87
      %p98 = scmp.eq.s32.totalorder %s14, 0
      %p99 = por %p97, %p98
      %p100 = scmp.ne.s32.totalorder %s86, %s87
      %p101 = scmp.eq.s32.totalorder %s15, 3
      %p102 = por %p100, %p101
      %p104 = scmp.ne.s32.totalorder %s87, %s103
      %p105 = scmp.eq.s32.totalorder %s15, 0
      %p106 = por %p104, %p105
      %s107 = ssub.s32 %s16, %s28
      %s108 = ssub.s32 %s17, %s24
      %s109 = sor.u32 %s107, %s108
      %p110 = scmp.eq.s32.totalorder %s109, 0
      %s112 = sadd.s32 %s111, 1
      %s113 = scalar_select %p110, %s111, %s112
      %p116 = pneg %p110
      %p117 = scmp.eq.s32.totalorder %s9, 3
      %p118 = por %p116, %p117
      %p119 = scmp.ne.s32.totalorder %s111, %s114
      %p120 = scmp.eq.s32.totalorder %s9, 0
      %p121 = por %p119, %p120
      %p122 = scmp.ne.s32.totalorder %s111, %s114
      %p123 = scmp.eq.s32.totalorder %s14, 3
      %p124 = por %p122, %p123
      %p125 = scmp.ne.s32.totalorder %s114, %s115
      %p126 = scmp.eq.s32.totalorder %s14, 0
      %p127 = por %p125, %p126
      %p128 = scmp.ne.s32.totalorder %s114, %s115
      %p129 = scmp.eq.s32.totalorder %s15, 3
      %p130 = por %p128, %p129
      %p132 = scmp.ne.s32.totalorder %s115, %s131
      %p133 = scmp.eq.s32.totalorder %s15, 0
      %p134 = por %p132, %p133
      %p135 = scmp.le.s32.totalorder 1, %s9
      %p136 = scmp.lt.s32.totalorder %s9, 5
      %p137 = pnand %p135, %p136
      %p138 = pneg %p137
      // Predicated region
      $region9: #{conv_decoder_forward.10} parent=5 // pred_check
        _
      $region10: #{conv_decoder_forward.10} parent=5 // pred_check_branch
        %140 = sbr.rel (%p137) target = $region12
      $region11: #{conv_decoder_forward.10} parent=5 // pred_region
        %s141 = ssub.s32 %s9, 1
        // Predicated region
        $region13: #{conv_decoder_forward.10} parent=11 // pred_check
          %p142 = pneg %p47
        $region14: #{conv_decoder_forward.10} parent=11 // pred_check_branch
          %144 = sbr.rel (%p142) target = $region16
        $region15: #{conv_decoder_forward.10} parent=11 // pred_region
          %s145 = smul.u32 25, %s18
          %p146 = scmp.lt.s32.totalorder %s145, 24
          %s147 = scalar_select %p146, %s145, 24
          %s148 = smul.addr %s147, 4
          %s149 = smul.addr %s148, 4
          %s150 = scalar_lea.vmem %s0, %s149
          %s151 = smul.u32 25, %s18
        $region16: #{conv_decoder_forward.10} parent=11 // pred_fallthru
          _
      $region12: #{conv_decoder_forward.10} parent=5 // pred_fallthru
        _
      %p152 = scmp.lt.s32.totalorder %s9, 4
      // Predicated region
      $region17: #{conv_decoder_forward.10} parent=5 // pred_check
        %p153 = pneg %p152
      $region18: #{conv_decoder_forward.10} parent=5 // pred_check_branch
        %155 = sbr.rel (%p153) target = $region20
      $region19: #{conv_decoder_forward.10} parent=5 // pred_region
        // Predicated region
        $region21: #{conv_decoder_forward.10} parent=19 // pred_check
          %p156 = pneg %p67
        $region22: #{conv_decoder_forward.10} parent=19 // pred_check_branch
          %158 = sbr.rel (%p156) target = $region24
        $region23: #{conv_decoder_forward.10} parent=19 // pred_region
          %s159 = sand.u32 %s57, 1
          %s160 = sand.u32 %s57, 1
          %s161 = smul.addr %s160, 512
          %s162 = scalar_lea.vmem [#allocation2], %s161
          %s163 = smul.u32 2, %s17
          %s164 = smul.addr %s163, 4
          %s165 = scalar_lea.vmem %s1, %s164
          // Predicated region
          $region25: #{conv_decoder_forward.10} parent=23 // pred_check
            _
          $region26: #{conv_decoder_forward.10} parent=23 // pred_check_branch
            %167 = sbr.rel (0) target = $region28
          $region27: #{conv_decoder_forward.10} parent=23 // pred_region
            // Predicated region
            $region29: #{conv_decoder_forward.10} parent=27 // pred_check
              _
            $region30: #{conv_decoder_forward.10} parent=27 // pred_check_branch
              %169 = sbr.rel (0) target = $region32
            $region31: #{conv_decoder_forward.10} parent=27 // pred_region
              // Predicated region
              $region44: #{conv_decoder_forward.10} parent=31 // pred_check
                _
              $region45: #{conv_decoder_forward.10} parent=31 // pred_check_branch
                %311 = sbr.rel (0) target = $region47
              $region46: #{conv_decoder_forward.10} parent=31 // pred_region
                loop: start=0, step=1, limit=1
                $region48: #{conv_decoder_forward.10} parent=46 // loop_pre_header
                  _
                $region49: #{conv_decoder_forward.10} parent=46 // loop_header
                  %s313 = sphi 0, %s317
                  %p314 = scmp.ge.s32.totalorder %s313, 1
                  %s318 = sphi %s165, %s165
                  %s319 = sphi %s162, %s162
                $region50: #{conv_decoder_forward.10} parent=46 // loop_header_branch
                  %316 = sbr.rel (%p314) target = $region54
                $region51: #{conv_decoder_forward.10} parent=46 // loop_body
                  %v320 = vld [vmem:[%s318] sm:$0xff]
                  %321 = vst [vmem:[%s319] sm:$0xff] %v320
                  %v322 = vld [vmem:[%s318 + $0x20] sm:$0xff]
                  %323 = vst [vmem:[%s319 + $0x8] sm:$0xff] %v322
                  %v324 = vld [vmem:[%s318 + $0x40] sm:$0xff]
                  %325 = vst [vmem:[%s319 + $0x10] sm:$0xff] %v324
                  %v326 = vld [vmem:[%s318 + $0x60] sm:$0xff]
                  %327 = vst [vmem:[%s319 + $0x18] sm:$0xff] %v326
                  %v328 = vld [vmem:[%s318 + $0x80] sm:$0xff]
                  %329 = vst [vmem:[%s319 + $0x20] sm:$0xff] %v328
                  %v330 = vld [vmem:[%s318 + $0xa0] sm:$0xff]
                  %331 = vst [vmem:[%s319 + $0x28] sm:$0xff] %v330
                  %v332 = vld [vmem:[%s318 + $0xc0] sm:$0xff]
                  %333 = vst [vmem:[%s319 + $0x30] sm:$0xff] %v332
                  %v334 = vld [vmem:[%s318 + $0xe0] sm:$0xff]
                  %335 = vst [vmem:[%s319 + $0x38] sm:$0xff] %v334
                  %v336 = vld [vmem:[%s318 + $0x100] sm:$0xff]
                  %337 = vst [vmem:[%s319 + $0x40] sm:$0xff] %v336
                  %v338 = vld [vmem:[%s318 + $0x120] sm:$0xff]
                  %339 = vst [vmem:[%s319 + $0x48] sm:$0xff] %v338
                  %v340 = vld [vmem:[%s318 + $0x140] sm:$0xff]
                  %341 = vst [vmem:[%s319 + $0x50] sm:$0xff] %v340
                  %v342 = vld [vmem:[%s318 + $0x160] sm:$0xff]
                  %343 = vst [vmem:[%s319 + $0x58] sm:$0xff] %v342
                  %v344 = vld [vmem:[%s318 + $0x180] sm:$0xff]
                  %345 = vst [vmem:[%s319 + $0x60] sm:$0xff] %v344
                  %v346 = vld [vmem:[%s318 + $0x1a0] sm:$0xff]
                  %347 = vst [vmem:[%s319 + $0x68] sm:$0xff] %v346
                  %v348 = vld [vmem:[%s318 + $0x1c0] sm:$0xff]
                  %349 = vst [vmem:[%s319 + $0x70] sm:$0xff] %v348
                  %v350 = vld [vmem:[%s318 + $0x1e0] sm:$0xff]
                  %351 = vst [vmem:[%s319 + $0x78] sm:$0xff] %v350
                  %v352 = vld [vmem:[%s318 + $0x200] sm:$0xff]
                  %353 = vst [vmem:[%s319 + $0x80] sm:$0xff] %v352
                  %v354 = vld [vmem:[%s318 + $0x220] sm:$0xff]
                  %355 = vst [vmem:[%s319 + $0x88] sm:$0xff] %v354
                  %v356 = vld [vmem:[%s318 + $0x240] sm:$0xff]
                  %357 = vst [vmem:[%s319 + $0x90] sm:$0xff] %v356
                  %v358 = vld [vmem:[%s318 + $0x260] sm:$0xff]
                  %359 = vst [vmem:[%s319 + $0x98] sm:$0xff] %v358
                  %v360 = vld [vmem:[%s318 + $0x280] sm:$0xff]
                  %361 = vst [vmem:[%s319 + $0xa0] sm:$0xff] %v360
                  %v362 = vld [vmem:[%s318 + $0x2a0] sm:$0xff]
                  %363 = vst [vmem:[%s319 + $0xa8] sm:$0xff] %v362
                  %v364 = vld [vmem:[%s318 + $0x2c0] sm:$0xff]
                  %365 = vst [vmem:[%s319 + $0xb0] sm:$0xff] %v364
                  %v366 = vld [vmem:[%s318 + $0x2e0] sm:$0xff]
                  %367 = vst [vmem:[%s319 + $0xb8] sm:$0xff] %v366
                  %v368 = vld [vmem:[%s318 + $0x300] sm:$0xff]
                  %369 = vst [vmem:[%s319 + $0xc0] sm:$0xff] %v368
                  %v370 = vld [vmem:[%s318 + $0x320] sm:$0xff]
                  %371 = vst [vmem:[%s319 + $0xc8] sm:$0xff] %v370
                  %v372 = vld [vmem:[%s318 + $0x340] sm:$0xff]
                  %373 = vst [vmem:[%s319 + $0xd0] sm:$0xff] %v372
                  %v374 = vld [vmem:[%s318 + $0x360] sm:$0xff]
                  %375 = vst [vmem:[%s319 + $0xd8] sm:$0xff] %v374
                  %v376 = vld [vmem:[%s318 + $0x380] sm:$0xff]
                  %377 = vst [vmem:[%s319 + $0xe0] sm:$0xff] %v376
                  %v378 = vld [vmem:[%s318 + $0x3a0] sm:$0xff]
                  %379 = vst [vmem:[%s319 + $0xe8] sm:$0xff] %v378
                  %v380 = vld [vmem:[%s318 + $0x3c0] sm:$0xff]
                  %381 = vst [vmem:[%s319 + $0xf0] sm:$0xff] %v380
                  %v382 = vld [vmem:[%s318 + $0x3e0] sm:$0xff]
                  %383 = vst [vmem:[%s319 + $0xf8] sm:$0xff] %v382
                  %v384 = vld [vmem:[%s318 + $0x400] sm:$0xff]
                  %385 = vst [vmem:[%s319 + $0x100] sm:$0xff] %v384
                  %v386 = vld [vmem:[%s318 + $0x420] sm:$0xff]
                  %387 = vst [vmem:[%s319 + $0x108] sm:$0xff] %v386
                  %v388 = vld [vmem:[%s318 + $0x440] sm:$0xff]
                  %389 = vst [vmem:[%s319 + $0x110] sm:$0xff] %v388
                  %v390 = vld [vmem:[%s318 + $0x460] sm:$0xff]
                  %391 = vst [vmem:[%s319 + $0x118] sm:$0xff] %v390
                  %v392 = vld [vmem:[%s318 + $0x480] sm:$0xff]
                  %393 = vst [vmem:[%s319 + $0x120] sm:$0xff] %v392
                  %v394 = vld [vmem:[%s318 + $0x4a0] sm:$0xff]
                  %395 = vst [vmem:[%s319 + $0x128] sm:$0xff] %v394
                  %v396 = vld [vmem:[%s318 + $0x4c0] sm:$0xff]
                  %397 = vst [vmem:[%s319 + $0x130] sm:$0xff] %v396
                  %v398 = vld [vmem:[%s318 + $0x4e0] sm:$0xff]
                  %399 = vst [vmem:[%s319 + $0x138] sm:$0xff] %v398
                  %v400 = vld [vmem:[%s318 + $0x500] sm:$0xff]
                  %401 = vst [vmem:[%s319 + $0x140] sm:$0xff] %v400
                  %v402 = vld [vmem:[%s318 + $0x520] sm:$0xff]
                  %403 = vst [vmem:[%s319 + $0x148] sm:$0xff] %v402
                  %v404 = vld [vmem:[%s318 + $0x540] sm:$0xff]
                  %405 = vst [vmem:[%s319 + $0x150] sm:$0xff] %v404
                  %v406 = vld [vmem:[%s318 + $0x560] sm:$0xff]
                  %407 = vst [vmem:[%s319 + $0x158] sm:$0xff] %v406
                  %v408 = vld [vmem:[%s318 + $0x580] sm:$0xff]
                  %409 = vst [vmem:[%s319 + $0x160] sm:$0xff] %v408
                  %v410 = vld [vmem:[%s318 + $0x5a0] sm:$0xff]
                  %411 = vst [vmem:[%s319 + $0x168] sm:$0xff] %v410
                  %v412 = vld [vmem:[%s318 + $0x5c0] sm:$0xff]
                  %413 = vst [vmem:[%s319 + $0x170] sm:$0xff] %v412
                  %v414 = vld [vmem:[%s318 + $0x5e0] sm:$0xff]
                  %415 = vst [vmem:[%s319 + $0x178] sm:$0xff] %v414
                  %v416 = vld [vmem:[%s318 + $0x600] sm:$0xff]
                  %417 = vst [vmem:[%s319 + $0x180] sm:$0xff] %v416
                  %v418 = vld [vmem:[%s318 + $0x620] sm:$0xff]
                  %419 = vst [vmem:[%s319 + $0x188] sm:$0xff] %v418
                  %v420 = vld [vmem:[%s318 + $0x640] sm:$0xff]
                  %421 = vst [vmem:[%s319 + $0x190] sm:$0xff] %v420
                  %v422 = vld [vmem:[%s318 + $0x660] sm:$0xff]
                  %423 = vst [vmem:[%s319 + $0x198] sm:$0xff] %v422
                  %v424 = vld [vmem:[%s318 + $0x680] sm:$0xff]
                  %425 = vst [vmem:[%s319 + $0x1a0] sm:$0xff] %v424
                  %v426 = vld [vmem:[%s318 + $0x6a0] sm:$0xff]
                  %427 = vst [vmem:[%s319 + $0x1a8] sm:$0xff] %v426
                  %v428 = vld [vmem:[%s318 + $0x6c0] sm:$0xff]
                  %429 = vst [vmem:[%s319 + $0x1b0] sm:$0xff] %v428
                  %v430 = vld [vmem:[%s318 + $0x6e0] sm:$0xff]
                  %431 = vst [vmem:[%s319 + $0x1b8] sm:$0xff] %v430
                  %v432 = vld [vmem:[%s318 + $0x700] sm:$0xff]
                  %433 = vst [vmem:[%s319 + $0x1c0] sm:$0xff] %v432
                  %v434 = vld [vmem:[%s318 + $0x720] sm:$0xff]
                  %435 = vst [vmem:[%s319 + $0x1c8] sm:$0xff] %v434
                  %v436 = vld [vmem:[%s318 + $0x740] sm:$0xff]
                  %437 = vst [vmem:[%s319 + $0x1d0] sm:$0xff] %v436
                  %v438 = vld [vmem:[%s318 + $0x760] sm:$0xff]
                  %439 = vst [vmem:[%s319 + $0x1d8] sm:$0xff] %v438
                  %v440 = vld [vmem:[%s318 + $0x780] sm:$0xff]
                  %441 = vst [vmem:[%s319 + $0x1e0] sm:$0xff] %v440
                  %v442 = vld [vmem:[%s318 + $0x7a0] sm:$0xff]
                  %443 = vst [vmem:[%s319 + $0x1e8] sm:$0xff] %v442
                  %v444 = vld [vmem:[%s318 + $0x7c0] sm:$0xff]
                  %445 = vst [vmem:[%s319 + $0x1f0] sm:$0xff] %v444
                  %v446 = vld [vmem:[%s318 + $0x7e0] sm:$0xff]
                  %447 = vst [vmem:[%s319 + $0x1f8] sm:$0xff] %v446
                $region52: #{conv_decoder_forward.10} parent=46 // loop_footer
                  %s317 = sadd.s32 1, %s313
                $region53: #{conv_decoder_forward.10} parent=46 // loop_footer_branch
                  %312 = sbr.rel target = $region49
                $region54: #{conv_decoder_forward.10} parent=46 // loop_exit
                  _
              $region47: #{conv_decoder_forward.10} parent=31 // pred_fallthru
                _
              // Predicated region
              $region55: #{conv_decoder_forward.10} parent=31 // pred_check
                _
              $region56: #{conv_decoder_forward.10} parent=31 // pred_check_branch
                %449 = sbr.rel target = $region58
              $region57: #{conv_decoder_forward.10} parent=31 // pred_region
                _
              $region58: #{conv_decoder_forward.10} parent=31 // pred_fallthru
                _
            $region32: #{conv_decoder_forward.10} parent=27 // pred_fallthru
              _
            // Predicated region
            $region33: #{conv_decoder_forward.10} parent=27 // pred_check
              _
            $region34: #{conv_decoder_forward.10} parent=27 // pred_check_branch
              %171 = sbr.rel target = $region36
            $region35: #{conv_decoder_forward.10} parent=27 // pred_region
              %s173 = ssub.s32 256, 1
              loop: start=0, step=1, limit=1
              $region37: #{conv_decoder_forward.10} parent=35 // loop_pre_header
                _
              $region38: #{conv_decoder_forward.10} parent=35 // loop_header
                %s175 = sphi 0, %s179
                %p176 = scmp.ge.s32.totalorder %s175, 1
                %s180 = sphi %s165, %s165
                %s181 = sphi %s162, %s162
              $region39: #{conv_decoder_forward.10} parent=35 // loop_header_branch
                %178 = sbr.rel (%p176) target = $region43
              $region40: #{conv_decoder_forward.10} parent=35 // loop_body
                %v182 = vld [vmem:[%s180] sm:%s173]
                %183 = vst [vmem:[%s181] sm:%s173] %v182
                %v184 = vld [vmem:[%s180 + $0x20] sm:%s173]
                %185 = vst [vmem:[%s181 + $0x8] sm:%s173] %v184
                %v186 = vld [vmem:[%s180 + $0x40] sm:%s173]
                %187 = vst [vmem:[%s181 + $0x10] sm:%s173] %v186
                %v188 = vld [vmem:[%s180 + $0x60] sm:%s173]
                %189 = vst [vmem:[%s181 + $0x18] sm:%s173] %v188
                %v190 = vld [vmem:[%s180 + $0x80] sm:%s173]
                %191 = vst [vmem:[%s181 + $0x20] sm:%s173] %v190
                %v192 = vld [vmem:[%s180 + $0xa0] sm:%s173]
                %193 = vst [vmem:[%s181 + $0x28] sm:%s173] %v192
                %v194 = vld [vmem:[%s180 + $0xc0] sm:%s173]
                %195 = vst [vmem:[%s181 + $0x30] sm:%s173] %v194
                %v196 = vld [vmem:[%s180 + $0xe0] sm:%s173]
                %197 = vst [vmem:[%s181 + $0x38] sm:%s173] %v196
                %v198 = vld [vmem:[%s180 + $0x100] sm:%s173]
                %199 = vst [vmem:[%s181 + $0x40] sm:%s173] %v198
                %v200 = vld [vmem:[%s180 + $0x120] sm:%s173]
                %201 = vst [vmem:[%s181 + $0x48] sm:%s173] %v200
                %v202 = vld [vmem:[%s180 + $0x140] sm:%s173]
                %203 = vst [vmem:[%s181 + $0x50] sm:%s173] %v202
                %v204 = vld [vmem:[%s180 + $0x160] sm:%s173]
                %205 = vst [vmem:[%s181 + $0x58] sm:%s173] %v204
                %v206 = vld [vmem:[%s180 + $0x180] sm:%s173]
                %207 = vst [vmem:[%s181 + $0x60] sm:%s173] %v206
                %v208 = vld [vmem:[%s180 + $0x1a0] sm:%s173]
                %209 = vst [vmem:[%s181 + $0x68] sm:%s173] %v208
                %v210 = vld [vmem:[%s180 + $0x1c0] sm:%s173]
                %211 = vst [vmem:[%s181 + $0x70] sm:%s173] %v210
                %v212 = vld [vmem:[%s180 + $0x1e0] sm:%s173]
                %213 = vst [vmem:[%s181 + $0x78] sm:%s173] %v212
                %v214 = vld [vmem:[%s180 + $0x200] sm:%s173]
                %215 = vst [vmem:[%s181 + $0x80] sm:%s173] %v214
                %v216 = vld [vmem:[%s180 + $0x220] sm:%s173]
                %217 = vst [vmem:[%s181 + $0x88] sm:%s173] %v216
                %v218 = vld [vmem:[%s180 + $0x240] sm:%s173]
                %219 = vst [vmem:[%s181 + $0x90] sm:%s173] %v218
                %v220 = vld [vmem:[%s180 + $0x260] sm:%s173]
                %221 = vst [vmem:[%s181 + $0x98] sm:%s173] %v220
                %v222 = vld [vmem:[%s180 + $0x280] sm:%s173]
                %223 = vst [vmem:[%s181 + $0xa0] sm:%s173] %v222
                %v224 = vld [vmem:[%s180 + $0x2a0] sm:%s173]
                %225 = vst [vmem:[%s181 + $0xa8] sm:%s173] %v224
                %v226 = vld [vmem:[%s180 + $0x2c0] sm:%s173]
                %227 = vst [vmem:[%s181 + $0xb0] sm:%s173] %v226
                %v228 = vld [vmem:[%s180 + $0x2e0] sm:%s173]
                %229 = vst [vmem:[%s181 + $0xb8] sm:%s173] %v228
                %v230 = vld [vmem:[%s180 + $0x300] sm:%s173]
                %231 = vst [vmem:[%s181 + $0xc0] sm:%s173] %v230
                %v232 = vld [vmem:[%s180 + $0x320] sm:%s173]
                %233 = vst [vmem:[%s181 + $0xc8] sm:%s173] %v232
                %v234 = vld [vmem:[%s180 + $0x340] sm:%s173]
                %235 = vst [vmem:[%s181 + $0xd0] sm:%s173] %v234
                %v236 = vld [vmem:[%s180 + $0x360] sm:%s173]
                %237 = vst [vmem:[%s181 + $0xd8] sm:%s173] %v236
                %v238 = vld [vmem:[%s180 + $0x380] sm:%s173]
                %239 = vst [vmem:[%s181 + $0xe0] sm:%s173] %v238
                %v240 = vld [vmem:[%s180 + $0x3a0] sm:%s173]
                %241 = vst [vmem:[%s181 + $0xe8] sm:%s173] %v240
                %v242 = vld [vmem:[%s180 + $0x3c0] sm:%s173]
                %243 = vst [vmem:[%s181 + $0xf0] sm:%s173] %v242
                %v244 = vld [vmem:[%s180 + $0x3e0] sm:%s173]
                %245 = vst [vmem:[%s181 + $0xf8] sm:%s173] %v244
                %v246 = vld [vmem:[%s180 + $0x400] sm:%s173]
                %247 = vst [vmem:[%s181 + $0x100] sm:%s173] %v246
                %v248 = vld [vmem:[%s180 + $0x420] sm:%s173]
                %249 = vst [vmem:[%s181 + $0x108] sm:%s173] %v248
                %v250 = vld [vmem:[%s180 + $0x440] sm:%s173]
                %251 = vst [vmem:[%s181 + $0x110] sm:%s173] %v250
                %v252 = vld [vmem:[%s180 + $0x460] sm:%s173]
                %253 = vst [vmem:[%s181 + $0x118] sm:%s173] %v252
                %v254 = vld [vmem:[%s180 + $0x480] sm:%s173]
                %255 = vst [vmem:[%s181 + $0x120] sm:%s173] %v254
                %v256 = vld [vmem:[%s180 + $0x4a0] sm:%s173]
                %257 = vst [vmem:[%s181 + $0x128] sm:%s173] %v256
                %v258 = vld [vmem:[%s180 + $0x4c0] sm:%s173]
                %259 = vst [vmem:[%s181 + $0x130] sm:%s173] %v258
                %v260 = vld [vmem:[%s180 + $0x4e0] sm:%s173]
                %261 = vst [vmem:[%s181 + $0x138] sm:%s173] %v260
                %v262 = vld [vmem:[%s180 + $0x500] sm:%s173]
                %263 = vst [vmem:[%s181 + $0x140] sm:%s173] %v262
                %v264 = vld [vmem:[%s180 + $0x520] sm:%s173]
                %265 = vst [vmem:[%s181 + $0x148] sm:%s173] %v264
                %v266 = vld [vmem:[%s180 + $0x540] sm:%s173]
                %267 = vst [vmem:[%s181 + $0x150] sm:%s173] %v266
                %v268 = vld [vmem:[%s180 + $0x560] sm:%s173]
                %269 = vst [vmem:[%s181 + $0x158] sm:%s173] %v268
                %v270 = vld [vmem:[%s180 + $0x580] sm:%s173]
                %271 = vst [vmem:[%s181 + $0x160] sm:%s173] %v270
                %v272 = vld [vmem:[%s180 + $0x5a0] sm:%s173]
                %273 = vst [vmem:[%s181 + $0x168] sm:%s173] %v272
                %v274 = vld [vmem:[%s180 + $0x5c0] sm:%s173]
                %275 = vst [vmem:[%s181 + $0x170] sm:%s173] %v274
                %v276 = vld [vmem:[%s180 + $0x5e0] sm:%s173]
                %277 = vst [vmem:[%s181 + $0x178] sm:%s173] %v276
                %v278 = vld [vmem:[%s180 + $0x600] sm:%s173]
                %279 = vst [vmem:[%s181 + $0x180] sm:%s173] %v278
                %v280 = vld [vmem:[%s180 + $0x620] sm:%s173]
                %281 = vst [vmem:[%s181 + $0x188] sm:%s173] %v280
                %v282 = vld [vmem:[%s180 + $0x640] sm:%s173]
                %283 = vst [vmem:[%s181 + $0x190] sm:%s173] %v282
                %v284 = vld [vmem:[%s180 + $0x660] sm:%s173]
                %285 = vst [vmem:[%s181 + $0x198] sm:%s173] %v284
                %v286 = vld [vmem:[%s180 + $0x680] sm:%s173]
                %287 = vst [vmem:[%s181 + $0x1a0] sm:%s173] %v286
                %v288 = vld [vmem:[%s180 + $0x6a0] sm:%s173]
                %289 = vst [vmem:[%s181 + $0x1a8] sm:%s173] %v288
                %v290 = vld [vmem:[%s180 + $0x6c0] sm:%s173]
                %291 = vst [vmem:[%s181 + $0x1b0] sm:%s173] %v290
                %v292 = vld [vmem:[%s180 + $0x6e0] sm:%s173]
                %293 = vst [vmem:[%s181 + $0x1b8] sm:%s173] %v292
                %v294 = vld [vmem:[%s180 + $0x700] sm:%s173]
                %295 = vst [vmem:[%s181 + $0x1c0] sm:%s173] %v294
                %v296 = vld [vmem:[%s180 + $0x720] sm:%s173]
                %297 = vst [vmem:[%s181 + $0x1c8] sm:%s173] %v296
                %v298 = vld [vmem:[%s180 + $0x740] sm:%s173]
                %299 = vst [vmem:[%s181 + $0x1d0] sm:%s173] %v298
                %v300 = vld [vmem:[%s180 + $0x760] sm:%s173]
                %301 = vst [vmem:[%s181 + $0x1d8] sm:%s173] %v300
                %v302 = vld [vmem:[%s180 + $0x780] sm:%s173]
                %303 = vst [vmem:[%s181 + $0x1e0] sm:%s173] %v302
                %v304 = vld [vmem:[%s180 + $0x7a0] sm:%s173]
                %305 = vst [vmem:[%s181 + $0x1e8] sm:%s173] %v304
                %v306 = vld [vmem:[%s180 + $0x7c0] sm:%s173]
                %307 = vst [vmem:[%s181 + $0x1f0] sm:%s173] %v306
                %v308 = vld [vmem:[%s180 + $0x7e0] sm:%s173]
                %309 = vst [vmem:[%s181 + $0x1f8] sm:%s173] %v308
              $region41: #{conv_decoder_forward.10} parent=35 // loop_footer
                %s179 = sadd.s32 1, %s175
              $region42: #{conv_decoder_forward.10} parent=35 // loop_footer_branch
                %174 = sbr.rel target = $region38
              $region43: #{conv_decoder_forward.10} parent=35 // loop_exit
                _
            $region36: #{conv_decoder_forward.10} parent=27 // pred_fallthru
              _
          $region28: #{conv_decoder_forward.10} parent=23 // pred_fallthru
            _
          %450 = vnop
        $region24: #{conv_decoder_forward.10} parent=19 // pred_fallthru
          _
        // Predicated region
        $region59: #{conv_decoder_forward.10} parent=19 // pred_check
          %p451 = pneg %p93
        $region60: #{conv_decoder_forward.10} parent=19 // pred_check_branch
          %453 = sbr.rel (%p451) target = $region62
        $region61: #{conv_decoder_forward.10} parent=19 // pred_region
          %s454 = smul.u32 2, %s17
          %p455 = scmp.lt.s32.totalorder %s454, 7
          %s456 = scalar_select %p455, %s454, 7
          %s457 = scalar_lea.vmem %s2, %s456
          %s458 = smul.u32 2, %s17
        $region62: #{conv_decoder_forward.10} parent=19 // pred_fallthru
          _
      $region20: #{conv_decoder_forward.10} parent=5 // pred_fallthru
        _
      %p459 = scmp.le.s32.totalorder 1, %s9
      %p460 = scmp.lt.s32.totalorder %s9, 5
      %p461 = pnand %p459, %p460
      %p462 = pneg %p461
      // Predicated region
      $region63: #{conv_decoder_forward.10} parent=5 // pred_check
        _
      $region64: #{conv_decoder_forward.10} parent=5 // pred_check_branch
        %464 = sbr.rel (%p461) target = $region66
      $region65: #{conv_decoder_forward.10} parent=5 // pred_region
        %s465 = ssub.s32 %s9, 1
        %s466 = sand.u32 %s60, 1
        %s467 = sand.u32 %s60, 1
        %s468 = smul.addr %s467, 512
        %s469 = scalar_lea.vmem [#allocation2], %s468
        // Predicated region
        $region67: #{conv_decoder_forward.10} parent=65 // pred_check
          %p470 = pneg %p73
        $region68: #{conv_decoder_forward.10} parent=65 // pred_check_branch
          %472 = sbr.rel (%p470) target = $region70
        $region69: #{conv_decoder_forward.10} parent=65 // pred_region
          _
        $region70: #{conv_decoder_forward.10} parent=65 // pred_fallthru
          _
        %s473 = smul.u32 25, %s18
        %p474 = scmp.lt.s32.totalorder %s473, 24
        %s475 = scalar_select %p474, %s473, 24
        %s476 = smul.addr %s475, 4
        %s477 = smul.addr %s476, 4
        %s478 = scalar_lea.vmem %s0, %s477
        %p479 = pneg %p47
        %p480 = pneg %p44
        %s481 = sand.u32 %s60, 1
        %s482 = sand.u32 %s60, 1
        %s483 = smul.addr %s482, 512
        %s484 = scalar_lea.vmem [#allocation2], %s483
        %p485 = pneg %p73
        %p486 = pneg %p70
        %s487 = smul.u32 2, %s19
        %p488 = scmp.lt.s32.totalorder %s487, 7
        %s489 = scalar_select %p488, %s487, 7
        %s490 = scalar_lea.vmem %s2, %s489
        %p491 = pneg %p99
        %p492 = pneg %p96
        %p493 = pneg %p127
        %p494 = pneg %p124
        %s495 = sand.u32 %s114, 1
        %s496 = sand.u32 %s114, 1
        %s497 = smul.addr %s496, 200
        %s498 = scalar_lea.vmem [#allocation3], %s497
        %s499 = smul.u32 25, %s18
        %p500 = scmp.lt.s32.totalorder %s499, 24
        %s501 = scalar_select %p500, %s499, 24
        %s502 = smul.addr %s501, 4
        %s503 = smul.addr %s502, 4
        %s504 = scalar_lea.vmem %s0, %s503
        %s505 = smul.u32 25, %s18
        %s506 = smul.u32 2, %s19
        %s507 = smul.u32 2, %s19
        %p508 = scmp.lt.s32.totalorder %s507, 7
        %s509 = scalar_select %p508, %s507, 7
        %s510 = scalar_lea.vmem %s2, %s509
        %s511 = smul.u32 2, %s19
        %s512 = smul.u32 25, %s18
        %s513 = smul.u32 2, %s19
        %v514 = vld [vmem:[%s504] sm:$0xff]
        %v515 = vld [vmem:[%s504 + $0x8] sm:$0xff]
        %v516 = vld [vmem:[%s504 + $0x10] sm:$0xff]
        %v517 = vld [vmem:[%s504 + $0x18] sm:$0xff]
        %v518 = vld [vmem:[%s504 + $0x20] sm:$0xff]
        %v519 = vld [vmem:[%s504 + $0x28] sm:$0xff]
        %v520 = vld [vmem:[%s504 + $0x30] sm:$0xff]
        %v521 = vld [vmem:[%s504 + $0x38] sm:$0xff]
        %v522 = vld [vmem:[%s504 + $0x40] sm:$0xff]
        %v523 = vld [vmem:[%s504 + $0x48] sm:$0xff]
        %v524 = vld [vmem:[%s504 + $0x50] sm:$0xff]
        %v525 = vld [vmem:[%s504 + $0x58] sm:$0xff]
        %v526 = vld [vmem:[%s504 + $0x60] sm:$0xff]
        %v527 = vld [vmem:[%s504 + $0x68] sm:$0xff]
        %v528 = vld [vmem:[%s504 + $0x70] sm:$0xff]
        %v529 = vld [vmem:[%s504 + $0x78] sm:$0xff]
        %v530 = vld [vmem:[%s504 + $0x80] sm:$0xff]
        %v531 = vld [vmem:[%s504 + $0x88] sm:$0xff]
        %v532 = vld [vmem:[%s504 + $0x90] sm:$0xff]
        %v533 = vld [vmem:[%s504 + $0x98] sm:$0xff]
        %v534 = vld [vmem:[%s504 + $0xa0] sm:$0xff]
        %v535 = vld [vmem:[%s504 + $0xa8] sm:$0xff]
        %v536 = vld [vmem:[%s504 + $0xb0] sm:$0xff]
        %v537 = vld [vmem:[%s504 + $0xb8] sm:$0xff]
        %v538 = vld [vmem:[%s504 + $0xc0] sm:$0xff]
        %v539 = vld [vmem:[%s504 + $0xc8] sm:$0xff]
        %v540 = vld [vmem:[%s504 + $0xd0] sm:$0xff]
        %v541 = vld [vmem:[%s504 + $0xd8] sm:$0xff]
        %v542 = vld [vmem:[%s504 + $0xe0] sm:$0xff]
        %v543 = vld [vmem:[%s504 + $0xe8] sm:$0xff]
        %v544 = vld [vmem:[%s504 + $0xf0] sm:$0xff]
        %v545 = vld [vmem:[%s504 + $0xf8] sm:$0xff]
        %v546 = vld [vmem:[%s504 + $0x100] sm:$0xff]
        %v547 = vld [vmem:[%s504 + $0x108] sm:$0xff]
        %v548 = vld [vmem:[%s504 + $0x110] sm:$0xff]
        %v549 = vld [vmem:[%s504 + $0x118] sm:$0xff]
        %v550 = vld [vmem:[%s504 + $0x120] sm:$0xff]
        %v551 = vld [vmem:[%s504 + $0x128] sm:$0xff]
        %v552 = vld [vmem:[%s504 + $0x130] sm:$0xff]
        %v553 = vld [vmem:[%s504 + $0x138] sm:$0xff]
        %v554 = vld [vmem:[%s504 + $0x140] sm:$0xff]
        %v555 = vld [vmem:[%s504 + $0x148] sm:$0xff]
        %v556 = vld [vmem:[%s504 + $0x150] sm:$0xff]
        %v557 = vld [vmem:[%s504 + $0x158] sm:$0xff]
        %v558 = vld [vmem:[%s504 + $0x160] sm:$0xff]
        %v559 = vld [vmem:[%s504 + $0x168] sm:$0xff]
        %v560 = vld [vmem:[%s504 + $0x170] sm:$0xff]
        %v561 = vld [vmem:[%s504 + $0x178] sm:$0xff]
        %v562 = vld [vmem:[%s504 + $0x180] sm:$0xff]
        %v563 = vld [vmem:[%s504 + $0x188] sm:$0xff]
        %v564 = vld [vmem:[%s469] sm:$0xff]
        %v565 = vld [vmem:[%s469 + $0x8] sm:$0xff]
        %v566 = vld [vmem:[%s469 + $0x10] sm:$0xff]
        %v567 = vld [vmem:[%s469 + $0x18] sm:$0xff]
        %v568 = vld [vmem:[%s469 + $0x20] sm:$0xff]
        %v569 = vld [vmem:[%s469 + $0x28] sm:$0xff]
        %v570 = vld [vmem:[%s469 + $0x30] sm:$0xff]
        %v571 = vld [vmem:[%s469 + $0x38] sm:$0xff]
        %v572 = vld [vmem:[%s469 + $0x40] sm:$0xff]
        %v573 = vld [vmem:[%s469 + $0x48] sm:$0xff]
        %v574 = vld [vmem:[%s469 + $0x50] sm:$0xff]
        %v575 = vld [vmem:[%s469 + $0x58] sm:$0xff]
        %v576 = vld [vmem:[%s469 + $0x60] sm:$0xff]
        %v577 = vld [vmem:[%s469 + $0x68] sm:$0xff]
        %v578 = vld [vmem:[%s469 + $0x70] sm:$0xff]
        %v579 = vld [vmem:[%s469 + $0x78] sm:$0xff]
        %v580 = vld [vmem:[%s469 + $0x80] sm:$0xff]
        %v581 = vld [vmem:[%s469 + $0x88] sm:$0xff]
        %v582 = vld [vmem:[%s469 + $0x90] sm:$0xff]
        %v583 = vld [vmem:[%s469 + $0x98] sm:$0xff]
        %v584 = vld [vmem:[%s469 + $0xa0] sm:$0xff]
        %v585 = vld [vmem:[%s469 + $0xa8] sm:$0xff]
        %v586 = vld [vmem:[%s469 + $0xb0] sm:$0xff]
        %v587 = vld [vmem:[%s469 + $0xb8] sm:$0xff]
        %v588 = vld [vmem:[%s469 + $0xc0] sm:$0xff]
        %v589 = vld [vmem:[%s469 + $0xc8] sm:$0xff]
        %v590 = vld [vmem:[%s469 + $0xd0] sm:$0xff]
        %v591 = vld [vmem:[%s469 + $0xd8] sm:$0xff]
        %v592 = vld [vmem:[%s469 + $0xe0] sm:$0xff]
        %v593 = vld [vmem:[%s469 + $0xe8] sm:$0xff]
        %v594 = vld [vmem:[%s469 + $0xf0] sm:$0xff]
        %v595 = vld [vmem:[%s469 + $0xf8] sm:$0xff]
        %v596 = vld [vmem:[%s469 + $0x100] sm:$0xff]
        %v597 = vld [vmem:[%s469 + $0x108] sm:$0xff]
        %v598 = vld [vmem:[%s469 + $0x110] sm:$0xff]
        %v599 = vld [vmem:[%s469 + $0x118] sm:$0xff]
        %v600 = vld [vmem:[%s469 + $0x120] sm:$0xff]
        %v601 = vld [vmem:[%s469 + $0x128] sm:$0xff]
        %v602 = vld [vmem:[%s469 + $0x130] sm:$0xff]
        %v603 = vld [vmem:[%s469 + $0x138] sm:$0xff]
        %v604 = vld [vmem:[%s469 + $0x140] sm:$0xff]
        %v605 = vld [vmem:[%s469 + $0x148] sm:$0xff]
        %v606 = vld [vmem:[%s469 + $0x150] sm:$0xff]
        %v607 = vld [vmem:[%s469 + $0x158] sm:$0xff]
        %v608 = vld [vmem:[%s469 + $0x160] sm:$0xff]
        %v609 = vld [vmem:[%s469 + $0x168] sm:$0xff]
        %v610 = vld [vmem:[%s469 + $0x170] sm:$0xff]
        %v611 = vld [vmem:[%s469 + $0x178] sm:$0xff]
        %v612 = vld [vmem:[%s469 + $0x180] sm:$0xff]
        %v613 = vld [vmem:[%s469 + $0x188] sm:$0xff]
        %v614 = vld [vmem:[%s469 + $0x190] sm:$0xff]
        %v615 = vld [vmem:[%s469 + $0x198] sm:$0xff]
        %v616 = vld [vmem:[%s469 + $0x1a0] sm:$0xff]
        %v617 = vld [vmem:[%s469 + $0x1a8] sm:$0xff]
        %v618 = vld [vmem:[%s469 + $0x1b0] sm:$0xff]
        %v619 = vld [vmem:[%s469 + $0x1b8] sm:$0xff]
        %v620 = vld [vmem:[%s469 + $0x1c0] sm:$0xff]
        %v621 = vld [vmem:[%s469 + $0x1c8] sm:$0xff]
        %v622 = vld [vmem:[%s469 + $0x1d0] sm:$0xff]
        %v623 = vld [vmem:[%s469 + $0x1d8] sm:$0xff]
        %v624 = vld [vmem:[%s469 + $0x1e0] sm:$0xff]
        %v625 = vld [vmem:[%s469 + $0x1e8] sm:$0xff]
        %v626 = vld [vmem:[%s469 + $0x1f0] sm:$0xff]
        %v627 = vld [vmem:[%s469 + $0x1f8] sm:$0xff]
        %v628 = vld [vmem:[%s510] sm:$0x3]
        %v630 = vperm.slane %v628, 0
        %v631 = vperm.slane %v628, 1
        %v684 = vunpack.c.l.b16 %v514
        %v685 = vunpack.c.h.b16 %v514
        %v686 = vunpack.c.l.b16 %v515
        %v687 = vunpack.c.h.b16 %v515
        %v688 = vunpack.c.l.b16 %v516
        %v689 = vunpack.c.h.b16 %v516
        %v690 = vunpack.c.l.b16 %v517
        %v691 = vunpack.c.h.b16 %v517
        %v692 = vunpack.c.l.b16 %v518
        %v693 = vunpack.c.h.b16 %v518
        %v694 = vunpack.c.l.b16 %v519
        %v695 = vunpack.c.h.b16 %v519
        %v696 = vunpack.c.l.b16 %v520
        %v697 = vunpack.c.h.b16 %v520
        %v698 = vunpack.c.l.b16 %v521
        %v699 = vunpack.c.h.b16 %v521
        %v700 = vunpack.c.l.b16 %v522
        %v701 = vunpack.c.h.b16 %v522
        %v702 = vunpack.c.l.b16 %v523
        %v703 = vunpack.c.h.b16 %v523
        %v704 = vunpack.c.l.b16 %v524
        %v705 = vunpack.c.h.b16 %v524
        %v706 = vunpack.c.l.b16 %v525
        %v707 = vunpack.c.h.b16 %v525
        %v708 = vunpack.c.l.b16 %v526
        %v709 = vunpack.c.h.b16 %v526
        %v710 = vunpack.c.l.b16 %v527
        %v711 = vunpack.c.h.b16 %v527
        %v712 = vunpack.c.l.b16 %v528
        %v713 = vunpack.c.h.b16 %v528
        %v714 = vunpack.c.l.b16 %v529
        %v715 = vunpack.c.h.b16 %v529
        %v716 = vunpack.c.l.b16 %v530
        %v717 = vunpack.c.h.b16 %v530
        %v718 = vunpack.c.l.b16 %v531
        %v719 = vunpack.c.h.b16 %v531
        %v720 = vunpack.c.l.b16 %v532
        %v721 = vunpack.c.h.b16 %v532
        %v722 = vunpack.c.l.b16 %v533
        %v723 = vunpack.c.h.b16 %v533
        %v724 = vunpack.c.l.b16 %v534
        %v725 = vunpack.c.h.b16 %v534
        %v726 = vunpack.c.l.b16 %v535
        %v727 = vunpack.c.h.b16 %v535
        %v728 = vunpack.c.l.b16 %v536
        %v729 = vunpack.c.h.b16 %v536
        %v730 = vunpack.c.l.b16 %v537
        %v731 = vunpack.c.h.b16 %v537
        %v732 = vunpack.c.l.b16 %v538
        %v733 = vunpack.c.h.b16 %v538
        %v734 = vunpack.c.l.b16 %v539
        %v735 = vunpack.c.h.b16 %v539
        %v736 = vunpack.c.l.b16 %v540
        %v737 = vunpack.c.h.b16 %v540
        %v738 = vunpack.c.l.b16 %v541
        %v739 = vunpack.c.h.b16 %v541
        %v740 = vunpack.c.l.b16 %v542
        %v741 = vunpack.c.h.b16 %v542
        %v742 = vunpack.c.l.b16 %v543
        %v743 = vunpack.c.h.b16 %v543
        %v744 = vunpack.c.l.b16 %v544
        %v745 = vunpack.c.h.b16 %v544
        %v746 = vunpack.c.l.b16 %v545
        %v747 = vunpack.c.h.b16 %v545
        %v748 = vunpack.c.l.b16 %v546
        %v749 = vunpack.c.h.b16 %v546
        %v750 = vunpack.c.l.b16 %v547
        %v751 = vunpack.c.h.b16 %v547
        %v752 = vunpack.c.l.b16 %v548
        %v753 = vunpack.c.h.b16 %v548
        %v754 = vunpack.c.l.b16 %v549
        %v755 = vunpack.c.h.b16 %v549
        %v756 = vunpack.c.l.b16 %v550
        %v757 = vunpack.c.h.b16 %v550
        %v758 = vunpack.c.l.b16 %v551
        %v759 = vunpack.c.h.b16 %v551
        %v760 = vunpack.c.l.b16 %v552
        %v761 = vunpack.c.h.b16 %v552
        %v762 = vunpack.c.l.b16 %v553
        %v763 = vunpack.c.h.b16 %v553
        %v764 = vunpack.c.l.b16 %v554
        %v765 = vunpack.c.h.b16 %v554
        %v766 = vunpack.c.l.b16 %v555
        %v767 = vunpack.c.h.b16 %v555
        %v768 = vunpack.c.l.b16 %v556
        %v769 = vunpack.c.h.b16 %v556
        %v770 = vunpack.c.l.b16 %v557
        %v771 = vunpack.c.h.b16 %v557
        %v772 = vunpack.c.l.b16 %v558
        %v773 = vunpack.c.h.b16 %v558
        %v774 = vunpack.c.l.b16 %v559
        %v775 = vunpack.c.h.b16 %v559
        %v776 = vunpack.c.l.b16 %v560
        %v777 = vunpack.c.h.b16 %v560
        %v778 = vunpack.c.l.b16 %v561
        %v779 = vunpack.c.h.b16 %v561
        %v780 = vunpack.c.l.b16 %v562
        %v781 = vunpack.c.h.b16 %v562
        %v782 = vunpack.c.l.b16 %v563
        %v783 = vunpack.c.h.b16 %v563
        %v784 = vpack.c.b16 %v688, %v684
        %v785 = vpack.c.b16 %v689, %v685
        %v786 = vpack.c.b16 %v690, %v686
        %v787 = vpack.c.b16 %v691, %v687
        %v788 = vpack.c.b16 %v696, %v692
        %v789 = vpack.c.b16 %v697, %v693
        %v790 = vpack.c.b16 %v698, %v694
        %v791 = vpack.c.b16 %v699, %v695
        %v792 = vpack.c.b16 %v704, %v700
        %v793 = vpack.c.b16 %v705, %v701
        %v794 = vpack.c.b16 %v706, %v702
        %v795 = vpack.c.b16 %v707, %v703
        %v796 = vpack.c.b16 %v712, %v708
        %v797 = vpack.c.b16 %v713, %v709
        %v798 = vpack.c.b16 %v714, %v710
        %v799 = vpack.c.b16 %v715, %v711
        %v800 = vpack.c.b16 %v720, %v716
        %v801 = vpack.c.b16 %v721, %v717
        %v802 = vpack.c.b16 %v722, %v718
        %v803 = vpack.c.b16 %v723, %v719
        %v804 = vpack.c.b16 %v728, %v724
        %v805 = vpack.c.b16 %v729, %v725
        %v806 = vpack.c.b16 %v730, %v726
        %v807 = vpack.c.b16 %v731, %v727
        %v808 = vpack.c.b16 %v736, %v732
        %v809 = vpack.c.b16 %v737, %v733
        %v810 = vpack.c.b16 %v738, %v734
        %v811 = vpack.c.b16 %v739, %v735
        %v812 = vpack.c.b16 %v744, %v740
        %v813 = vpack.c.b16 %v745, %v741
        %v814 = vpack.c.b16 %v746, %v742
        %v815 = vpack.c.b16 %v747, %v743
        %v816 = vpack.c.b16 %v752, %v748
        %v817 = vpack.c.b16 %v753, %v749
        %v818 = vpack.c.b16 %v754, %v750
        %v819 = vpack.c.b16 %v755, %v751
        %v820 = vpack.c.b16 %v760, %v756
        %v821 = vpack.c.b16 %v761, %v757
        %v822 = vpack.c.b16 %v762, %v758
        %v823 = vpack.c.b16 %v763, %v759
        %v824 = vpack.c.b16 %v768, %v764
        %v825 = vpack.c.b16 %v769, %v765
        %v826 = vpack.c.b16 %v770, %v766
        %v827 = vpack.c.b16 %v771, %v767
        %v828 = vpack.c.b16 %v776, %v772
        %v829 = vpack.c.b16 %v777, %v773
        %v830 = vpack.c.b16 %v778, %v774
        %v831 = vpack.c.b16 %v779, %v775
        %v832 = vpack.c.b16 %v780, %v780
        %v833 = vpack.c.b16 %v781, %v781
        %v834 = vpack.c.b16 %v782, %v782
        %v835 = vpack.c.b16 %v783, %v783
        %v952 = vunpack.c.l.b16 %v564
        %v953 = vunpack.c.h.b16 %v564
        %v954 = vunpack.c.l.b16 %v565
        %v955 = vunpack.c.h.b16 %v565
        %v956 = vunpack.c.l.b16 %v566
        %v957 = vunpack.c.h.b16 %v566
        %v958 = vunpack.c.l.b16 %v567
        %v959 = vunpack.c.h.b16 %v567
        %v960 = vunpack.c.l.b16 %v568
        %v961 = vunpack.c.h.b16 %v568
        %v962 = vunpack.c.l.b16 %v569
        %v963 = vunpack.c.h.b16 %v569
        %v964 = vunpack.c.l.b16 %v570
        %v965 = vunpack.c.h.b16 %v570
        %v966 = vunpack.c.l.b16 %v571
        %v967 = vunpack.c.h.b16 %v571
        %v968 = vunpack.c.l.b16 %v572
        %v969 = vunpack.c.h.b16 %v572
        %v970 = vunpack.c.l.b16 %v573
        %v971 = vunpack.c.h.b16 %v573
        %v972 = vunpack.c.l.b16 %v574
        %v973 = vunpack.c.h.b16 %v574
        %v974 = vunpack.c.l.b16 %v575
        %v975 = vunpack.c.h.b16 %v575
        %v976 = vunpack.c.l.b16 %v576
        %v977 = vunpack.c.h.b16 %v576
        %v978 = vunpack.c.l.b16 %v577
        %v979 = vunpack.c.h.b16 %v577
        %v980 = vunpack.c.l.b16 %v578
        %v981 = vunpack.c.h.b16 %v578
        %v982 = vunpack.c.l.b16 %v579
        %v983 = vunpack.c.h.b16 %v579
        %v984 = vunpack.c.l.b16 %v580
        %v985 = vunpack.c.h.b16 %v580
        %v986 = vunpack.c.l.b16 %v581
        %v987 = vunpack.c.h.b16 %v581
        %v988 = vunpack.c.l.b16 %v582
        %v989 = vunpack.c.h.b16 %v582
        %v990 = vunpack.c.l.b16 %v583
        %v991 = vunpack.c.h.b16 %v583
        %v992 = vunpack.c.l.b16 %v584
        %v993 = vunpack.c.h.b16 %v584
        %v994 = vunpack.c.l.b16 %v585
        %v995 = vunpack.c.h.b16 %v585
        %v996 = vunpack.c.l.b16 %v586
        %v997 = vunpack.c.h.b16 %v586
        %v998 = vunpack.c.l.b16 %v587
        %v999 = vunpack.c.h.b16 %v587
        %v1000 = vunpack.c.l.b16 %v588
        %v1001 = vunpack.c.h.b16 %v588
        %v1002 = vunpack.c.l.b16 %v589
        %v1003 = vunpack.c.h.b16 %v589
        %v1004 = vunpack.c.l.b16 %v590
        %v1005 = vunpack.c.h.b16 %v590
        %v1006 = vunpack.c.l.b16 %v591
        %v1007 = vunpack.c.h.b16 %v591
        %v1008 = vunpack.c.l.b16 %v592
        %v1009 = vunpack.c.h.b16 %v592
        %v1010 = vunpack.c.l.b16 %v593
        %v1011 = vunpack.c.h.b16 %v593
        %v1012 = vunpack.c.l.b16 %v594
        %v1013 = vunpack.c.h.b16 %v594
        %v1014 = vunpack.c.l.b16 %v595
        %v1015 = vunpack.c.h.b16 %v595
        %v1016 = vunpack.c.l.b16 %v596
        %v1017 = vunpack.c.h.b16 %v596
        %v1018 = vunpack.c.l.b16 %v597
        %v1019 = vunpack.c.h.b16 %v597
        %v1020 = vunpack.c.l.b16 %v598
        %v1021 = vunpack.c.h.b16 %v598
        %v1022 = vunpack.c.l.b16 %v599
        %v1023 = vunpack.c.h.b16 %v599
        %v1024 = vunpack.c.l.b16 %v600
        %v1025 = vunpack.c.h.b16 %v600
        %v1026 = vunpack.c.l.b16 %v601
        %v1027 = vunpack.c.h.b16 %v601
        %v1028 = vunpack.c.l.b16 %v602
        %v1029 = vunpack.c.h.b16 %v602
        %v1030 = vunpack.c.l.b16 %v603
        %v1031 = vunpack.c.h.b16 %v603
        %v1032 = vunpack.c.l.b16 %v604
        %v1033 = vunpack.c.h.b16 %v604
        %v1034 = vunpack.c.l.b16 %v605
        %v1035 = vunpack.c.h.b16 %v605
        %v1036 = vunpack.c.l.b16 %v606
        %v1037 = vunpack.c.h.b16 %v606
        %v1038 = vunpack.c.l.b16 %v607
        %v1039 = vunpack.c.h.b16 %v607
        %v1040 = vunpack.c.l.b16 %v608
        %v1041 = vunpack.c.h.b16 %v608
        %v1042 = vunpack.c.l.b16 %v609
        %v1043 = vunpack.c.h.b16 %v609
        %v1044 = vunpack.c.l.b16 %v610
        %v1045 = vunpack.c.h.b16 %v610
        %v1046 = vunpack.c.l.b16 %v611
        %v1047 = vunpack.c.h.b16 %v611
        %v1048 = vunpack.c.l.b16 %v612
        %v1049 = vunpack.c.h.b16 %v612
        %v1050 = vunpack.c.l.b16 %v613
        %v1051 = vunpack.c.h.b16 %v613
        %v1052 = vunpack.c.l.b16 %v614
        %v1053 = vunpack.c.h.b16 %v614
        %v1054 = vunpack.c.l.b16 %v615
        %v1055 = vunpack.c.h.b16 %v615
        %v1056 = vunpack.c.l.b16 %v616
        %v1057 = vunpack.c.h.b16 %v616
        %v1058 = vunpack.c.l.b16 %v617
        %v1059 = vunpack.c.h.b16 %v617
        %v1060 = vunpack.c.l.b16 %v618
        %v1061 = vunpack.c.h.b16 %v618
        %v1062 = vunpack.c.l.b16 %v619
        %v1063 = vunpack.c.h.b16 %v619
        %v1064 = vunpack.c.l.b16 %v620
        %v1065 = vunpack.c.h.b16 %v620
        %v1066 = vunpack.c.l.b16 %v621
        %v1067 = vunpack.c.h.b16 %v621
        %v1068 = vunpack.c.l.b16 %v622
        %v1069 = vunpack.c.h.b16 %v622
        %v1070 = vunpack.c.l.b16 %v623
        %v1071 = vunpack.c.h.b16 %v623
        %v1072 = vunpack.c.l.b16 %v624
        %v1073 = vunpack.c.h.b16 %v624
        %v1074 = vunpack.c.l.b16 %v625
        %v1075 = vunpack.c.h.b16 %v625
        %v1076 = vunpack.c.l.b16 %v626
        %v1077 = vunpack.c.h.b16 %v626
        %v1078 = vunpack.c.l.b16 %v627
        %v1079 = vunpack.c.h.b16 %v627
        %v1080 = vpack.c.b16 %v954, %v952
        %v1081 = vpack.c.b16 %v955, %v953
        %v1082 = vpack.c.b16 %v958, %v956
        %v1083 = vpack.c.b16 %v959, %v957
        %v1084 = vpack.c.b16 %v962, %v960
        %v1085 = vpack.c.b16 %v963, %v961
        %v1086 = vpack.c.b16 %v966, %v964
        %v1087 = vpack.c.b16 %v967, %v965
        %v1088 = vpack.c.b16 %v970, %v968
        %v1089 = vpack.c.b16 %v971, %v969
        %v1090 = vpack.c.b16 %v974, %v972
        %v1091 = vpack.c.b16 %v975, %v973
        %v1092 = vpack.c.b16 %v978, %v976
        %v1093 = vpack.c.b16 %v979, %v977
        %v1094 = vpack.c.b16 %v982, %v980
        %v1095 = vpack.c.b16 %v983, %v981
        %v1096 = vpack.c.b16 %v986, %v984
        %v1097 = vpack.c.b16 %v987, %v985
        %v1098 = vpack.c.b16 %v990, %v988
        %v1099 = vpack.c.b16 %v991, %v989
        %v1100 = vpack.c.b16 %v994, %v992
        %v1101 = vpack.c.b16 %v995, %v993
        %v1102 = vpack.c.b16 %v998, %v996
        %v1103 = vpack.c.b16 %v999, %v997
        %v1104 = vpack.c.b16 %v1002, %v1000
        %v1105 = vpack.c.b16 %v1003, %v1001
        %v1106 = vpack.c.b16 %v1006, %v1004
        %v1107 = vpack.c.b16 %v1007, %v1005
        %v1108 = vpack.c.b16 %v1010, %v1008
        %v1109 = vpack.c.b16 %v1011, %v1009
        %v1110 = vpack.c.b16 %v1014, %v1012
        %v1111 = vpack.c.b16 %v1015, %v1013
        %v1112 = vpack.c.b16 %v1018, %v1016
        %v1113 = vpack.c.b16 %v1019, %v1017
        %v1114 = vpack.c.b16 %v1022, %v1020
        %v1115 = vpack.c.b16 %v1023, %v1021
        %v1116 = vpack.c.b16 %v1026, %v1024
        %v1117 = vpack.c.b16 %v1027, %v1025
        %v1118 = vpack.c.b16 %v1030, %v1028
        %v1119 = vpack.c.b16 %v1031, %v1029
        %v1120 = vpack.c.b16 %v1034, %v1032
        %v1121 = vpack.c.b16 %v1035, %v1033
        %v1122 = vpack.c.b16 %v1038, %v1036
        %v1123 = vpack.c.b16 %v1039, %v1037
        %v1124 = vpack.c.b16 %v1042, %v1040
        %v1125 = vpack.c.b16 %v1043, %v1041
        %v1126 = vpack.c.b16 %v1046, %v1044
        %v1127 = vpack.c.b16 %v1047, %v1045
        %v1128 = vpack.c.b16 %v1050, %v1048
        %v1129 = vpack.c.b16 %v1051, %v1049
        %v1130 = vpack.c.b16 %v1054, %v1052
        %v1131 = vpack.c.b16 %v1055, %v1053
        %v1132 = vpack.c.b16 %v1058, %v1056
        %v1133 = vpack.c.b16 %v1059, %v1057
        %v1134 = vpack.c.b16 %v1062, %v1060
        %v1135 = vpack.c.b16 %v1063, %v1061
        %v1136 = vpack.c.b16 %v1066, %v1064
        %v1137 = vpack.c.b16 %v1067, %v1065
        %v1138 = vpack.c.b16 %v1070, %v1068
        %v1139 = vpack.c.b16 %v1071, %v1069
        %v1140 = vpack.c.b16 %v1074, %v1072
        %v1141 = vpack.c.b16 %v1075, %v1073
        %v1142 = vpack.c.b16 %v1078, %v1076
        %v1143 = vpack.c.b16 %v1079, %v1077
        %1208 = vmatpush.bf16.msra.mxu0 %v1094
        %1209 = vmatpush.bf16.msra.mxu0 %v1092
        %1210 = vmatpush.bf16.msra.mxu0 %v1090
        %1211 = vmatpush.bf16.msra.mxu0 %v1088
        %1212 = vmatpush.bf16.msra.mxu0 %v1086
        %1213 = vmatpush.bf16.msra.mxu0 %v1084
        %1214 = vmatpush.bf16.msra.mxu0 %v1082
        %1215 = vmatpush.bf16.msra.mxu0 %v1080
        %1216 = vmatmul.bf16.gmra.mxu0 %v784
        %v1217 = vpop.f32.mrf.mxu0
        %v1218 = vadd.f32 %v630, %v1217
        %v1219 = vpop.f32.mrf.mxu0
        %v1220 = vadd.f32 %v630, %v1219
        %1221 = vmatmul.bf16.gmra.mxu0 %v788
        %v1222 = vpop.f32.mrf.mxu0
        %v1223 = vadd.f32 %v630, %v1222
        %v1224 = vpop.f32.mrf.mxu0
        %v1225 = vadd.f32 %v630, %v1224
        %1226 = vmatmul.bf16.gmra.mxu0 %v792
        %v1227 = vpop.f32.mrf.mxu0
        %v1228 = vadd.f32 %v630, %v1227
        %v1229 = vpop.f32.mrf.mxu0
        %v1230 = vadd.f32 %v630, %v1229
        %1231 = vmatmul.bf16.gmra.mxu0 %v796
        %v1232 = vpop.f32.mrf.mxu0
        %v1233 = vadd.f32 %v630, %v1232
        %v1234 = vpop.f32.mrf.mxu0
        %v1235 = vadd.f32 %v630, %v1234
        %1236 = vmatmul.bf16.gmra.mxu0 %v800
        %v1237 = vpop.f32.mrf.mxu0
        %v1238 = vadd.f32 %v630, %v1237
        %v1239 = vpop.f32.mrf.mxu0
        %v1240 = vadd.f32 %v630, %v1239
        %1241 = vmatmul.bf16.gmra.mxu0 %v804
        %v1242 = vpop.f32.mrf.mxu0
        %v1243 = vadd.f32 %v630, %v1242
        %v1244 = vpop.f32.mrf.mxu0
        %v1245 = vadd.f32 %v630, %v1244
        %1246 = vmatmul.bf16.gmra.mxu0 %v808
        %v1247 = vpop.f32.mrf.mxu0
        %v1248 = vadd.f32 %v630, %v1247
        %v1249 = vpop.f32.mrf.mxu0
        %v1250 = vadd.f32 %v630, %v1249
        %1251 = vmatmul.bf16.gmra.mxu0 %v812
        %v1252 = vpop.f32.mrf.mxu0
        %v1253 = vadd.f32 %v630, %v1252
        %v1254 = vpop.f32.mrf.mxu0
        %v1255 = vadd.f32 %v630, %v1254
        %1256 = vmatmul.bf16.gmra.mxu0 %v816
        %v1257 = vpop.f32.mrf.mxu0
        %v1258 = vadd.f32 %v630, %v1257
        %v1259 = vpop.f32.mrf.mxu0
        %v1260 = vadd.f32 %v630, %v1259
        %1261 = vmatmul.bf16.gmra.mxu0 %v820
        %v1262 = vpop.f32.mrf.mxu0
        %v1263 = vadd.f32 %v630, %v1262
        %v1264 = vpop.f32.mrf.mxu0
        %v1265 = vadd.f32 %v630, %v1264
        %1266 = vmatmul.bf16.gmra.mxu0 %v824
        %v1267 = vpop.f32.mrf.mxu0
        %v1268 = vadd.f32 %v630, %v1267
        %v1269 = vpop.f32.mrf.mxu0
        %v1270 = vadd.f32 %v630, %v1269
        %1271 = vmatmul.bf16.gmra.mxu0 %v828
        %v1272 = vpop.f32.mrf.mxu0
        %v1273 = vadd.f32 %v630, %v1272
        %v1274 = vpop.f32.mrf.mxu0
        %v1275 = vadd.f32 %v630, %v1274
        %1276 = vmatmul.bf16.gmra.mxu0 %v832
        %v1277 = vpop.f32.mrf.mxu0
        %v1278 = vadd.f32 %v630, %v1277
        %v1279 = vpop.f32.mrf.mxu0
        %1280 = vdwg.mxu0
        %1281 = vmatpush.bf16.msra.mxu0 %v1110
        %1282 = vmatpush.bf16.msra.mxu0 %v1108
        %1283 = vmatpush.bf16.msra.mxu0 %v1106
        %1284 = vmatpush.bf16.msra.mxu0 %v1104
        %1285 = vmatpush.bf16.msra.mxu0 %v1102
        %1286 = vmatpush.bf16.msra.mxu0 %v1100
        %1287 = vmatpush.bf16.msra.mxu0 %v1098
        %1288 = vmatpush.bf16.msra.mxu0 %v1096
        %1289 = vmatmul.bf16.gmra.mxu0 %v785
        %v1290 = vpop.f32.mrf.mxu0
        %v1291 = vadd.f32 %v1218, %v1290
        %v1292 = vpop.f32.mrf.mxu0
        %v1293 = vadd.f32 %v1220, %v1292
        %1294 = vmatmul.bf16.gmra.mxu0 %v789
        %v1295 = vpop.f32.mrf.mxu0
        %v1296 = vadd.f32 %v1223, %v1295
        %v1297 = vpop.f32.mrf.mxu0
        %v1298 = vadd.f32 %v1225, %v1297
        %1299 = vmatmul.bf16.gmra.mxu0 %v793
        %v1300 = vpop.f32.mrf.mxu0
        %v1301 = vadd.f32 %v1228, %v1300
        %v1302 = vpop.f32.mrf.mxu0
        %v1303 = vadd.f32 %v1230, %v1302
        %1304 = vmatmul.bf16.gmra.mxu0 %v797
        %v1305 = vpop.f32.mrf.mxu0
        %v1306 = vadd.f32 %v1233, %v1305
        %v1307 = vpop.f32.mrf.mxu0
        %v1308 = vadd.f32 %v1235, %v1307
        %1309 = vmatmul.bf16.gmra.mxu0 %v801
        %v1310 = vpop.f32.mrf.mxu0
        %v1311 = vadd.f32 %v1238, %v1310
        %v1312 = vpop.f32.mrf.mxu0
        %v1313 = vadd.f32 %v1240, %v1312
        %1314 = vmatmul.bf16.gmra.mxu0 %v805
        %v1315 = vpop.f32.mrf.mxu0
        %v1316 = vadd.f32 %v1243, %v1315
        %v1317 = vpop.f32.mrf.mxu0
        %v1318 = vadd.f32 %v1245, %v1317
        %1319 = vmatmul.bf16.gmra.mxu0 %v809
        %v1320 = vpop.f32.mrf.mxu0
        %v1321 = vadd.f32 %v1248, %v1320
        %v1322 = vpop.f32.mrf.mxu0
        %v1323 = vadd.f32 %v1250, %v1322
        %1324 = vmatmul.bf16.gmra.mxu0 %v813
        %v1325 = vpop.f32.mrf.mxu0
        %v1326 = vadd.f32 %v1253, %v1325
        %v1327 = vpop.f32.mrf.mxu0
        %v1328 = vadd.f32 %v1255, %v1327
        %1329 = vmatmul.bf16.gmra.mxu0 %v817
        %v1330 = vpop.f32.mrf.mxu0
        %v1331 = vadd.f32 %v1258, %v1330
        %v1332 = vpop.f32.mrf.mxu0
        %v1333 = vadd.f32 %v1260, %v1332
        %1334 = vmatmul.bf16.gmra.mxu0 %v821
        %v1335 = vpop.f32.mrf.mxu0
        %v1336 = vadd.f32 %v1263, %v1335
        %v1337 = vpop.f32.mrf.mxu0
        %v1338 = vadd.f32 %v1265, %v1337
        %1339 = vmatmul.bf16.gmra.mxu0 %v825
        %v1340 = vpop.f32.mrf.mxu0
        %v1341 = vadd.f32 %v1268, %v1340
        %v1342 = vpop.f32.mrf.mxu0
        %v1343 = vadd.f32 %v1270, %v1342
        %1344 = vmatmul.bf16.gmra.mxu0 %v829
        %v1345 = vpop.f32.mrf.mxu0
        %v1346 = vadd.f32 %v1273, %v1345
        %v1347 = vpop.f32.mrf.mxu0
        %v1348 = vadd.f32 %v1275, %v1347
        %1349 = vmatmul.bf16.gmra.mxu0 %v833
        %v1350 = vpop.f32.mrf.mxu0
        %v1351 = vadd.f32 %v1278, %v1350
        %v1352 = vpop.f32.mrf.mxu0
        %1353 = vdwg.mxu0
        %1354 = vmatpush.bf16.msra.mxu0 %v1126
        %1355 = vmatpush.bf16.msra.mxu0 %v1124
        %1356 = vmatpush.bf16.msra.mxu0 %v1122
        %1357 = vmatpush.bf16.msra.mxu0 %v1120
        %1358 = vmatpush.bf16.msra.mxu0 %v1118
        %1359 = vmatpush.bf16.msra.mxu0 %v1116
        %1360 = vmatpush.bf16.msra.mxu0 %v1114
        %1361 = vmatpush.bf16.msra.mxu0 %v1112
        %1362 = vmatmul.bf16.gmra.mxu0 %v786
        %v1363 = vpop.f32.mrf.mxu0
        %v1364 = vadd.f32 %v1291, %v1363
        %v1365 = vpop.f32.mrf.mxu0
        %v1366 = vadd.f32 %v1293, %v1365
        %1367 = vmatmul.bf16.gmra.mxu0 %v790
        %v1368 = vpop.f32.mrf.mxu0
        %v1369 = vadd.f32 %v1296, %v1368
        %v1370 = vpop.f32.mrf.mxu0
        %v1371 = vadd.f32 %v1298, %v1370
        %1372 = vmatmul.bf16.gmra.mxu0 %v794
        %v1373 = vpop.f32.mrf.mxu0
        %v1374 = vadd.f32 %v1301, %v1373
        %v1375 = vpop.f32.mrf.mxu0
        %v1376 = vadd.f32 %v1303, %v1375
        %1377 = vmatmul.bf16.gmra.mxu0 %v798
        %v1378 = vpop.f32.mrf.mxu0
        %v1379 = vadd.f32 %v1306, %v1378
        %v1380 = vpop.f32.mrf.mxu0
        %v1381 = vadd.f32 %v1308, %v1380
        %1382 = vmatmul.bf16.gmra.mxu0 %v802
        %v1383 = vpop.f32.mrf.mxu0
        %v1384 = vadd.f32 %v1311, %v1383
        %v1385 = vpop.f32.mrf.mxu0
        %v1386 = vadd.f32 %v1313, %v1385
        %1387 = vmatmul.bf16.gmra.mxu0 %v806
        %v1388 = vpop.f32.mrf.mxu0
        %v1389 = vadd.f32 %v1316, %v1388
        %v1390 = vpop.f32.mrf.mxu0
        %v1391 = vadd.f32 %v1318, %v1390
        %1392 = vmatmul.bf16.gmra.mxu0 %v810
        %v1393 = vpop.f32.mrf.mxu0
        %v1394 = vadd.f32 %v1321, %v1393
        %v1395 = vpop.f32.mrf.mxu0
        %v1396 = vadd.f32 %v1323, %v1395
        %1397 = vmatmul.bf16.gmra.mxu0 %v814
        %v1398 = vpop.f32.mrf.mxu0
        %v1399 = vadd.f32 %v1326, %v1398
        %v1400 = vpop.f32.mrf.mxu0
        %v1401 = vadd.f32 %v1328, %v1400
        %1402 = vmatmul.bf16.gmra.mxu0 %v818
        %v1403 = vpop.f32.mrf.mxu0
        %v1404 = vadd.f32 %v1331, %v1403
        %v1405 = vpop.f32.mrf.mxu0
        %v1406 = vadd.f32 %v1333, %v1405
        %1407 = vmatmul.bf16.gmra.mxu0 %v822
        %v1408 = vpop.f32.mrf.mxu0
        %v1409 = vadd.f32 %v1336, %v1408
        %v1410 = vpop.f32.mrf.mxu0
        %v1411 = vadd.f32 %v1338, %v1410
        %1412 = vmatmul.bf16.gmra.mxu0 %v826
        %v1413 = vpop.f32.mrf.mxu0
        %v1414 = vadd.f32 %v1341, %v1413
        %v1415 = vpop.f32.mrf.mxu0
        %v1416 = vadd.f32 %v1343, %v1415
        %1417 = vmatmul.bf16.gmra.mxu0 %v830
        %v1418 = vpop.f32.mrf.mxu0
        %v1419 = vadd.f32 %v1346, %v1418
        %v1420 = vpop.f32.mrf.mxu0
        %v1421 = vadd.f32 %v1348, %v1420
        %1422 = vmatmul.bf16.gmra.mxu0 %v834
        %v1423 = vpop.f32.mrf.mxu0
        %v1424 = vadd.f32 %v1351, %v1423
        %v1425 = vpop.f32.mrf.mxu0
        %1426 = vdwg.mxu0
        %1427 = vmatpush.bf16.msra.mxu0 %v1142
        %1428 = vmatpush.bf16.msra.mxu0 %v1140
        %1429 = vmatpush.bf16.msra.mxu0 %v1138
        %1430 = vmatpush.bf16.msra.mxu0 %v1136
        %1431 = vmatpush.bf16.msra.mxu0 %v1134
        %1432 = vmatpush.bf16.msra.mxu0 %v1132
        %1433 = vmatpush.bf16.msra.mxu0 %v1130
        %1434 = vmatpush.bf16.msra.mxu0 %v1128
        %1435 = vmatmul.bf16.gmra.mxu0 %v787
        %v1436 = vpop.f32.mrf.mxu0
        %v1437 = vadd.f32 %v1364, %v1436
        %v1438 = vpop.f32.mrf.mxu0
        %v1439 = vadd.f32 %v1366, %v1438
        %1440 = vmatmul.bf16.gmra.mxu0 %v791
        %v1441 = vpop.f32.mrf.mxu0
        %v1442 = vadd.f32 %v1369, %v1441
        %v1443 = vpop.f32.mrf.mxu0
        %v1444 = vadd.f32 %v1371, %v1443
        %1445 = vmatmul.bf16.gmra.mxu0 %v795
        %v1446 = vpop.f32.mrf.mxu0
        %v1447 = vadd.f32 %v1374, %v1446
        %v1448 = vpop.f32.mrf.mxu0
        %v1449 = vadd.f32 %v1376, %v1448
        %1450 = vmatmul.bf16.gmra.mxu0 %v799
        %v1451 = vpop.f32.mrf.mxu0
        %v1452 = vadd.f32 %v1379, %v1451
        %v1453 = vpop.f32.mrf.mxu0
        %v1454 = vadd.f32 %v1381, %v1453
        %1455 = vmatmul.bf16.gmra.mxu0 %v803
        %v1456 = vpop.f32.mrf.mxu0
        %v1457 = vadd.f32 %v1384, %v1456
        %v1458 = vpop.f32.mrf.mxu0
        %v1459 = vadd.f32 %v1386, %v1458
        %1460 = vmatmul.bf16.gmra.mxu0 %v807
        %v1461 = vpop.f32.mrf.mxu0
        %v1462 = vadd.f32 %v1389, %v1461
        %v1463 = vpop.f32.mrf.mxu0
        %v1464 = vadd.f32 %v1391, %v1463
        %1465 = vmatmul.bf16.gmra.mxu0 %v811
        %v1466 = vpop.f32.mrf.mxu0
        %v1467 = vadd.f32 %v1394, %v1466
        %v1468 = vpop.f32.mrf.mxu0
        %v1469 = vadd.f32 %v1396, %v1468
        %1470 = vmatmul.bf16.gmra.mxu0 %v815
        %v1471 = vpop.f32.mrf.mxu0
        %v1472 = vadd.f32 %v1399, %v1471
        %v1473 = vpop.f32.mrf.mxu0
        %v1474 = vadd.f32 %v1401, %v1473
        %1475 = vmatmul.bf16.gmra.mxu0 %v819
        %v1476 = vpop.f32.mrf.mxu0
        %v1477 = vadd.f32 %v1404, %v1476
        %v1478 = vpop.f32.mrf.mxu0
        %v1479 = vadd.f32 %v1406, %v1478
        %1480 = vmatmul.bf16.gmra.mxu0 %v823
        %v1481 = vpop.f32.mrf.mxu0
        %v1482 = vadd.f32 %v1409, %v1481
        %v1483 = vpop.f32.mrf.mxu0
        %v1484 = vadd.f32 %v1411, %v1483
        %1485 = vmatmul.bf16.gmra.mxu0 %v827
        %v1486 = vpop.f32.mrf.mxu0
        %v1487 = vadd.f32 %v1414, %v1486
        %v1488 = vpop.f32.mrf.mxu0
        %v1489 = vadd.f32 %v1416, %v1488
        %1490 = vmatmul.bf16.gmra.mxu0 %v831
        %v1491 = vpop.f32.mrf.mxu0
        %v1492 = vadd.f32 %v1419, %v1491
        %v1493 = vpop.f32.mrf.mxu0
        %v1494 = vadd.f32 %v1421, %v1493
        %1495 = vmatmul.bf16.gmra.mxu0 %v835
        %v1496 = vpop.f32.mrf.mxu0
        %v1497 = vadd.f32 %v1424, %v1496
        %v1498 = vpop.f32.mrf.mxu0
        %1499 = vdwg.mxu0
        %1500 = vmatpush.bf16.msra.mxu0 %v1095
        %1501 = vmatpush.bf16.msra.mxu0 %v1093
        %1502 = vmatpush.bf16.msra.mxu0 %v1091
        %1503 = vmatpush.bf16.msra.mxu0 %v1089
        %1504 = vmatpush.bf16.msra.mxu0 %v1087
        %1505 = vmatpush.bf16.msra.mxu0 %v1085
        %1506 = vmatpush.bf16.msra.mxu0 %v1083
        %1507 = vmatpush.bf16.msra.mxu0 %v1081
        %1508 = vmatmul.bf16.gmra.mxu0 %v784
        %v1509 = vpop.f32.mrf.mxu0
        %v1510 = vadd.f32 %v631, %v1509
        %v1511 = vpop.f32.mrf.mxu0
        %v1512 = vadd.f32 %v631, %v1511
        %1513 = vmatmul.bf16.gmra.mxu0 %v788
        %v1514 = vpop.f32.mrf.mxu0
        %v1515 = vadd.f32 %v631, %v1514
        %v1516 = vpop.f32.mrf.mxu0
        %v1517 = vadd.f32 %v631, %v1516
        %1518 = vmatmul.bf16.gmra.mxu0 %v792
        %v1519 = vpop.f32.mrf.mxu0
        %v1520 = vadd.f32 %v631, %v1519
        %v1521 = vpop.f32.mrf.mxu0
        %v1522 = vadd.f32 %v631, %v1521
        %1523 = vmatmul.bf16.gmra.mxu0 %v796
        %v1524 = vpop.f32.mrf.mxu0
        %v1525 = vadd.f32 %v631, %v1524
        %v1526 = vpop.f32.mrf.mxu0
        %v1527 = vadd.f32 %v631, %v1526
        %1528 = vmatmul.bf16.gmra.mxu0 %v800
        %v1529 = vpop.f32.mrf.mxu0
        %v1530 = vadd.f32 %v631, %v1529
        %v1531 = vpop.f32.mrf.mxu0
        %v1532 = vadd.f32 %v631, %v1531
        %1533 = vmatmul.bf16.gmra.mxu0 %v804
        %v1534 = vpop.f32.mrf.mxu0
        %v1535 = vadd.f32 %v631, %v1534
        %v1536 = vpop.f32.mrf.mxu0
        %v1537 = vadd.f32 %v631, %v1536
        %1538 = vmatmul.bf16.gmra.mxu0 %v808
        %v1539 = vpop.f32.mrf.mxu0
        %v1540 = vadd.f32 %v631, %v1539
        %v1541 = vpop.f32.mrf.mxu0
        %v1542 = vadd.f32 %v631, %v1541
        %1543 = vmatmul.bf16.gmra.mxu0 %v812
        %v1544 = vpop.f32.mrf.mxu0
        %v1545 = vadd.f32 %v631, %v1544
        %v1546 = vpop.f32.mrf.mxu0
        %v1547 = vadd.f32 %v631, %v1546
        %1548 = vmatmul.bf16.gmra.mxu0 %v816
        %v1549 = vpop.f32.mrf.mxu0
        %v1550 = vadd.f32 %v631, %v1549
        %v1551 = vpop.f32.mrf.mxu0
        %v1552 = vadd.f32 %v631, %v1551
        %1553 = vmatmul.bf16.gmra.mxu0 %v820
        %v1554 = vpop.f32.mrf.mxu0
        %v1555 = vadd.f32 %v631, %v1554
        %v1556 = vpop.f32.mrf.mxu0
        %v1557 = vadd.f32 %v631, %v1556
        %1558 = vmatmul.bf16.gmra.mxu0 %v824
        %v1559 = vpop.f32.mrf.mxu0
        %v1560 = vadd.f32 %v631, %v1559
        %v1561 = vpop.f32.mrf.mxu0
        %v1562 = vadd.f32 %v631, %v1561
        %1563 = vmatmul.bf16.gmra.mxu0 %v828
        %v1564 = vpop.f32.mrf.mxu0
        %v1565 = vadd.f32 %v631, %v1564
        %v1566 = vpop.f32.mrf.mxu0
        %v1567 = vadd.f32 %v631, %v1566
        %1568 = vmatmul.bf16.gmra.mxu0 %v832
        %v1569 = vpop.f32.mrf.mxu0
        %v1570 = vadd.f32 %v631, %v1569
        %v1571 = vpop.f32.mrf.mxu0
        %1572 = vdwg.mxu0
        %1573 = vmatpush.bf16.msra.mxu0 %v1111
        %1574 = vmatpush.bf16.msra.mxu0 %v1109
        %1575 = vmatpush.bf16.msra.mxu0 %v1107
        %1576 = vmatpush.bf16.msra.mxu0 %v1105
        %1577 = vmatpush.bf16.msra.mxu0 %v1103
        %1578 = vmatpush.bf16.msra.mxu0 %v1101
        %1579 = vmatpush.bf16.msra.mxu0 %v1099
        %1580 = vmatpush.bf16.msra.mxu0 %v1097
        %1581 = vmatmul.bf16.gmra.mxu0 %v785
        %v1582 = vpop.f32.mrf.mxu0
        %v1583 = vadd.f32 %v1510, %v1582
        %v1584 = vpop.f32.mrf.mxu0
        %v1585 = vadd.f32 %v1512, %v1584
        %1586 = vmatmul.bf16.gmra.mxu0 %v789
        %v1587 = vpop.f32.mrf.mxu0
        %v1588 = vadd.f32 %v1515, %v1587
        %v1589 = vpop.f32.mrf.mxu0
        %v1590 = vadd.f32 %v1517, %v1589
        %1591 = vmatmul.bf16.gmra.mxu0 %v793
        %v1592 = vpop.f32.mrf.mxu0
        %v1593 = vadd.f32 %v1520, %v1592
        %v1594 = vpop.f32.mrf.mxu0
        %v1595 = vadd.f32 %v1522, %v1594
        %1596 = vmatmul.bf16.gmra.mxu0 %v797
        %v1597 = vpop.f32.mrf.mxu0
        %v1598 = vadd.f32 %v1525, %v1597
        %v1599 = vpop.f32.mrf.mxu0
        %v1600 = vadd.f32 %v1527, %v1599
        %1601 = vmatmul.bf16.gmra.mxu0 %v801
        %v1602 = vpop.f32.mrf.mxu0
        %v1603 = vadd.f32 %v1530, %v1602
        %v1604 = vpop.f32.mrf.mxu0
        %v1605 = vadd.f32 %v1532, %v1604
        %1606 = vmatmul.bf16.gmra.mxu0 %v805
        %v1607 = vpop.f32.mrf.mxu0
        %v1608 = vadd.f32 %v1535, %v1607
        %v1609 = vpop.f32.mrf.mxu0
        %v1610 = vadd.f32 %v1537, %v1609
        %1611 = vmatmul.bf16.gmra.mxu0 %v809
        %v1612 = vpop.f32.mrf.mxu0
        %v1613 = vadd.f32 %v1540, %v1612
        %v1614 = vpop.f32.mrf.mxu0
        %v1615 = vadd.f32 %v1542, %v1614
        %1616 = vmatmul.bf16.gmra.mxu0 %v813
        %v1617 = vpop.f32.mrf.mxu0
        %v1618 = vadd.f32 %v1545, %v1617
        %v1619 = vpop.f32.mrf.mxu0
        %v1620 = vadd.f32 %v1547, %v1619
        %1621 = vmatmul.bf16.gmra.mxu0 %v817
        %v1622 = vpop.f32.mrf.mxu0
        %v1623 = vadd.f32 %v1550, %v1622
        %v1624 = vpop.f32.mrf.mxu0
        %v1625 = vadd.f32 %v1552, %v1624
        %1626 = vmatmul.bf16.gmra.mxu0 %v821
        %v1627 = vpop.f32.mrf.mxu0
        %v1628 = vadd.f32 %v1555, %v1627
        %v1629 = vpop.f32.mrf.mxu0
        %v1630 = vadd.f32 %v1557, %v1629
        %1631 = vmatmul.bf16.gmra.mxu0 %v825
        %v1632 = vpop.f32.mrf.mxu0
        %v1633 = vadd.f32 %v1560, %v1632
        %v1634 = vpop.f32.mrf.mxu0
        %v1635 = vadd.f32 %v1562, %v1634
        %1636 = vmatmul.bf16.gmra.mxu0 %v829
        %v1637 = vpop.f32.mrf.mxu0
        %v1638 = vadd.f32 %v1565, %v1637
        %v1639 = vpop.f32.mrf.mxu0
        %v1640 = vadd.f32 %v1567, %v1639
        %1641 = vmatmul.bf16.gmra.mxu0 %v833
        %v1642 = vpop.f32.mrf.mxu0
        %v1643 = vadd.f32 %v1570, %v1642
        %v1644 = vpop.f32.mrf.mxu0
        %1645 = vdwg.mxu0
        %1646 = vmatpush.bf16.msra.mxu0 %v1127
        %1647 = vmatpush.bf16.msra.mxu0 %v1125
        %1648 = vmatpush.bf16.msra.mxu0 %v1123
        %1649 = vmatpush.bf16.msra.mxu0 %v1121
        %1650 = vmatpush.bf16.msra.mxu0 %v1119
        %1651 = vmatpush.bf16.msra.mxu0 %v1117
        %1652 = vmatpush.bf16.msra.mxu0 %v1115
        %1653 = vmatpush.bf16.msra.mxu0 %v1113
        %1654 = vmatmul.bf16.gmra.mxu0 %v786
        %v1655 = vpop.f32.mrf.mxu0
        %v1656 = vadd.f32 %v1583, %v1655
        %v1657 = vpop.f32.mrf.mxu0
        %v1658 = vadd.f32 %v1585, %v1657
        %1659 = vmatmul.bf16.gmra.mxu0 %v790
        %v1660 = vpop.f32.mrf.mxu0
        %v1661 = vadd.f32 %v1588, %v1660
        %v1662 = vpop.f32.mrf.mxu0
        %v1663 = vadd.f32 %v1590, %v1662
        %1664 = vmatmul.bf16.gmra.mxu0 %v794
        %v1665 = vpop.f32.mrf.mxu0
        %v1666 = vadd.f32 %v1593, %v1665
        %v1667 = vpop.f32.mrf.mxu0
        %v1668 = vadd.f32 %v1595, %v1667
        %1669 = vmatmul.bf16.gmra.mxu0 %v798
        %v1670 = vpop.f32.mrf.mxu0
        %v1671 = vadd.f32 %v1598, %v1670
        %v1672 = vpop.f32.mrf.mxu0
        %v1673 = vadd.f32 %v1600, %v1672
        %1674 = vmatmul.bf16.gmra.mxu0 %v802
        %v1675 = vpop.f32.mrf.mxu0
        %v1676 = vadd.f32 %v1603, %v1675
        %v1677 = vpop.f32.mrf.mxu0
        %v1678 = vadd.f32 %v1605, %v1677
        %1679 = vmatmul.bf16.gmra.mxu0 %v806
        %v1680 = vpop.f32.mrf.mxu0
        %v1681 = vadd.f32 %v1608, %v1680
        %v1682 = vpop.f32.mrf.mxu0
        %v1683 = vadd.f32 %v1610, %v1682
        %1684 = vmatmul.bf16.gmra.mxu0 %v810
        %v1685 = vpop.f32.mrf.mxu0
        %v1686 = vadd.f32 %v1613, %v1685
        %v1687 = vpop.f32.mrf.mxu0
        %v1688 = vadd.f32 %v1615, %v1687
        %1689 = vmatmul.bf16.gmra.mxu0 %v814
        %v1690 = vpop.f32.mrf.mxu0
        %v1691 = vadd.f32 %v1618, %v1690
        %v1692 = vpop.f32.mrf.mxu0
        %v1693 = vadd.f32 %v1620, %v1692
        %1694 = vmatmul.bf16.gmra.mxu0 %v818
        %v1695 = vpop.f32.mrf.mxu0
        %v1696 = vadd.f32 %v1623, %v1695
        %v1697 = vpop.f32.mrf.mxu0
        %v1698 = vadd.f32 %v1625, %v1697
        %1699 = vmatmul.bf16.gmra.mxu0 %v822
        %v1700 = vpop.f32.mrf.mxu0
        %v1701 = vadd.f32 %v1628, %v1700
        %v1702 = vpop.f32.mrf.mxu0
        %v1703 = vadd.f32 %v1630, %v1702
        %1704 = vmatmul.bf16.gmra.mxu0 %v826
        %v1705 = vpop.f32.mrf.mxu0
        %v1706 = vadd.f32 %v1633, %v1705
        %v1707 = vpop.f32.mrf.mxu0
        %v1708 = vadd.f32 %v1635, %v1707
        %1709 = vmatmul.bf16.gmra.mxu0 %v830
        %v1710 = vpop.f32.mrf.mxu0
        %v1711 = vadd.f32 %v1638, %v1710
        %v1712 = vpop.f32.mrf.mxu0
        %v1713 = vadd.f32 %v1640, %v1712
        %1714 = vmatmul.bf16.gmra.mxu0 %v834
        %v1715 = vpop.f32.mrf.mxu0
        %v1716 = vadd.f32 %v1643, %v1715
        %v1717 = vpop.f32.mrf.mxu0
        %1718 = vdwg.mxu0
        %1719 = vmatpush.bf16.msra.mxu0 %v1143
        %1720 = vmatpush.bf16.msra.mxu0 %v1141
        %1721 = vmatpush.bf16.msra.mxu0 %v1139
        %1722 = vmatpush.bf16.msra.mxu0 %v1137
        %1723 = vmatpush.bf16.msra.mxu0 %v1135
        %1724 = vmatpush.bf16.msra.mxu0 %v1133
        %1725 = vmatpush.bf16.msra.mxu0 %v1131
        %1726 = vmatpush.bf16.msra.mxu0 %v1129
        %1727 = vmatmul.bf16.gmra.mxu0 %v787
        %v1728 = vpop.f32.mrf.mxu0
        %v1729 = vadd.f32 %v1656, %v1728
        %v1730 = vpop.f32.mrf.mxu0
        %v1731 = vadd.f32 %v1658, %v1730
        %1732 = vmatmul.bf16.gmra.mxu0 %v791
        %v1733 = vpop.f32.mrf.mxu0
        %v1734 = vadd.f32 %v1661, %v1733
        %v1735 = vpop.f32.mrf.mxu0
        %v1736 = vadd.f32 %v1663, %v1735
        %1737 = vmatmul.bf16.gmra.mxu0 %v795
        %v1738 = vpop.f32.mrf.mxu0
        %v1739 = vadd.f32 %v1666, %v1738
        %v1740 = vpop.f32.mrf.mxu0
        %v1741 = vadd.f32 %v1668, %v1740
        %1742 = vmatmul.bf16.gmra.mxu0 %v799
        %v1743 = vpop.f32.mrf.mxu0
        %v1744 = vadd.f32 %v1671, %v1743
        %v1745 = vpop.f32.mrf.mxu0
        %v1746 = vadd.f32 %v1673, %v1745
        %1747 = vmatmul.bf16.gmra.mxu0 %v803
        %v1748 = vpop.f32.mrf.mxu0
        %v1749 = vadd.f32 %v1676, %v1748
        %v1750 = vpop.f32.mrf.mxu0
        %v1751 = vadd.f32 %v1678, %v1750
        %1752 = vmatmul.bf16.gmra.mxu0 %v807
        %v1753 = vpop.f32.mrf.mxu0
        %v1754 = vadd.f32 %v1681, %v1753
        %v1755 = vpop.f32.mrf.mxu0
        %v1756 = vadd.f32 %v1683, %v1755
        %1757 = vmatmul.bf16.gmra.mxu0 %v811
        %v1758 = vpop.f32.mrf.mxu0
        %v1759 = vadd.f32 %v1686, %v1758
        %v1760 = vpop.f32.mrf.mxu0
        %v1761 = vadd.f32 %v1688, %v1760
        %1762 = vmatmul.bf16.gmra.mxu0 %v815
        %v1763 = vpop.f32.mrf.mxu0
        %v1764 = vadd.f32 %v1691, %v1763
        %v1765 = vpop.f32.mrf.mxu0
        %v1766 = vadd.f32 %v1693, %v1765
        %1767 = vmatmul.bf16.gmra.mxu0 %v819
        %v1768 = vpop.f32.mrf.mxu0
        %v1769 = vadd.f32 %v1696, %v1768
        %v1770 = vpop.f32.mrf.mxu0
        %v1771 = vadd.f32 %v1698, %v1770
        %1772 = vmatmul.bf16.gmra.mxu0 %v823
        %v1773 = vpop.f32.mrf.mxu0
        %v1774 = vadd.f32 %v1701, %v1773
        %v1775 = vpop.f32.mrf.mxu0
        %v1776 = vadd.f32 %v1703, %v1775
        %1777 = vmatmul.bf16.gmra.mxu0 %v827
        %v1778 = vpop.f32.mrf.mxu0
        %v1779 = vadd.f32 %v1706, %v1778
        %v1780 = vpop.f32.mrf.mxu0
        %v1781 = vadd.f32 %v1708, %v1780
        %1782 = vmatmul.bf16.gmra.mxu0 %v831
        %v1783 = vpop.f32.mrf.mxu0
        %v1784 = vadd.f32 %v1711, %v1783
        %v1785 = vpop.f32.mrf.mxu0
        %v1786 = vadd.f32 %v1713, %v1785
        %1787 = vmatmul.bf16.gmra.mxu0 %v835
        %v1788 = vpop.f32.mrf.mxu0
        %v1789 = vadd.f32 %v1716, %v1788
        %v1790 = vpop.f32.mrf.mxu0
        %1791 = vdwg.mxu0
        %v1792 = vmax.f32 %v1437, 0.0
        %v1793 = vmax.f32 %v1729, 0.0
        %v1794 = vmax.f32 %v1439, 0.0
        %v1795 = vmax.f32 %v1731, 0.0
        %v1796 = vmax.f32 %v1442, 0.0
        %v1797 = vmax.f32 %v1734, 0.0
        %v1798 = vmax.f32 %v1444, 0.0
        %v1799 = vmax.f32 %v1736, 0.0
        %v1800 = vmax.f32 %v1447, 0.0
        %v1801 = vmax.f32 %v1739, 0.0
        %v1802 = vmax.f32 %v1449, 0.0
        %v1803 = vmax.f32 %v1741, 0.0
        %v1804 = vmax.f32 %v1452, 0.0
        %v1805 = vmax.f32 %v1744, 0.0
        %v1806 = vmax.f32 %v1454, 0.0
        %v1807 = vmax.f32 %v1746, 0.0
        %v1808 = vmax.f32 %v1457, 0.0
        %v1809 = vmax.f32 %v1749, 0.0
        %v1810 = vmax.f32 %v1459, 0.0
        %v1811 = vmax.f32 %v1751, 0.0
        %v1812 = vmax.f32 %v1462, 0.0
        %v1813 = vmax.f32 %v1754, 0.0
        %v1814 = vmax.f32 %v1464, 0.0
        %v1815 = vmax.f32 %v1756, 0.0
        %v1816 = vmax.f32 %v1467, 0.0
        %v1817 = vmax.f32 %v1759, 0.0
        %v1818 = vmax.f32 %v1469, 0.0
        %v1819 = vmax.f32 %v1761, 0.0
        %v1820 = vmax.f32 %v1472, 0.0
        %v1821 = vmax.f32 %v1764, 0.0
        %v1822 = vmax.f32 %v1474, 0.0
        %v1823 = vmax.f32 %v1766, 0.0
        %v1824 = vmax.f32 %v1477, 0.0
        %v1825 = vmax.f32 %v1769, 0.0
        %v1826 = vmax.f32 %v1479, 0.0
        %v1827 = vmax.f32 %v1771, 0.0
        %v1828 = vmax.f32 %v1482, 0.0
        %v1829 = vmax.f32 %v1774, 0.0
        %v1830 = vmax.f32 %v1484, 0.0
        %v1831 = vmax.f32 %v1776, 0.0
        %v1832 = vmax.f32 %v1487, 0.0
        %v1833 = vmax.f32 %v1779, 0.0
        %v1834 = vmax.f32 %v1489, 0.0
        %v1835 = vmax.f32 %v1781, 0.0
        %v1836 = vmax.f32 %v1492, 0.0
        %v1837 = vmax.f32 %v1784, 0.0
        %v1838 = vmax.f32 %v1494, 0.0
        %v1839 = vmax.f32 %v1786, 0.0
        %v1840 = vmax.f32 %v1497, 0.0
        %v1841 = vmax.f32 %v1789, 0.0
        %v1842 = vpack.c.bf16 %v1793, %v1792
        %v1843 = vpack.c.bf16 %v1795, %v1794
        %v1844 = vpack.c.bf16 %v1797, %v1796
        %v1845 = vpack.c.bf16 %v1799, %v1798
        %v1846 = vpack.c.bf16 %v1801, %v1800
        %v1847 = vpack.c.bf16 %v1803, %v1802
        %v1848 = vpack.c.bf16 %v1805, %v1804
        %v1849 = vpack.c.bf16 %v1807, %v1806
        %v1850 = vpack.c.bf16 %v1809, %v1808
        %v1851 = vpack.c.bf16 %v1811, %v1810
        %v1852 = vpack.c.bf16 %v1813, %v1812
        %v1853 = vpack.c.bf16 %v1815, %v1814
        %v1854 = vpack.c.bf16 %v1817, %v1816
        %v1855 = vpack.c.bf16 %v1819, %v1818
        %v1856 = vpack.c.bf16 %v1821, %v1820
        %v1857 = vpack.c.bf16 %v1823, %v1822
        %v1858 = vpack.c.bf16 %v1825, %v1824
        %v1859 = vpack.c.bf16 %v1827, %v1826
        %v1860 = vpack.c.bf16 %v1829, %v1828
        %v1861 = vpack.c.bf16 %v1831, %v1830
        %v1862 = vpack.c.bf16 %v1833, %v1832
        %v1863 = vpack.c.bf16 %v1835, %v1834
        %v1864 = vpack.c.bf16 %v1837, %v1836
        %v1865 = vpack.c.bf16 %v1839, %v1838
        %v1866 = vpack.c.bf16 %v1841, %v1840
        %1867 = vst [vmem:[%s498] sm:$0xff] %v1842
        %1868 = vst [vmem:[%s498 + $0x8] sm:$0xff] %v1843
        %1869 = vst [vmem:[%s498 + $0x10] sm:$0xff] %v1844
        %1870 = vst [vmem:[%s498 + $0x18] sm:$0xff] %v1845
        %1871 = vst [vmem:[%s498 + $0x20] sm:$0xff] %v1846
        %1872 = vst [vmem:[%s498 + $0x28] sm:$0xff] %v1847
        %1873 = vst [vmem:[%s498 + $0x30] sm:$0xff] %v1848
        %1874 = vst [vmem:[%s498 + $0x38] sm:$0xff] %v1849
        %1875 = vst [vmem:[%s498 + $0x40] sm:$0xff] %v1850
        %1876 = vst [vmem:[%s498 + $0x48] sm:$0xff] %v1851
        %1877 = vst [vmem:[%s498 + $0x50] sm:$0xff] %v1852
        %1878 = vst [vmem:[%s498 + $0x58] sm:$0xff] %v1853
        %1879 = vst [vmem:[%s498 + $0x60] sm:$0xff] %v1854
        %1880 = vst [vmem:[%s498 + $0x68] sm:$0xff] %v1855
        %1881 = vst [vmem:[%s498 + $0x70] sm:$0xff] %v1856
        %1882 = vst [vmem:[%s498 + $0x78] sm:$0xff] %v1857
        %1883 = vst [vmem:[%s498 + $0x80] sm:$0xff] %v1858
        %1884 = vst [vmem:[%s498 + $0x88] sm:$0xff] %v1859
        %1885 = vst [vmem:[%s498 + $0x90] sm:$0xff] %v1860
        %1886 = vst [vmem:[%s498 + $0x98] sm:$0xff] %v1861
        %1887 = vst [vmem:[%s498 + $0xa0] sm:$0xff] %v1862
        %1888 = vst [vmem:[%s498 + $0xa8] sm:$0xff] %v1863
        %1889 = vst [vmem:[%s498 + $0xb0] sm:$0xff] %v1864
        %1890 = vst [vmem:[%s498 + $0xb8] sm:$0xff] %v1865
        %1891 = vst [vmem:[%s498 + $0xc0] sm:$0xff] %v1866
        %s1892 = sand.u32 %s114, 1
        %s1893 = sand.u32 %s114, 1
        %s1894 = smul.addr %s1893, 200
        %s1895 = scalar_lea.vmem [#allocation3], %s1894
        // Predicated region
        $region71: #{conv_decoder_forward.10} parent=65 // pred_check
          %p1896 = pneg %p124
        $region72: #{conv_decoder_forward.10} parent=65 // pred_check_branch
          %1898 = sbr.rel (%p1896) target = $region74
        $region73: #{conv_decoder_forward.10} parent=65 // pred_region
          %s1899 = smul.u32 25, %s18
          %s1900 = smul.u32 2, %s19
          %s1901 = smul.addr %s1899, 8
          %s1902 = sadd.s32 %s1900, %s1901
          %s1903 = smul.addr %s1902, 4
          %s1904 = scalar_lea.vmem %s3, %s1903
          // Predicated region
          $region75: #{conv_decoder_forward.10} parent=73 // pred_check
            _
          $region76: #{conv_decoder_forward.10} parent=73 // pred_check_branch
            %1906 = sbr.rel (0) target = $region78
          $region77: #{conv_decoder_forward.10} parent=73 // pred_region
            // Predicated region
            $region79: #{conv_decoder_forward.10} parent=77 // pred_check
              _
            $region80: #{conv_decoder_forward.10} parent=77 // pred_check_branch
              %1908 = sbr.rel (0) target = $region82
            $region81: #{conv_decoder_forward.10} parent=77 // pred_region
              // Predicated region
              $region94: #{conv_decoder_forward.10} parent=81 // pred_check
                _
              $region95: #{conv_decoder_forward.10} parent=81 // pred_check_branch
                %1972 = sbr.rel (0) target = $region97
              $region96: #{conv_decoder_forward.10} parent=81 // pred_region
                loop: start=0, step=1, limit=1
                $region98: #{conv_decoder_forward.10} parent=96 // loop_pre_header
                  _
                $region99: #{conv_decoder_forward.10} parent=96 // loop_header
                  %s1974 = sphi 0, %s1978
                  %p1975 = scmp.ge.s32.totalorder %s1974, 1
                  %s1979 = sphi %s1895, %s1895
                  %s1980 = sphi %s1904, %s1904
                $region100: #{conv_decoder_forward.10} parent=96 // loop_header_branch
                  %1977 = sbr.rel (%p1975) target = $region104
                $region101: #{conv_decoder_forward.10} parent=96 // loop_body
                  %v1981 = vld [vmem:[%s1979] sm:$0xff]
                  %1982 = vst [vmem:[%s1980] sm:$0xff] %v1981
                  %v1983 = vld [vmem:[%s1979 + $0x8] sm:$0xff]
                  %1984 = vst [vmem:[%s1980 + $0x20] sm:$0xff] %v1983
                  %v1985 = vld [vmem:[%s1979 + $0x10] sm:$0xff]
                  %1986 = vst [vmem:[%s1980 + $0x40] sm:$0xff] %v1985
                  %v1987 = vld [vmem:[%s1979 + $0x18] sm:$0xff]
                  %1988 = vst [vmem:[%s1980 + $0x60] sm:$0xff] %v1987
                  %v1989 = vld [vmem:[%s1979 + $0x20] sm:$0xff]
                  %1990 = vst [vmem:[%s1980 + $0x80] sm:$0xff] %v1989
                  %v1991 = vld [vmem:[%s1979 + $0x28] sm:$0xff]
                  %1992 = vst [vmem:[%s1980 + $0xa0] sm:$0xff] %v1991
                  %v1993 = vld [vmem:[%s1979 + $0x30] sm:$0xff]
                  %1994 = vst [vmem:[%s1980 + $0xc0] sm:$0xff] %v1993
                  %v1995 = vld [vmem:[%s1979 + $0x38] sm:$0xff]
                  %1996 = vst [vmem:[%s1980 + $0xe0] sm:$0xff] %v1995
                  %v1997 = vld [vmem:[%s1979 + $0x40] sm:$0xff]
                  %1998 = vst [vmem:[%s1980 + $0x100] sm:$0xff] %v1997
                  %v1999 = vld [vmem:[%s1979 + $0x48] sm:$0xff]
                  %2000 = vst [vmem:[%s1980 + $0x120] sm:$0xff] %v1999
                  %v2001 = vld [vmem:[%s1979 + $0x50] sm:$0xff]
                  %2002 = vst [vmem:[%s1980 + $0x140] sm:$0xff] %v2001
                  %v2003 = vld [vmem:[%s1979 + $0x58] sm:$0xff]
                  %2004 = vst [vmem:[%s1980 + $0x160] sm:$0xff] %v2003
                  %v2005 = vld [vmem:[%s1979 + $0x60] sm:$0xff]
                  %2006 = vst [vmem:[%s1980 + $0x180] sm:$0xff] %v2005
                  %v2007 = vld [vmem:[%s1979 + $0x68] sm:$0xff]
                  %2008 = vst [vmem:[%s1980 + $0x1a0] sm:$0xff] %v2007
                  %v2009 = vld [vmem:[%s1979 + $0x70] sm:$0xff]
                  %2010 = vst [vmem:[%s1980 + $0x1c0] sm:$0xff] %v2009
                  %v2011 = vld [vmem:[%s1979 + $0x78] sm:$0xff]
                  %2012 = vst [vmem:[%s1980 + $0x1e0] sm:$0xff] %v2011
                  %v2013 = vld [vmem:[%s1979 + $0x80] sm:$0xff]
                  %2014 = vst [vmem:[%s1980 + $0x200] sm:$0xff] %v2013
                  %v2015 = vld [vmem:[%s1979 + $0x88] sm:$0xff]
                  %2016 = vst [vmem:[%s1980 + $0x220] sm:$0xff] %v2015
                  %v2017 = vld [vmem:[%s1979 + $0x90] sm:$0xff]
                  %2018 = vst [vmem:[%s1980 + $0x240] sm:$0xff] %v2017
                  %v2019 = vld [vmem:[%s1979 + $0x98] sm:$0xff]
                  %2020 = vst [vmem:[%s1980 + $0x260] sm:$0xff] %v2019
                  %v2021 = vld [vmem:[%s1979 + $0xa0] sm:$0xff]
                  %2022 = vst [vmem:[%s1980 + $0x280] sm:$0xff] %v2021
                  %v2023 = vld [vmem:[%s1979 + $0xa8] sm:$0xff]
                  %2024 = vst [vmem:[%s1980 + $0x2a0] sm:$0xff] %v2023
                  %v2025 = vld [vmem:[%s1979 + $0xb0] sm:$0xff]
                  %2026 = vst [vmem:[%s1980 + $0x2c0] sm:$0xff] %v2025
                  %v2027 = vld [vmem:[%s1979 + $0xb8] sm:$0xff]
                  %2028 = vst [vmem:[%s1980 + $0x2e0] sm:$0xff] %v2027
                  %v2029 = vld [vmem:[%s1979 + $0xc0] sm:$0xff]
                  %2030 = vst [vmem:[%s1980 + $0x300] sm:$0xff] %v2029
                $region102: #{conv_decoder_forward.10} parent=96 // loop_footer
                  %s1978 = sadd.s32 1, %s1974
                $region103: #{conv_decoder_forward.10} parent=96 // loop_footer_branch
                  %1973 = sbr.rel target = $region99
                $region104: #{conv_decoder_forward.10} parent=96 // loop_exit
                  _
              $region97: #{conv_decoder_forward.10} parent=81 // pred_fallthru
                _
              // Predicated region
              $region105: #{conv_decoder_forward.10} parent=81 // pred_check
                _
              $region106: #{conv_decoder_forward.10} parent=81 // pred_check_branch
                %2032 = sbr.rel target = $region108
              $region107: #{conv_decoder_forward.10} parent=81 // pred_region
                _
              $region108: #{conv_decoder_forward.10} parent=81 // pred_fallthru
                _
            $region82: #{conv_decoder_forward.10} parent=77 // pred_fallthru
              _
            // Predicated region
            $region83: #{conv_decoder_forward.10} parent=77 // pred_check
              _
            $region84: #{conv_decoder_forward.10} parent=77 // pred_check_branch
              %1910 = sbr.rel target = $region86
            $region85: #{conv_decoder_forward.10} parent=77 // pred_region
              %s1912 = ssub.s32 256, 1
              loop: start=0, step=1, limit=1
              $region87: #{conv_decoder_forward.10} parent=85 // loop_pre_header
                _
              $region88: #{conv_decoder_forward.10} parent=85 // loop_header
                %s1914 = sphi 0, %s1918
                %p1915 = scmp.ge.s32.totalorder %s1914, 1
                %s1919 = sphi %s1895, %s1895
                %s1920 = sphi %s1904, %s1904
              $region89: #{conv_decoder_forward.10} parent=85 // loop_header_branch
                %1917 = sbr.rel (%p1915) target = $region93
              $region90: #{conv_decoder_forward.10} parent=85 // loop_body
                %v1921 = vld [vmem:[%s1919] sm:%s1912]
                %1922 = vst [vmem:[%s1920] sm:%s1912] %v1921
                %v1923 = vld [vmem:[%s1919 + $0x8] sm:%s1912]
                %1924 = vst [vmem:[%s1920 + $0x20] sm:%s1912] %v1923
                %v1925 = vld [vmem:[%s1919 + $0x10] sm:%s1912]
                %1926 = vst [vmem:[%s1920 + $0x40] sm:%s1912] %v1925
                %v1927 = vld [vmem:[%s1919 + $0x18] sm:%s1912]
                %1928 = vst [vmem:[%s1920 + $0x60] sm:%s1912] %v1927
                %v1929 = vld [vmem:[%s1919 + $0x20] sm:%s1912]
                %1930 = vst [vmem:[%s1920 + $0x80] sm:%s1912] %v1929
                %v1931 = vld [vmem:[%s1919 + $0x28] sm:%s1912]
                %1932 = vst [vmem:[%s1920 + $0xa0] sm:%s1912] %v1931
                %v1933 = vld [vmem:[%s1919 + $0x30] sm:%s1912]
                %1934 = vst [vmem:[%s1920 + $0xc0] sm:%s1912] %v1933
                %v1935 = vld [vmem:[%s1919 + $0x38] sm:%s1912]
                %1936 = vst [vmem:[%s1920 + $0xe0] sm:%s1912] %v1935
                %v1937 = vld [vmem:[%s1919 + $0x40] sm:%s1912]
                %1938 = vst [vmem:[%s1920 + $0x100] sm:%s1912] %v1937
                %v1939 = vld [vmem:[%s1919 + $0x48] sm:%s1912]
                %1940 = vst [vmem:[%s1920 + $0x120] sm:%s1912] %v1939
                %v1941 = vld [vmem:[%s1919 + $0x50] sm:%s1912]
                %1942 = vst [vmem:[%s1920 + $0x140] sm:%s1912] %v1941
                %v1943 = vld [vmem:[%s1919 + $0x58] sm:%s1912]
                %1944 = vst [vmem:[%s1920 + $0x160] sm:%s1912] %v1943
                %v1945 = vld [vmem:[%s1919 + $0x60] sm:%s1912]
                %1946 = vst [vmem:[%s1920 + $0x180] sm:%s1912] %v1945
                %v1947 = vld [vmem:[%s1919 + $0x68] sm:%s1912]
                %1948 = vst [vmem:[%s1920 + $0x1a0] sm:%s1912] %v1947
                %v1949 = vld [vmem:[%s1919 + $0x70] sm:%s1912]
                %1950 = vst [vmem:[%s1920 + $0x1c0] sm:%s1912] %v1949
                %v1951 = vld [vmem:[%s1919 + $0x78] sm:%s1912]
                %1952 = vst [vmem:[%s1920 + $0x1e0] sm:%s1912] %v1951
                %v1953 = vld [vmem:[%s1919 + $0x80] sm:%s1912]
                %1954 = vst [vmem:[%s1920 + $0x200] sm:%s1912] %v1953
                %v1955 = vld [vmem:[%s1919 + $0x88] sm:%s1912]
                %1956 = vst [vmem:[%s1920 + $0x220] sm:%s1912] %v1955
                %v1957 = vld [vmem:[%s1919 + $0x90] sm:%s1912]
                %1958 = vst [vmem:[%s1920 + $0x240] sm:%s1912] %v1957
                %v1959 = vld [vmem:[%s1919 + $0x98] sm:%s1912]
                %1960 = vst [vmem:[%s1920 + $0x260] sm:%s1912] %v1959
                %v1961 = vld [vmem:[%s1919 + $0xa0] sm:%s1912]
                %1962 = vst [vmem:[%s1920 + $0x280] sm:%s1912] %v1961
                %v1963 = vld [vmem:[%s1919 + $0xa8] sm:%s1912]
                %1964 = vst [vmem:[%s1920 + $0x2a0] sm:%s1912] %v1963
                %v1965 = vld [vmem:[%s1919 + $0xb0] sm:%s1912]
                %1966 = vst [vmem:[%s1920 + $0x2c0] sm:%s1912] %v1965
                %v1967 = vld [vmem:[%s1919 + $0xb8] sm:%s1912]
                %1968 = vst [vmem:[%s1920 + $0x2e0] sm:%s1912] %v1967
                %v1969 = vld [vmem:[%s1919 + $0xc0] sm:%s1912]
                %1970 = vst [vmem:[%s1920 + $0x300] sm:%s1912] %v1969
              $region91: #{conv_decoder_forward.10} parent=85 // loop_footer
                %s1918 = sadd.s32 1, %s1914
              $region92: #{conv_decoder_forward.10} parent=85 // loop_footer_branch
                %1913 = sbr.rel target = $region88
              $region93: #{conv_decoder_forward.10} parent=85 // loop_exit
                _
            $region86: #{conv_decoder_forward.10} parent=77 // pred_fallthru
              _
          $region78: #{conv_decoder_forward.10} parent=73 // pred_fallthru
            _
          %2033 = vnop
        $region74: #{conv_decoder_forward.10} parent=65 // pred_fallthru
          _
      $region66: #{conv_decoder_forward.10} parent=5 // pred_fallthru
        _
      %p2034 = scmp.le.s32.totalorder 2, %s9
      // Predicated region
      $region109: #{conv_decoder_forward.10} parent=5 // pred_check
        %p2035 = pneg %p2034
      $region110: #{conv_decoder_forward.10} parent=5 // pred_check_branch
        %2037 = sbr.rel (%p2035) target = $region112
      $region111: #{conv_decoder_forward.10} parent=5 // pred_region
        %s2038 = ssub.s32 %s9, 2
        // Predicated region
        $region113: #{conv_decoder_forward.10} parent=111 // pred_check
          %p2039 = pneg %p130
        $region114: #{conv_decoder_forward.10} parent=111 // pred_check_branch
          %2041 = sbr.rel (%p2039) target = $region116
        $region115: #{conv_decoder_forward.10} parent=111 // pred_region
          %s2042 = sand.u32 %s115, 1
          %s2043 = sand.u32 %s115, 1
          %s2044 = smul.addr %s2043, 200
          %s2045 = scalar_lea.vmem [#allocation3], %s2044
        $region116: #{conv_decoder_forward.10} parent=111 // pred_fallthru
          _
      $region112: #{conv_decoder_forward.10} parent=5 // pred_fallthru
        _
    $region6: #{conv_decoder_forward.10} parent=1 // loop_footer
      %s13 = sadd.s32 1, %s9
    $region7: #{conv_decoder_forward.10} parent=1 // loop_footer_branch
      %8 = sbr.rel target = $region3
    $region8: #{conv_decoder_forward.10} parent=1 // loop_exit
      _

// kernel: conv_decoder_forward.11
$region0: #{conv_decoder_forward.11}
  #allocation0 [shape = 'u32[]', space=smem, size = 0x4, offset = 0x4, fixed_abs, tag = 'smem constant byte address 0x4 - core index']
  #allocation1 [shape = 'u32[72,128]{1,0:T(1,128)}', space=vmem, size = 0x9000, scoped, tag = 'internal scratch']
  %s0 = inlined_call_operand.vmem [shape: bf16[800,256], index: 0, kind: input, shape index: {}]
  %s1 = inlined_call_operand.vmem [shape: bf16[256,512], index: 1, kind: input, shape index: {}]
  %s2 = inlined_call_operand.vmem [shape: f32[1,512], index: 2, kind: input, shape index: {}]
  %s3 = inlined_call_operand.vmem [shape: bf16[800,512], index: 3, kind: output, shape index: {}]
  %s4 = sld [smem:[#allocation0]]
  $region117: #{conv_decoder_forward.11} parent=0
    _
  %s6 = ssub.s32 1, %s4
  %s7 = scalar_select 0, %s6, %s4
  $region1: #{conv_decoder_forward.11} parent=0
    #allocation2 [shape = 'u8[262144]{0}', space=vmem, size = 0x40000, scoped, tag = 'input window, operand 1']
    #allocation3 [shape = 'u8[819200]{0}', space=vmem, size = 0xc8000, scoped, tag = 'output window, operand 0']
    loop: start=0, step=1, limit=4
    $region2: #{conv_decoder_forward.11} parent=1 // loop_pre_header
      _
    $region3: #{conv_decoder_forward.11} parent=1 // loop_header
      %s9 = sphi 0, %s13
      %p10 = scmp.ge.s32.totalorder %s9, 4
      %s16 = sphi 0, %s28
      %s17 = sphi 0, %s24
      %s18 = sphi 0, %s16
      %s19 = sphi 0, %s17
      %s20 = sphi 0, %s18
      %s21 = sphi 0, %s19
      %s31 = sphi 0, %s33
      %s34 = sphi 0, %s31
      %s35 = sphi 0, %s34
      %s51 = sphi 0, %s35
      %s57 = sphi 0, %s59
      %s60 = sphi 0, %s57
      %s61 = sphi 0, %s60
      %s77 = sphi 0, %s61
      %s83 = sphi 0, %s85
      %s86 = sphi 0, %s83
      %s87 = sphi 0, %s86
      %s103 = sphi 0, %s87
      %s111 = sphi 0, %s113
      %s114 = sphi 0, %s111
      %s115 = sphi 0, %s114
      %s131 = sphi 0, %s115
    $region4: #{conv_decoder_forward.11} parent=1 // loop_header_branch
      %12 = sbr.rel (%p10) target = $region8
    $region5: #{conv_decoder_forward.11} parent=1 // loop_body
      %s14 = ssub.s32 %s9, 1
      %s15 = ssub.s32 %s9, 2
      %s22 = sadd.s32 1, %s17
      %p23 = scmp.ge.s32.totalorder %s22, 2
      %s24 = scalar_select %p23, 0, %s22
      %s25 = sadd.s32 1, %s16
      %s26 = scalar_select %p23, %s25, %s16
      %p27 = scmp.ge.s32.totalorder %s26, 1
      %s28 = scalar_select %p27, 0, %s26
      %s29 = ssub.s32 %s16, %s28
      %p30 = scmp.eq.s32.totalorder %s29, 0
      %s32 = sadd.s32 %s31, 1
      %s33 = scalar_select %p30, %s31, %s32
      %p36 = pneg %p30
      %p37 = scmp.eq.s32.totalorder %s9, 1
      %p38 = por %p36, %p37
      %p39 = scmp.ne.s32.totalorder %s31, %s34
      %p40 = scmp.eq.s32.totalorder %s9, 0
      %p41 = por %p39, %p40
      %p42 = scmp.ne.s32.totalorder %s31, %s34
      %p43 = scmp.eq.s32.totalorder %s14, 1
      %p44 = por %p42, %p43
      %p45 = scmp.ne.s32.totalorder %s34, %s35
      %p46 = scmp.eq.s32.totalorder %s14, 0
      %p47 = por %p45, %p46
      %p48 = scmp.ne.s32.totalorder %s34, %s35
      %p49 = scmp.eq.s32.totalorder %s15, 1
      %p50 = por %p48, %p49
      %p52 = scmp.ne.s32.totalorder %s35, %s51
      %p53 = scmp.eq.s32.totalorder %s15, 0
      %p54 = por %p52, %p53
      %s55 = ssub.s32 %s17, %s24
      %p56 = scmp.eq.s32.totalorder %s55, 0
      %s58 = sadd.s32 %s57, 1
      %s59 = scalar_select %p56, %s57, %s58
      %p62 = pneg %p56
      %p63 = scmp.eq.s32.totalorder %s9, 1
      %p64 = por %p62, %p63
      %p65 = scmp.ne.s32.totalorder %s57, %s60
      %p66 = scmp.eq.s32.totalorder %s9, 0
      %p67 = por %p65, %p66
      %p68 = scmp.ne.s32.totalorder %s57, %s60
      %p69 = scmp.eq.s32.totalorder %s14, 1
      %p70 = por %p68, %p69
      %p71 = scmp.ne.s32.totalorder %s60, %s61
      %p72 = scmp.eq.s32.totalorder %s14, 0
      %p73 = por %p71, %p72
      %p74 = scmp.ne.s32.totalorder %s60, %s61
      %p75 = scmp.eq.s32.totalorder %s15, 1
      %p76 = por %p74, %p75
      %p78 = scmp.ne.s32.totalorder %s61, %s77
      %p79 = scmp.eq.s32.totalorder %s15, 0
      %p80 = por %p78, %p79
      %s81 = ssub.s32 %s17, %s24
      %p82 = scmp.eq.s32.totalorder %s81, 0
      %s84 = sadd.s32 %s83, 1
      %s85 = scalar_select %p82, %s83, %s84
      %p88 = pneg %p82
      %p89 = scmp.eq.s32.totalorder %s9, 1
      %p90 = por %p88, %p89
      %p91 = scmp.ne.s32.totalorder %s83, %s86
      %p92 = scmp.eq.s32.totalorder %s9, 0
      %p93 = por %p91, %p92
      %p94 = scmp.ne.s32.totalorder %s83, %s86
      %p95 = scmp.eq.s32.totalorder %s14, 1
      %p96 = por %p94, %p95
      %p97 = scmp.ne.s32.totalorder %s86, %s87
      %p98 = scmp.eq.s32.totalorder %s14, 0
      %p99 = por %p97, %p98
      %p100 = scmp.ne.s32.totalorder %s86, %s87
      %p101 = scmp.eq.s32.totalorder %s15, 1
      %p102 = por %p100, %p101
      %p104 = scmp.ne.s32.totalorder %s87, %s103
      %p105 = scmp.eq.s32.totalorder %s15, 0
      %p106 = por %p104, %p105
      %s107 = ssub.s32 %s16, %s28
      %s108 = ssub.s32 %s17, %s24
      %s109 = sor.u32 %s107, %s108
      %p110 = scmp.eq.s32.totalorder %s109, 0
      %s112 = sadd.s32 %s111, 1
      %s113 = scalar_select %p110, %s111, %s112
      %p116 = pneg %p110
      %p117 = scmp.eq.s32.totalorder %s9, 1
      %p118 = por %p116, %p117
      %p119 = scmp.ne.s32.totalorder %s111, %s114
      %p120 = scmp.eq.s32.totalorder %s9, 0
      %p121 = por %p119, %p120
      %p122 = scmp.ne.s32.totalorder %s111, %s114
      %p123 = scmp.eq.s32.totalorder %s14, 1
      %p124 = por %p122, %p123
      %p125 = scmp.ne.s32.totalorder %s114, %s115
      %p126 = scmp.eq.s32.totalorder %s14, 0
      %p127 = por %p125, %p126
      %p128 = scmp.ne.s32.totalorder %s114, %s115
      %p129 = scmp.eq.s32.totalorder %s15, 1
      %p130 = por %p128, %p129
      %p132 = scmp.ne.s32.totalorder %s115, %s131
      %p133 = scmp.eq.s32.totalorder %s15, 0
      %p134 = por %p132, %p133
      %p135 = scmp.le.s32.totalorder 1, %s9
      %p136 = scmp.lt.s32.totalorder %s9, 3
      %p137 = pnand %p135, %p136
      %p138 = pneg %p137
      // Predicated region
      $region9: #{conv_decoder_forward.11} parent=5 // pred_check
        _
      $region10: #{conv_decoder_forward.11} parent=5 // pred_check_branch
        %140 = sbr.rel (%p137) target = $region12
      $region11: #{conv_decoder_forward.11} parent=5 // pred_region
        %s141 = ssub.s32 %s9, 1
        // Predicated region
        $region13: #{conv_decoder_forward.11} parent=11 // pred_check
          %p142 = pneg %p47
        $region14: #{conv_decoder_forward.11} parent=11 // pred_check_branch
          %144 = sbr.rel (%p142) target = $region16
        $region15: #{conv_decoder_forward.11} parent=11 // pred_region
          %s145 = smul.u32 100, %s18
          %p146 = scmp.lt.s32.totalorder %s145, 99
          %s147 = scalar_select %p146, %s145, 99
          %s148 = smul.addr %s147, 2
          %s149 = smul.addr %s148, 4
          %s150 = scalar_lea.vmem %s0, %s149
          %s151 = smul.u32 100, %s18
        $region16: #{conv_decoder_forward.11} parent=11 // pred_fallthru
          _
      $region12: #{conv_decoder_forward.11} parent=5 // pred_fallthru
        _
      %p152 = scmp.lt.s32.totalorder %s9, 2
      // Predicated region
      $region17: #{conv_decoder_forward.11} parent=5 // pred_check
        %p153 = pneg %p152
      $region18: #{conv_decoder_forward.11} parent=5 // pred_check_branch
        %155 = sbr.rel (%p153) target = $region20
      $region19: #{conv_decoder_forward.11} parent=5 // pred_region
        // Predicated region
        $region21: #{conv_decoder_forward.11} parent=19 // pred_check
          %p156 = pneg %p67
        $region22: #{conv_decoder_forward.11} parent=19 // pred_check_branch
          %158 = sbr.rel (%p156) target = $region24
        $region23: #{conv_decoder_forward.11} parent=19 // pred_region
          %s159 = sand.u32 %s57, 1
          %s160 = sand.u32 %s57, 1
          %s161 = smul.addr %s160, 256
          %s162 = scalar_lea.vmem [#allocation2], %s161
          %s163 = smul.u32 2, %s17
          %s164 = smul.addr %s163, 4
          %s165 = scalar_lea.vmem %s1, %s164
          // Predicated region
          $region25: #{conv_decoder_forward.11} parent=23 // pred_check
            _
          $region26: #{conv_decoder_forward.11} parent=23 // pred_check_branch
            %167 = sbr.rel (0) target = $region28
          $region27: #{conv_decoder_forward.11} parent=23 // pred_region
            // Predicated region
            $region29: #{conv_decoder_forward.11} parent=27 // pred_check
              _
            $region30: #{conv_decoder_forward.11} parent=27 // pred_check_branch
              %169 = sbr.rel (0) target = $region32
            $region31: #{conv_decoder_forward.11} parent=27 // pred_region
              // Predicated region
              $region44: #{conv_decoder_forward.11} parent=31 // pred_check
                _
              $region45: #{conv_decoder_forward.11} parent=31 // pred_check_branch
                %247 = sbr.rel (0) target = $region47
              $region46: #{conv_decoder_forward.11} parent=31 // pred_region
                loop: start=0, step=1, limit=1
                $region48: #{conv_decoder_forward.11} parent=46 // loop_pre_header
                  _
                $region49: #{conv_decoder_forward.11} parent=46 // loop_header
                  %s249 = sphi 0, %s253
                  %p250 = scmp.ge.s32.totalorder %s249, 1
                  %s254 = sphi %s165, %s165
                  %s255 = sphi %s162, %s162
                $region50: #{conv_decoder_forward.11} parent=46 // loop_header_branch
                  %252 = sbr.rel (%p250) target = $region54
                $region51: #{conv_decoder_forward.11} parent=46 // loop_body
                  %v256 = vld [vmem:[%s254] sm:$0xff]
                  %257 = vst [vmem:[%s255] sm:$0xff] %v256
                  %v258 = vld [vmem:[%s254 + $0x10] sm:$0xff]
                  %259 = vst [vmem:[%s255 + $0x8] sm:$0xff] %v258
                  %v260 = vld [vmem:[%s254 + $0x20] sm:$0xff]
                  %261 = vst [vmem:[%s255 + $0x10] sm:$0xff] %v260
                  %v262 = vld [vmem:[%s254 + $0x30] sm:$0xff]
                  %263 = vst [vmem:[%s255 + $0x18] sm:$0xff] %v262
                  %v264 = vld [vmem:[%s254 + $0x40] sm:$0xff]
                  %265 = vst [vmem:[%s255 + $0x20] sm:$0xff] %v264
                  %v266 = vld [vmem:[%s254 + $0x50] sm:$0xff]
                  %267 = vst [vmem:[%s255 + $0x28] sm:$0xff] %v266
                  %v268 = vld [vmem:[%s254 + $0x60] sm:$0xff]
                  %269 = vst [vmem:[%s255 + $0x30] sm:$0xff] %v268
                  %v270 = vld [vmem:[%s254 + $0x70] sm:$0xff]
                  %271 = vst [vmem:[%s255 + $0x38] sm:$0xff] %v270
                  %v272 = vld [vmem:[%s254 + $0x80] sm:$0xff]
                  %273 = vst [vmem:[%s255 + $0x40] sm:$0xff] %v272
                  %v274 = vld [vmem:[%s254 + $0x90] sm:$0xff]
                  %275 = vst [vmem:[%s255 + $0x48] sm:$0xff] %v274
                  %v276 = vld [vmem:[%s254 + $0xa0] sm:$0xff]
                  %277 = vst [vmem:[%s255 + $0x50] sm:$0xff] %v276
                  %v278 = vld [vmem:[%s254 + $0xb0] sm:$0xff]
                  %279 = vst [vmem:[%s255 + $0x58] sm:$0xff] %v278
                  %v280 = vld [vmem:[%s254 + $0xc0] sm:$0xff]
                  %281 = vst [vmem:[%s255 + $0x60] sm:$0xff] %v280
                  %v282 = vld [vmem:[%s254 + $0xd0] sm:$0xff]
                  %283 = vst [vmem:[%s255 + $0x68] sm:$0xff] %v282
                  %v284 = vld [vmem:[%s254 + $0xe0] sm:$0xff]
                  %285 = vst [vmem:[%s255 + $0x70] sm:$0xff] %v284
                  %v286 = vld [vmem:[%s254 + $0xf0] sm:$0xff]
                  %287 = vst [vmem:[%s255 + $0x78] sm:$0xff] %v286
                  %v288 = vld [vmem:[%s254 + $0x100] sm:$0xff]
                  %289 = vst [vmem:[%s255 + $0x80] sm:$0xff] %v288
                  %v290 = vld [vmem:[%s254 + $0x110] sm:$0xff]
                  %291 = vst [vmem:[%s255 + $0x88] sm:$0xff] %v290
                  %v292 = vld [vmem:[%s254 + $0x120] sm:$0xff]
                  %293 = vst [vmem:[%s255 + $0x90] sm:$0xff] %v292
                  %v294 = vld [vmem:[%s254 + $0x130] sm:$0xff]
                  %295 = vst [vmem:[%s255 + $0x98] sm:$0xff] %v294
                  %v296 = vld [vmem:[%s254 + $0x140] sm:$0xff]
                  %297 = vst [vmem:[%s255 + $0xa0] sm:$0xff] %v296
                  %v298 = vld [vmem:[%s254 + $0x150] sm:$0xff]
                  %299 = vst [vmem:[%s255 + $0xa8] sm:$0xff] %v298
                  %v300 = vld [vmem:[%s254 + $0x160] sm:$0xff]
                  %301 = vst [vmem:[%s255 + $0xb0] sm:$0xff] %v300
                  %v302 = vld [vmem:[%s254 + $0x170] sm:$0xff]
                  %303 = vst [vmem:[%s255 + $0xb8] sm:$0xff] %v302
                  %v304 = vld [vmem:[%s254 + $0x180] sm:$0xff]
                  %305 = vst [vmem:[%s255 + $0xc0] sm:$0xff] %v304
                  %v306 = vld [vmem:[%s254 + $0x190] sm:$0xff]
                  %307 = vst [vmem:[%s255 + $0xc8] sm:$0xff] %v306
                  %v308 = vld [vmem:[%s254 + $0x1a0] sm:$0xff]
                  %309 = vst [vmem:[%s255 + $0xd0] sm:$0xff] %v308
                  %v310 = vld [vmem:[%s254 + $0x1b0] sm:$0xff]
                  %311 = vst [vmem:[%s255 + $0xd8] sm:$0xff] %v310
                  %v312 = vld [vmem:[%s254 + $0x1c0] sm:$0xff]
                  %313 = vst [vmem:[%s255 + $0xe0] sm:$0xff] %v312
                  %v314 = vld [vmem:[%s254 + $0x1d0] sm:$0xff]
                  %315 = vst [vmem:[%s255 + $0xe8] sm:$0xff] %v314
                  %v316 = vld [vmem:[%s254 + $0x1e0] sm:$0xff]
                  %317 = vst [vmem:[%s255 + $0xf0] sm:$0xff] %v316
                  %v318 = vld [vmem:[%s254 + $0x1f0] sm:$0xff]
                  %319 = vst [vmem:[%s255 + $0xf8] sm:$0xff] %v318
                $region52: #{conv_decoder_forward.11} parent=46 // loop_footer
                  %s253 = sadd.s32 1, %s249
                $region53: #{conv_decoder_forward.11} parent=46 // loop_footer_branch
                  %248 = sbr.rel target = $region49
                $region54: #{conv_decoder_forward.11} parent=46 // loop_exit
                  _
              $region47: #{conv_decoder_forward.11} parent=31 // pred_fallthru
                _
              // Predicated region
              $region55: #{conv_decoder_forward.11} parent=31 // pred_check
                _
              $region56: #{conv_decoder_forward.11} parent=31 // pred_check_branch
                %321 = sbr.rel target = $region58
              $region57: #{conv_decoder_forward.11} parent=31 // pred_region
                _
              $region58: #{conv_decoder_forward.11} parent=31 // pred_fallthru
                _
            $region32: #{conv_decoder_forward.11} parent=27 // pred_fallthru
              _
            // Predicated region
            $region33: #{conv_decoder_forward.11} parent=27 // pred_check
              _
            $region34: #{conv_decoder_forward.11} parent=27 // pred_check_branch
              %171 = sbr.rel target = $region36
            $region35: #{conv_decoder_forward.11} parent=27 // pred_region
              %s173 = ssub.s32 256, 1
              loop: start=0, step=1, limit=1
              $region37: #{conv_decoder_forward.11} parent=35 // loop_pre_header
                _
              $region38: #{conv_decoder_forward.11} parent=35 // loop_header
                %s175 = sphi 0, %s179
                %p176 = scmp.ge.s32.totalorder %s175, 1
                %s180 = sphi %s165, %s165
                %s181 = sphi %s162, %s162
              $region39: #{conv_decoder_forward.11} parent=35 // loop_header_branch
                %178 = sbr.rel (%p176) target = $region43
              $region40: #{conv_decoder_forward.11} parent=35 // loop_body
                %v182 = vld [vmem:[%s180] sm:%s173]
                %183 = vst [vmem:[%s181] sm:%s173] %v182
                %v184 = vld [vmem:[%s180 + $0x10] sm:%s173]
                %185 = vst [vmem:[%s181 + $0x8] sm:%s173] %v184
                %v186 = vld [vmem:[%s180 + $0x20] sm:%s173]
                %187 = vst [vmem:[%s181 + $0x10] sm:%s173] %v186
                %v188 = vld [vmem:[%s180 + $0x30] sm:%s173]
                %189 = vst [vmem:[%s181 + $0x18] sm:%s173] %v188
                %v190 = vld [vmem:[%s180 + $0x40] sm:%s173]
                %191 = vst [vmem:[%s181 + $0x20] sm:%s173] %v190
                %v192 = vld [vmem:[%s180 + $0x50] sm:%s173]
                %193 = vst [vmem:[%s181 + $0x28] sm:%s173] %v192
                %v194 = vld [vmem:[%s180 + $0x60] sm:%s173]
                %195 = vst [vmem:[%s181 + $0x30] sm:%s173] %v194
                %v196 = vld [vmem:[%s180 + $0x70] sm:%s173]
                %197 = vst [vmem:[%s181 + $0x38] sm:%s173] %v196
                %v198 = vld [vmem:[%s180 + $0x80] sm:%s173]
                %199 = vst [vmem:[%s181 + $0x40] sm:%s173] %v198
                %v200 = vld [vmem:[%s180 + $0x90] sm:%s173]
                %201 = vst [vmem:[%s181 + $0x48] sm:%s173] %v200
                %v202 = vld [vmem:[%s180 + $0xa0] sm:%s173]
                %203 = vst [vmem:[%s181 + $0x50] sm:%s173] %v202
                %v204 = vld [vmem:[%s180 + $0xb0] sm:%s173]
                %205 = vst [vmem:[%s181 + $0x58] sm:%s173] %v204
                %v206 = vld [vmem:[%s180 + $0xc0] sm:%s173]
                %207 = vst [vmem:[%s181 + $0x60] sm:%s173] %v206
                %v208 = vld [vmem:[%s180 + $0xd0] sm:%s173]
                %209 = vst [vmem:[%s181 + $0x68] sm:%s173] %v208
                %v210 = vld [vmem:[%s180 + $0xe0] sm:%s173]
                %211 = vst [vmem:[%s181 + $0x70] sm:%s173] %v210
                %v212 = vld [vmem:[%s180 + $0xf0] sm:%s173]
                %213 = vst [vmem:[%s181 + $0x78] sm:%s173] %v212
                %v214 = vld [vmem:[%s180 + $0x100] sm:%s173]
                %215 = vst [vmem:[%s181 + $0x80] sm:%s173] %v214
                %v216 = vld [vmem:[%s180 + $0x110] sm:%s173]
                %217 = vst [vmem:[%s181 + $0x88] sm:%s173] %v216
                %v218 = vld [vmem:[%s180 + $0x120] sm:%s173]
                %219 = vst [vmem:[%s181 + $0x90] sm:%s173] %v218
                %v220 = vld [vmem:[%s180 + $0x130] sm:%s173]
                %221 = vst [vmem:[%s181 + $0x98] sm:%s173] %v220
                %v222 = vld [vmem:[%s180 + $0x140] sm:%s173]
                %223 = vst [vmem:[%s181 + $0xa0] sm:%s173] %v222
                %v224 = vld [vmem:[%s180 + $0x150] sm:%s173]
                %225 = vst [vmem:[%s181 + $0xa8] sm:%s173] %v224
                %v226 = vld [vmem:[%s180 + $0x160] sm:%s173]
                %227 = vst [vmem:[%s181 + $0xb0] sm:%s173] %v226
                %v228 = vld [vmem:[%s180 + $0x170] sm:%s173]
                %229 = vst [vmem:[%s181 + $0xb8] sm:%s173] %v228
                %v230 = vld [vmem:[%s180 + $0x180] sm:%s173]
                %231 = vst [vmem:[%s181 + $0xc0] sm:%s173] %v230
                %v232 = vld [vmem:[%s180 + $0x190] sm:%s173]
                %233 = vst [vmem:[%s181 + $0xc8] sm:%s173] %v232
                %v234 = vld [vmem:[%s180 + $0x1a0] sm:%s173]
                %235 = vst [vmem:[%s181 + $0xd0] sm:%s173] %v234
                %v236 = vld [vmem:[%s180 + $0x1b0] sm:%s173]
                %237 = vst [vmem:[%s181 + $0xd8] sm:%s173] %v236
                %v238 = vld [vmem:[%s180 + $0x1c0] sm:%s173]
                %239 = vst [vmem:[%s181 + $0xe0] sm:%s173] %v238
                %v240 = vld [vmem:[%s180 + $0x1d0] sm:%s173]
                %241 = vst [vmem:[%s181 + $0xe8] sm:%s173] %v240
                %v242 = vld [vmem:[%s180 + $0x1e0] sm:%s173]
                %243 = vst [vmem:[%s181 + $0xf0] sm:%s173] %v242
                %v244 = vld [vmem:[%s180 + $0x1f0] sm:%s173]
                %245 = vst [vmem:[%s181 + $0xf8] sm:%s173] %v244
              $region41: #{conv_decoder_forward.11} parent=35 // loop_footer
                %s179 = sadd.s32 1, %s175
              $region42: #{conv_decoder_forward.11} parent=35 // loop_footer_branch
                %174 = sbr.rel target = $region38
              $region43: #{conv_decoder_forward.11} parent=35 // loop_exit
                _
            $region36: #{conv_decoder_forward.11} parent=27 // pred_fallthru
              _
          $region28: #{conv_decoder_forward.11} parent=23 // pred_fallthru
            _
          %322 = vnop
        $region24: #{conv_decoder_forward.11} parent=19 // pred_fallthru
          _
        // Predicated region
        $region59: #{conv_decoder_forward.11} parent=19 // pred_check
          %p323 = pneg %p93
        $region60: #{conv_decoder_forward.11} parent=19 // pred_check_branch
          %325 = sbr.rel (%p323) target = $region62
        $region61: #{conv_decoder_forward.11} parent=19 // pred_region
          %s326 = smul.u32 2, %s17
          %p327 = scmp.lt.s32.totalorder %s326, 3
          %s328 = scalar_select %p327, %s326, 3
          %s329 = scalar_lea.vmem %s2, %s328
          %s330 = smul.u32 2, %s17
        $region62: #{conv_decoder_forward.11} parent=19 // pred_fallthru
          _
      $region20: #{conv_decoder_forward.11} parent=5 // pred_fallthru
        _
      %p331 = scmp.le.s32.totalorder 1, %s9
      %p332 = scmp.lt.s32.totalorder %s9, 3
      %p333 = pnand %p331, %p332
      %p334 = pneg %p333
      // Predicated region
      $region63: #{conv_decoder_forward.11} parent=5 // pred_check
        _
      $region64: #{conv_decoder_forward.11} parent=5 // pred_check_branch
        %336 = sbr.rel (%p333) target = $region66
      $region65: #{conv_decoder_forward.11} parent=5 // pred_region
        %s337 = ssub.s32 %s9, 1
        %s338 = sand.u32 %s60, 1
        %s339 = sand.u32 %s60, 1
        %s340 = smul.addr %s339, 256
        %s341 = scalar_lea.vmem [#allocation2], %s340
        // Predicated region
        $region67: #{conv_decoder_forward.11} parent=65 // pred_check
          %p342 = pneg %p73
        $region68: #{conv_decoder_forward.11} parent=65 // pred_check_branch
          %344 = sbr.rel (%p342) target = $region70
        $region69: #{conv_decoder_forward.11} parent=65 // pred_region
          _
        $region70: #{conv_decoder_forward.11} parent=65 // pred_fallthru
          _
        %s345 = smul.u32 100, %s18
        %p346 = scmp.lt.s32.totalorder %s345, 99
        %s347 = scalar_select %p346, %s345, 99
        %s348 = smul.addr %s347, 2
        %s349 = smul.addr %s348, 4
        %s350 = scalar_lea.vmem %s0, %s349
        %p351 = pneg %p47
        %p352 = pneg %p44
        %s353 = sand.u32 %s60, 1
        %s354 = sand.u32 %s60, 1
        %s355 = smul.addr %s354, 256
        %s356 = scalar_lea.vmem [#allocation2], %s355
        %p357 = pneg %p73
        %p358 = pneg %p70
        %s359 = smul.u32 2, %s19
        %p360 = scmp.lt.s32.totalorder %s359, 3
        %s361 = scalar_select %p360, %s359, 3
        %s362 = scalar_lea.vmem %s2, %s361
        %p363 = pneg %p99
        %p364 = pneg %p96
        %p365 = pneg %p127
        %p366 = pneg %p124
        %s367 = sand.u32 %s114, 1
        %s368 = sand.u32 %s114, 1
        %s369 = smul.addr %s368, 800
        %s370 = scalar_lea.vmem [#allocation3], %s369
        %s371 = smul.u32 100, %s18
        %p372 = scmp.lt.s32.totalorder %s371, 99
        %s373 = scalar_select %p372, %s371, 99
        %s374 = smul.addr %s373, 2
        %s375 = smul.addr %s374, 4
        %s376 = scalar_lea.vmem %s0, %s375
        %s377 = smul.u32 100, %s18
        %s378 = smul.u32 2, %s19
        %s379 = smul.u32 2, %s19
        %p380 = scmp.lt.s32.totalorder %s379, 3
        %s381 = scalar_select %p380, %s379, 3
        %s382 = scalar_lea.vmem %s2, %s381
        %s383 = smul.u32 2, %s19
        %s384 = smul.u32 100, %s18
        %s385 = smul.u32 2, %s19
        %v386 = vld [vmem:[%s376] sm:$0xff]
        %v387 = vld [vmem:[%s376 + $0x8] sm:$0xff]
        %v388 = vld [vmem:[%s376 + $0x10] sm:$0xff]
        %v389 = vld [vmem:[%s376 + $0x18] sm:$0xff]
        %v390 = vld [vmem:[%s376 + $0x20] sm:$0xff]
        %v391 = vld [vmem:[%s376 + $0x28] sm:$0xff]
        %v392 = vld [vmem:[%s376 + $0x30] sm:$0xff]
        %v393 = vld [vmem:[%s376 + $0x38] sm:$0xff]
        %v394 = vld [vmem:[%s376 + $0x40] sm:$0xff]
        %v395 = vld [vmem:[%s376 + $0x48] sm:$0xff]
        %v396 = vld [vmem:[%s376 + $0x50] sm:$0xff]
        %v397 = vld [vmem:[%s376 + $0x58] sm:$0xff]
        %v398 = vld [vmem:[%s376 + $0x60] sm:$0xff]
        %v399 = vld [vmem:[%s376 + $0x68] sm:$0xff]
        %v400 = vld [vmem:[%s376 + $0x70] sm:$0xff]
        %v401 = vld [vmem:[%s376 + $0x78] sm:$0xff]
        %v402 = vld [vmem:[%s376 + $0x80] sm:$0xff]
        %v403 = vld [vmem:[%s376 + $0x88] sm:$0xff]
        %v404 = vld [vmem:[%s376 + $0x90] sm:$0xff]
        %v405 = vld [vmem:[%s376 + $0x98] sm:$0xff]
        %v406 = vld [vmem:[%s376 + $0xa0] sm:$0xff]
        %v407 = vld [vmem:[%s376 + $0xa8] sm:$0xff]
        %v408 = vld [vmem:[%s376 + $0xb0] sm:$0xff]
        %v409 = vld [vmem:[%s376 + $0xb8] sm:$0xff]
        %v410 = vld [vmem:[%s376 + $0xc0] sm:$0xff]
        %v411 = vld [vmem:[%s376 + $0xc8] sm:$0xff]
        %v412 = vld [vmem:[%s376 + $0xd0] sm:$0xff]
        %v413 = vld [vmem:[%s376 + $0xd8] sm:$0xff]
        %v414 = vld [vmem:[%s376 + $0xe0] sm:$0xff]
        %v415 = vld [vmem:[%s376 + $0xe8] sm:$0xff]
        %v416 = vld [vmem:[%s376 + $0xf0] sm:$0xff]
        %v417 = vld [vmem:[%s376 + $0xf8] sm:$0xff]
        %v418 = vld [vmem:[%s376 + $0x100] sm:$0xff]
        %v419 = vld [vmem:[%s376 + $0x108] sm:$0xff]
        %v420 = vld [vmem:[%s376 + $0x110] sm:$0xff]
        %v421 = vld [vmem:[%s376 + $0x118] sm:$0xff]
        %v422 = vld [vmem:[%s376 + $0x120] sm:$0xff]
        %v423 = vld [vmem:[%s376 + $0x128] sm:$0xff]
        %v424 = vld [vmem:[%s376 + $0x130] sm:$0xff]
        %v425 = vld [vmem:[%s376 + $0x138] sm:$0xff]
        %v426 = vld [vmem:[%s376 + $0x140] sm:$0xff]
        %v427 = vld [vmem:[%s376 + $0x148] sm:$0xff]
        %v428 = vld [vmem:[%s376 + $0x150] sm:$0xff]
        %v429 = vld [vmem:[%s376 + $0x158] sm:$0xff]
        %v430 = vld [vmem:[%s376 + $0x160] sm:$0xff]
        %v431 = vld [vmem:[%s376 + $0x168] sm:$0xff]
        %v432 = vld [vmem:[%s376 + $0x170] sm:$0xff]
        %v433 = vld [vmem:[%s376 + $0x178] sm:$0xff]
        %v434 = vld [vmem:[%s376 + $0x180] sm:$0xff]
        %v435 = vld [vmem:[%s376 + $0x188] sm:$0xff]
        %v436 = vld [vmem:[%s376 + $0x190] sm:$0xff]
        %v437 = vld [vmem:[%s376 + $0x198] sm:$0xff]
        %v438 = vld [vmem:[%s376 + $0x1a0] sm:$0xff]
        %v439 = vld [vmem:[%s376 + $0x1a8] sm:$0xff]
        %v440 = vld [vmem:[%s376 + $0x1b0] sm:$0xff]
        %v441 = vld [vmem:[%s376 + $0x1b8] sm:$0xff]
        %v442 = vld [vmem:[%s376 + $0x1c0] sm:$0xff]
        %v443 = vld [vmem:[%s376 + $0x1c8] sm:$0xff]
        %v444 = vld [vmem:[%s376 + $0x1d0] sm:$0xff]
        %v445 = vld [vmem:[%s376 + $0x1d8] sm:$0xff]
        %v446 = vld [vmem:[%s376 + $0x1e0] sm:$0xff]
        %v447 = vld [vmem:[%s376 + $0x1e8] sm:$0xff]
        %v448 = vld [vmem:[%s376 + $0x1f0] sm:$0xff]
        %v449 = vld [vmem:[%s376 + $0x1f8] sm:$0xff]
        %v450 = vld [vmem:[%s376 + $0x200] sm:$0xff]
        %v451 = vld [vmem:[%s376 + $0x208] sm:$0xff]
        %v452 = vld [vmem:[%s376 + $0x210] sm:$0xff]
        %v453 = vld [vmem:[%s376 + $0x218] sm:$0xff]
        %v454 = vld [vmem:[%s376 + $0x220] sm:$0xff]
        %v455 = vld [vmem:[%s376 + $0x228] sm:$0xff]
        %v456 = vld [vmem:[%s376 + $0x230] sm:$0xff]
        %v457 = vld [vmem:[%s376 + $0x238] sm:$0xff]
        %v458 = vld [vmem:[%s376 + $0x240] sm:$0xff]
        %v459 = vld [vmem:[%s376 + $0x248] sm:$0xff]
        %v460 = vld [vmem:[%s376 + $0x250] sm:$0xff]
        %v461 = vld [vmem:[%s376 + $0x258] sm:$0xff]
        %v462 = vld [vmem:[%s376 + $0x260] sm:$0xff]
        %v463 = vld [vmem:[%s376 + $0x268] sm:$0xff]
        %v464 = vld [vmem:[%s376 + $0x270] sm:$0xff]
        %v465 = vld [vmem:[%s376 + $0x278] sm:$0xff]
        %v466 = vld [vmem:[%s376 + $0x280] sm:$0xff]
        %v467 = vld [vmem:[%s376 + $0x288] sm:$0xff]
        %v468 = vld [vmem:[%s376 + $0x290] sm:$0xff]
        %v469 = vld [vmem:[%s376 + $0x298] sm:$0xff]
        %v470 = vld [vmem:[%s376 + $0x2a0] sm:$0xff]
        %v471 = vld [vmem:[%s376 + $0x2a8] sm:$0xff]
        %v472 = vld [vmem:[%s376 + $0x2b0] sm:$0xff]
        %v473 = vld [vmem:[%s376 + $0x2b8] sm:$0xff]
        %v474 = vld [vmem:[%s376 + $0x2c0] sm:$0xff]
        %v475 = vld [vmem:[%s376 + $0x2c8] sm:$0xff]
        %v476 = vld [vmem:[%s376 + $0x2d0] sm:$0xff]
        %v477 = vld [vmem:[%s376 + $0x2d8] sm:$0xff]
        %v478 = vld [vmem:[%s376 + $0x2e0] sm:$0xff]
        %v479 = vld [vmem:[%s376 + $0x2e8] sm:$0xff]
        %v480 = vld [vmem:[%s376 + $0x2f0] sm:$0xff]
        %v481 = vld [vmem:[%s376 + $0x2f8] sm:$0xff]
        %v482 = vld [vmem:[%s376 + $0x300] sm:$0xff]
        %v483 = vld [vmem:[%s376 + $0x308] sm:$0xff]
        %v484 = vld [vmem:[%s376 + $0x310] sm:$0xff]
        %v485 = vld [vmem:[%s376 + $0x318] sm:$0xff]
        %v486 = vld [vmem:[%s341] sm:$0xff]
        %v487 = vld [vmem:[%s341 + $0x8] sm:$0xff]
        %v488 = vld [vmem:[%s341 + $0x10] sm:$0xff]
        %v489 = vld [vmem:[%s341 + $0x18] sm:$0xff]
        %v490 = vld [vmem:[%s341 + $0x20] sm:$0xff]
        %v491 = vld [vmem:[%s341 + $0x28] sm:$0xff]
        %v492 = vld [vmem:[%s341 + $0x30] sm:$0xff]
        %v493 = vld [vmem:[%s341 + $0x38] sm:$0xff]
        %v494 = vld [vmem:[%s341 + $0x40] sm:$0xff]
        %v495 = vld [vmem:[%s341 + $0x48] sm:$0xff]
        %v496 = vld [vmem:[%s341 + $0x50] sm:$0xff]
        %v497 = vld [vmem:[%s341 + $0x58] sm:$0xff]
        %v498 = vld [vmem:[%s341 + $0x60] sm:$0xff]
        %v499 = vld [vmem:[%s341 + $0x68] sm:$0xff]
        %v500 = vld [vmem:[%s341 + $0x70] sm:$0xff]
        %v501 = vld [vmem:[%s341 + $0x78] sm:$0xff]
        %v502 = vld [vmem:[%s341 + $0x80] sm:$0xff]
        %v503 = vld [vmem:[%s341 + $0x88] sm:$0xff]
        %v504 = vld [vmem:[%s341 + $0x90] sm:$0xff]
        %v505 = vld [vmem:[%s341 + $0x98] sm:$0xff]
        %v506 = vld [vmem:[%s341 + $0xa0] sm:$0xff]
        %v507 = vld [vmem:[%s341 + $0xa8] sm:$0xff]
        %v508 = vld [vmem:[%s341 + $0xb0] sm:$0xff]
        %v509 = vld [vmem:[%s341 + $0xb8] sm:$0xff]
        %v510 = vld [vmem:[%s341 + $0xc0] sm:$0xff]
        %v511 = vld [vmem:[%s341 + $0xc8] sm:$0xff]
        %v512 = vld [vmem:[%s341 + $0xd0] sm:$0xff]
        %v513 = vld [vmem:[%s341 + $0xd8] sm:$0xff]
        %v514 = vld [vmem:[%s341 + $0xe0] sm:$0xff]
        %v515 = vld [vmem:[%s341 + $0xe8] sm:$0xff]
        %v516 = vld [vmem:[%s341 + $0xf0] sm:$0xff]
        %v517 = vld [vmem:[%s341 + $0xf8] sm:$0xff]
        %v518 = vld [vmem:[%s382] sm:$0x3]
        %v520 = vperm.slane %v518, 0
        %v521 = vperm.slane %v518, 1
        %v624 = vunpack.c.l.b16 %v386
        %v625 = vunpack.c.h.b16 %v386
        %v626 = vunpack.c.l.b16 %v387
        %v627 = vunpack.c.h.b16 %v387
        %v628 = vunpack.c.l.b16 %v388
        %v629 = vunpack.c.h.b16 %v388
        %v630 = vunpack.c.l.b16 %v389
        %v631 = vunpack.c.h.b16 %v389
        %v632 = vunpack.c.l.b16 %v390
        %v633 = vunpack.c.h.b16 %v390
        %v634 = vunpack.c.l.b16 %v391
        %v635 = vunpack.c.h.b16 %v391
        %v636 = vunpack.c.l.b16 %v392
        %v637 = vunpack.c.h.b16 %v392
        %v638 = vunpack.c.l.b16 %v393
        %v639 = vunpack.c.h.b16 %v393
        %v640 = vunpack.c.l.b16 %v394
        %v641 = vunpack.c.h.b16 %v394
        %v642 = vunpack.c.l.b16 %v395
        %v643 = vunpack.c.h.b16 %v395
        %v644 = vunpack.c.l.b16 %v396
        %v645 = vunpack.c.h.b16 %v396
        %v646 = vunpack.c.l.b16 %v397
        %v647 = vunpack.c.h.b16 %v397
        %v648 = vunpack.c.l.b16 %v398
        %v649 = vunpack.c.h.b16 %v398
        %v650 = vunpack.c.l.b16 %v399
        %v651 = vunpack.c.h.b16 %v399
        %v652 = vunpack.c.l.b16 %v400
        %v653 = vunpack.c.h.b16 %v400
        %v654 = vunpack.c.l.b16 %v401
        %v655 = vunpack.c.h.b16 %v401
        %v656 = vunpack.c.l.b16 %v402
        %v657 = vunpack.c.h.b16 %v402
        %v658 = vunpack.c.l.b16 %v403
        %v659 = vunpack.c.h.b16 %v403
        %v660 = vunpack.c.l.b16 %v404
        %v661 = vunpack.c.h.b16 %v404
        %v662 = vunpack.c.l.b16 %v405
        %v663 = vunpack.c.h.b16 %v405
        %v664 = vunpack.c.l.b16 %v406
        %v665 = vunpack.c.h.b16 %v406
        %v666 = vunpack.c.l.b16 %v407
        %v667 = vunpack.c.h.b16 %v407
        %v668 = vunpack.c.l.b16 %v408
        %v669 = vunpack.c.h.b16 %v408
        %v670 = vunpack.c.l.b16 %v409
        %v671 = vunpack.c.h.b16 %v409
        %v672 = vunpack.c.l.b16 %v410
        %v673 = vunpack.c.h.b16 %v410
        %v674 = vunpack.c.l.b16 %v411
        %v675 = vunpack.c.h.b16 %v411
        %v676 = vunpack.c.l.b16 %v412
        %v677 = vunpack.c.h.b16 %v412
        %v678 = vunpack.c.l.b16 %v413
        %v679 = vunpack.c.h.b16 %v413
        %v680 = vunpack.c.l.b16 %v414
        %v681 = vunpack.c.h.b16 %v414
        %v682 = vunpack.c.l.b16 %v415
        %v683 = vunpack.c.h.b16 %v415
        %v684 = vunpack.c.l.b16 %v416
        %v685 = vunpack.c.h.b16 %v416
        %v686 = vunpack.c.l.b16 %v417
        %v687 = vunpack.c.h.b16 %v417
        %v688 = vunpack.c.l.b16 %v418
        %v689 = vunpack.c.h.b16 %v418
        %v690 = vunpack.c.l.b16 %v419
        %v691 = vunpack.c.h.b16 %v419
        %v692 = vunpack.c.l.b16 %v420
        %v693 = vunpack.c.h.b16 %v420
        %v694 = vunpack.c.l.b16 %v421
        %v695 = vunpack.c.h.b16 %v421
        %v696 = vunpack.c.l.b16 %v422
        %v697 = vunpack.c.h.b16 %v422
        %v698 = vunpack.c.l.b16 %v423
        %v699 = vunpack.c.h.b16 %v423
        %v700 = vunpack.c.l.b16 %v424
        %v701 = vunpack.c.h.b16 %v424
        %v702 = vunpack.c.l.b16 %v425
        %v703 = vunpack.c.h.b16 %v425
        %v704 = vunpack.c.l.b16 %v426
        %v705 = vunpack.c.h.b16 %v426
        %v706 = vunpack.c.l.b16 %v427
        %v707 = vunpack.c.h.b16 %v427
        %v708 = vunpack.c.l.b16 %v428
        %v709 = vunpack.c.h.b16 %v428
        %v710 = vunpack.c.l.b16 %v429
        %v711 = vunpack.c.h.b16 %v429
        %v712 = vunpack.c.l.b16 %v430
        %v713 = vunpack.c.h.b16 %v430
        %v714 = vunpack.c.l.b16 %v431
        %v715 = vunpack.c.h.b16 %v431
        %v716 = vunpack.c.l.b16 %v432
        %v717 = vunpack.c.h.b16 %v432
        %v718 = vunpack.c.l.b16 %v433
        %v719 = vunpack.c.h.b16 %v433
        %v720 = vunpack.c.l.b16 %v434
        %v721 = vunpack.c.h.b16 %v434
        %v722 = vunpack.c.l.b16 %v435
        %v723 = vunpack.c.h.b16 %v435
        %v724 = vunpack.c.l.b16 %v436
        %v725 = vunpack.c.h.b16 %v436
        %v726 = vunpack.c.l.b16 %v437
        %v727 = vunpack.c.h.b16 %v437
        %v728 = vunpack.c.l.b16 %v438
        %v729 = vunpack.c.h.b16 %v438
        %v730 = vunpack.c.l.b16 %v439
        %v731 = vunpack.c.h.b16 %v439
        %v732 = vunpack.c.l.b16 %v440
        %v733 = vunpack.c.h.b16 %v440
        %v734 = vunpack.c.l.b16 %v441
        %v735 = vunpack.c.h.b16 %v441
        %v736 = vunpack.c.l.b16 %v442
        %v737 = vunpack.c.h.b16 %v442
        %v738 = vunpack.c.l.b16 %v443
        %v739 = vunpack.c.h.b16 %v443
        %v740 = vunpack.c.l.b16 %v444
        %v741 = vunpack.c.h.b16 %v444
        %v742 = vunpack.c.l.b16 %v445
        %v743 = vunpack.c.h.b16 %v445
        %v744 = vunpack.c.l.b16 %v446
        %v745 = vunpack.c.h.b16 %v446
        %v746 = vunpack.c.l.b16 %v447
        %v747 = vunpack.c.h.b16 %v447
        %v748 = vunpack.c.l.b16 %v448
        %v749 = vunpack.c.h.b16 %v448
        %v750 = vunpack.c.l.b16 %v449
        %v751 = vunpack.c.h.b16 %v449
        %v752 = vunpack.c.l.b16 %v450
        %v753 = vunpack.c.h.b16 %v450
        %v754 = vunpack.c.l.b16 %v451
        %v755 = vunpack.c.h.b16 %v451
        %v756 = vunpack.c.l.b16 %v452
        %v757 = vunpack.c.h.b16 %v452
        %v758 = vunpack.c.l.b16 %v453
        %v759 = vunpack.c.h.b16 %v453
        %v760 = vunpack.c.l.b16 %v454
        %v761 = vunpack.c.h.b16 %v454
        %v762 = vunpack.c.l.b16 %v455
        %v763 = vunpack.c.h.b16 %v455
        %v764 = vunpack.c.l.b16 %v456
        %v765 = vunpack.c.h.b16 %v456
        %v766 = vunpack.c.l.b16 %v457
        %v767 = vunpack.c.h.b16 %v457
        %v768 = vunpack.c.l.b16 %v458
        %v769 = vunpack.c.h.b16 %v458
        %v770 = vunpack.c.l.b16 %v459
        %v771 = vunpack.c.h.b16 %v459
        %v772 = vunpack.c.l.b16 %v460
        %v773 = vunpack.c.h.b16 %v460
        %v774 = vunpack.c.l.b16 %v461
        %v775 = vunpack.c.h.b16 %v461
        %v776 = vunpack.c.l.b16 %v462
        %v777 = vunpack.c.h.b16 %v462
        %v778 = vunpack.c.l.b16 %v463
        %v779 = vunpack.c.h.b16 %v463
        %v780 = vunpack.c.l.b16 %v464
        %v781 = vunpack.c.h.b16 %v464
        %v782 = vunpack.c.l.b16 %v465
        %v783 = vunpack.c.h.b16 %v465
        %v784 = vunpack.c.l.b16 %v466
        %v785 = vunpack.c.h.b16 %v466
        %v786 = vunpack.c.l.b16 %v467
        %v787 = vunpack.c.h.b16 %v467
        %v788 = vunpack.c.l.b16 %v468
        %v789 = vunpack.c.h.b16 %v468
        %v790 = vunpack.c.l.b16 %v469
        %v791 = vunpack.c.h.b16 %v469
        %v792 = vunpack.c.l.b16 %v470
        %v793 = vunpack.c.h.b16 %v470
        %v794 = vunpack.c.l.b16 %v471
        %v795 = vunpack.c.h.b16 %v471
        %v796 = vunpack.c.l.b16 %v472
        %v797 = vunpack.c.h.b16 %v472
        %v798 = vunpack.c.l.b16 %v473
        %v799 = vunpack.c.h.b16 %v473
        %v800 = vunpack.c.l.b16 %v474
        %v801 = vunpack.c.h.b16 %v474
        %v802 = vunpack.c.l.b16 %v475
        %v803 = vunpack.c.h.b16 %v475
        %v804 = vunpack.c.l.b16 %v476
        %v805 = vunpack.c.h.b16 %v476
        %v806 = vunpack.c.l.b16 %v477
        %v807 = vunpack.c.h.b16 %v477
        %v808 = vunpack.c.l.b16 %v478
        %v809 = vunpack.c.h.b16 %v478
        %v810 = vunpack.c.l.b16 %v479
        %v811 = vunpack.c.h.b16 %v479
        %v812 = vunpack.c.l.b16 %v480
        %v813 = vunpack.c.h.b16 %v480
        %v814 = vunpack.c.l.b16 %v481
        %v815 = vunpack.c.h.b16 %v481
        %v816 = vunpack.c.l.b16 %v482
        %v817 = vunpack.c.h.b16 %v482
        %v818 = vunpack.c.l.b16 %v483
        %v819 = vunpack.c.h.b16 %v483
        %v820 = vunpack.c.l.b16 %v484
        %v821 = vunpack.c.h.b16 %v484
        %v822 = vunpack.c.l.b16 %v485
        %v823 = vunpack.c.h.b16 %v485
        %v824 = vpack.c.b16 %v626, %v624
        %v825 = vpack.c.b16 %v627, %v625
        %v826 = vpack.c.b16 %v630, %v628
        %v827 = vpack.c.b16 %v631, %v629
        %v828 = vpack.c.b16 %v634, %v632
        %v829 = vpack.c.b16 %v635, %v633
        %v830 = vpack.c.b16 %v638, %v636
        %v831 = vpack.c.b16 %v639, %v637
        %v832 = vpack.c.b16 %v642, %v640
        %v833 = vpack.c.b16 %v643, %v641
        %v834 = vpack.c.b16 %v646, %v644
        %v835 = vpack.c.b16 %v647, %v645
        %v836 = vpack.c.b16 %v650, %v648
        %v837 = vpack.c.b16 %v651, %v649
        %v838 = vpack.c.b16 %v654, %v652
        %v839 = vpack.c.b16 %v655, %v653
        %v840 = vpack.c.b16 %v658, %v656
        %v841 = vpack.c.b16 %v659, %v657
        %v842 = vpack.c.b16 %v662, %v660
        %v843 = vpack.c.b16 %v663, %v661
        %v844 = vpack.c.b16 %v666, %v664
        %v845 = vpack.c.b16 %v667, %v665
        %v846 = vpack.c.b16 %v670, %v668
        %v847 = vpack.c.b16 %v671, %v669
        %v848 = vpack.c.b16 %v674, %v672
        %v849 = vpack.c.b16 %v675, %v673
        %v850 = vpack.c.b16 %v678, %v676
        %v851 = vpack.c.b16 %v679, %v677
        %v852 = vpack.c.b16 %v682, %v680
        %v853 = vpack.c.b16 %v683, %v681
        %v854 = vpack.c.b16 %v686, %v684
        %v855 = vpack.c.b16 %v687, %v685
        %v856 = vpack.c.b16 %v690, %v688
        %v857 = vpack.c.b16 %v691, %v689
        %v858 = vpack.c.b16 %v694, %v692
        %v859 = vpack.c.b16 %v695, %v693
        %v860 = vpack.c.b16 %v698, %v696
        %v861 = vpack.c.b16 %v699, %v697
        %v862 = vpack.c.b16 %v702, %v700
        %v863 = vpack.c.b16 %v703, %v701
        %v864 = vpack.c.b16 %v706, %v704
        %v865 = vpack.c.b16 %v707, %v705
        %v866 = vpack.c.b16 %v710, %v708
        %v867 = vpack.c.b16 %v711, %v709
        %v868 = vpack.c.b16 %v714, %v712
        %v869 = vpack.c.b16 %v715, %v713
        %v870 = vpack.c.b16 %v718, %v716
        %v871 = vpack.c.b16 %v719, %v717
        %v872 = vpack.c.b16 %v722, %v720
        %v873 = vpack.c.b16 %v723, %v721
        %v874 = vpack.c.b16 %v726, %v724
        %v875 = vpack.c.b16 %v727, %v725
        %v876 = vpack.c.b16 %v730, %v728
        %v877 = vpack.c.b16 %v731, %v729
        %v878 = vpack.c.b16 %v734, %v732
        %v879 = vpack.c.b16 %v735, %v733
        %v880 = vpack.c.b16 %v738, %v736
        %v881 = vpack.c.b16 %v739, %v737
        %v882 = vpack.c.b16 %v742, %v740
        %v883 = vpack.c.b16 %v743, %v741
        %v884 = vpack.c.b16 %v746, %v744
        %v885 = vpack.c.b16 %v747, %v745
        %v886 = vpack.c.b16 %v750, %v748
        %v887 = vpack.c.b16 %v751, %v749
        %v888 = vpack.c.b16 %v754, %v752
        %v889 = vpack.c.b16 %v755, %v753
        %v890 = vpack.c.b16 %v758, %v756
        %v891 = vpack.c.b16 %v759, %v757
        %v892 = vpack.c.b16 %v762, %v760
        %v893 = vpack.c.b16 %v763, %v761
        %v894 = vpack.c.b16 %v766, %v764
        %v895 = vpack.c.b16 %v767, %v765
        %v896 = vpack.c.b16 %v770, %v768
        %v897 = vpack.c.b16 %v771, %v769
        %v898 = vpack.c.b16 %v774, %v772
        %v899 = vpack.c.b16 %v775, %v773
        %v900 = vpack.c.b16 %v778, %v776
        %v901 = vpack.c.b16 %v779, %v777
        %v902 = vpack.c.b16 %v782, %v780
        %v903 = vpack.c.b16 %v783, %v781
        %v904 = vpack.c.b16 %v786, %v784
        %v905 = vpack.c.b16 %v787, %v785
        %v906 = vpack.c.b16 %v790, %v788
        %v907 = vpack.c.b16 %v791, %v789
        %v908 = vpack.c.b16 %v794, %v792
        %v909 = vpack.c.b16 %v795, %v793
        %v910 = vpack.c.b16 %v798, %v796
        %v911 = vpack.c.b16 %v799, %v797
        %v912 = vpack.c.b16 %v802, %v800
        %v913 = vpack.c.b16 %v803, %v801
        %v914 = vpack.c.b16 %v806, %v804
        %v915 = vpack.c.b16 %v807, %v805
        %v916 = vpack.c.b16 %v810, %v808
        %v917 = vpack.c.b16 %v811, %v809
        %v918 = vpack.c.b16 %v814, %v812
        %v919 = vpack.c.b16 %v815, %v813
        %v920 = vpack.c.b16 %v818, %v816
        %v921 = vpack.c.b16 %v819, %v817
        %v922 = vpack.c.b16 %v822, %v820
        %v923 = vpack.c.b16 %v823, %v821
        %v1056 = vunpack.c.l.b16 %v486
        %v1057 = vunpack.c.h.b16 %v486
        %v1058 = vunpack.c.l.b16 %v487
        %v1059 = vunpack.c.h.b16 %v487
        %v1060 = vunpack.c.l.b16 %v488
        %v1061 = vunpack.c.h.b16 %v488
        %v1062 = vunpack.c.l.b16 %v489
        %v1063 = vunpack.c.h.b16 %v489
        %v1064 = vunpack.c.l.b16 %v490
        %v1065 = vunpack.c.h.b16 %v490
        %v1066 = vunpack.c.l.b16 %v491
        %v1067 = vunpack.c.h.b16 %v491
        %v1068 = vunpack.c.l.b16 %v492
        %v1069 = vunpack.c.h.b16 %v492
        %v1070 = vunpack.c.l.b16 %v493
        %v1071 = vunpack.c.h.b16 %v493
        %v1072 = vunpack.c.l.b16 %v494
        %v1073 = vunpack.c.h.b16 %v494
        %v1074 = vunpack.c.l.b16 %v495
        %v1075 = vunpack.c.h.b16 %v495
        %v1076 = vunpack.c.l.b16 %v496
        %v1077 = vunpack.c.h.b16 %v496
        %v1078 = vunpack.c.l.b16 %v497
        %v1079 = vunpack.c.h.b16 %v497
        %v1080 = vunpack.c.l.b16 %v498
        %v1081 = vunpack.c.h.b16 %v498
        %v1082 = vunpack.c.l.b16 %v499
        %v1083 = vunpack.c.h.b16 %v499
        %v1084 = vunpack.c.l.b16 %v500
        %v1085 = vunpack.c.h.b16 %v500
        %v1086 = vunpack.c.l.b16 %v501
        %v1087 = vunpack.c.h.b16 %v501
        %v1088 = vunpack.c.l.b16 %v502
        %v1089 = vunpack.c.h.b16 %v502
        %v1090 = vunpack.c.l.b16 %v503
        %v1091 = vunpack.c.h.b16 %v503
        %v1092 = vunpack.c.l.b16 %v504
        %v1093 = vunpack.c.h.b16 %v504
        %v1094 = vunpack.c.l.b16 %v505
        %v1095 = vunpack.c.h.b16 %v505
        %v1096 = vunpack.c.l.b16 %v506
        %v1097 = vunpack.c.h.b16 %v506
        %v1098 = vunpack.c.l.b16 %v507
        %v1099 = vunpack.c.h.b16 %v507
        %v1100 = vunpack.c.l.b16 %v508
        %v1101 = vunpack.c.h.b16 %v508
        %v1102 = vunpack.c.l.b16 %v509
        %v1103 = vunpack.c.h.b16 %v509
        %v1104 = vunpack.c.l.b16 %v510
        %v1105 = vunpack.c.h.b16 %v510
        %v1106 = vunpack.c.l.b16 %v511
        %v1107 = vunpack.c.h.b16 %v511
        %v1108 = vunpack.c.l.b16 %v512
        %v1109 = vunpack.c.h.b16 %v512
        %v1110 = vunpack.c.l.b16 %v513
        %v1111 = vunpack.c.h.b16 %v513
        %v1112 = vunpack.c.l.b16 %v514
        %v1113 = vunpack.c.h.b16 %v514
        %v1114 = vunpack.c.l.b16 %v515
        %v1115 = vunpack.c.h.b16 %v515
        %v1116 = vunpack.c.l.b16 %v516
        %v1117 = vunpack.c.h.b16 %v516
        %v1118 = vunpack.c.l.b16 %v517
        %v1119 = vunpack.c.h.b16 %v517
        %v1120 = vpack.c.b16 %v1058, %v1056
        %v1121 = vpack.c.b16 %v1059, %v1057
        %v1122 = vpack.c.b16 %v1062, %v1060
        %v1123 = vpack.c.b16 %v1063, %v1061
        %v1124 = vpack.c.b16 %v1066, %v1064
        %v1125 = vpack.c.b16 %v1067, %v1065
        %v1126 = vpack.c.b16 %v1070, %v1068
        %v1127 = vpack.c.b16 %v1071, %v1069
        %v1128 = vpack.c.b16 %v1074, %v1072
        %v1129 = vpack.c.b16 %v1075, %v1073
        %v1130 = vpack.c.b16 %v1078, %v1076
        %v1131 = vpack.c.b16 %v1079, %v1077
        %v1132 = vpack.c.b16 %v1082, %v1080
        %v1133 = vpack.c.b16 %v1083, %v1081
        %v1134 = vpack.c.b16 %v1086, %v1084
        %v1135 = vpack.c.b16 %v1087, %v1085
        %v1136 = vpack.c.b16 %v1090, %v1088
        %v1137 = vpack.c.b16 %v1091, %v1089
        %v1138 = vpack.c.b16 %v1094, %v1092
        %v1139 = vpack.c.b16 %v1095, %v1093
        %v1140 = vpack.c.b16 %v1098, %v1096
        %v1141 = vpack.c.b16 %v1099, %v1097
        %v1142 = vpack.c.b16 %v1102, %v1100
        %v1143 = vpack.c.b16 %v1103, %v1101
        %v1144 = vpack.c.b16 %v1106, %v1104
        %v1145 = vpack.c.b16 %v1107, %v1105
        %v1146 = vpack.c.b16 %v1110, %v1108
        %v1147 = vpack.c.b16 %v1111, %v1109
        %v1148 = vpack.c.b16 %v1114, %v1112
        %v1149 = vpack.c.b16 %v1115, %v1113
        %v1150 = vpack.c.b16 %v1118, %v1116
        %v1151 = vpack.c.b16 %v1119, %v1117
        %1184 = vmatpush.bf16.msra.mxu0 %v1134
        %1185 = vmatpush.bf16.msra.mxu0 %v1132
        %1186 = vmatpush.bf16.msra.mxu0 %v1130
        %1187 = vmatpush.bf16.msra.mxu0 %v1128
        %1188 = vmatpush.bf16.msra.mxu0 %v1126
        %1189 = vmatpush.bf16.msra.mxu0 %v1124
        %1190 = vmatpush.bf16.msra.mxu0 %v1122
        %1191 = vmatpush.bf16.msra.mxu0 %v1120
        %1192 = vmatmul.bf16.gmra.mxu0 %v824
        %v1193 = vpop.f32.mrf.mxu0
        %v1194 = vadd.f32 %v520, %v1193
        %v1195 = vpop.f32.mrf.mxu0
        %v1196 = vadd.f32 %v520, %v1195
        %1197 = vmatmul.bf16.gmra.mxu0 %v826
        %v1198 = vpop.f32.mrf.mxu0
        %v1199 = vadd.f32 %v520, %v1198
        %v1200 = vpop.f32.mrf.mxu0
        %v1201 = vadd.f32 %v520, %v1200
        %1202 = vmatmul.bf16.gmra.mxu0 %v828
        %v1203 = vpop.f32.mrf.mxu0
        %v1204 = vadd.f32 %v520, %v1203
        %v1205 = vpop.f32.mrf.mxu0
        %v1206 = vadd.f32 %v520, %v1205
        %1207 = vmatmul.bf16.gmra.mxu0 %v830
        %v1208 = vpop.f32.mrf.mxu0
        %v1209 = vadd.f32 %v520, %v1208
        %v1210 = vpop.f32.mrf.mxu0
        %v1211 = vadd.f32 %v520, %v1210
        %1212 = vmatmul.bf16.gmra.mxu0 %v832
        %v1213 = vpop.f32.mrf.mxu0
        %v1214 = vadd.f32 %v520, %v1213
        %v1215 = vpop.f32.mrf.mxu0
        %v1216 = vadd.f32 %v520, %v1215
        %1217 = vmatmul.bf16.gmra.mxu0 %v834
        %v1218 = vpop.f32.mrf.mxu0
        %v1219 = vadd.f32 %v520, %v1218
        %v1220 = vpop.f32.mrf.mxu0
        %v1221 = vadd.f32 %v520, %v1220
        %1222 = vmatmul.bf16.gmra.mxu0 %v836
        %v1223 = vpop.f32.mrf.mxu0
        %v1224 = vadd.f32 %v520, %v1223
        %v1225 = vpop.f32.mrf.mxu0
        %v1226 = vadd.f32 %v520, %v1225
        %1227 = vmatmul.bf16.gmra.mxu0 %v838
        %v1228 = vpop.f32.mrf.mxu0
        %v1229 = vadd.f32 %v520, %v1228
        %v1230 = vpop.f32.mrf.mxu0
        %v1231 = vadd.f32 %v520, %v1230
        %1232 = vmatmul.bf16.gmra.mxu0 %v840
        %v1233 = vpop.f32.mrf.mxu0
        %v1234 = vadd.f32 %v520, %v1233
        %v1235 = vpop.f32.mrf.mxu0
        %v1236 = vadd.f32 %v520, %v1235
        %1237 = vmatmul.bf16.gmra.mxu0 %v842
        %v1238 = vpop.f32.mrf.mxu0
        %v1239 = vadd.f32 %v520, %v1238
        %v1240 = vpop.f32.mrf.mxu0
        %v1241 = vadd.f32 %v520, %v1240
        %1242 = vmatmul.bf16.gmra.mxu0 %v844
        %v1243 = vpop.f32.mrf.mxu0
        %v1244 = vadd.f32 %v520, %v1243
        %v1245 = vpop.f32.mrf.mxu0
        %v1246 = vadd.f32 %v520, %v1245
        %1247 = vmatmul.bf16.gmra.mxu0 %v846
        %v1248 = vpop.f32.mrf.mxu0
        %v1249 = vadd.f32 %v520, %v1248
        %v1250 = vpop.f32.mrf.mxu0
        %v1251 = vadd.f32 %v520, %v1250
        %1252 = vmatmul.bf16.gmra.mxu0 %v848
        %v1253 = vpop.f32.mrf.mxu0
        %v1254 = vadd.f32 %v520, %v1253
        %v1255 = vpop.f32.mrf.mxu0
        %v1256 = vadd.f32 %v520, %v1255
        %1257 = vmatmul.bf16.gmra.mxu0 %v850
        %v1258 = vpop.f32.mrf.mxu0
        %v1259 = vadd.f32 %v520, %v1258
        %v1260 = vpop.f32.mrf.mxu0
        %v1261 = vadd.f32 %v520, %v1260
        %1262 = vmatmul.bf16.gmra.mxu0 %v852
        %v1263 = vpop.f32.mrf.mxu0
        %v1264 = vadd.f32 %v520, %v1263
        %v1265 = vpop.f32.mrf.mxu0
        %v1266 = vadd.f32 %v520, %v1265
        %1267 = vmatmul.bf16.gmra.mxu0 %v854
        %v1268 = vpop.f32.mrf.mxu0
        %v1269 = vadd.f32 %v520, %v1268
        %v1270 = vpop.f32.mrf.mxu0
        %v1271 = vadd.f32 %v520, %v1270
        %1272 = vmatmul.bf16.gmra.mxu0 %v856
        %v1273 = vpop.f32.mrf.mxu0
        %v1274 = vadd.f32 %v520, %v1273
        %v1275 = vpop.f32.mrf.mxu0
        %v1276 = vadd.f32 %v520, %v1275
        %1277 = vmatmul.bf16.gmra.mxu0 %v858
        %v1278 = vpop.f32.mrf.mxu0
        %v1279 = vadd.f32 %v520, %v1278
        %v1280 = vpop.f32.mrf.mxu0
        %v1281 = vadd.f32 %v520, %v1280
        %1282 = vmatmul.bf16.gmra.mxu0 %v860
        %v1283 = vpop.f32.mrf.mxu0
        %v1284 = vadd.f32 %v520, %v1283
        %v1285 = vpop.f32.mrf.mxu0
        %v1286 = vadd.f32 %v520, %v1285
        %1287 = vmatmul.bf16.gmra.mxu0 %v862
        %v1288 = vpop.f32.mrf.mxu0
        %v1289 = vadd.f32 %v520, %v1288
        %v1290 = vpop.f32.mrf.mxu0
        %v1291 = vadd.f32 %v520, %v1290
        %1292 = vmatmul.bf16.gmra.mxu0 %v864
        %v1293 = vpop.f32.mrf.mxu0
        %v1294 = vadd.f32 %v520, %v1293
        %v1295 = vpop.f32.mrf.mxu0
        %v1296 = vadd.f32 %v520, %v1295
        %1297 = vmatmul.bf16.gmra.mxu0 %v866
        %v1298 = vpop.f32.mrf.mxu0
        %v1299 = vadd.f32 %v520, %v1298
        %v1300 = vpop.f32.mrf.mxu0
        %v1301 = vadd.f32 %v520, %v1300
        %1302 = vmatmul.bf16.gmra.mxu0 %v868
        %v1303 = vpop.f32.mrf.mxu0
        %v1304 = vadd.f32 %v520, %v1303
        %v1305 = vpop.f32.mrf.mxu0
        %v1306 = vadd.f32 %v520, %v1305
        %1307 = vmatmul.bf16.gmra.mxu0 %v870
        %v1308 = vpop.f32.mrf.mxu0
        %v1309 = vadd.f32 %v520, %v1308
        %v1310 = vpop.f32.mrf.mxu0
        %v1311 = vadd.f32 %v520, %v1310
        %1312 = vmatmul.bf16.gmra.mxu0 %v872
        %v1313 = vpop.f32.mrf.mxu0
        %v1314 = vadd.f32 %v520, %v1313
        %v1315 = vpop.f32.mrf.mxu0
        %v1316 = vadd.f32 %v520, %v1315
        %1317 = vmatmul.bf16.gmra.mxu0 %v874
        %v1318 = vpop.f32.mrf.mxu0
        %v1319 = vadd.f32 %v520, %v1318
        %v1320 = vpop.f32.mrf.mxu0
        %v1321 = vadd.f32 %v520, %v1320
        %1322 = vmatmul.bf16.gmra.mxu0 %v876
        %v1323 = vpop.f32.mrf.mxu0
        %v1324 = vadd.f32 %v520, %v1323
        %v1325 = vpop.f32.mrf.mxu0
        %v1326 = vadd.f32 %v520, %v1325
        %1327 = vmatmul.bf16.gmra.mxu0 %v878
        %v1328 = vpop.f32.mrf.mxu0
        %v1329 = vadd.f32 %v520, %v1328
        %v1330 = vpop.f32.mrf.mxu0
        %v1331 = vadd.f32 %v520, %v1330
        %1332 = vmatmul.bf16.gmra.mxu0 %v880
        %v1333 = vpop.f32.mrf.mxu0
        %v1334 = vadd.f32 %v520, %v1333
        %v1335 = vpop.f32.mrf.mxu0
        %v1336 = vadd.f32 %v520, %v1335
        %1337 = vmatmul.bf16.gmra.mxu0 %v882
        %v1338 = vpop.f32.mrf.mxu0
        %v1339 = vadd.f32 %v520, %v1338
        %v1340 = vpop.f32.mrf.mxu0
        %v1341 = vadd.f32 %v520, %v1340
        %1342 = vmatmul.bf16.gmra.mxu0 %v884
        %v1343 = vpop.f32.mrf.mxu0
        %v1344 = vadd.f32 %v520, %v1343
        %v1345 = vpop.f32.mrf.mxu0
        %v1346 = vadd.f32 %v520, %v1345
        %1347 = vmatmul.bf16.gmra.mxu0 %v886
        %v1348 = vpop.f32.mrf.mxu0
        %v1349 = vadd.f32 %v520, %v1348
        %v1350 = vpop.f32.mrf.mxu0
        %v1351 = vadd.f32 %v520, %v1350
        %1352 = vmatmul.bf16.gmra.mxu0 %v888
        %v1353 = vpop.f32.mrf.mxu0
        %v1354 = vadd.f32 %v520, %v1353
        %v1355 = vpop.f32.mrf.mxu0
        %v1356 = vadd.f32 %v520, %v1355
        %1357 = vmatmul.bf16.gmra.mxu0 %v890
        %v1358 = vpop.f32.mrf.mxu0
        %v1359 = vadd.f32 %v520, %v1358
        %v1360 = vpop.f32.mrf.mxu0
        %v1361 = vadd.f32 %v520, %v1360
        %1362 = vmatmul.bf16.gmra.mxu0 %v892
        %v1363 = vpop.f32.mrf.mxu0
        %v1364 = vadd.f32 %v520, %v1363
        %v1365 = vpop.f32.mrf.mxu0
        %v1366 = vadd.f32 %v520, %v1365
        %1367 = vmatmul.bf16.gmra.mxu0 %v894
        %v1368 = vpop.f32.mrf.mxu0
        %v1369 = vadd.f32 %v520, %v1368
        %v1370 = vpop.f32.mrf.mxu0
        %v1371 = vadd.f32 %v520, %v1370
        %1372 = vmatmul.bf16.gmra.mxu0 %v896
        %v1373 = vpop.f32.mrf.mxu0
        %v1374 = vadd.f32 %v520, %v1373
        %v1375 = vpop.f32.mrf.mxu0
        %v1376 = vadd.f32 %v520, %v1375
        %1377 = vmatmul.bf16.gmra.mxu0 %v898
        %v1378 = vpop.f32.mrf.mxu0
        %v1379 = vadd.f32 %v520, %v1378
        %v1380 = vpop.f32.mrf.mxu0
        %v1381 = vadd.f32 %v520, %v1380
        %1382 = vmatmul.bf16.gmra.mxu0 %v900
        %v1383 = vpop.f32.mrf.mxu0
        %v1384 = vadd.f32 %v520, %v1383
        %v1385 = vpop.f32.mrf.mxu0
        %v1386 = vadd.f32 %v520, %v1385
        %1387 = vmatmul.bf16.gmra.mxu0 %v902
        %v1388 = vpop.f32.mrf.mxu0
        %v1389 = vadd.f32 %v520, %v1388
        %v1390 = vpop.f32.mrf.mxu0
        %v1391 = vadd.f32 %v520, %v1390
        %1392 = vmatmul.bf16.gmra.mxu0 %v904
        %v1393 = vpop.f32.mrf.mxu0
        %v1394 = vadd.f32 %v520, %v1393
        %v1395 = vpop.f32.mrf.mxu0
        %v1396 = vadd.f32 %v520, %v1395
        %1397 = vmatmul.bf16.gmra.mxu0 %v906
        %v1398 = vpop.f32.mrf.mxu0
        %v1399 = vadd.f32 %v520, %v1398
        %v1400 = vpop.f32.mrf.mxu0
        %v1401 = vadd.f32 %v520, %v1400
        %1402 = vmatmul.bf16.gmra.mxu0 %v908
        %v1403 = vpop.f32.mrf.mxu0
        %v1404 = vadd.f32 %v520, %v1403
        %v1405 = vpop.f32.mrf.mxu0
        %v1406 = vadd.f32 %v520, %v1405
        %1407 = vmatmul.bf16.gmra.mxu0 %v910
        %v1408 = vpop.f32.mrf.mxu0
        %v1409 = vadd.f32 %v520, %v1408
        %v1410 = vpop.f32.mrf.mxu0
        %v1411 = vadd.f32 %v520, %v1410
        %1412 = vmatmul.bf16.gmra.mxu0 %v912
        %v1413 = vpop.f32.mrf.mxu0
        %v1414 = vadd.f32 %v520, %v1413
        %v1415 = vpop.f32.mrf.mxu0
        %v1416 = vadd.f32 %v520, %v1415
        %1417 = vmatmul.bf16.gmra.mxu0 %v914
        %v1418 = vpop.f32.mrf.mxu0
        %v1419 = vadd.f32 %v520, %v1418
        %v1420 = vpop.f32.mrf.mxu0
        %v1421 = vadd.f32 %v520, %v1420
        %1422 = vmatmul.bf16.gmra.mxu0 %v916
        %v1423 = vpop.f32.mrf.mxu0
        %v1424 = vadd.f32 %v520, %v1423
        %v1425 = vpop.f32.mrf.mxu0
        %v1426 = vadd.f32 %v520, %v1425
        %1427 = vmatmul.bf16.gmra.mxu0 %v918
        %v1428 = vpop.f32.mrf.mxu0
        %v1429 = vadd.f32 %v520, %v1428
        %v1430 = vpop.f32.mrf.mxu0
        %v1431 = vadd.f32 %v520, %v1430
        %1432 = vmatmul.bf16.gmra.mxu0 %v920
        %v1433 = vpop.f32.mrf.mxu0
        %v1434 = vadd.f32 %v520, %v1433
        %v1435 = vpop.f32.mrf.mxu0
        %v1436 = vadd.f32 %v520, %v1435
        %1437 = vmatmul.bf16.gmra.mxu0 %v922
        %v1438 = vpop.f32.mrf.mxu0
        %v1439 = vadd.f32 %v520, %v1438
        %v1440 = vpop.f32.mrf.mxu0
        %v1441 = vadd.f32 %v520, %v1440
        %1442 = vdwg.mxu0
        %1443 = vmatpush.bf16.msra.mxu0 %v1150
        %1444 = vmatpush.bf16.msra.mxu0 %v1148
        %1445 = vmatpush.bf16.msra.mxu0 %v1146
        %1446 = vmatpush.bf16.msra.mxu0 %v1144
        %1447 = vmatpush.bf16.msra.mxu0 %v1142
        %1448 = vmatpush.bf16.msra.mxu0 %v1140
        %1449 = vmatpush.bf16.msra.mxu0 %v1138
        %1450 = vmatpush.bf16.msra.mxu0 %v1136
        %1451 = vmatmul.bf16.gmra.mxu0 %v825
        %v1452 = vpop.f32.mrf.mxu0
        %v1453 = vadd.f32 %v1194, %v1452
        %v1454 = vpop.f32.mrf.mxu0
        %v1455 = vadd.f32 %v1196, %v1454
        %1456 = vmatmul.bf16.gmra.mxu0 %v827
        %v1457 = vpop.f32.mrf.mxu0
        %v1458 = vadd.f32 %v1199, %v1457
        %v1459 = vpop.f32.mrf.mxu0
        %v1460 = vadd.f32 %v1201, %v1459
        %1461 = vmatmul.bf16.gmra.mxu0 %v829
        %v1462 = vpop.f32.mrf.mxu0
        %v1463 = vadd.f32 %v1204, %v1462
        %v1464 = vpop.f32.mrf.mxu0
        %v1465 = vadd.f32 %v1206, %v1464
        %1466 = vmatmul.bf16.gmra.mxu0 %v831
        %v1467 = vpop.f32.mrf.mxu0
        %v1468 = vadd.f32 %v1209, %v1467
        %v1469 = vpop.f32.mrf.mxu0
        %v1470 = vadd.f32 %v1211, %v1469
        %1471 = vmatmul.bf16.gmra.mxu0 %v833
        %v1472 = vpop.f32.mrf.mxu0
        %v1473 = vadd.f32 %v1214, %v1472
        %v1474 = vpop.f32.mrf.mxu0
        %v1475 = vadd.f32 %v1216, %v1474
        %1476 = vmatmul.bf16.gmra.mxu0 %v835
        %v1477 = vpop.f32.mrf.mxu0
        %v1478 = vadd.f32 %v1219, %v1477
        %v1479 = vpop.f32.mrf.mxu0
        %v1480 = vadd.f32 %v1221, %v1479
        %1481 = vmatmul.bf16.gmra.mxu0 %v837
        %v1482 = vpop.f32.mrf.mxu0
        %v1483 = vadd.f32 %v1224, %v1482
        %v1484 = vpop.f32.mrf.mxu0
        %v1485 = vadd.f32 %v1226, %v1484
        %1486 = vmatmul.bf16.gmra.mxu0 %v839
        %v1487 = vpop.f32.mrf.mxu0
        %v1488 = vadd.f32 %v1229, %v1487
        %v1489 = vpop.f32.mrf.mxu0
        %v1490 = vadd.f32 %v1231, %v1489
        %1491 = vmatmul.bf16.gmra.mxu0 %v841
        %v1492 = vpop.f32.mrf.mxu0
        %v1493 = vadd.f32 %v1234, %v1492
        %v1494 = vpop.f32.mrf.mxu0
        %v1495 = vadd.f32 %v1236, %v1494
        %1496 = vmatmul.bf16.gmra.mxu0 %v843
        %v1497 = vpop.f32.mrf.mxu0
        %v1498 = vadd.f32 %v1239, %v1497
        %v1499 = vpop.f32.mrf.mxu0
        %v1500 = vadd.f32 %v1241, %v1499
        %1501 = vmatmul.bf16.gmra.mxu0 %v845
        %v1502 = vpop.f32.mrf.mxu0
        %v1503 = vadd.f32 %v1244, %v1502
        %v1504 = vpop.f32.mrf.mxu0
        %v1505 = vadd.f32 %v1246, %v1504
        %1506 = vmatmul.bf16.gmra.mxu0 %v847
        %v1507 = vpop.f32.mrf.mxu0
        %v1508 = vadd.f32 %v1249, %v1507
        %v1509 = vpop.f32.mrf.mxu0
        %v1510 = vadd.f32 %v1251, %v1509
        %1511 = vmatmul.bf16.gmra.mxu0 %v849
        %v1512 = vpop.f32.mrf.mxu0
        %v1513 = vadd.f32 %v1254, %v1512
        %v1514 = vpop.f32.mrf.mxu0
        %v1515 = vadd.f32 %v1256, %v1514
        %1516 = vmatmul.bf16.gmra.mxu0 %v851
        %v1517 = vpop.f32.mrf.mxu0
        %v1518 = vadd.f32 %v1259, %v1517
        %v1519 = vpop.f32.mrf.mxu0
        %v1520 = vadd.f32 %v1261, %v1519
        %1521 = vmatmul.bf16.gmra.mxu0 %v853
        %v1522 = vpop.f32.mrf.mxu0
        %v1523 = vadd.f32 %v1264, %v1522
        %v1524 = vpop.f32.mrf.mxu0
        %v1525 = vadd.f32 %v1266, %v1524
        %1526 = vmatmul.bf16.gmra.mxu0 %v855
        %v1527 = vpop.f32.mrf.mxu0
        %v1528 = vadd.f32 %v1269, %v1527
        %v1529 = vpop.f32.mrf.mxu0
        %v1530 = vadd.f32 %v1271, %v1529
        %1531 = vmatmul.bf16.gmra.mxu0 %v857
        %v1532 = vpop.f32.mrf.mxu0
        %v1533 = vadd.f32 %v1274, %v1532
        %v1534 = vpop.f32.mrf.mxu0
        %v1535 = vadd.f32 %v1276, %v1534
        %1536 = vmatmul.bf16.gmra.mxu0 %v859
        %v1537 = vpop.f32.mrf.mxu0
        %v1538 = vadd.f32 %v1279, %v1537
        %v1539 = vpop.f32.mrf.mxu0
        %v1540 = vadd.f32 %v1281, %v1539
        %1541 = vmatmul.bf16.gmra.mxu0 %v861
        %v1542 = vpop.f32.mrf.mxu0
        %v1543 = vadd.f32 %v1284, %v1542
        %v1544 = vpop.f32.mrf.mxu0
        %v1545 = vadd.f32 %v1286, %v1544
        %1546 = vmatmul.bf16.gmra.mxu0 %v863
        %v1547 = vpop.f32.mrf.mxu0
        %v1548 = vadd.f32 %v1289, %v1547
        %v1549 = vpop.f32.mrf.mxu0
        %v1550 = vadd.f32 %v1291, %v1549
        %1551 = vmatmul.bf16.gmra.mxu0 %v865
        %v1552 = vpop.f32.mrf.mxu0
        %v1553 = vadd.f32 %v1294, %v1552
        %v1554 = vpop.f32.mrf.mxu0
        %v1555 = vadd.f32 %v1296, %v1554
        %1556 = vmatmul.bf16.gmra.mxu0 %v867
        %v1557 = vpop.f32.mrf.mxu0
        %v1558 = vadd.f32 %v1299, %v1557
        %v1559 = vpop.f32.mrf.mxu0
        %v1560 = vadd.f32 %v1301, %v1559
        %1561 = vmatmul.bf16.gmra.mxu0 %v869
        %v1562 = vpop.f32.mrf.mxu0
        %v1563 = vadd.f32 %v1304, %v1562
        %v1564 = vpop.f32.mrf.mxu0
        %v1565 = vadd.f32 %v1306, %v1564
        %1566 = vmatmul.bf16.gmra.mxu0 %v871
        %v1567 = vpop.f32.mrf.mxu0
        %v1568 = vadd.f32 %v1309, %v1567
        %v1569 = vpop.f32.mrf.mxu0
        %v1570 = vadd.f32 %v1311, %v1569
        %1571 = vmatmul.bf16.gmra.mxu0 %v873
        %v1572 = vpop.f32.mrf.mxu0
        %v1573 = vadd.f32 %v1314, %v1572
        %v1574 = vpop.f32.mrf.mxu0
        %v1575 = vadd.f32 %v1316, %v1574
        %1576 = vmatmul.bf16.gmra.mxu0 %v875
        %v1577 = vpop.f32.mrf.mxu0
        %v1578 = vadd.f32 %v1319, %v1577
        %v1579 = vpop.f32.mrf.mxu0
        %v1580 = vadd.f32 %v1321, %v1579
        %1581 = vmatmul.bf16.gmra.mxu0 %v877
        %v1582 = vpop.f32.mrf.mxu0
        %v1583 = vadd.f32 %v1324, %v1582
        %v1584 = vpop.f32.mrf.mxu0
        %v1585 = vadd.f32 %v1326, %v1584
        %1586 = vmatmul.bf16.gmra.mxu0 %v879
        %v1587 = vpop.f32.mrf.mxu0
        %v1588 = vadd.f32 %v1329, %v1587
        %v1589 = vpop.f32.mrf.mxu0
        %v1590 = vadd.f32 %v1331, %v1589
        %1591 = vmatmul.bf16.gmra.mxu0 %v881
        %v1592 = vpop.f32.mrf.mxu0
        %v1593 = vadd.f32 %v1334, %v1592
        %v1594 = vpop.f32.mrf.mxu0
        %v1595 = vadd.f32 %v1336, %v1594
        %1596 = vmatmul.bf16.gmra.mxu0 %v883
        %v1597 = vpop.f32.mrf.mxu0
        %v1598 = vadd.f32 %v1339, %v1597
        %v1599 = vpop.f32.mrf.mxu0
        %v1600 = vadd.f32 %v1341, %v1599
        %1601 = vmatmul.bf16.gmra.mxu0 %v885
        %v1602 = vpop.f32.mrf.mxu0
        %v1603 = vadd.f32 %v1344, %v1602
        %v1604 = vpop.f32.mrf.mxu0
        %v1605 = vadd.f32 %v1346, %v1604
        %1606 = vmatmul.bf16.gmra.mxu0 %v887
        %v1607 = vpop.f32.mrf.mxu0
        %v1608 = vadd.f32 %v1349, %v1607
        %v1609 = vpop.f32.mrf.mxu0
        %v1610 = vadd.f32 %v1351, %v1609
        %1611 = vmatmul.bf16.gmra.mxu0 %v889
        %v1612 = vpop.f32.mrf.mxu0
        %v1613 = vadd.f32 %v1354, %v1612
        %v1614 = vpop.f32.mrf.mxu0
        %v1615 = vadd.f32 %v1356, %v1614
        %1616 = vmatmul.bf16.gmra.mxu0 %v891
        %v1617 = vpop.f32.mrf.mxu0
        %v1618 = vadd.f32 %v1359, %v1617
        %v1619 = vpop.f32.mrf.mxu0
        %v1620 = vadd.f32 %v1361, %v1619
        %1621 = vmatmul.bf16.gmra.mxu0 %v893
        %v1622 = vpop.f32.mrf.mxu0
        %v1623 = vadd.f32 %v1364, %v1622
        %v1624 = vpop.f32.mrf.mxu0
        %v1625 = vadd.f32 %v1366, %v1624
        %1626 = vmatmul.bf16.gmra.mxu0 %v895
        %v1627 = vpop.f32.mrf.mxu0
        %v1628 = vadd.f32 %v1369, %v1627
        %v1629 = vpop.f32.mrf.mxu0
        %v1630 = vadd.f32 %v1371, %v1629
        %1631 = vmatmul.bf16.gmra.mxu0 %v897
        %v1632 = vpop.f32.mrf.mxu0
        %v1633 = vadd.f32 %v1374, %v1632
        %v1634 = vpop.f32.mrf.mxu0
        %v1635 = vadd.f32 %v1376, %v1634
        %1636 = vmatmul.bf16.gmra.mxu0 %v899
        %v1637 = vpop.f32.mrf.mxu0
        %v1638 = vadd.f32 %v1379, %v1637
        %v1639 = vpop.f32.mrf.mxu0
        %v1640 = vadd.f32 %v1381, %v1639
        %1641 = vmatmul.bf16.gmra.mxu0 %v901
        %v1642 = vpop.f32.mrf.mxu0
        %v1643 = vadd.f32 %v1384, %v1642
        %v1644 = vpop.f32.mrf.mxu0
        %v1645 = vadd.f32 %v1386, %v1644
        %1646 = vmatmul.bf16.gmra.mxu0 %v903
        %v1647 = vpop.f32.mrf.mxu0
        %v1648 = vadd.f32 %v1389, %v1647
        %v1649 = vpop.f32.mrf.mxu0
        %v1650 = vadd.f32 %v1391, %v1649
        %1651 = vmatmul.bf16.gmra.mxu0 %v905
        %v1652 = vpop.f32.mrf.mxu0
        %v1653 = vadd.f32 %v1394, %v1652
        %v1654 = vpop.f32.mrf.mxu0
        %v1655 = vadd.f32 %v1396, %v1654
        %1656 = vmatmul.bf16.gmra.mxu0 %v907
        %v1657 = vpop.f32.mrf.mxu0
        %v1658 = vadd.f32 %v1399, %v1657
        %v1659 = vpop.f32.mrf.mxu0
        %v1660 = vadd.f32 %v1401, %v1659
        %1661 = vmatmul.bf16.gmra.mxu0 %v909
        %v1662 = vpop.f32.mrf.mxu0
        %v1663 = vadd.f32 %v1404, %v1662
        %v1664 = vpop.f32.mrf.mxu0
        %v1665 = vadd.f32 %v1406, %v1664
        %1666 = vmatmul.bf16.gmra.mxu0 %v911
        %v1667 = vpop.f32.mrf.mxu0
        %v1668 = vadd.f32 %v1409, %v1667
        %v1669 = vpop.f32.mrf.mxu0
        %v1670 = vadd.f32 %v1411, %v1669
        %1671 = vmatmul.bf16.gmra.mxu0 %v913
        %v1672 = vpop.f32.mrf.mxu0
        %v1673 = vadd.f32 %v1414, %v1672
        %v1674 = vpop.f32.mrf.mxu0
        %v1675 = vadd.f32 %v1416, %v1674
        %1676 = vmatmul.bf16.gmra.mxu0 %v915
        %v1677 = vpop.f32.mrf.mxu0
        %v1678 = vadd.f32 %v1419, %v1677
        %v1679 = vpop.f32.mrf.mxu0
        %v1680 = vadd.f32 %v1421, %v1679
        %1681 = vmatmul.bf16.gmra.mxu0 %v917
        %v1682 = vpop.f32.mrf.mxu0
        %v1683 = vadd.f32 %v1424, %v1682
        %v1684 = vpop.f32.mrf.mxu0
        %v1685 = vadd.f32 %v1426, %v1684
        %1686 = vmatmul.bf16.gmra.mxu0 %v919
        %v1687 = vpop.f32.mrf.mxu0
        %v1688 = vadd.f32 %v1429, %v1687
        %v1689 = vpop.f32.mrf.mxu0
        %v1690 = vadd.f32 %v1431, %v1689
        %1691 = vmatmul.bf16.gmra.mxu0 %v921
        %v1692 = vpop.f32.mrf.mxu0
        %v1693 = vadd.f32 %v1434, %v1692
        %v1694 = vpop.f32.mrf.mxu0
        %v1695 = vadd.f32 %v1436, %v1694
        %1696 = vmatmul.bf16.gmra.mxu0 %v923
        %v1697 = vpop.f32.mrf.mxu0
        %v1698 = vadd.f32 %v1439, %v1697
        %v1699 = vpop.f32.mrf.mxu0
        %v1700 = vadd.f32 %v1441, %v1699
        %1701 = vdwg.mxu0
        %1702 = vmatpush.bf16.msra.mxu0 %v1135
        %1703 = vmatpush.bf16.msra.mxu0 %v1133
        %1704 = vmatpush.bf16.msra.mxu0 %v1131
        %1705 = vmatpush.bf16.msra.mxu0 %v1129
        %1706 = vmatpush.bf16.msra.mxu0 %v1127
        %1707 = vmatpush.bf16.msra.mxu0 %v1125
        %1708 = vmatpush.bf16.msra.mxu0 %v1123
        %1709 = vmatpush.bf16.msra.mxu0 %v1121
        %1710 = vmatmul.bf16.gmra.mxu0 %v824
        %v1711 = vpop.f32.mrf.mxu0
        %v1712 = vadd.f32 %v521, %v1711
        %v1713 = vpop.f32.mrf.mxu0
        %v1714 = vadd.f32 %v521, %v1713
        %1715 = vmatmul.bf16.gmra.mxu0 %v826
        %v1716 = vpop.f32.mrf.mxu0
        %v1717 = vadd.f32 %v521, %v1716
        %v1718 = vpop.f32.mrf.mxu0
        %v1719 = vadd.f32 %v521, %v1718
        %1720 = vmatmul.bf16.gmra.mxu0 %v828
        %v1721 = vpop.f32.mrf.mxu0
        %v1722 = vadd.f32 %v521, %v1721
        %v1723 = vpop.f32.mrf.mxu0
        %v1724 = vadd.f32 %v521, %v1723
        %1725 = vmatmul.bf16.gmra.mxu0 %v830
        %v1726 = vpop.f32.mrf.mxu0
        %v1727 = vadd.f32 %v521, %v1726
        %v1728 = vpop.f32.mrf.mxu0
        %v1729 = vadd.f32 %v521, %v1728
        %1730 = vmatmul.bf16.gmra.mxu0 %v832
        %v1731 = vpop.f32.mrf.mxu0
        %v1732 = vadd.f32 %v521, %v1731
        %v1733 = vpop.f32.mrf.mxu0
        %v1734 = vadd.f32 %v521, %v1733
        %1735 = vmatmul.bf16.gmra.mxu0 %v834
        %v1736 = vpop.f32.mrf.mxu0
        %v1737 = vadd.f32 %v521, %v1736
        %v1738 = vpop.f32.mrf.mxu0
        %v1739 = vadd.f32 %v521, %v1738
        %1740 = vmatmul.bf16.gmra.mxu0 %v836
        %v1741 = vpop.f32.mrf.mxu0
        %v1742 = vadd.f32 %v521, %v1741
        %v1743 = vpop.f32.mrf.mxu0
        %v1744 = vadd.f32 %v521, %v1743
        %1745 = vmatmul.bf16.gmra.mxu0 %v838
        %v1746 = vpop.f32.mrf.mxu0
        %v1747 = vadd.f32 %v521, %v1746
        %v1748 = vpop.f32.mrf.mxu0
        %v1749 = vadd.f32 %v521, %v1748
        %1750 = vmatmul.bf16.gmra.mxu0 %v840
        %v1751 = vpop.f32.mrf.mxu0
        %v1752 = vadd.f32 %v521, %v1751
        %v1753 = vpop.f32.mrf.mxu0
        %v1754 = vadd.f32 %v521, %v1753
        %1755 = vmatmul.bf16.gmra.mxu0 %v842
        %v1756 = vpop.f32.mrf.mxu0
        %v1757 = vadd.f32 %v521, %v1756
        %v1758 = vpop.f32.mrf.mxu0
        %v1759 = vadd.f32 %v521, %v1758
        %1760 = vmatmul.bf16.gmra.mxu0 %v844
        %v1761 = vpop.f32.mrf.mxu0
        %v1762 = vadd.f32 %v521, %v1761
        %v1763 = vpop.f32.mrf.mxu0
        %v1764 = vadd.f32 %v521, %v1763
        %1765 = vmatmul.bf16.gmra.mxu0 %v846
        %v1766 = vpop.f32.mrf.mxu0
        %v1767 = vadd.f32 %v521, %v1766
        %v1768 = vpop.f32.mrf.mxu0
        %v1769 = vadd.f32 %v521, %v1768
        %1770 = vmatmul.bf16.gmra.mxu0 %v848
        %v1771 = vpop.f32.mrf.mxu0
        %v1772 = vadd.f32 %v521, %v1771
        %v1773 = vpop.f32.mrf.mxu0
        %v1774 = vadd.f32 %v521, %v1773
        %1775 = vmatmul.bf16.gmra.mxu0 %v850
        %v1776 = vpop.f32.mrf.mxu0
        %v1777 = vadd.f32 %v521, %v1776
        %v1778 = vpop.f32.mrf.mxu0
        %v1779 = vadd.f32 %v521, %v1778
        %1780 = vmatmul.bf16.gmra.mxu0 %v852
        %v1781 = vpop.f32.mrf.mxu0
        %v1782 = vadd.f32 %v521, %v1781
        %v1783 = vpop.f32.mrf.mxu0
        %v1784 = vadd.f32 %v521, %v1783
        %1785 = vmatmul.bf16.gmra.mxu0 %v854
        %v1786 = vpop.f32.mrf.mxu0
        %v1787 = vadd.f32 %v521, %v1786
        %v1788 = vpop.f32.mrf.mxu0
        %v1789 = vadd.f32 %v521, %v1788
        %1790 = vmatmul.bf16.gmra.mxu0 %v856
        %v1791 = vpop.f32.mrf.mxu0
        %v1792 = vadd.f32 %v521, %v1791
        %v1793 = vpop.f32.mrf.mxu0
        %v1794 = vadd.f32 %v521, %v1793
        %1795 = vmatmul.bf16.gmra.mxu0 %v858
        %v1796 = vpop.f32.mrf.mxu0
        %v1797 = vadd.f32 %v521, %v1796
        %v1798 = vpop.f32.mrf.mxu0
        %v1799 = vadd.f32 %v521, %v1798
        %1800 = vmatmul.bf16.gmra.mxu0 %v860
        %v1801 = vpop.f32.mrf.mxu0
        %v1802 = vadd.f32 %v521, %v1801
        %v1803 = vpop.f32.mrf.mxu0
        %v1804 = vadd.f32 %v521, %v1803
        %1805 = vmatmul.bf16.gmra.mxu0 %v862
        %v1806 = vpop.f32.mrf.mxu0
        %v1807 = vadd.f32 %v521, %v1806
        %v1808 = vpop.f32.mrf.mxu0
        %v1809 = vadd.f32 %v521, %v1808
        %1810 = vmatmul.bf16.gmra.mxu0 %v864
        %v1811 = vpop.f32.mrf.mxu0
        %v1812 = vadd.f32 %v521, %v1811
        %v1813 = vpop.f32.mrf.mxu0
        %v1814 = vadd.f32 %v521, %v1813
        %1815 = vmatmul.bf16.gmra.mxu0 %v866
        %v1816 = vpop.f32.mrf.mxu0
        %v1817 = vadd.f32 %v521, %v1816
        %v1818 = vpop.f32.mrf.mxu0
        %v1819 = vadd.f32 %v521, %v1818
        %1820 = vmatmul.bf16.gmra.mxu0 %v868
        %v1821 = vpop.f32.mrf.mxu0
        %v1822 = vadd.f32 %v521, %v1821
        %v1823 = vpop.f32.mrf.mxu0
        %v1824 = vadd.f32 %v521, %v1823
        %1825 = vmatmul.bf16.gmra.mxu0 %v870
        %v1826 = vpop.f32.mrf.mxu0
        %v1827 = vadd.f32 %v521, %v1826
        %v1828 = vpop.f32.mrf.mxu0
        %v1829 = vadd.f32 %v521, %v1828
        %1830 = vmatmul.bf16.gmra.mxu0 %v872
        %v1831 = vpop.f32.mrf.mxu0
        %v1832 = vadd.f32 %v521, %v1831
        %v1833 = vpop.f32.mrf.mxu0
        %v1834 = vadd.f32 %v521, %v1833
        %1835 = vmatmul.bf16.gmra.mxu0 %v874
        %v1836 = vpop.f32.mrf.mxu0
        %v1837 = vadd.f32 %v521, %v1836
        %v1838 = vpop.f32.mrf.mxu0
        %v1839 = vadd.f32 %v521, %v1838
        %1840 = vmatmul.bf16.gmra.mxu0 %v876
        %v1841 = vpop.f32.mrf.mxu0
        %v1842 = vadd.f32 %v521, %v1841
        %v1843 = vpop.f32.mrf.mxu0
        %v1844 = vadd.f32 %v521, %v1843
        %1845 = vmatmul.bf16.gmra.mxu0 %v878
        %v1846 = vpop.f32.mrf.mxu0
        %v1847 = vadd.f32 %v521, %v1846
        %v1848 = vpop.f32.mrf.mxu0
        %v1849 = vadd.f32 %v521, %v1848
        %1850 = vmatmul.bf16.gmra.mxu0 %v880
        %v1851 = vpop.f32.mrf.mxu0
        %v1852 = vadd.f32 %v521, %v1851
        %v1853 = vpop.f32.mrf.mxu0
        %v1854 = vadd.f32 %v521, %v1853
        %1855 = vmatmul.bf16.gmra.mxu0 %v882
        %v1856 = vpop.f32.mrf.mxu0
        %v1857 = vadd.f32 %v521, %v1856
        %v1858 = vpop.f32.mrf.mxu0
        %v1859 = vadd.f32 %v521, %v1858
        %1860 = vmatmul.bf16.gmra.mxu0 %v884
        %v1861 = vpop.f32.mrf.mxu0
        %v1862 = vadd.f32 %v521, %v1861
        %v1863 = vpop.f32.mrf.mxu0
        %v1864 = vadd.f32 %v521, %v1863
        %1865 = vmatmul.bf16.gmra.mxu0 %v886
        %v1866 = vpop.f32.mrf.mxu0
        %v1867 = vadd.f32 %v521, %v1866
        %v1868 = vpop.f32.mrf.mxu0
        %v1869 = vadd.f32 %v521, %v1868
        %1870 = vmatmul.bf16.gmra.mxu0 %v888
        %v1871 = vpop.f32.mrf.mxu0
        %v1872 = vadd.f32 %v521, %v1871
        %v1873 = vpop.f32.mrf.mxu0
        %v1874 = vadd.f32 %v521, %v1873
        %1875 = vmatmul.bf16.gmra.mxu0 %v890
        %v1876 = vpop.f32.mrf.mxu0
        %v1877 = vadd.f32 %v521, %v1876
        %v1878 = vpop.f32.mrf.mxu0
        %v1879 = vadd.f32 %v521, %v1878
        %1880 = vmatmul.bf16.gmra.mxu0 %v892
        %v1881 = vpop.f32.mrf.mxu0
        %v1882 = vadd.f32 %v521, %v1881
        %v1883 = vpop.f32.mrf.mxu0
        %v1884 = vadd.f32 %v521, %v1883
        %1885 = vmatmul.bf16.gmra.mxu0 %v894
        %v1886 = vpop.f32.mrf.mxu0
        %v1887 = vadd.f32 %v521, %v1886
        %v1888 = vpop.f32.mrf.mxu0
        %v1889 = vadd.f32 %v521, %v1888
        %1890 = vmatmul.bf16.gmra.mxu0 %v896
        %v1891 = vpop.f32.mrf.mxu0
        %v1892 = vadd.f32 %v521, %v1891
        %v1893 = vpop.f32.mrf.mxu0
        %v1894 = vadd.f32 %v521, %v1893
        %1895 = vmatmul.bf16.gmra.mxu0 %v898
        %v1896 = vpop.f32.mrf.mxu0
        %v1897 = vadd.f32 %v521, %v1896
        %v1898 = vpop.f32.mrf.mxu0
        %v1899 = vadd.f32 %v521, %v1898
        %1900 = vmatmul.bf16.gmra.mxu0 %v900
        %v1901 = vpop.f32.mrf.mxu0
        %v1902 = vadd.f32 %v521, %v1901
        %v1903 = vpop.f32.mrf.mxu0
        %v1904 = vadd.f32 %v521, %v1903
        %1905 = vmatmul.bf16.gmra.mxu0 %v902
        %v1906 = vpop.f32.mrf.mxu0
        %v1907 = vadd.f32 %v521, %v1906
        %v1908 = vpop.f32.mrf.mxu0
        %v1909 = vadd.f32 %v521, %v1908
        %1910 = vmatmul.bf16.gmra.mxu0 %v904
        %v1911 = vpop.f32.mrf.mxu0
        %v1912 = vadd.f32 %v521, %v1911
        %v1913 = vpop.f32.mrf.mxu0
        %v1914 = vadd.f32 %v521, %v1913
        %1915 = vmatmul.bf16.gmra.mxu0 %v906
        %v1916 = vpop.f32.mrf.mxu0
        %v1917 = vadd.f32 %v521, %v1916
        %v1918 = vpop.f32.mrf.mxu0
        %v1919 = vadd.f32 %v521, %v1918
        %1920 = vmatmul.bf16.gmra.mxu0 %v908
        %v1921 = vpop.f32.mrf.mxu0
        %v1922 = vadd.f32 %v521, %v1921
        %v1923 = vpop.f32.mrf.mxu0
        %v1924 = vadd.f32 %v521, %v1923
        %1925 = vmatmul.bf16.gmra.mxu0 %v910
        %v1926 = vpop.f32.mrf.mxu0
        %v1927 = vadd.f32 %v521, %v1926
        %v1928 = vpop.f32.mrf.mxu0
        %v1929 = vadd.f32 %v521, %v1928
        %1930 = vmatmul.bf16.gmra.mxu0 %v912
        %v1931 = vpop.f32.mrf.mxu0
        %v1932 = vadd.f32 %v521, %v1931
        %v1933 = vpop.f32.mrf.mxu0
        %v1934 = vadd.f32 %v521, %v1933
        %1935 = vmatmul.bf16.gmra.mxu0 %v914
        %v1936 = vpop.f32.mrf.mxu0
        %v1937 = vadd.f32 %v521, %v1936
        %v1938 = vpop.f32.mrf.mxu0
        %v1939 = vadd.f32 %v521, %v1938
        %1940 = vmatmul.bf16.gmra.mxu0 %v916
        %v1941 = vpop.f32.mrf.mxu0
        %v1942 = vadd.f32 %v521, %v1941
        %v1943 = vpop.f32.mrf.mxu0
        %v1944 = vadd.f32 %v521, %v1943
        %1945 = vmatmul.bf16.gmra.mxu0 %v918
        %v1946 = vpop.f32.mrf.mxu0
        %v1947 = vadd.f32 %v521, %v1946
        %v1948 = vpop.f32.mrf.mxu0
        %v1949 = vadd.f32 %v521, %v1948
        %1950 = vmatmul.bf16.gmra.mxu0 %v920
        %v1951 = vpop.f32.mrf.mxu0
        %v1952 = vadd.f32 %v521, %v1951
        %v1953 = vpop.f32.mrf.mxu0
        %v1954 = vadd.f32 %v521, %v1953
        %1955 = vmatmul.bf16.gmra.mxu0 %v922
        %v1956 = vpop.f32.mrf.mxu0
        %v1957 = vadd.f32 %v521, %v1956
        %v1958 = vpop.f32.mrf.mxu0
        %v1959 = vadd.f32 %v521, %v1958
        %1960 = vdwg.mxu0
        %1961 = vmatpush.bf16.msra.mxu0 %v1151
        %1962 = vmatpush.bf16.msra.mxu0 %v1149
        %1963 = vmatpush.bf16.msra.mxu0 %v1147
        %1964 = vmatpush.bf16.msra.mxu0 %v1145
        %1965 = vmatpush.bf16.msra.mxu0 %v1143
        %1966 = vmatpush.bf16.msra.mxu0 %v1141
        %1967 = vmatpush.bf16.msra.mxu0 %v1139
        %1968 = vmatpush.bf16.msra.mxu0 %v1137
        %1969 = vmatmul.bf16.gmra.mxu0 %v825
        %v1970 = vpop.f32.mrf.mxu0
        %v1971 = vadd.f32 %v1712, %v1970
        %v1972 = vpop.f32.mrf.mxu0
        %v1973 = vadd.f32 %v1714, %v1972
        %1974 = vmatmul.bf16.gmra.mxu0 %v827
        %v1975 = vpop.f32.mrf.mxu0
        %v1976 = vadd.f32 %v1717, %v1975
        %v1977 = vpop.f32.mrf.mxu0
        %v1978 = vadd.f32 %v1719, %v1977
        %1979 = vmatmul.bf16.gmra.mxu0 %v829
        %v1980 = vpop.f32.mrf.mxu0
        %v1981 = vadd.f32 %v1722, %v1980
        %v1982 = vpop.f32.mrf.mxu0
        %v1983 = vadd.f32 %v1724, %v1982
        %1984 = vmatmul.bf16.gmra.mxu0 %v831
        %v1985 = vpop.f32.mrf.mxu0
        %v1986 = vadd.f32 %v1727, %v1985
        %v1987 = vpop.f32.mrf.mxu0
        %v1988 = vadd.f32 %v1729, %v1987
        %1989 = vmatmul.bf16.gmra.mxu0 %v833
        %v1990 = vpop.f32.mrf.mxu0
        %v1991 = vadd.f32 %v1732, %v1990
        %v1992 = vpop.f32.mrf.mxu0
        %v1993 = vadd.f32 %v1734, %v1992
        %1994 = vmatmul.bf16.gmra.mxu0 %v835
        %v1995 = vpop.f32.mrf.mxu0
        %v1996 = vadd.f32 %v1737, %v1995
        %v1997 = vpop.f32.mrf.mxu0
        %v1998 = vadd.f32 %v1739, %v1997
        %1999 = vmatmul.bf16.gmra.mxu0 %v837
        %v2000 = vpop.f32.mrf.mxu0
        %v2001 = vadd.f32 %v1742, %v2000
        %v2002 = vpop.f32.mrf.mxu0
        %v2003 = vadd.f32 %v1744, %v2002
        %2004 = vmatmul.bf16.gmra.mxu0 %v839
        %v2005 = vpop.f32.mrf.mxu0
        %v2006 = vadd.f32 %v1747, %v2005
        %v2007 = vpop.f32.mrf.mxu0
        %v2008 = vadd.f32 %v1749, %v2007
        %2009 = vmatmul.bf16.gmra.mxu0 %v841
        %v2010 = vpop.f32.mrf.mxu0
        %v2011 = vadd.f32 %v1752, %v2010
        %v2012 = vpop.f32.mrf.mxu0
        %v2013 = vadd.f32 %v1754, %v2012
        %2014 = vmatmul.bf16.gmra.mxu0 %v843
        %v2015 = vpop.f32.mrf.mxu0
        %v2016 = vadd.f32 %v1757, %v2015
        %v2017 = vpop.f32.mrf.mxu0
        %v2018 = vadd.f32 %v1759, %v2017
        %2019 = vmatmul.bf16.gmra.mxu0 %v845
        %v2020 = vpop.f32.mrf.mxu0
        %v2021 = vadd.f32 %v1762, %v2020
        %v2022 = vpop.f32.mrf.mxu0
        %v2023 = vadd.f32 %v1764, %v2022
        %2024 = vmatmul.bf16.gmra.mxu0 %v847
        %v2025 = vpop.f32.mrf.mxu0
        %v2026 = vadd.f32 %v1767, %v2025
        %v2027 = vpop.f32.mrf.mxu0
        %v2028 = vadd.f32 %v1769, %v2027
        %2029 = vmatmul.bf16.gmra.mxu0 %v849
        %v2030 = vpop.f32.mrf.mxu0
        %v2031 = vadd.f32 %v1772, %v2030
        %v2032 = vpop.f32.mrf.mxu0
        %v2033 = vadd.f32 %v1774, %v2032
        %2034 = vmatmul.bf16.gmra.mxu0 %v851
        %v2035 = vpop.f32.mrf.mxu0
        %v2036 = vadd.f32 %v1777, %v2035
        %v2037 = vpop.f32.mrf.mxu0
        %v2038 = vadd.f32 %v1779, %v2037
        %2039 = vmatmul.bf16.gmra.mxu0 %v853
        %v2040 = vpop.f32.mrf.mxu0
        %v2041 = vadd.f32 %v1782, %v2040
        %v2042 = vpop.f32.mrf.mxu0
        %v2043 = vadd.f32 %v1784, %v2042
        %2044 = vmatmul.bf16.gmra.mxu0 %v855
        %v2045 = vpop.f32.mrf.mxu0
        %v2046 = vadd.f32 %v1787, %v2045
        %v2047 = vpop.f32.mrf.mxu0
        %v2048 = vadd.f32 %v1789, %v2047
        %2049 = vmatmul.bf16.gmra.mxu0 %v857
        %v2050 = vpop.f32.mrf.mxu0
        %v2051 = vadd.f32 %v1792, %v2050
        %v2052 = vpop.f32.mrf.mxu0
        %v2053 = vadd.f32 %v1794, %v2052
        %2054 = vmatmul.bf16.gmra.mxu0 %v859
        %v2055 = vpop.f32.mrf.mxu0
        %v2056 = vadd.f32 %v1797, %v2055
        %v2057 = vpop.f32.mrf.mxu0
        %v2058 = vadd.f32 %v1799, %v2057
        %2059 = vmatmul.bf16.gmra.mxu0 %v861
        %v2060 = vpop.f32.mrf.mxu0
        %v2061 = vadd.f32 %v1802, %v2060
        %v2062 = vpop.f32.mrf.mxu0
        %v2063 = vadd.f32 %v1804, %v2062
        %2064 = vmatmul.bf16.gmra.mxu0 %v863
        %v2065 = vpop.f32.mrf.mxu0
        %v2066 = vadd.f32 %v1807, %v2065
        %v2067 = vpop.f32.mrf.mxu0
        %v2068 = vadd.f32 %v1809, %v2067
        %2069 = vmatmul.bf16.gmra.mxu0 %v865
        %v2070 = vpop.f32.mrf.mxu0
        %v2071 = vadd.f32 %v1812, %v2070
        %v2072 = vpop.f32.mrf.mxu0
        %v2073 = vadd.f32 %v1814, %v2072
        %2074 = vmatmul.bf16.gmra.mxu0 %v867
        %v2075 = vpop.f32.mrf.mxu0
        %v2076 = vadd.f32 %v1817, %v2075
        %v2077 = vpop.f32.mrf.mxu0
        %v2078 = vadd.f32 %v1819, %v2077
        %2079 = vmatmul.bf16.gmra.mxu0 %v869
        %v2080 = vpop.f32.mrf.mxu0
        %v2081 = vadd.f32 %v1822, %v2080
        %v2082 = vpop.f32.mrf.mxu0
        %v2083 = vadd.f32 %v1824, %v2082
        %2084 = vmatmul.bf16.gmra.mxu0 %v871
        %v2085 = vpop.f32.mrf.mxu0
        %v2086 = vadd.f32 %v1827, %v2085
        %v2087 = vpop.f32.mrf.mxu0
        %v2088 = vadd.f32 %v1829, %v2087
        %2089 = vmatmul.bf16.gmra.mxu0 %v873
        %v2090 = vpop.f32.mrf.mxu0
        %v2091 = vadd.f32 %v1832, %v2090
        %v2092 = vpop.f32.mrf.mxu0
        %v2093 = vadd.f32 %v1834, %v2092
        %2094 = vmatmul.bf16.gmra.mxu0 %v875
        %v2095 = vpop.f32.mrf.mxu0
        %v2096 = vadd.f32 %v1837, %v2095
        %v2097 = vpop.f32.mrf.mxu0
        %v2098 = vadd.f32 %v1839, %v2097
        %2099 = vmatmul.bf16.gmra.mxu0 %v877
        %v2100 = vpop.f32.mrf.mxu0
        %v2101 = vadd.f32 %v1842, %v2100
        %v2102 = vpop.f32.mrf.mxu0
        %v2103 = vadd.f32 %v1844, %v2102
        %2104 = vmatmul.bf16.gmra.mxu0 %v879
        %v2105 = vpop.f32.mrf.mxu0
        %v2106 = vadd.f32 %v1847, %v2105
        %v2107 = vpop.f32.mrf.mxu0
        %v2108 = vadd.f32 %v1849, %v2107
        %2109 = vmatmul.bf16.gmra.mxu0 %v881
        %v2110 = vpop.f32.mrf.mxu0
        %v2111 = vadd.f32 %v1852, %v2110
        %v2112 = vpop.f32.mrf.mxu0
        %v2113 = vadd.f32 %v1854, %v2112
        %2114 = vmatmul.bf16.gmra.mxu0 %v883
        %v2115 = vpop.f32.mrf.mxu0
        %v2116 = vadd.f32 %v1857, %v2115
        %v2117 = vpop.f32.mrf.mxu0
        %v2118 = vadd.f32 %v1859, %v2117
        %2119 = vmatmul.bf16.gmra.mxu0 %v885
        %v2120 = vpop.f32.mrf.mxu0
        %v2121 = vadd.f32 %v1862, %v2120
        %v2122 = vpop.f32.mrf.mxu0
        %v2123 = vadd.f32 %v1864, %v2122
        %2124 = vmatmul.bf16.gmra.mxu0 %v887
        %v2125 = vpop.f32.mrf.mxu0
        %v2126 = vadd.f32 %v1867, %v2125
        %v2127 = vpop.f32.mrf.mxu0
        %v2128 = vadd.f32 %v1869, %v2127
        %2129 = vmatmul.bf16.gmra.mxu0 %v889
        %v2130 = vpop.f32.mrf.mxu0
        %v2131 = vadd.f32 %v1872, %v2130
        %v2132 = vpop.f32.mrf.mxu0
        %v2133 = vadd.f32 %v1874, %v2132
        %2134 = vmatmul.bf16.gmra.mxu0 %v891
        %v2135 = vpop.f32.mrf.mxu0
        %v2136 = vadd.f32 %v1877, %v2135
        %v2137 = vpop.f32.mrf.mxu0
        %v2138 = vadd.f32 %v1879, %v2137
        %2139 = vmatmul.bf16.gmra.mxu0 %v893
        %v2140 = vpop.f32.mrf.mxu0
        %v2141 = vadd.f32 %v1882, %v2140
        %v2142 = vpop.f32.mrf.mxu0
        %v2143 = vadd.f32 %v1884, %v2142
        %2144 = vmatmul.bf16.gmra.mxu0 %v895
        %v2145 = vpop.f32.mrf.mxu0
        %v2146 = vadd.f32 %v1887, %v2145
        %v2147 = vpop.f32.mrf.mxu0
        %v2148 = vadd.f32 %v1889, %v2147
        %2149 = vmatmul.bf16.gmra.mxu0 %v897
        %v2150 = vpop.f32.mrf.mxu0
        %v2151 = vadd.f32 %v1892, %v2150
        %v2152 = vpop.f32.mrf.mxu0
        %v2153 = vadd.f32 %v1894, %v2152
        %2154 = vmatmul.bf16.gmra.mxu0 %v899
        %v2155 = vpop.f32.mrf.mxu0
        %v2156 = vadd.f32 %v1897, %v2155
        %v2157 = vpop.f32.mrf.mxu0
        %v2158 = vadd.f32 %v1899, %v2157
        %2159 = vmatmul.bf16.gmra.mxu0 %v901
        %v2160 = vpop.f32.mrf.mxu0
        %v2161 = vadd.f32 %v1902, %v2160
        %v2162 = vpop.f32.mrf.mxu0
        %v2163 = vadd.f32 %v1904, %v2162
        %2164 = vmatmul.bf16.gmra.mxu0 %v903
        %v2165 = vpop.f32.mrf.mxu0
        %v2166 = vadd.f32 %v1907, %v2165
        %v2167 = vpop.f32.mrf.mxu0
        %v2168 = vadd.f32 %v1909, %v2167
        %2169 = vmatmul.bf16.gmra.mxu0 %v905
        %v2170 = vpop.f32.mrf.mxu0
        %v2171 = vadd.f32 %v1912, %v2170
        %v2172 = vpop.f32.mrf.mxu0
        %v2173 = vadd.f32 %v1914, %v2172
        %2174 = vmatmul.bf16.gmra.mxu0 %v907
        %v2175 = vpop.f32.mrf.mxu0
        %v2176 = vadd.f32 %v1917, %v2175
        %v2177 = vpop.f32.mrf.mxu0
        %v2178 = vadd.f32 %v1919, %v2177
        %2179 = vmatmul.bf16.gmra.mxu0 %v909
        %v2180 = vpop.f32.mrf.mxu0
        %v2181 = vadd.f32 %v1922, %v2180
        %v2182 = vpop.f32.mrf.mxu0
        %v2183 = vadd.f32 %v1924, %v2182
        %2184 = vmatmul.bf16.gmra.mxu0 %v911
        %v2185 = vpop.f32.mrf.mxu0
        %v2186 = vadd.f32 %v1927, %v2185
        %v2187 = vpop.f32.mrf.mxu0
        %v2188 = vadd.f32 %v1929, %v2187
        %2189 = vmatmul.bf16.gmra.mxu0 %v913
        %v2190 = vpop.f32.mrf.mxu0
        %v2191 = vadd.f32 %v1932, %v2190
        %v2192 = vpop.f32.mrf.mxu0
        %v2193 = vadd.f32 %v1934, %v2192
        %2194 = vmatmul.bf16.gmra.mxu0 %v915
        %v2195 = vpop.f32.mrf.mxu0
        %v2196 = vadd.f32 %v1937, %v2195
        %v2197 = vpop.f32.mrf.mxu0
        %v2198 = vadd.f32 %v1939, %v2197
        %2199 = vmatmul.bf16.gmra.mxu0 %v917
        %v2200 = vpop.f32.mrf.mxu0
        %v2201 = vadd.f32 %v1942, %v2200
        %v2202 = vpop.f32.mrf.mxu0
        %v2203 = vadd.f32 %v1944, %v2202
        %2204 = vmatmul.bf16.gmra.mxu0 %v919
        %v2205 = vpop.f32.mrf.mxu0
        %v2206 = vadd.f32 %v1947, %v2205
        %v2207 = vpop.f32.mrf.mxu0
        %v2208 = vadd.f32 %v1949, %v2207
        %2209 = vmatmul.bf16.gmra.mxu0 %v921
        %v2210 = vpop.f32.mrf.mxu0
        %v2211 = vadd.f32 %v1952, %v2210
        %v2212 = vpop.f32.mrf.mxu0
        %v2213 = vadd.f32 %v1954, %v2212
        %2214 = vmatmul.bf16.gmra.mxu0 %v923
        %v2215 = vpop.f32.mrf.mxu0
        %v2216 = vadd.f32 %v1957, %v2215
        %v2217 = vpop.f32.mrf.mxu0
        %v2218 = vadd.f32 %v1959, %v2217
        %2219 = vdwg.mxu0
        %v2220 = vmax.f32 %v1453, 0.0
        %v2221 = vmax.f32 %v1971, 0.0
        %v2222 = vmax.f32 %v1455, 0.0
        %v2223 = vmax.f32 %v1973, 0.0
        %v2224 = vmax.f32 %v1458, 0.0
        %v2225 = vmax.f32 %v1976, 0.0
        %v2226 = vmax.f32 %v1460, 0.0
        %v2227 = vmax.f32 %v1978, 0.0
        %v2228 = vmax.f32 %v1463, 0.0
        %v2229 = vmax.f32 %v1981, 0.0
        %v2230 = vmax.f32 %v1465, 0.0
        %v2231 = vmax.f32 %v1983, 0.0
        %v2232 = vmax.f32 %v1468, 0.0
        %v2233 = vmax.f32 %v1986, 0.0
        %v2234 = vmax.f32 %v1470, 0.0
        %v2235 = vmax.f32 %v1988, 0.0
        %v2236 = vmax.f32 %v1473, 0.0
        %v2237 = vmax.f32 %v1991, 0.0
        %v2238 = vmax.f32 %v1475, 0.0
        %v2239 = vmax.f32 %v1993, 0.0
        %v2240 = vmax.f32 %v1478, 0.0
        %v2241 = vmax.f32 %v1996, 0.0
        %v2242 = vmax.f32 %v1480, 0.0
        %v2243 = vmax.f32 %v1998, 0.0
        %v2244 = vmax.f32 %v1483, 0.0
        %v2245 = vmax.f32 %v2001, 0.0
        %v2246 = vmax.f32 %v1485, 0.0
        %v2247 = vmax.f32 %v2003, 0.0
        %v2248 = vmax.f32 %v1488, 0.0
        %v2249 = vmax.f32 %v2006, 0.0
        %v2250 = vmax.f32 %v1490, 0.0
        %v2251 = vmax.f32 %v2008, 0.0
        %v2252 = vmax.f32 %v1493, 0.0
        %v2253 = vmax.f32 %v2011, 0.0
        %v2254 = vmax.f32 %v1495, 0.0
        %v2255 = vmax.f32 %v2013, 0.0
        %v2256 = vmax.f32 %v1498, 0.0
        %v2257 = vmax.f32 %v2016, 0.0
        %v2258 = vmax.f32 %v1500, 0.0
        %v2259 = vmax.f32 %v2018, 0.0
        %v2260 = vmax.f32 %v1503, 0.0
        %v2261 = vmax.f32 %v2021, 0.0
        %v2262 = vmax.f32 %v1505, 0.0
        %v2263 = vmax.f32 %v2023, 0.0
        %v2264 = vmax.f32 %v1508, 0.0
        %v2265 = vmax.f32 %v2026, 0.0
        %v2266 = vmax.f32 %v1510, 0.0
        %v2267 = vmax.f32 %v2028, 0.0
        %v2268 = vmax.f32 %v1513, 0.0
        %v2269 = vmax.f32 %v2031, 0.0
        %v2270 = vmax.f32 %v1515, 0.0
        %v2271 = vmax.f32 %v2033, 0.0
        %v2272 = vmax.f32 %v1518, 0.0
        %v2273 = vmax.f32 %v2036, 0.0
        %v2274 = vmax.f32 %v1520, 0.0
        %v2275 = vmax.f32 %v2038, 0.0
        %v2276 = vmax.f32 %v1523, 0.0
        %v2277 = vmax.f32 %v2041, 0.0
        %v2278 = vmax.f32 %v1525, 0.0
        %v2279 = vmax.f32 %v2043, 0.0
        %v2280 = vmax.f32 %v1528, 0.0
        %v2281 = vmax.f32 %v2046, 0.0
        %v2282 = vmax.f32 %v1530, 0.0
        %v2283 = vmax.f32 %v2048, 0.0
        %v2284 = vmax.f32 %v1533, 0.0
        %v2285 = vmax.f32 %v2051, 0.0
        %v2286 = vmax.f32 %v1535, 0.0
        %v2287 = vmax.f32 %v2053, 0.0
        %v2288 = vmax.f32 %v1538, 0.0
        %v2289 = vmax.f32 %v2056, 0.0
        %v2290 = vmax.f32 %v1540, 0.0
        %v2291 = vmax.f32 %v2058, 0.0
        %v2292 = vmax.f32 %v1543, 0.0
        %v2293 = vmax.f32 %v2061, 0.0
        %v2294 = vmax.f32 %v1545, 0.0
        %v2295 = vmax.f32 %v2063, 0.0
        %v2296 = vmax.f32 %v1548, 0.0
        %v2297 = vmax.f32 %v2066, 0.0
        %v2298 = vmax.f32 %v1550, 0.0
        %v2299 = vmax.f32 %v2068, 0.0
        %v2300 = vmax.f32 %v1553, 0.0
        %v2301 = vmax.f32 %v2071, 0.0
        %v2302 = vmax.f32 %v1555, 0.0
        %v2303 = vmax.f32 %v2073, 0.0
        %v2304 = vmax.f32 %v1558, 0.0
        %v2305 = vmax.f32 %v2076, 0.0
        %v2306 = vmax.f32 %v1560, 0.0
        %v2307 = vmax.f32 %v2078, 0.0
        %v2308 = vmax.f32 %v1563, 0.0
        %v2309 = vmax.f32 %v2081, 0.0
        %v2310 = vmax.f32 %v1565, 0.0
        %v2311 = vmax.f32 %v2083, 0.0
        %v2312 = vmax.f32 %v1568, 0.0
        %v2313 = vmax.f32 %v2086, 0.0
        %v2314 = vmax.f32 %v1570, 0.0
        %v2315 = vmax.f32 %v2088, 0.0
        %v2316 = vmax.f32 %v1573, 0.0
        %v2317 = vmax.f32 %v2091, 0.0
        %v2318 = vmax.f32 %v1575, 0.0
        %v2319 = vmax.f32 %v2093, 0.0
        %v2320 = vmax.f32 %v1578, 0.0
        %v2321 = vmax.f32 %v2096, 0.0
        %v2322 = vmax.f32 %v1580, 0.0
        %v2323 = vmax.f32 %v2098, 0.0
        %v2324 = vmax.f32 %v1583, 0.0
        %v2325 = vmax.f32 %v2101, 0.0
        %v2326 = vmax.f32 %v1585, 0.0
        %v2327 = vmax.f32 %v2103, 0.0
        %v2328 = vmax.f32 %v1588, 0.0
        %v2329 = vmax.f32 %v2106, 0.0
        %v2330 = vmax.f32 %v1590, 0.0
        %v2331 = vmax.f32 %v2108, 0.0
        %v2332 = vmax.f32 %v1593, 0.0
        %v2333 = vmax.f32 %v2111, 0.0
        %v2334 = vmax.f32 %v1595, 0.0
        %v2335 = vmax.f32 %v2113, 0.0
        %v2336 = vmax.f32 %v1598, 0.0
        %v2337 = vmax.f32 %v2116, 0.0
        %v2338 = vmax.f32 %v1600, 0.0
        %v2339 = vmax.f32 %v2118, 0.0
        %v2340 = vmax.f32 %v1603, 0.0
        %v2341 = vmax.f32 %v2121, 0.0
        %v2342 = vmax.f32 %v1605, 0.0
        %v2343 = vmax.f32 %v2123, 0.0
        %v2344 = vmax.f32 %v1608, 0.0
        %v2345 = vmax.f32 %v2126, 0.0
        %v2346 = vmax.f32 %v1610, 0.0
        %v2347 = vmax.f32 %v2128, 0.0
        %v2348 = vmax.f32 %v1613, 0.0
        %v2349 = vmax.f32 %v2131, 0.0
        %v2350 = vmax.f32 %v1615, 0.0
        %v2351 = vmax.f32 %v2133, 0.0
        %v2352 = vmax.f32 %v1618, 0.0
        %v2353 = vmax.f32 %v2136, 0.0
        %v2354 = vmax.f32 %v1620, 0.0
        %v2355 = vmax.f32 %v2138, 0.0
        %v2356 = vmax.f32 %v1623, 0.0
        %v2357 = vmax.f32 %v2141, 0.0
        %v2358 = vmax.f32 %v1625, 0.0
        %v2359 = vmax.f32 %v2143, 0.0
        %v2360 = vmax.f32 %v1628, 0.0
        %v2361 = vmax.f32 %v2146, 0.0
        %v2362 = vmax.f32 %v1630, 0.0
        %v2363 = vmax.f32 %v2148, 0.0
        %v2364 = vmax.f32 %v1633, 0.0
        %v2365 = vmax.f32 %v2151, 0.0
        %v2366 = vmax.f32 %v1635, 0.0
        %v2367 = vmax.f32 %v2153, 0.0
        %v2368 = vmax.f32 %v1638, 0.0
        %v2369 = vmax.f32 %v2156, 0.0
        %v2370 = vmax.f32 %v1640, 0.0
        %v2371 = vmax.f32 %v2158, 0.0
        %v2372 = vmax.f32 %v1643, 0.0
        %v2373 = vmax.f32 %v2161, 0.0
        %v2374 = vmax.f32 %v1645, 0.0
        %v2375 = vmax.f32 %v2163, 0.0
        %v2376 = vmax.f32 %v1648, 0.0
        %v2377 = vmax.f32 %v2166, 0.0
        %v2378 = vmax.f32 %v1650, 0.0
        %v2379 = vmax.f32 %v2168, 0.0
        %v2380 = vmax.f32 %v1653, 0.0
        %v2381 = vmax.f32 %v2171, 0.0
        %v2382 = vmax.f32 %v1655, 0.0
        %v2383 = vmax.f32 %v2173, 0.0
        %v2384 = vmax.f32 %v1658, 0.0
        %v2385 = vmax.f32 %v2176, 0.0
        %v2386 = vmax.f32 %v1660, 0.0
        %v2387 = vmax.f32 %v2178, 0.0
        %v2388 = vmax.f32 %v1663, 0.0
        %v2389 = vmax.f32 %v2181, 0.0
        %v2390 = vmax.f32 %v1665, 0.0
        %v2391 = vmax.f32 %v2183, 0.0
        %v2392 = vmax.f32 %v1668, 0.0
        %v2393 = vmax.f32 %v2186, 0.0
        %v2394 = vmax.f32 %v1670, 0.0
        %v2395 = vmax.f32 %v2188, 0.0
        %v2396 = vmax.f32 %v1673, 0.0
        %v2397 = vmax.f32 %v2191, 0.0
        %v2398 = vmax.f32 %v1675, 0.0
        %v2399 = vmax.f32 %v2193, 0.0
        %v2400 = vmax.f32 %v1678, 0.0
        %v2401 = vmax.f32 %v2196, 0.0
        %v2402 = vmax.f32 %v1680, 0.0
        %v2403 = vmax.f32 %v2198, 0.0
        %v2404 = vmax.f32 %v1683, 0.0
        %v2405 = vmax.f32 %v2201, 0.0
        %v2406 = vmax.f32 %v1685, 0.0
        %v2407 = vmax.f32 %v2203, 0.0
        %v2408 = vmax.f32 %v1688, 0.0
        %v2409 = vmax.f32 %v2206, 0.0
        %v2410 = vmax.f32 %v1690, 0.0
        %v2411 = vmax.f32 %v2208, 0.0
        %v2412 = vmax.f32 %v1693, 0.0
        %v2413 = vmax.f32 %v2211, 0.0
        %v2414 = vmax.f32 %v1695, 0.0
        %v2415 = vmax.f32 %v2213, 0.0
        %v2416 = vmax.f32 %v1698, 0.0
        %v2417 = vmax.f32 %v2216, 0.0
        %v2418 = vmax.f32 %v1700, 0.0
        %v2419 = vmax.f32 %v2218, 0.0
        %v2420 = vpack.c.bf16 %v2221, %v2220
        %v2421 = vpack.c.bf16 %v2223, %v2222
        %v2422 = vpack.c.bf16 %v2225, %v2224
        %v2423 = vpack.c.bf16 %v2227, %v2226
        %v2424 = vpack.c.bf16 %v2229, %v2228
        %v2425 = vpack.c.bf16 %v2231, %v2230
        %v2426 = vpack.c.bf16 %v2233, %v2232
        %v2427 = vpack.c.bf16 %v2235, %v2234
        %v2428 = vpack.c.bf16 %v2237, %v2236
        %v2429 = vpack.c.bf16 %v2239, %v2238
        %v2430 = vpack.c.bf16 %v2241, %v2240
        %v2431 = vpack.c.bf16 %v2243, %v2242
        %v2432 = vpack.c.bf16 %v2245, %v2244
        %v2433 = vpack.c.bf16 %v2247, %v2246
        %v2434 = vpack.c.bf16 %v2249, %v2248
        %v2435 = vpack.c.bf16 %v2251, %v2250
        %v2436 = vpack.c.bf16 %v2253, %v2252
        %v2437 = vpack.c.bf16 %v2255, %v2254
        %v2438 = vpack.c.bf16 %v2257, %v2256
        %v2439 = vpack.c.bf16 %v2259, %v2258
        %v2440 = vpack.c.bf16 %v2261, %v2260
        %v2441 = vpack.c.bf16 %v2263, %v2262
        %v2442 = vpack.c.bf16 %v2265, %v2264
        %v2443 = vpack.c.bf16 %v2267, %v2266
        %v2444 = vpack.c.bf16 %v2269, %v2268
        %v2445 = vpack.c.bf16 %v2271, %v2270
        %v2446 = vpack.c.bf16 %v2273, %v2272
        %v2447 = vpack.c.bf16 %v2275, %v2274
        %v2448 = vpack.c.bf16 %v2277, %v2276
        %v2449 = vpack.c.bf16 %v2279, %v2278
        %v2450 = vpack.c.bf16 %v2281, %v2280
        %v2451 = vpack.c.bf16 %v2283, %v2282
        %v2452 = vpack.c.bf16 %v2285, %v2284
        %v2453 = vpack.c.bf16 %v2287, %v2286
        %v2454 = vpack.c.bf16 %v2289, %v2288
        %v2455 = vpack.c.bf16 %v2291, %v2290
        %v2456 = vpack.c.bf16 %v2293, %v2292
        %v2457 = vpack.c.bf16 %v2295, %v2294
        %v2458 = vpack.c.bf16 %v2297, %v2296
        %v2459 = vpack.c.bf16 %v2299, %v2298
        %v2460 = vpack.c.bf16 %v2301, %v2300
        %v2461 = vpack.c.bf16 %v2303, %v2302
        %v2462 = vpack.c.bf16 %v2305, %v2304
        %v2463 = vpack.c.bf16 %v2307, %v2306
        %v2464 = vpack.c.bf16 %v2309, %v2308
        %v2465 = vpack.c.bf16 %v2311, %v2310
        %v2466 = vpack.c.bf16 %v2313, %v2312
        %v2467 = vpack.c.bf16 %v2315, %v2314
        %v2468 = vpack.c.bf16 %v2317, %v2316
        %v2469 = vpack.c.bf16 %v2319, %v2318
        %v2470 = vpack.c.bf16 %v2321, %v2320
        %v2471 = vpack.c.bf16 %v2323, %v2322
        %v2472 = vpack.c.bf16 %v2325, %v2324
        %v2473 = vpack.c.bf16 %v2327, %v2326
        %v2474 = vpack.c.bf16 %v2329, %v2328
        %v2475 = vpack.c.bf16 %v2331, %v2330
        %v2476 = vpack.c.bf16 %v2333, %v2332
        %v2477 = vpack.c.bf16 %v2335, %v2334
        %v2478 = vpack.c.bf16 %v2337, %v2336
        %v2479 = vpack.c.bf16 %v2339, %v2338
        %v2480 = vpack.c.bf16 %v2341, %v2340
        %v2481 = vpack.c.bf16 %v2343, %v2342
        %v2482 = vpack.c.bf16 %v2345, %v2344
        %v2483 = vpack.c.bf16 %v2347, %v2346
        %v2484 = vpack.c.bf16 %v2349, %v2348
        %v2485 = vpack.c.bf16 %v2351, %v2350
        %v2486 = vpack.c.bf16 %v2353, %v2352
        %v2487 = vpack.c.bf16 %v2355, %v2354
        %v2488 = vpack.c.bf16 %v2357, %v2356
        %v2489 = vpack.c.bf16 %v2359, %v2358
        %v2490 = vpack.c.bf16 %v2361, %v2360
        %v2491 = vpack.c.bf16 %v2363, %v2362
        %v2492 = vpack.c.bf16 %v2365, %v2364
        %v2493 = vpack.c.bf16 %v2367, %v2366
        %v2494 = vpack.c.bf16 %v2369, %v2368
        %v2495 = vpack.c.bf16 %v2371, %v2370
        %v2496 = vpack.c.bf16 %v2373, %v2372
        %v2497 = vpack.c.bf16 %v2375, %v2374
        %v2498 = vpack.c.bf16 %v2377, %v2376
        %v2499 = vpack.c.bf16 %v2379, %v2378
        %v2500 = vpack.c.bf16 %v2381, %v2380
        %v2501 = vpack.c.bf16 %v2383, %v2382
        %v2502 = vpack.c.bf16 %v2385, %v2384
        %v2503 = vpack.c.bf16 %v2387, %v2386
        %v2504 = vpack.c.bf16 %v2389, %v2388
        %v2505 = vpack.c.bf16 %v2391, %v2390
        %v2506 = vpack.c.bf16 %v2393, %v2392
        %v2507 = vpack.c.bf16 %v2395, %v2394
        %v2508 = vpack.c.bf16 %v2397, %v2396
        %v2509 = vpack.c.bf16 %v2399, %v2398
        %v2510 = vpack.c.bf16 %v2401, %v2400
        %v2511 = vpack.c.bf16 %v2403, %v2402
        %v2512 = vpack.c.bf16 %v2405, %v2404
        %v2513 = vpack.c.bf16 %v2407, %v2406
        %v2514 = vpack.c.bf16 %v2409, %v2408
        %v2515 = vpack.c.bf16 %v2411, %v2410
        %v2516 = vpack.c.bf16 %v2413, %v2412
        %v2517 = vpack.c.bf16 %v2415, %v2414
        %v2518 = vpack.c.bf16 %v2417, %v2416
        %v2519 = vpack.c.bf16 %v2419, %v2418
        %2520 = vst [vmem:[%s370] sm:$0xff] %v2420
        %2521 = vst [vmem:[%s370 + $0x8] sm:$0xff] %v2421
        %2522 = vst [vmem:[%s370 + $0x10] sm:$0xff] %v2422
        %2523 = vst [vmem:[%s370 + $0x18] sm:$0xff] %v2423
        %2524 = vst [vmem:[%s370 + $0x20] sm:$0xff] %v2424
        %2525 = vst [vmem:[%s370 + $0x28] sm:$0xff] %v2425
        %2526 = vst [vmem:[%s370 + $0x30] sm:$0xff] %v2426
        %2527 = vst [vmem:[%s370 + $0x38] sm:$0xff] %v2427
        %2528 = vst [vmem:[%s370 + $0x40] sm:$0xff] %v2428
        %2529 = vst [vmem:[%s370 + $0x48] sm:$0xff] %v2429
        %2530 = vst [vmem:[%s370 + $0x50] sm:$0xff] %v2430
        %2531 = vst [vmem:[%s370 + $0x58] sm:$0xff] %v2431
        %2532 = vst [vmem:[%s370 + $0x60] sm:$0xff] %v2432
        %2533 = vst [vmem:[%s370 + $0x68] sm:$0xff] %v2433
        %2534 = vst [vmem:[%s370 + $0x70] sm:$0xff] %v2434
        %2535 = vst [vmem:[%s370 + $0x78] sm:$0xff] %v2435
        %2536 = vst [vmem:[%s370 + $0x80] sm:$0xff] %v2436
        %2537 = vst [vmem:[%s370 + $0x88] sm:$0xff] %v2437
        %2538 = vst [vmem:[%s370 + $0x90] sm:$0xff] %v2438
        %2539 = vst [vmem:[%s370 + $0x98] sm:$0xff] %v2439
        %2540 = vst [vmem:[%s370 + $0xa0] sm:$0xff] %v2440
        %2541 = vst [vmem:[%s370 + $0xa8] sm:$0xff] %v2441
        %2542 = vst [vmem:[%s370 + $0xb0] sm:$0xff] %v2442
        %2543 = vst [vmem:[%s370 + $0xb8] sm:$0xff] %v2443
        %2544 = vst [vmem:[%s370 + $0xc0] sm:$0xff] %v2444
        %2545 = vst [vmem:[%s370 + $0xc8] sm:$0xff] %v2445
        %2546 = vst [vmem:[%s370 + $0xd0] sm:$0xff] %v2446
        %2547 = vst [vmem:[%s370 + $0xd8] sm:$0xff] %v2447
        %2548 = vst [vmem:[%s370 + $0xe0] sm:$0xff] %v2448
        %2549 = vst [vmem:[%s370 + $0xe8] sm:$0xff] %v2449
        %2550 = vst [vmem:[%s370 + $0xf0] sm:$0xff] %v2450
        %2551 = vst [vmem:[%s370 + $0xf8] sm:$0xff] %v2451
        %2552 = vst [vmem:[%s370 + $0x100] sm:$0xff] %v2452
        %2553 = vst [vmem:[%s370 + $0x108] sm:$0xff] %v2453
        %2554 = vst [vmem:[%s370 + $0x110] sm:$0xff] %v2454
        %2555 = vst [vmem:[%s370 + $0x118] sm:$0xff] %v2455
        %2556 = vst [vmem:[%s370 + $0x120] sm:$0xff] %v2456
        %2557 = vst [vmem:[%s370 + $0x128] sm:$0xff] %v2457
        %2558 = vst [vmem:[%s370 + $0x130] sm:$0xff] %v2458
        %2559 = vst [vmem:[%s370 + $0x138] sm:$0xff] %v2459
        %2560 = vst [vmem:[%s370 + $0x140] sm:$0xff] %v2460
        %2561 = vst [vmem:[%s370 + $0x148] sm:$0xff] %v2461
        %2562 = vst [vmem:[%s370 + $0x150] sm:$0xff] %v2462
        %2563 = vst [vmem:[%s370 + $0x158] sm:$0xff] %v2463
        %2564 = vst [vmem:[%s370 + $0x160] sm:$0xff] %v2464
        %2565 = vst [vmem:[%s370 + $0x168] sm:$0xff] %v2465
        %2566 = vst [vmem:[%s370 + $0x170] sm:$0xff] %v2466
        %2567 = vst [vmem:[%s370 + $0x178] sm:$0xff] %v2467
        %2568 = vst [vmem:[%s370 + $0x180] sm:$0xff] %v2468
        %2569 = vst [vmem:[%s370 + $0x188] sm:$0xff] %v2469
        %2570 = vst [vmem:[%s370 + $0x190] sm:$0xff] %v2470
        %2571 = vst [vmem:[%s370 + $0x198] sm:$0xff] %v2471
        %2572 = vst [vmem:[%s370 + $0x1a0] sm:$0xff] %v2472
        %2573 = vst [vmem:[%s370 + $0x1a8] sm:$0xff] %v2473
        %2574 = vst [vmem:[%s370 + $0x1b0] sm:$0xff] %v2474
        %2575 = vst [vmem:[%s370 + $0x1b8] sm:$0xff] %v2475
        %2576 = vst [vmem:[%s370 + $0x1c0] sm:$0xff] %v2476
        %2577 = vst [vmem:[%s370 + $0x1c8] sm:$0xff] %v2477
        %2578 = vst [vmem:[%s370 + $0x1d0] sm:$0xff] %v2478
        %2579 = vst [vmem:[%s370 + $0x1d8] sm:$0xff] %v2479
        %2580 = vst [vmem:[%s370 + $0x1e0] sm:$0xff] %v2480
        %2581 = vst [vmem:[%s370 + $0x1e8] sm:$0xff] %v2481
        %2582 = vst [vmem:[%s370 + $0x1f0] sm:$0xff] %v2482
        %2583 = vst [vmem:[%s370 + $0x1f8] sm:$0xff] %v2483
        %2584 = vst [vmem:[%s370 + $0x200] sm:$0xff] %v2484
        %2585 = vst [vmem:[%s370 + $0x208] sm:$0xff] %v2485
        %2586 = vst [vmem:[%s370 + $0x210] sm:$0xff] %v2486
        %2587 = vst [vmem:[%s370 + $0x218] sm:$0xff] %v2487
        %2588 = vst [vmem:[%s370 + $0x220] sm:$0xff] %v2488
        %2589 = vst [vmem:[%s370 + $0x228] sm:$0xff] %v2489
        %2590 = vst [vmem:[%s370 + $0x230] sm:$0xff] %v2490
        %2591 = vst [vmem:[%s370 + $0x238] sm:$0xff] %v2491
        %2592 = vst [vmem:[%s370 + $0x240] sm:$0xff] %v2492
        %2593 = vst [vmem:[%s370 + $0x248] sm:$0xff] %v2493
        %2594 = vst [vmem:[%s370 + $0x250] sm:$0xff] %v2494
        %2595 = vst [vmem:[%s370 + $0x258] sm:$0xff] %v2495
        %2596 = vst [vmem:[%s370 + $0x260] sm:$0xff] %v2496
        %2597 = vst [vmem:[%s370 + $0x268] sm:$0xff] %v2497
        %2598 = vst [vmem:[%s370 + $0x270] sm:$0xff] %v2498
        %2599 = vst [vmem:[%s370 + $0x278] sm:$0xff] %v2499
        %2600 = vst [vmem:[%s370 + $0x280] sm:$0xff] %v2500
        %2601 = vst [vmem:[%s370 + $0x288] sm:$0xff] %v2501
        %2602 = vst [vmem:[%s370 + $0x290] sm:$0xff] %v2502
        %2603 = vst [vmem:[%s370 + $0x298] sm:$0xff] %v2503
        %2604 = vst [vmem:[%s370 + $0x2a0] sm:$0xff] %v2504
        %2605 = vst [vmem:[%s370 + $0x2a8] sm:$0xff] %v2505
        %2606 = vst [vmem:[%s370 + $0x2b0] sm:$0xff] %v2506
        %2607 = vst [vmem:[%s370 + $0x2b8] sm:$0xff] %v2507
        %2608 = vst [vmem:[%s370 + $0x2c0] sm:$0xff] %v2508
        %2609 = vst [vmem:[%s370 + $0x2c8] sm:$0xff] %v2509
        %2610 = vst [vmem:[%s370 + $0x2d0] sm:$0xff] %v2510
        %2611 = vst [vmem:[%s370 + $0x2d8] sm:$0xff] %v2511
        %2612 = vst [vmem:[%s370 + $0x2e0] sm:$0xff] %v2512
        %2613 = vst [vmem:[%s370 + $0x2e8] sm:$0xff] %v2513
        %2614 = vst [vmem:[%s370 + $0x2f0] sm:$0xff] %v2514
        %2615 = vst [vmem:[%s370 + $0x2f8] sm:$0xff] %v2515
        %2616 = vst [vmem:[%s370 + $0x300] sm:$0xff] %v2516
        %2617 = vst [vmem:[%s370 + $0x308] sm:$0xff] %v2517
        %2618 = vst [vmem:[%s370 + $0x310] sm:$0xff] %v2518
        %2619 = vst [vmem:[%s370 + $0x318] sm:$0xff] %v2519
        %s2620 = sand.u32 %s114, 1
        %s2621 = sand.u32 %s114, 1
        %s2622 = smul.addr %s2621, 800
        %s2623 = scalar_lea.vmem [#allocation3], %s2622
        // Predicated region
        $region71: #{conv_decoder_forward.11} parent=65 // pred_check
          %p2624 = pneg %p124
        $region72: #{conv_decoder_forward.11} parent=65 // pred_check_branch
          %2626 = sbr.rel (%p2624) target = $region74
        $region73: #{conv_decoder_forward.11} parent=65 // pred_region
          %s2627 = smul.u32 100, %s18
          %s2628 = smul.u32 2, %s19
          %s2629 = smul.addr %s2627, 4
          %s2630 = sadd.s32 %s2628, %s2629
          %s2631 = smul.addr %s2630, 4
          %s2632 = scalar_lea.vmem %s3, %s2631
          // Predicated region
          $region75: #{conv_decoder_forward.11} parent=73 // pred_check
            _
          $region76: #{conv_decoder_forward.11} parent=73 // pred_check_branch
            %2634 = sbr.rel (0) target = $region78
          $region77: #{conv_decoder_forward.11} parent=73 // pred_region
            // Predicated region
            $region79: #{conv_decoder_forward.11} parent=77 // pred_check
              _
            $region80: #{conv_decoder_forward.11} parent=77 // pred_check_branch
              %2636 = sbr.rel (0) target = $region82
            $region81: #{conv_decoder_forward.11} parent=77 // pred_region
              // Predicated region
              $region94: #{conv_decoder_forward.11} parent=81 // pred_check
                _
              $region95: #{conv_decoder_forward.11} parent=81 // pred_check_branch
                %2850 = sbr.rel (0) target = $region97
              $region96: #{conv_decoder_forward.11} parent=81 // pred_region
                loop: start=0, step=1, limit=1
                $region98: #{conv_decoder_forward.11} parent=96 // loop_pre_header
                  _
                $region99: #{conv_decoder_forward.11} parent=96 // loop_header
                  %s2852 = sphi 0, %s2856
                  %p2853 = scmp.ge.s32.totalorder %s2852, 1
                  %s2857 = sphi %s2623, %s2623
                  %s2858 = sphi %s2632, %s2632
                $region100: #{conv_decoder_forward.11} parent=96 // loop_header_branch
                  %2855 = sbr.rel (%p2853) target = $region104
                $region101: #{conv_decoder_forward.11} parent=96 // loop_body
                  %v2859 = vld [vmem:[%s2857] sm:$0xff]
                  %2860 = vst [vmem:[%s2858] sm:$0xff] %v2859
                  %v2861 = vld [vmem:[%s2857 + $0x8] sm:$0xff]
                  %2862 = vst [vmem:[%s2858 + $0x10] sm:$0xff] %v2861
                  %v2863 = vld [vmem:[%s2857 + $0x10] sm:$0xff]
                  %2864 = vst [vmem:[%s2858 + $0x20] sm:$0xff] %v2863
                  %v2865 = vld [vmem:[%s2857 + $0x18] sm:$0xff]
                  %2866 = vst [vmem:[%s2858 + $0x30] sm:$0xff] %v2865
                  %v2867 = vld [vmem:[%s2857 + $0x20] sm:$0xff]
                  %2868 = vst [vmem:[%s2858 + $0x40] sm:$0xff] %v2867
                  %v2869 = vld [vmem:[%s2857 + $0x28] sm:$0xff]
                  %2870 = vst [vmem:[%s2858 + $0x50] sm:$0xff] %v2869
                  %v2871 = vld [vmem:[%s2857 + $0x30] sm:$0xff]
                  %2872 = vst [vmem:[%s2858 + $0x60] sm:$0xff] %v2871
                  %v2873 = vld [vmem:[%s2857 + $0x38] sm:$0xff]
                  %2874 = vst [vmem:[%s2858 + $0x70] sm:$0xff] %v2873
                  %v2875 = vld [vmem:[%s2857 + $0x40] sm:$0xff]
                  %2876 = vst [vmem:[%s2858 + $0x80] sm:$0xff] %v2875
                  %v2877 = vld [vmem:[%s2857 + $0x48] sm:$0xff]
                  %2878 = vst [vmem:[%s2858 + $0x90] sm:$0xff] %v2877
                  %v2879 = vld [vmem:[%s2857 + $0x50] sm:$0xff]
                  %2880 = vst [vmem:[%s2858 + $0xa0] sm:$0xff] %v2879
                  %v2881 = vld [vmem:[%s2857 + $0x58] sm:$0xff]
                  %2882 = vst [vmem:[%s2858 + $0xb0] sm:$0xff] %v2881
                  %v2883 = vld [vmem:[%s2857 + $0x60] sm:$0xff]
                  %2884 = vst [vmem:[%s2858 + $0xc0] sm:$0xff] %v2883
                  %v2885 = vld [vmem:[%s2857 + $0x68] sm:$0xff]
                  %2886 = vst [vmem:[%s2858 + $0xd0] sm:$0xff] %v2885
                  %v2887 = vld [vmem:[%s2857 + $0x70] sm:$0xff]
                  %2888 = vst [vmem:[%s2858 + $0xe0] sm:$0xff] %v2887
                  %v2889 = vld [vmem:[%s2857 + $0x78] sm:$0xff]
                  %2890 = vst [vmem:[%s2858 + $0xf0] sm:$0xff] %v2889
                  %v2891 = vld [vmem:[%s2857 + $0x80] sm:$0xff]
                  %2892 = vst [vmem:[%s2858 + $0x100] sm:$0xff] %v2891
                  %v2893 = vld [vmem:[%s2857 + $0x88] sm:$0xff]
                  %2894 = vst [vmem:[%s2858 + $0x110] sm:$0xff] %v2893
                  %v2895 = vld [vmem:[%s2857 + $0x90] sm:$0xff]
                  %2896 = vst [vmem:[%s2858 + $0x120] sm:$0xff] %v2895
                  %v2897 = vld [vmem:[%s2857 + $0x98] sm:$0xff]
                  %2898 = vst [vmem:[%s2858 + $0x130] sm:$0xff] %v2897
                  %v2899 = vld [vmem:[%s2857 + $0xa0] sm:$0xff]
                  %2900 = vst [vmem:[%s2858 + $0x140] sm:$0xff] %v2899
                  %v2901 = vld [vmem:[%s2857 + $0xa8] sm:$0xff]
                  %2902 = vst [vmem:[%s2858 + $0x150] sm:$0xff] %v2901
                  %v2903 = vld [vmem:[%s2857 + $0xb0] sm:$0xff]
                  %2904 = vst [vmem:[%s2858 + $0x160] sm:$0xff] %v2903
                  %v2905 = vld [vmem:[%s2857 + $0xb8] sm:$0xff]
                  %2906 = vst [vmem:[%s2858 + $0x170] sm:$0xff] %v2905
                  %v2907 = vld [vmem:[%s2857 + $0xc0] sm:$0xff]
                  %2908 = vst [vmem:[%s2858 + $0x180] sm:$0xff] %v2907
                  %v2909 = vld [vmem:[%s2857 + $0xc8] sm:$0xff]
                  %2910 = vst [vmem:[%s2858 + $0x190] sm:$0xff] %v2909
                  %v2911 = vld [vmem:[%s2857 + $0xd0] sm:$0xff]
                  %2912 = vst [vmem:[%s2858 + $0x1a0] sm:$0xff] %v2911
                  %v2913 = vld [vmem:[%s2857 + $0xd8] sm:$0xff]
                  %2914 = vst [vmem:[%s2858 + $0x1b0] sm:$0xff] %v2913
                  %v2915 = vld [vmem:[%s2857 + $0xe0] sm:$0xff]
                  %2916 = vst [vmem:[%s2858 + $0x1c0] sm:$0xff] %v2915
                  %v2917 = vld [vmem:[%s2857 + $0xe8] sm:$0xff]
                  %2918 = vst [vmem:[%s2858 + $0x1d0] sm:$0xff] %v2917
                  %v2919 = vld [vmem:[%s2857 + $0xf0] sm:$0xff]
                  %2920 = vst [vmem:[%s2858 + $0x1e0] sm:$0xff] %v2919
                  %v2921 = vld [vmem:[%s2857 + $0xf8] sm:$0xff]
                  %2922 = vst [vmem:[%s2858 + $0x1f0] sm:$0xff] %v2921
                  %v2923 = vld [vmem:[%s2857 + $0x100] sm:$0xff]
                  %2924 = vst [vmem:[%s2858 + $0x200] sm:$0xff] %v2923
                  %v2925 = vld [vmem:[%s2857 + $0x108] sm:$0xff]
                  %2926 = vst [vmem:[%s2858 + $0x210] sm:$0xff] %v2925
                  %v2927 = vld [vmem:[%s2857 + $0x110] sm:$0xff]
                  %2928 = vst [vmem:[%s2858 + $0x220] sm:$0xff] %v2927
                  %v2929 = vld [vmem:[%s2857 + $0x118] sm:$0xff]
                  %2930 = vst [vmem:[%s2858 + $0x230] sm:$0xff] %v2929
                  %v2931 = vld [vmem:[%s2857 + $0x120] sm:$0xff]
                  %2932 = vst [vmem:[%s2858 + $0x240] sm:$0xff] %v2931
                  %v2933 = vld [vmem:[%s2857 + $0x128] sm:$0xff]
                  %2934 = vst [vmem:[%s2858 + $0x250] sm:$0xff] %v2933
                  %v2935 = vld [vmem:[%s2857 + $0x130] sm:$0xff]
                  %2936 = vst [vmem:[%s2858 + $0x260] sm:$0xff] %v2935
                  %v2937 = vld [vmem:[%s2857 + $0x138] sm:$0xff]
                  %2938 = vst [vmem:[%s2858 + $0x270] sm:$0xff] %v2937
                  %v2939 = vld [vmem:[%s2857 + $0x140] sm:$0xff]
                  %2940 = vst [vmem:[%s2858 + $0x280] sm:$0xff] %v2939
                  %v2941 = vld [vmem:[%s2857 + $0x148] sm:$0xff]
                  %2942 = vst [vmem:[%s2858 + $0x290] sm:$0xff] %v2941
                  %v2943 = vld [vmem:[%s2857 + $0x150] sm:$0xff]
                  %2944 = vst [vmem:[%s2858 + $0x2a0] sm:$0xff] %v2943
                  %v2945 = vld [vmem:[%s2857 + $0x158] sm:$0xff]
                  %2946 = vst [vmem:[%s2858 + $0x2b0] sm:$0xff] %v2945
                  %v2947 = vld [vmem:[%s2857 + $0x160] sm:$0xff]
                  %2948 = vst [vmem:[%s2858 + $0x2c0] sm:$0xff] %v2947
                  %v2949 = vld [vmem:[%s2857 + $0x168] sm:$0xff]
                  %2950 = vst [vmem:[%s2858 + $0x2d0] sm:$0xff] %v2949
                  %v2951 = vld [vmem:[%s2857 + $0x170] sm:$0xff]
                  %2952 = vst [vmem:[%s2858 + $0x2e0] sm:$0xff] %v2951
                  %v2953 = vld [vmem:[%s2857 + $0x178] sm:$0xff]
                  %2954 = vst [vmem:[%s2858 + $0x2f0] sm:$0xff] %v2953
                  %v2955 = vld [vmem:[%s2857 + $0x180] sm:$0xff]
                  %2956 = vst [vmem:[%s2858 + $0x300] sm:$0xff] %v2955
                  %v2957 = vld [vmem:[%s2857 + $0x188] sm:$0xff]
                  %2958 = vst [vmem:[%s2858 + $0x310] sm:$0xff] %v2957
                  %v2959 = vld [vmem:[%s2857 + $0x190] sm:$0xff]
                  %2960 = vst [vmem:[%s2858 + $0x320] sm:$0xff] %v2959
                  %v2961 = vld [vmem:[%s2857 + $0x198] sm:$0xff]
                  %2962 = vst [vmem:[%s2858 + $0x330] sm:$0xff] %v2961
                  %v2963 = vld [vmem:[%s2857 + $0x1a0] sm:$0xff]
                  %2964 = vst [vmem:[%s2858 + $0x340] sm:$0xff] %v2963
                  %v2965 = vld [vmem:[%s2857 + $0x1a8] sm:$0xff]
                  %2966 = vst [vmem:[%s2858 + $0x350] sm:$0xff] %v2965
                  %v2967 = vld [vmem:[%s2857 + $0x1b0] sm:$0xff]
                  %2968 = vst [vmem:[%s2858 + $0x360] sm:$0xff] %v2967
                  %v2969 = vld [vmem:[%s2857 + $0x1b8] sm:$0xff]
                  %2970 = vst [vmem:[%s2858 + $0x370] sm:$0xff] %v2969
                  %v2971 = vld [vmem:[%s2857 + $0x1c0] sm:$0xff]
                  %2972 = vst [vmem:[%s2858 + $0x380] sm:$0xff] %v2971
                  %v2973 = vld [vmem:[%s2857 + $0x1c8] sm:$0xff]
                  %2974 = vst [vmem:[%s2858 + $0x390] sm:$0xff] %v2973
                  %v2975 = vld [vmem:[%s2857 + $0x1d0] sm:$0xff]
                  %2976 = vst [vmem:[%s2858 + $0x3a0] sm:$0xff] %v2975
                  %v2977 = vld [vmem:[%s2857 + $0x1d8] sm:$0xff]
                  %2978 = vst [vmem:[%s2858 + $0x3b0] sm:$0xff] %v2977
                  %v2979 = vld [vmem:[%s2857 + $0x1e0] sm:$0xff]
                  %2980 = vst [vmem:[%s2858 + $0x3c0] sm:$0xff] %v2979
                  %v2981 = vld [vmem:[%s2857 + $0x1e8] sm:$0xff]
                  %2982 = vst [vmem:[%s2858 + $0x3d0] sm:$0xff] %v2981
                  %v2983 = vld [vmem:[%s2857 + $0x1f0] sm:$0xff]
                  %2984 = vst [vmem:[%s2858 + $0x3e0] sm:$0xff] %v2983
                  %v2985 = vld [vmem:[%s2857 + $0x1f8] sm:$0xff]
                  %2986 = vst [vmem:[%s2858 + $0x3f0] sm:$0xff] %v2985
                  %v2987 = vld [vmem:[%s2857 + $0x200] sm:$0xff]
                  %2988 = vst [vmem:[%s2858 + $0x400] sm:$0xff] %v2987
                  %v2989 = vld [vmem:[%s2857 + $0x208] sm:$0xff]
                  %2990 = vst [vmem:[%s2858 + $0x410] sm:$0xff] %v2989
                  %v2991 = vld [vmem:[%s2857 + $0x210] sm:$0xff]
                  %2992 = vst [vmem:[%s2858 + $0x420] sm:$0xff] %v2991
                  %v2993 = vld [vmem:[%s2857 + $0x218] sm:$0xff]
                  %2994 = vst [vmem:[%s2858 + $0x430] sm:$0xff] %v2993
                  %v2995 = vld [vmem:[%s2857 + $0x220] sm:$0xff]
                  %2996 = vst [vmem:[%s2858 + $0x440] sm:$0xff] %v2995
                  %v2997 = vld [vmem:[%s2857 + $0x228] sm:$0xff]
                  %2998 = vst [vmem:[%s2858 + $0x450] sm:$0xff] %v2997
                  %v2999 = vld [vmem:[%s2857 + $0x230] sm:$0xff]
                  %3000 = vst [vmem:[%s2858 + $0x460] sm:$0xff] %v2999
                  %v3001 = vld [vmem:[%s2857 + $0x238] sm:$0xff]
                  %3002 = vst [vmem:[%s2858 + $0x470] sm:$0xff] %v3001
                  %v3003 = vld [vmem:[%s2857 + $0x240] sm:$0xff]
                  %3004 = vst [vmem:[%s2858 + $0x480] sm:$0xff] %v3003
                  %v3005 = vld [vmem:[%s2857 + $0x248] sm:$0xff]
                  %3006 = vst [vmem:[%s2858 + $0x490] sm:$0xff] %v3005
                  %v3007 = vld [vmem:[%s2857 + $0x250] sm:$0xff]
                  %3008 = vst [vmem:[%s2858 + $0x4a0] sm:$0xff] %v3007
                  %v3009 = vld [vmem:[%s2857 + $0x258] sm:$0xff]
                  %3010 = vst [vmem:[%s2858 + $0x4b0] sm:$0xff] %v3009
                  %v3011 = vld [vmem:[%s2857 + $0x260] sm:$0xff]
                  %3012 = vst [vmem:[%s2858 + $0x4c0] sm:$0xff] %v3011
                  %v3013 = vld [vmem:[%s2857 + $0x268] sm:$0xff]
                  %3014 = vst [vmem:[%s2858 + $0x4d0] sm:$0xff] %v3013
                  %v3015 = vld [vmem:[%s2857 + $0x270] sm:$0xff]
                  %3016 = vst [vmem:[%s2858 + $0x4e0] sm:$0xff] %v3015
                  %v3017 = vld [vmem:[%s2857 + $0x278] sm:$0xff]
                  %3018 = vst [vmem:[%s2858 + $0x4f0] sm:$0xff] %v3017
                  %v3019 = vld [vmem:[%s2857 + $0x280] sm:$0xff]
                  %3020 = vst [vmem:[%s2858 + $0x500] sm:$0xff] %v3019
                  %v3021 = vld [vmem:[%s2857 + $0x288] sm:$0xff]
                  %3022 = vst [vmem:[%s2858 + $0x510] sm:$0xff] %v3021
                  %v3023 = vld [vmem:[%s2857 + $0x290] sm:$0xff]
                  %3024 = vst [vmem:[%s2858 + $0x520] sm:$0xff] %v3023
                  %v3025 = vld [vmem:[%s2857 + $0x298] sm:$0xff]
                  %3026 = vst [vmem:[%s2858 + $0x530] sm:$0xff] %v3025
                  %v3027 = vld [vmem:[%s2857 + $0x2a0] sm:$0xff]
                  %3028 = vst [vmem:[%s2858 + $0x540] sm:$0xff] %v3027
                  %v3029 = vld [vmem:[%s2857 + $0x2a8] sm:$0xff]
                  %3030 = vst [vmem:[%s2858 + $0x550] sm:$0xff] %v3029
                  %v3031 = vld [vmem:[%s2857 + $0x2b0] sm:$0xff]
                  %3032 = vst [vmem:[%s2858 + $0x560] sm:$0xff] %v3031
                  %v3033 = vld [vmem:[%s2857 + $0x2b8] sm:$0xff]
                  %3034 = vst [vmem:[%s2858 + $0x570] sm:$0xff] %v3033
                  %v3035 = vld [vmem:[%s2857 + $0x2c0] sm:$0xff]
                  %3036 = vst [vmem:[%s2858 + $0x580] sm:$0xff] %v3035
                  %v3037 = vld [vmem:[%s2857 + $0x2c8] sm:$0xff]
                  %3038 = vst [vmem:[%s2858 + $0x590] sm:$0xff] %v3037
                  %v3039 = vld [vmem:[%s2857 + $0x2d0] sm:$0xff]
                  %3040 = vst [vmem:[%s2858 + $0x5a0] sm:$0xff] %v3039
                  %v3041 = vld [vmem:[%s2857 + $0x2d8] sm:$0xff]
                  %3042 = vst [vmem:[%s2858 + $0x5b0] sm:$0xff] %v3041
                  %v3043 = vld [vmem:[%s2857 + $0x2e0] sm:$0xff]
                  %3044 = vst [vmem:[%s2858 + $0x5c0] sm:$0xff] %v3043
                  %v3045 = vld [vmem:[%s2857 + $0x2e8] sm:$0xff]
                  %3046 = vst [vmem:[%s2858 + $0x5d0] sm:$0xff] %v3045
                  %v3047 = vld [vmem:[%s2857 + $0x2f0] sm:$0xff]
                  %3048 = vst [vmem:[%s2858 + $0x5e0] sm:$0xff] %v3047
                  %v3049 = vld [vmem:[%s2857 + $0x2f8] sm:$0xff]
                  %3050 = vst [vmem:[%s2858 + $0x5f0] sm:$0xff] %v3049
                  %v3051 = vld [vmem:[%s2857 + $0x300] sm:$0xff]
                  %3052 = vst [vmem:[%s2858 + $0x600] sm:$0xff] %v3051
                  %v3053 = vld [vmem:[%s2857 + $0x308] sm:$0xff]
                  %3054 = vst [vmem:[%s2858 + $0x610] sm:$0xff] %v3053
                  %v3055 = vld [vmem:[%s2857 + $0x310] sm:$0xff]
                  %3056 = vst [vmem:[%s2858 + $0x620] sm:$0xff] %v3055
                  %v3057 = vld [vmem:[%s2857 + $0x318] sm:$0xff]
                  %3058 = vst [vmem:[%s2858 + $0x630] sm:$0xff] %v3057
                $region102: #{conv_decoder_forward.11} parent=96 // loop_footer
                  %s2856 = sadd.s32 1, %s2852
                $region103: #{conv_decoder_forward.11} parent=96 // loop_footer_branch
                  %2851 = sbr.rel target = $region99
                $region104: #{conv_decoder_forward.11} parent=96 // loop_exit
                  _
              $region97: #{conv_decoder_forward.11} parent=81 // pred_fallthru
                _
              // Predicated region
              $region105: #{conv_decoder_forward.11} parent=81 // pred_check
                _
              $region106: #{conv_decoder_forward.11} parent=81 // pred_check_branch
                %3060 = sbr.rel target = $region108
              $region107: #{conv_decoder_forward.11} parent=81 // pred_region
                _
              $region108: #{conv_decoder_forward.11} parent=81 // pred_fallthru
                _
            $region82: #{conv_decoder_forward.11} parent=77 // pred_fallthru
              _
            // Predicated region
            $region83: #{conv_decoder_forward.11} parent=77 // pred_check
              _
            $region84: #{conv_decoder_forward.11} parent=77 // pred_check_branch
              %2638 = sbr.rel target = $region86
            $region85: #{conv_decoder_forward.11} parent=77 // pred_region
              %s2640 = ssub.s32 256, 1
              loop: start=0, step=1, limit=1
              $region87: #{conv_decoder_forward.11} parent=85 // loop_pre_header
                _
              $region88: #{conv_decoder_forward.11} parent=85 // loop_header
                %s2642 = sphi 0, %s2646
                %p2643 = scmp.ge.s32.totalorder %s2642, 1
                %s2647 = sphi %s2623, %s2623
                %s2648 = sphi %s2632, %s2632
              $region89: #{conv_decoder_forward.11} parent=85 // loop_header_branch
                %2645 = sbr.rel (%p2643) target = $region93
              $region90: #{conv_decoder_forward.11} parent=85 // loop_body
                %v2649 = vld [vmem:[%s2647] sm:%s2640]
                %2650 = vst [vmem:[%s2648] sm:%s2640] %v2649
                %v2651 = vld [vmem:[%s2647 + $0x8] sm:%s2640]
                %2652 = vst [vmem:[%s2648 + $0x10] sm:%s2640] %v2651
                %v2653 = vld [vmem:[%s2647 + $0x10] sm:%s2640]
                %2654 = vst [vmem:[%s2648 + $0x20] sm:%s2640] %v2653
                %v2655 = vld [vmem:[%s2647 + $0x18] sm:%s2640]
                %2656 = vst [vmem:[%s2648 + $0x30] sm:%s2640] %v2655
                %v2657 = vld [vmem:[%s2647 + $0x20] sm:%s2640]
                %2658 = vst [vmem:[%s2648 + $0x40] sm:%s2640] %v2657
                %v2659 = vld [vmem:[%s2647 + $0x28] sm:%s2640]
                %2660 = vst [vmem:[%s2648 + $0x50] sm:%s2640] %v2659
                %v2661 = vld [vmem:[%s2647 + $0x30] sm:%s2640]
                %2662 = vst [vmem:[%s2648 + $0x60] sm:%s2640] %v2661
                %v2663 = vld [vmem:[%s2647 + $0x38] sm:%s2640]
                %2664 = vst [vmem:[%s2648 + $0x70] sm:%s2640] %v2663
                %v2665 = vld [vmem:[%s2647 + $0x40] sm:%s2640]
                %2666 = vst [vmem:[%s2648 + $0x80] sm:%s2640] %v2665
                %v2667 = vld [vmem:[%s2647 + $0x48] sm:%s2640]
                %2668 = vst [vmem:[%s2648 + $0x90] sm:%s2640] %v2667
                %v2669 = vld [vmem:[%s2647 + $0x50] sm:%s2640]
                %2670 = vst [vmem:[%s2648 + $0xa0] sm:%s2640] %v2669
                %v2671 = vld [vmem:[%s2647 + $0x58] sm:%s2640]
                %2672 = vst [vmem:[%s2648 + $0xb0] sm:%s2640] %v2671
                %v2673 = vld [vmem:[%s2647 + $0x60] sm:%s2640]
                %2674 = vst [vmem:[%s2648 + $0xc0] sm:%s2640] %v2673
                %v2675 = vld [vmem:[%s2647 + $0x68] sm:%s2640]
                %2676 = vst [vmem:[%s2648 + $0xd0] sm:%s2640] %v2675
                %v2677 = vld [vmem:[%s2647 + $0x70] sm:%s2640]
                %2678 = vst [vmem:[%s2648 + $0xe0] sm:%s2640] %v2677
                %v2679 = vld [vmem:[%s2647 + $0x78] sm:%s2640]
                %2680 = vst [vmem:[%s2648 + $0xf0] sm:%s2640] %v2679
                %v2681 = vld [vmem:[%s2647 + $0x80] sm:%s2640]
                %2682 = vst [vmem:[%s2648 + $0x100] sm:%s2640] %v2681
                %v2683 = vld [vmem:[%s2647 + $0x88] sm:%s2640]
                %2684 = vst [vmem:[%s2648 + $0x110] sm:%s2640] %v2683
                %v2685 = vld [vmem:[%s2647 + $0x90] sm:%s2640]
                %2686 = vst [vmem:[%s2648 + $0x120] sm:%s2640] %v2685
                %v2687 = vld [vmem:[%s2647 + $0x98] sm:%s2640]
                %2688 = vst [vmem:[%s2648 + $0x130] sm:%s2640] %v2687
                %v2689 = vld [vmem:[%s2647 + $0xa0] sm:%s2640]
                %2690 = vst [vmem:[%s2648 + $0x140] sm:%s2640] %v2689
                %v2691 = vld [vmem:[%s2647 + $0xa8] sm:%s2640]
                %2692 = vst [vmem:[%s2648 + $0x150] sm:%s2640] %v2691
                %v2693 = vld [vmem:[%s2647 + $0xb0] sm:%s2640]
                %2694 = vst [vmem:[%s2648 + $0x160] sm:%s2640] %v2693
                %v2695 = vld [vmem:[%s2647 + $0xb8] sm:%s2640]
                %2696 = vst [vmem:[%s2648 + $0x170] sm:%s2640] %v2695
                %v2697 = vld [vmem:[%s2647 + $0xc0] sm:%s2640]
                %2698 = vst [vmem:[%s2648 + $0x180] sm:%s2640] %v2697
                %v2699 = vld [vmem:[%s2647 + $0xc8] sm:%s2640]
                %2700 = vst [vmem:[%s2648 + $0x190] sm:%s2640] %v2699
                %v2701 = vld [vmem:[%s2647 + $0xd0] sm:%s2640]
                %2702 = vst [vmem:[%s2648 + $0x1a0] sm:%s2640] %v2701
                %v2703 = vld [vmem:[%s2647 + $0xd8] sm:%s2640]
                %2704 = vst [vmem:[%s2648 + $0x1b0] sm:%s2640] %v2703
                %v2705 = vld [vmem:[%s2647 + $0xe0] sm:%s2640]
                %2706 = vst [vmem:[%s2648 + $0x1c0] sm:%s2640] %v2705
                %v2707 = vld [vmem:[%s2647 + $0xe8] sm:%s2640]
                %2708 = vst [vmem:[%s2648 + $0x1d0] sm:%s2640] %v2707
                %v2709 = vld [vmem:[%s2647 + $0xf0] sm:%s2640]
                %2710 = vst [vmem:[%s2648 + $0x1e0] sm:%s2640] %v2709
                %v2711 = vld [vmem:[%s2647 + $0xf8] sm:%s2640]
                %2712 = vst [vmem:[%s2648 + $0x1f0] sm:%s2640] %v2711
                %v2713 = vld [vmem:[%s2647 + $0x100] sm:%s2640]
                %2714 = vst [vmem:[%s2648 + $0x200] sm:%s2640] %v2713
                %v2715 = vld [vmem:[%s2647 + $0x108] sm:%s2640]
                %2716 = vst [vmem:[%s2648 + $0x210] sm:%s2640] %v2715
                %v2717 = vld [vmem:[%s2647 + $0x110] sm:%s2640]
                %2718 = vst [vmem:[%s2648 + $0x220] sm:%s2640] %v2717
                %v2719 = vld [vmem:[%s2647 + $0x118] sm:%s2640]
                %2720 = vst [vmem:[%s2648 + $0x230] sm:%s2640] %v2719
                %v2721 = vld [vmem:[%s2647 + $0x120] sm:%s2640]
                %2722 = vst [vmem:[%s2648 + $0x240] sm:%s2640] %v2721
                %v2723 = vld [vmem:[%s2647 + $0x128] sm:%s2640]
                %2724 = vst [vmem:[%s2648 + $0x250] sm:%s2640] %v2723
                %v2725 = vld [vmem:[%s2647 + $0x130] sm:%s2640]
                %2726 = vst [vmem:[%s2648 + $0x260] sm:%s2640] %v2725
                %v2727 = vld [vmem:[%s2647 + $0x138] sm:%s2640]
                %2728 = vst [vmem:[%s2648 + $0x270] sm:%s2640] %v2727
                %v2729 = vld [vmem:[%s2647 + $0x140] sm:%s2640]
                %2730 = vst [vmem:[%s2648 + $0x280] sm:%s2640] %v2729
                %v2731 = vld [vmem:[%s2647 + $0x148] sm:%s2640]
                %2732 = vst [vmem:[%s2648 + $0x290] sm:%s2640] %v2731
                %v2733 = vld [vmem:[%s2647 + $0x150] sm:%s2640]
                %2734 = vst [vmem:[%s2648 + $0x2a0] sm:%s2640] %v2733
                %v2735 = vld [vmem:[%s2647 + $0x158] sm:%s2640]
                %2736 = vst [vmem:[%s2648 + $0x2b0] sm:%s2640] %v2735
                %v2737 = vld [vmem:[%s2647 + $0x160] sm:%s2640]
                %2738 = vst [vmem:[%s2648 + $0x2c0] sm:%s2640] %v2737
                %v2739 = vld [vmem:[%s2647 + $0x168] sm:%s2640]
                %2740 = vst [vmem:[%s2648 + $0x2d0] sm:%s2640] %v2739
                %v2741 = vld [vmem:[%s2647 + $0x170] sm:%s2640]
                %2742 = vst [vmem:[%s2648 + $0x2e0] sm:%s2640] %v2741
                %v2743 = vld [vmem:[%s2647 + $0x178] sm:%s2640]
                %2744 = vst [vmem:[%s2648 + $0x2f0] sm:%s2640] %v2743
                %v2745 = vld [vmem:[%s2647 + $0x180] sm:%s2640]
                %2746 = vst [vmem:[%s2648 + $0x300] sm:%s2640] %v2745
                %v2747 = vld [vmem:[%s2647 + $0x188] sm:%s2640]
                %2748 = vst [vmem:[%s2648 + $0x310] sm:%s2640] %v2747
                %v2749 = vld [vmem:[%s2647 + $0x190] sm:%s2640]
                %2750 = vst [vmem:[%s2648 + $0x320] sm:%s2640] %v2749
                %v2751 = vld [vmem:[%s2647 + $0x198] sm:%s2640]
                %2752 = vst [vmem:[%s2648 + $0x330] sm:%s2640] %v2751
                %v2753 = vld [vmem:[%s2647 + $0x1a0] sm:%s2640]
                %2754 = vst [vmem:[%s2648 + $0x340] sm:%s2640] %v2753
                %v2755 = vld [vmem:[%s2647 + $0x1a8] sm:%s2640]
                %2756 = vst [vmem:[%s2648 + $0x350] sm:%s2640] %v2755
                %v2757 = vld [vmem:[%s2647 + $0x1b0] sm:%s2640]
                %2758 = vst [vmem:[%s2648 + $0x360] sm:%s2640] %v2757
                %v2759 = vld [vmem:[%s2647 + $0x1b8] sm:%s2640]
                %2760 = vst [vmem:[%s2648 + $0x370] sm:%s2640] %v2759
                %v2761 = vld [vmem:[%s2647 + $0x1c0] sm:%s2640]
                %2762 = vst [vmem:[%s2648 + $0x380] sm:%s2640] %v2761
                %v2763 = vld [vmem:[%s2647 + $0x1c8] sm:%s2640]
                %2764 = vst [vmem:[%s2648 + $0x390] sm:%s2640] %v2763
                %v2765 = vld [vmem:[%s2647 + $0x1d0] sm:%s2640]
                %2766 = vst [vmem:[%s2648 + $0x3a0] sm:%s2640] %v2765
                %v2767 = vld [vmem:[%s2647 + $0x1d8] sm:%s2640]
                %2768 = vst [vmem:[%s2648 + $0x3b0] sm:%s2640] %v2767
                %v2769 = vld [vmem:[%s2647 + $0x1e0] sm:%s2640]
                %2770 = vst [vmem:[%s2648 + $0x3c0] sm:%s2640] %v2769
                %v2771 = vld [vmem:[%s2647 + $0x1e8] sm:%s2640]
                %2772 = vst [vmem:[%s2648 + $0x3d0] sm:%s2640] %v2771
                %v2773 = vld [vmem:[%s2647 + $0x1f0] sm:%s2640]
                %2774 = vst [vmem:[%s2648 + $0x3e0] sm:%s2640] %v2773
                %v2775 = vld [vmem:[%s2647 + $0x1f8] sm:%s2640]
                %2776 = vst [vmem:[%s2648 + $0x3f0] sm:%s2640] %v2775
                %v2777 = vld [vmem:[%s2647 + $0x200] sm:%s2640]
                %2778 = vst [vmem:[%s2648 + $0x400] sm:%s2640] %v2777
                %v2779 = vld [vmem:[%s2647 + $0x208] sm:%s2640]
                %2780 = vst [vmem:[%s2648 + $0x410] sm:%s2640] %v2779
                %v2781 = vld [vmem:[%s2647 + $0x210] sm:%s2640]
                %2782 = vst [vmem:[%s2648 + $0x420] sm:%s2640] %v2781
                %v2783 = vld [vmem:[%s2647 + $0x218] sm:%s2640]
                %2784 = vst [vmem:[%s2648 + $0x430] sm:%s2640] %v2783
                %v2785 = vld [vmem:[%s2647 + $0x220] sm:%s2640]
                %2786 = vst [vmem:[%s2648 + $0x440] sm:%s2640] %v2785
                %v2787 = vld [vmem:[%s2647 + $0x228] sm:%s2640]
                %2788 = vst [vmem:[%s2648 + $0x450] sm:%s2640] %v2787
                %v2789 = vld [vmem:[%s2647 + $0x230] sm:%s2640]
                %2790 = vst [vmem:[%s2648 + $0x460] sm:%s2640] %v2789
                %v2791 = vld [vmem:[%s2647 + $0x238] sm:%s2640]
                %2792 = vst [vmem:[%s2648 + $0x470] sm:%s2640] %v2791
                %v2793 = vld [vmem:[%s2647 + $0x240] sm:%s2640]
                %2794 = vst [vmem:[%s2648 + $0x480] sm:%s2640] %v2793
                %v2795 = vld [vmem:[%s2647 + $0x248] sm:%s2640]
                %2796 = vst [vmem:[%s2648 + $0x490] sm:%s2640] %v2795
                %v2797 = vld [vmem:[%s2647 + $0x250] sm:%s2640]
                %2798 = vst [vmem:[%s2648 + $0x4a0] sm:%s2640] %v2797
                %v2799 = vld [vmem:[%s2647 + $0x258] sm:%s2640]
                %2800 = vst [vmem:[%s2648 + $0x4b0] sm:%s2640] %v2799
                %v2801 = vld [vmem:[%s2647 + $0x260] sm:%s2640]
                %2802 = vst [vmem:[%s2648 + $0x4c0] sm:%s2640] %v2801
                %v2803 = vld [vmem:[%s2647 + $0x268] sm:%s2640]
                %2804 = vst [vmem:[%s2648 + $0x4d0] sm:%s2640] %v2803
                %v2805 = vld [vmem:[%s2647 + $0x270] sm:%s2640]
                %2806 = vst [vmem:[%s2648 + $0x4e0] sm:%s2640] %v2805
                %v2807 = vld [vmem:[%s2647 + $0x278] sm:%s2640]
                %2808 = vst [vmem:[%s2648 + $0x4f0] sm:%s2640] %v2807
                %v2809 = vld [vmem:[%s2647 + $0x280] sm:%s2640]
                %2810 = vst [vmem:[%s2648 + $0x500] sm:%s2640] %v2809
                %v2811 = vld [vmem:[%s2647 + $0x288] sm:%s2640]
                %2812 = vst [vmem:[%s2648 + $0x510] sm:%s2640] %v2811
                %v2813 = vld [vmem:[%s2647 + $0x290] sm:%s2640]
                %2814 = vst [vmem:[%s2648 + $0x520] sm:%s2640] %v2813
                %v2815 = vld [vmem:[%s2647 + $0x298] sm:%s2640]
                %2816 = vst [vmem:[%s2648 + $0x530] sm:%s2640] %v2815
                %v2817 = vld [vmem:[%s2647 + $0x2a0] sm:%s2640]
                %2818 = vst [vmem:[%s2648 + $0x540] sm:%s2640] %v2817
                %v2819 = vld [vmem:[%s2647 + $0x2a8] sm:%s2640]
                %2820 = vst [vmem:[%s2648 + $0x550] sm:%s2640] %v2819
                %v2821 = vld [vmem:[%s2647 + $0x2b0] sm:%s2640]
                %2822 = vst [vmem:[%s2648 + $0x560] sm:%s2640] %v2821
                %v2823 = vld [vmem:[%s2647 + $0x2b8] sm:%s2640]
                %2824 = vst [vmem:[%s2648 + $0x570] sm:%s2640] %v2823
                %v2825 = vld [vmem:[%s2647 + $0x2c0] sm:%s2640]
                %2826 = vst [vmem:[%s2648 + $0x580] sm:%s2640] %v2825
                %v2827 = vld [vmem:[%s2647 + $0x2c8] sm:%s2640]
                %2828 = vst [vmem:[%s2648 + $0x590] sm:%s2640] %v2827
                %v2829 = vld [vmem:[%s2647 + $0x2d0] sm:%s2640]
                %2830 = vst [vmem:[%s2648 + $0x5a0] sm:%s2640] %v2829
                %v2831 = vld [vmem:[%s2647 + $0x2d8] sm:%s2640]
                %2832 = vst [vmem:[%s2648 + $0x5b0] sm:%s2640] %v2831
                %v2833 = vld [vmem:[%s2647 + $0x2e0] sm:%s2640]
                %2834 = vst [vmem:[%s2648 + $0x5c0] sm:%s2640] %v2833
                %v2835 = vld [vmem:[%s2647 + $0x2e8] sm:%s2640]
                %2836 = vst [vmem:[%s2648 + $0x5d0] sm:%s2640] %v2835
                %v2837 = vld [vmem:[%s2647 + $0x2f0] sm:%s2640]
                %2838 = vst [vmem:[%s2648 + $0x5e0] sm:%s2640] %v2837
                %v2839 = vld [vmem:[%s2647 + $0x2f8] sm:%s2640]
                %2840 = vst [vmem:[%s2648 + $0x5f0] sm:%s2640] %v2839
                %v2841 = vld [vmem:[%s2647 + $0x300] sm:%s2640]
                %2842 = vst [vmem:[%s2648 + $0x600] sm:%s2640] %v2841
                %v2843 = vld [vmem:[%s2647 + $0x308] sm:%s2640]
                %2844 = vst [vmem:[%s2648 + $0x610] sm:%s2640] %v2843
                %v2845 = vld [vmem:[%s2647 + $0x310] sm:%s2640]
                %2846 = vst [vmem:[%s2648 + $0x620] sm:%s2640] %v2845
                %v2847 = vld [vmem:[%s2647 + $0x318] sm:%s2640]
                %2848 = vst [vmem:[%s2648 + $0x630] sm:%s2640] %v2847
              $region91: #{conv_decoder_forward.11} parent=85 // loop_footer
                %s2646 = sadd.s32 1, %s2642
              $region92: #{conv_decoder_forward.11} parent=85 // loop_footer_branch
                %2641 = sbr.rel target = $region88
              $region93: #{conv_decoder_forward.11} parent=85 // loop_exit
                _
            $region86: #{conv_decoder_forward.11} parent=77 // pred_fallthru
              _
          $region78: #{conv_decoder_forward.11} parent=73 // pred_fallthru
            _
          %3061 = vnop
        $region74: #{conv_decoder_forward.11} parent=65 // pred_fallthru
          _
      $region66: #{conv_decoder_forward.11} parent=5 // pred_fallthru
        _
      %p3062 = scmp.le.s32.totalorder 2, %s9
      // Predicated region
      $region109: #{conv_decoder_forward.11} parent=5 // pred_check
        %p3063 = pneg %p3062
      $region110: #{conv_decoder_forward.11} parent=5 // pred_check_branch
        %3065 = sbr.rel (%p3063) target = $region112
      $region111: #{conv_decoder_forward.11} parent=5 // pred_region
        %s3066 = ssub.s32 %s9, 2
        // Predicated region
        $region113: #{conv_decoder_forward.11} parent=111 // pred_check
          %p3067 = pneg %p130
        $region114: #{conv_decoder_forward.11} parent=111 // pred_check_branch
          %3069 = sbr.rel (%p3067) target = $region116
        $region115: #{conv_decoder_forward.11} parent=111 // pred_region
          %s3070 = sand.u32 %s115, 1
          %s3071 = sand.u32 %s115, 1
          %s3072 = smul.addr %s3071, 800
          %s3073 = scalar_lea.vmem [#allocation3], %s3072
        $region116: #{conv_decoder_forward.11} parent=111 // pred_fallthru
          _
      $region112: #{conv_decoder_forward.11} parent=5 // pred_fallthru
        _
    $region6: #{conv_decoder_forward.11} parent=1 // loop_footer
      %s13 = sadd.s32 1, %s9
    $region7: #{conv_decoder_forward.11} parent=1 // loop_footer_branch
      %8 = sbr.rel target = $region3
    $region8: #{conv_decoder_forward.11} parent=1 // loop_exit
      _

// kernel: conv_decoder_forward.12
$region0: #{conv_decoder_forward.12}
  #allocation0 [shape = 'u32[]', space=smem, size = 0x4, offset = 0x4, fixed_abs, tag = 'smem constant byte address 0x4 - core index']
  #allocation1 [shape = 'u32[72,128]{1,0:T(1,128)}', space=vmem, size = 0x9000, scoped, tag = 'internal scratch']
  %s0 = inlined_call_operand.vmem [shape: bf16[3200,128], index: 0, kind: input, shape index: {}]
  %s1 = inlined_call_operand.vmem [shape: bf16[128,256], index: 1, kind: input, shape index: {}]
  %s2 = inlined_call_operand.vmem [shape: f32[1,256], index: 2, kind: input, shape index: {}]
  %s3 = inlined_call_operand.vmem [shape: bf16[3200,256], index: 3, kind: output, shape index: {}]
  %s4 = sld [smem:[#allocation0]]
  $region45: #{conv_decoder_forward.12} parent=0
    _
  %s6 = ssub.s32 1, %s4
  %s7 = scalar_select 0, %s6, %s4
  loop: start=0, step=1, limit=6
  $region2: #{conv_decoder_forward.12} parent=0 // loop_pre_header
    _
  $region3: #{conv_decoder_forward.12} parent=0 // loop_header
    %s9 = sphi 0, %s13
    %p10 = scmp.ge.s32.totalorder %s9, 6
    %s16 = sphi 0, %s28
    %s17 = sphi 0, %s24
    %s18 = sphi 0, %s16
    %s19 = sphi 0, %s17
    %s20 = sphi 0, %s18
    %s21 = sphi 0, %s19
    %s31 = sphi 0, %s33
    %s34 = sphi 0, %s31
    %s35 = sphi 0, %s34
    %s51 = sphi 0, %s35
    %s57 = sphi 0, %s59
    %s60 = sphi 0, %s57
    %s61 = sphi 0, %s60
    %s77 = sphi 0, %s61
    %s83 = sphi 0, %s85
    %s86 = sphi 0, %s83
    %s87 = sphi 0, %s86
    %s103 = sphi 0, %s87
    %s111 = sphi 0, %s113
    %s114 = sphi 0, %s111
    %s115 = sphi 0, %s114
    %s131 = sphi 0, %s115
  $region4: #{conv_decoder_forward.12} parent=0 // loop_header_branch
    %12 = sbr.rel (%p10) target = $region8
  $region5: #{conv_decoder_forward.12} parent=0 // loop_body
    %s14 = ssub.s32 %s9, 1
    %s15 = ssub.s32 %s9, 2
    %s22 = sadd.s32 1, %s17
    %p23 = scmp.ge.s32.totalorder %s22, 1
    %s24 = scalar_select %p23, 0, %s22
    %s25 = sadd.s32 1, %s16
    %s26 = scalar_select %p23, %s25, %s16
    %p27 = scmp.ge.s32.totalorder %s26, 4
    %s28 = scalar_select %p27, 0, %s26
    %s29 = ssub.s32 %s16, %s28
    %p30 = scmp.eq.s32.totalorder %s29, 0
    %s32 = sadd.s32 %s31, 1
    %s33 = scalar_select %p30, %s31, %s32
    %p36 = pneg %p30
    %p37 = scmp.eq.s32.totalorder %s9, 3
    %p38 = por %p36, %p37
    %p39 = scmp.ne.s32.totalorder %s31, %s34
    %p40 = scmp.eq.s32.totalorder %s9, 0
    %p41 = por %p39, %p40
    %p42 = scmp.ne.s32.totalorder %s31, %s34
    %p43 = scmp.eq.s32.totalorder %s14, 3
    %p44 = por %p42, %p43
    %p45 = scmp.ne.s32.totalorder %s34, %s35
    %p46 = scmp.eq.s32.totalorder %s14, 0
    %p47 = por %p45, %p46
    %p48 = scmp.ne.s32.totalorder %s34, %s35
    %p49 = scmp.eq.s32.totalorder %s15, 3
    %p50 = por %p48, %p49
    %p52 = scmp.ne.s32.totalorder %s35, %s51
    %p53 = scmp.eq.s32.totalorder %s15, 0
    %p54 = por %p52, %p53
    %s55 = ssub.s32 %s17, %s24
    %p56 = scmp.eq.s32.totalorder %s55, 0
    %s58 = sadd.s32 %s57, 1
    %s59 = scalar_select %p56, %s57, %s58
    %p62 = pneg %p56
    %p63 = scmp.eq.s32.totalorder %s9, 3
    %p64 = por %p62, %p63
    %p65 = scmp.ne.s32.totalorder %s57, %s60
    %p66 = scmp.eq.s32.totalorder %s9, 0
    %p67 = por %p65, %p66
    %p68 = scmp.ne.s32.totalorder %s57, %s60
    %p69 = scmp.eq.s32.totalorder %s14, 3
    %p70 = por %p68, %p69
    %p71 = scmp.ne.s32.totalorder %s60, %s61
    %p72 = scmp.eq.s32.totalorder %s14, 0
    %p73 = por %p71, %p72
    %p74 = scmp.ne.s32.totalorder %s60, %s61
    %p75 = scmp.eq.s32.totalorder %s15, 3
    %p76 = por %p74, %p75
    %p78 = scmp.ne.s32.totalorder %s61, %s77
    %p79 = scmp.eq.s32.totalorder %s15, 0
    %p80 = por %p78, %p79
    %s81 = ssub.s32 %s17, %s24
    %p82 = scmp.eq.s32.totalorder %s81, 0
    %s84 = sadd.s32 %s83, 1
    %s85 = scalar_select %p82, %s83, %s84
    %p88 = pneg %p82
    %p89 = scmp.eq.s32.totalorder %s9, 3
    %p90 = por %p88, %p89
    %p91 = scmp.ne.s32.totalorder %s83, %s86
    %p92 = scmp.eq.s32.totalorder %s9, 0
    %p93 = por %p91, %p92
    %p94 = scmp.ne.s32.totalorder %s83, %s86
    %p95 = scmp.eq.s32.totalorder %s14, 3
    %p96 = por %p94, %p95
    %p97 = scmp.ne.s32.totalorder %s86, %s87
    %p98 = scmp.eq.s32.totalorder %s14, 0
    %p99 = por %p97, %p98
    %p100 = scmp.ne.s32.totalorder %s86, %s87
    %p101 = scmp.eq.s32.totalorder %s15, 3
    %p102 = por %p100, %p101
    %p104 = scmp.ne.s32.totalorder %s87, %s103
    %p105 = scmp.eq.s32.totalorder %s15, 0
    %p106 = por %p104, %p105
    %s107 = ssub.s32 %s16, %s28
    %s108 = ssub.s32 %s17, %s24
    %s109 = sor.u32 %s107, %s108
    %p110 = scmp.eq.s32.totalorder %s109, 0
    %s112 = sadd.s32 %s111, 1
    %s113 = scalar_select %p110, %s111, %s112
    %p116 = pneg %p110
    %p117 = scmp.eq.s32.totalorder %s9, 3
    %p118 = por %p116, %p117
    %p119 = scmp.ne.s32.totalorder %s111, %s114
    %p120 = scmp.eq.s32.totalorder %s9, 0
    %p121 = por %p119, %p120
    %p122 = scmp.ne.s32.totalorder %s111, %s114
    %p123 = scmp.eq.s32.totalorder %s14, 3
    %p124 = por %p122, %p123
    %p125 = scmp.ne.s32.totalorder %s114, %s115
    %p126 = scmp.eq.s32.totalorder %s14, 0
    %p127 = por %p125, %p126
    %p128 = scmp.ne.s32.totalorder %s114, %s115
    %p129 = scmp.eq.s32.totalorder %s15, 3
    %p130 = por %p128, %p129
    %p132 = scmp.ne.s32.totalorder %s115, %s131
    %p133 = scmp.eq.s32.totalorder %s15, 0
    %p134 = por %p132, %p133
    %p135 = scmp.le.s32.totalorder 1, %s9
    %p136 = scmp.lt.s32.totalorder %s9, 5
    %p137 = pnand %p135, %p136
    %p138 = pneg %p137
    // Predicated region
    $region9: #{conv_decoder_forward.12} parent=5 // pred_check
      _
    $region10: #{conv_decoder_forward.12} parent=5 // pred_check_branch
      %140 = sbr.rel (%p137) target = $region12
    $region11: #{conv_decoder_forward.12} parent=5 // pred_region
      %s141 = ssub.s32 %s9, 1
      // Predicated region
      $region13: #{conv_decoder_forward.12} parent=11 // pred_check
        %p142 = pneg %p73
      $region14: #{conv_decoder_forward.12} parent=11 // pred_check_branch
        %144 = sbr.rel (%p142) target = $region16
      $region15: #{conv_decoder_forward.12} parent=11 // pred_region
        %s145 = smul.u32 2, %s19
        %p146 = scmp.lt.s32.totalorder %s145, 1
        %s147 = scalar_select %p146, %s145, 1
        %s148 = smul.addr %s147, 4
        %s149 = scalar_lea.vmem %s1, %s148
        %s150 = smul.u32 2, %s19
      $region16: #{conv_decoder_forward.12} parent=11 // pred_fallthru
        _
      // Predicated region
      $region17: #{conv_decoder_forward.12} parent=11 // pred_check
        %p151 = pneg %p99
      $region18: #{conv_decoder_forward.12} parent=11 // pred_check_branch
        %153 = sbr.rel (%p151) target = $region20
      $region19: #{conv_decoder_forward.12} parent=11 // pred_region
        %s154 = smul.u32 2, %s19
        %p155 = scmp.lt.s32.totalorder %s154, 1
        %s156 = scalar_select %p155, %s154, 1
        %s157 = scalar_lea.vmem %s2, %s156
        %s158 = smul.u32 2, %s19
      $region20: #{conv_decoder_forward.12} parent=11 // pred_fallthru
        _
    $region12: #{conv_decoder_forward.12} parent=5 // pred_fallthru
      _
    %p159 = scmp.lt.s32.totalorder %s9, 4
    // Predicated region
    $region21: #{conv_decoder_forward.12} parent=5 // pred_check
      %p160 = pneg %p159
    $region22: #{conv_decoder_forward.12} parent=5 // pred_check_branch
      %162 = sbr.rel (%p160) target = $region24
    $region23: #{conv_decoder_forward.12} parent=5 // pred_region
      // Predicated region
      $region25: #{conv_decoder_forward.12} parent=23 // pred_check
        %p163 = pneg %p41
      $region26: #{conv_decoder_forward.12} parent=23 // pred_check_branch
        %165 = sbr.rel (%p163) target = $region28
      $region27: #{conv_decoder_forward.12} parent=23 // pred_region
        %s166 = smul.u32 100, %s16
        %p167 = scmp.lt.s32.totalorder %s166, 399
        %s168 = scalar_select %p167, %s166, 399
        %s169 = smul.addr %s168, 4
        %s170 = scalar_lea.vmem %s0, %s169
        %s171 = smul.u32 100, %s16
      $region28: #{conv_decoder_forward.12} parent=23 // pred_fallthru
        _
    $region24: #{conv_decoder_forward.12} parent=5 // pred_fallthru
      _
    %p172 = scmp.le.s32.totalorder 1, %s9
    %p173 = scmp.lt.s32.totalorder %s9, 5
    %p174 = pnand %p172, %p173
    %p175 = pneg %p174
    // Predicated region
    $region29: #{conv_decoder_forward.12} parent=5 // pred_check
      _
    $region30: #{conv_decoder_forward.12} parent=5 // pred_check_branch
      %177 = sbr.rel (%p174) target = $region32
    $region31: #{conv_decoder_forward.12} parent=5 // pred_region
      %s178 = ssub.s32 %s9, 1
      %s179 = smul.u32 100, %s18
      %p180 = scmp.lt.s32.totalorder %s179, 399
      %s181 = scalar_select %p180, %s179, 399
      %s182 = smul.addr %s181, 4
      %s183 = scalar_lea.vmem %s0, %s182
      %p184 = pneg %p47
      %p185 = pneg %p44
      %s186 = smul.u32 2, %s19
      %p187 = scmp.lt.s32.totalorder %s186, 1
      %s188 = scalar_select %p187, %s186, 1
      %s189 = smul.addr %s188, 4
      %s190 = scalar_lea.vmem %s1, %s189
      %p191 = pneg %p73
      %p192 = pneg %p70
      %s193 = smul.u32 2, %s19
      %p194 = scmp.lt.s32.totalorder %s193, 1
      %s195 = scalar_select %p194, %s193, 1
      %s196 = scalar_lea.vmem %s2, %s195
      %p197 = pneg %p99
      %p198 = pneg %p96
      %p199 = pneg %p127
      %p200 = pneg %p124
      %s201 = smul.u32 100, %s18
      %s202 = smul.u32 2, %s19
      %p203 = scmp.lt.s32.totalorder %s201, 399
      %s204 = scalar_select %p203, %s201, 399
      %p205 = scmp.lt.s32.totalorder %s202, 1
      %s206 = scalar_select %p205, %s202, 1
      %s207 = smul.addr %s204, 2
      %s208 = sadd.s32 %s206, %s207
      %s209 = smul.addr %s208, 4
      %s210 = scalar_lea.vmem %s3, %s209
      %s211 = smul.u32 100, %s18
      %p212 = scmp.lt.s32.totalorder %s211, 399
      %s213 = scalar_select %p212, %s211, 399
      %s214 = smul.addr %s213, 4
      %s215 = scalar_lea.vmem %s0, %s214
      %s216 = smul.u32 100, %s18
      %s217 = smul.u32 2, %s19
      %p218 = scmp.lt.s32.totalorder %s217, 1
      %s219 = scalar_select %p218, %s217, 1
      %s220 = smul.addr %s219, 4
      %s221 = scalar_lea.vmem %s1, %s220
      %s222 = smul.u32 2, %s19
      %s223 = smul.u32 2, %s19
      %p224 = scmp.lt.s32.totalorder %s223, 1
      %s225 = scalar_select %p224, %s223, 1
      %s226 = scalar_lea.vmem %s2, %s225
      %s227 = smul.u32 2, %s19
      %s228 = smul.u32 100, %s18
      %s229 = smul.u32 2, %s19
      %p230 = scmp.lt.s32.totalorder %s228, 399
      %s231 = scalar_select %p230, %s228, 399
      %p232 = scmp.lt.s32.totalorder %s229, 1
      %s233 = scalar_select %p232, %s229, 1
      %s234 = smul.addr %s231, 2
      %s235 = sadd.s32 %s233, %s234
      %s236 = smul.addr %s235, 4
      %s237 = scalar_lea.vmem %s3, %s236
      %s238 = smul.u32 100, %s18
      %s239 = smul.u32 2, %s19
      %v240 = vld [vmem:[%s215] sm:$0xf]
      %v241 = vld [vmem:[%s215 + $0x4] sm:$0xf]
      %v242 = vld [vmem:[%s215 + $0x8] sm:$0xf]
      %v243 = vld [vmem:[%s215 + $0xc] sm:$0xf]
      %v244 = vld [vmem:[%s215 + $0x10] sm:$0xf]
      %v245 = vld [vmem:[%s215 + $0x14] sm:$0xf]
      %v246 = vld [vmem:[%s215 + $0x18] sm:$0xf]
      %v247 = vld [vmem:[%s215 + $0x1c] sm:$0xf]
      %v248 = vld [vmem:[%s215 + $0x20] sm:$0xf]
      %v249 = vld [vmem:[%s215 + $0x24] sm:$0xf]
      %v250 = vld [vmem:[%s215 + $0x28] sm:$0xf]
      %v251 = vld [vmem:[%s215 + $0x2c] sm:$0xf]
      %v252 = vld [vmem:[%s215 + $0x30] sm:$0xf]
      %v253 = vld [vmem:[%s215 + $0x34] sm:$0xf]
      %v254 = vld [vmem:[%s215 + $0x38] sm:$0xf]
      %v255 = vld [vmem:[%s215 + $0x3c] sm:$0xf]
      %v256 = vld [vmem:[%s215 + $0x40] sm:$0xf]
      %v257 = vld [vmem:[%s215 + $0x44] sm:$0xf]
      %v258 = vld [vmem:[%s215 + $0x48] sm:$0xf]
      %v259 = vld [vmem:[%s215 + $0x4c] sm:$0xf]
      %v260 = vld [vmem:[%s215 + $0x50] sm:$0xf]
      %v261 = vld [vmem:[%s215 + $0x54] sm:$0xf]
      %v262 = vld [vmem:[%s215 + $0x58] sm:$0xf]
      %v263 = vld [vmem:[%s215 + $0x5c] sm:$0xf]
      %v264 = vld [vmem:[%s215 + $0x60] sm:$0xf]
      %v265 = vld [vmem:[%s215 + $0x64] sm:$0xf]
      %v266 = vld [vmem:[%s215 + $0x68] sm:$0xf]
      %v267 = vld [vmem:[%s215 + $0x6c] sm:$0xf]
      %v268 = vld [vmem:[%s215 + $0x70] sm:$0xf]
      %v269 = vld [vmem:[%s215 + $0x74] sm:$0xf]
      %v270 = vld [vmem:[%s215 + $0x78] sm:$0xf]
      %v271 = vld [vmem:[%s215 + $0x7c] sm:$0xf]
      %v272 = vld [vmem:[%s215 + $0x80] sm:$0xf]
      %v273 = vld [vmem:[%s215 + $0x84] sm:$0xf]
      %v274 = vld [vmem:[%s215 + $0x88] sm:$0xf]
      %v275 = vld [vmem:[%s215 + $0x8c] sm:$0xf]
      %v276 = vld [vmem:[%s215 + $0x90] sm:$0xf]
      %v277 = vld [vmem:[%s215 + $0x94] sm:$0xf]
      %v278 = vld [vmem:[%s215 + $0x98] sm:$0xf]
      %v279 = vld [vmem:[%s215 + $0x9c] sm:$0xf]
      %v280 = vld [vmem:[%s215 + $0xa0] sm:$0xf]
      %v281 = vld [vmem:[%s215 + $0xa4] sm:$0xf]
      %v282 = vld [vmem:[%s215 + $0xa8] sm:$0xf]
      %v283 = vld [vmem:[%s215 + $0xac] sm:$0xf]
      %v284 = vld [vmem:[%s215 + $0xb0] sm:$0xf]
      %v285 = vld [vmem:[%s215 + $0xb4] sm:$0xf]
      %v286 = vld [vmem:[%s215 + $0xb8] sm:$0xf]
      %v287 = vld [vmem:[%s215 + $0xbc] sm:$0xf]
      %v288 = vld [vmem:[%s215 + $0xc0] sm:$0xf]
      %v289 = vld [vmem:[%s215 + $0xc4] sm:$0xf]
      %v290 = vld [vmem:[%s215 + $0xc8] sm:$0xf]
      %v291 = vld [vmem:[%s215 + $0xcc] sm:$0xf]
      %v292 = vld [vmem:[%s215 + $0xd0] sm:$0xf]
      %v293 = vld [vmem:[%s215 + $0xd4] sm:$0xf]
      %v294 = vld [vmem:[%s215 + $0xd8] sm:$0xf]
      %v295 = vld [vmem:[%s215 + $0xdc] sm:$0xf]
      %v296 = vld [vmem:[%s215 + $0xe0] sm:$0xf]
      %v297 = vld [vmem:[%s215 + $0xe4] sm:$0xf]
      %v298 = vld [vmem:[%s215 + $0xe8] sm:$0xf]
      %v299 = vld [vmem:[%s215 + $0xec] sm:$0xf]
      %v300 = vld [vmem:[%s215 + $0xf0] sm:$0xf]
      %v301 = vld [vmem:[%s215 + $0xf4] sm:$0xf]
      %v302 = vld [vmem:[%s215 + $0xf8] sm:$0xf]
      %v303 = vld [vmem:[%s215 + $0xfc] sm:$0xf]
      %v304 = vld [vmem:[%s215 + $0x100] sm:$0xf]
      %v305 = vld [vmem:[%s215 + $0x104] sm:$0xf]
      %v306 = vld [vmem:[%s215 + $0x108] sm:$0xf]
      %v307 = vld [vmem:[%s215 + $0x10c] sm:$0xf]
      %v308 = vld [vmem:[%s215 + $0x110] sm:$0xf]
      %v309 = vld [vmem:[%s215 + $0x114] sm:$0xf]
      %v310 = vld [vmem:[%s215 + $0x118] sm:$0xf]
      %v311 = vld [vmem:[%s215 + $0x11c] sm:$0xf]
      %v312 = vld [vmem:[%s215 + $0x120] sm:$0xf]
      %v313 = vld [vmem:[%s215 + $0x124] sm:$0xf]
      %v314 = vld [vmem:[%s215 + $0x128] sm:$0xf]
      %v315 = vld [vmem:[%s215 + $0x12c] sm:$0xf]
      %v316 = vld [vmem:[%s215 + $0x130] sm:$0xf]
      %v317 = vld [vmem:[%s215 + $0x134] sm:$0xf]
      %v318 = vld [vmem:[%s215 + $0x138] sm:$0xf]
      %v319 = vld [vmem:[%s215 + $0x13c] sm:$0xf]
      %v320 = vld [vmem:[%s215 + $0x140] sm:$0xf]
      %v321 = vld [vmem:[%s215 + $0x144] sm:$0xf]
      %v322 = vld [vmem:[%s215 + $0x148] sm:$0xf]
      %v323 = vld [vmem:[%s215 + $0x14c] sm:$0xf]
      %v324 = vld [vmem:[%s215 + $0x150] sm:$0xf]
      %v325 = vld [vmem:[%s215 + $0x154] sm:$0xf]
      %v326 = vld [vmem:[%s215 + $0x158] sm:$0xf]
      %v327 = vld [vmem:[%s215 + $0x15c] sm:$0xf]
      %v328 = vld [vmem:[%s215 + $0x160] sm:$0xf]
      %v329 = vld [vmem:[%s215 + $0x164] sm:$0xf]
      %v330 = vld [vmem:[%s215 + $0x168] sm:$0xf]
      %v331 = vld [vmem:[%s215 + $0x16c] sm:$0xf]
      %v332 = vld [vmem:[%s215 + $0x170] sm:$0xf]
      %v333 = vld [vmem:[%s215 + $0x174] sm:$0xf]
      %v334 = vld [vmem:[%s215 + $0x178] sm:$0xf]
      %v335 = vld [vmem:[%s215 + $0x17c] sm:$0xf]
      %v336 = vld [vmem:[%s215 + $0x180] sm:$0xf]
      %v337 = vld [vmem:[%s215 + $0x184] sm:$0xf]
      %v338 = vld [vmem:[%s215 + $0x188] sm:$0xf]
      %v339 = vld [vmem:[%s215 + $0x18c] sm:$0xf]
      %v340 = vld [vmem:[%s221] sm:$0xff]
      %v341 = vld [vmem:[%s221 + $0x8] sm:$0xff]
      %v342 = vld [vmem:[%s221 + $0x10] sm:$0xff]
      %v343 = vld [vmem:[%s221 + $0x18] sm:$0xff]
      %v344 = vld [vmem:[%s221 + $0x20] sm:$0xff]
      %v345 = vld [vmem:[%s221 + $0x28] sm:$0xff]
      %v346 = vld [vmem:[%s221 + $0x30] sm:$0xff]
      %v347 = vld [vmem:[%s221 + $0x38] sm:$0xff]
      %v348 = vld [vmem:[%s221 + $0x40] sm:$0xff]
      %v349 = vld [vmem:[%s221 + $0x48] sm:$0xff]
      %v350 = vld [vmem:[%s221 + $0x50] sm:$0xff]
      %v351 = vld [vmem:[%s221 + $0x58] sm:$0xff]
      %v352 = vld [vmem:[%s221 + $0x60] sm:$0xff]
      %v353 = vld [vmem:[%s221 + $0x68] sm:$0xff]
      %v354 = vld [vmem:[%s221 + $0x70] sm:$0xff]
      %v355 = vld [vmem:[%s221 + $0x78] sm:$0xff]
      %v356 = vld [vmem:[%s226] sm:$0x3]
      %v358 = vperm.slane %v356, 0
      %v359 = vperm.slane %v356, 1
      %v462 = vunpack.c.l.b16 %v240
      %v463 = vunpack.c.l.b16 %v241
      %v464 = vunpack.c.l.b16 %v242
      %v465 = vunpack.c.l.b16 %v243
      %v466 = vunpack.c.l.b16 %v244
      %v467 = vunpack.c.l.b16 %v245
      %v468 = vunpack.c.l.b16 %v246
      %v469 = vunpack.c.l.b16 %v247
      %v470 = vunpack.c.l.b16 %v248
      %v471 = vunpack.c.l.b16 %v249
      %v472 = vunpack.c.l.b16 %v250
      %v473 = vunpack.c.l.b16 %v251
      %v474 = vunpack.c.l.b16 %v252
      %v475 = vunpack.c.l.b16 %v253
      %v476 = vunpack.c.l.b16 %v254
      %v477 = vunpack.c.l.b16 %v255
      %v478 = vunpack.c.l.b16 %v256
      %v479 = vunpack.c.l.b16 %v257
      %v480 = vunpack.c.l.b16 %v258
      %v481 = vunpack.c.l.b16 %v259
      %v482 = vunpack.c.l.b16 %v260
      %v483 = vunpack.c.l.b16 %v261
      %v484 = vunpack.c.l.b16 %v262
      %v485 = vunpack.c.l.b16 %v263
      %v486 = vunpack.c.l.b16 %v264
      %v487 = vunpack.c.l.b16 %v265
      %v488 = vunpack.c.l.b16 %v266
      %v489 = vunpack.c.l.b16 %v267
      %v490 = vunpack.c.l.b16 %v268
      %v491 = vunpack.c.l.b16 %v269
      %v492 = vunpack.c.l.b16 %v270
      %v493 = vunpack.c.l.b16 %v271
      %v494 = vunpack.c.l.b16 %v272
      %v495 = vunpack.c.l.b16 %v273
      %v496 = vunpack.c.l.b16 %v274
      %v497 = vunpack.c.l.b16 %v275
      %v498 = vunpack.c.l.b16 %v276
      %v499 = vunpack.c.l.b16 %v277
      %v500 = vunpack.c.l.b16 %v278
      %v501 = vunpack.c.l.b16 %v279
      %v502 = vunpack.c.l.b16 %v280
      %v503 = vunpack.c.l.b16 %v281
      %v504 = vunpack.c.l.b16 %v282
      %v505 = vunpack.c.l.b16 %v283
      %v506 = vunpack.c.l.b16 %v284
      %v507 = vunpack.c.l.b16 %v285
      %v508 = vunpack.c.l.b16 %v286
      %v509 = vunpack.c.l.b16 %v287
      %v510 = vunpack.c.l.b16 %v288
      %v511 = vunpack.c.l.b16 %v289
      %v512 = vunpack.c.l.b16 %v290
      %v513 = vunpack.c.l.b16 %v291
      %v514 = vunpack.c.l.b16 %v292
      %v515 = vunpack.c.l.b16 %v293
      %v516 = vunpack.c.l.b16 %v294
      %v517 = vunpack.c.l.b16 %v295
      %v518 = vunpack.c.l.b16 %v296
      %v519 = vunpack.c.l.b16 %v297
      %v520 = vunpack.c.l.b16 %v298
      %v521 = vunpack.c.l.b16 %v299
      %v522 = vunpack.c.l.b16 %v300
      %v523 = vunpack.c.l.b16 %v301
      %v524 = vunpack.c.l.b16 %v302
      %v525 = vunpack.c.l.b16 %v303
      %v526 = vunpack.c.l.b16 %v304
      %v527 = vunpack.c.l.b16 %v305
      %v528 = vunpack.c.l.b16 %v306
      %v529 = vunpack.c.l.b16 %v307
      %v530 = vunpack.c.l.b16 %v308
      %v531 = vunpack.c.l.b16 %v309
      %v532 = vunpack.c.l.b16 %v310
      %v533 = vunpack.c.l.b16 %v311
      %v534 = vunpack.c.l.b16 %v312
      %v535 = vunpack.c.l.b16 %v313
      %v536 = vunpack.c.l.b16 %v314
      %v537 = vunpack.c.l.b16 %v315
      %v538 = vunpack.c.l.b16 %v316
      %v539 = vunpack.c.l.b16 %v317
      %v540 = vunpack.c.l.b16 %v318
      %v541 = vunpack.c.l.b16 %v319
      %v542 = vunpack.c.l.b16 %v320
      %v543 = vunpack.c.l.b16 %v321
      %v544 = vunpack.c.l.b16 %v322
      %v545 = vunpack.c.l.b16 %v323
      %v546 = vunpack.c.l.b16 %v324
      %v547 = vunpack.c.l.b16 %v325
      %v548 = vunpack.c.l.b16 %v326
      %v549 = vunpack.c.l.b16 %v327
      %v550 = vunpack.c.l.b16 %v328
      %v551 = vunpack.c.l.b16 %v329
      %v552 = vunpack.c.l.b16 %v330
      %v553 = vunpack.c.l.b16 %v331
      %v554 = vunpack.c.l.b16 %v332
      %v555 = vunpack.c.l.b16 %v333
      %v556 = vunpack.c.l.b16 %v334
      %v557 = vunpack.c.l.b16 %v335
      %v558 = vunpack.c.l.b16 %v336
      %v559 = vunpack.c.l.b16 %v337
      %v560 = vunpack.c.l.b16 %v338
      %v561 = vunpack.c.l.b16 %v339
      %v562 = vpack.c.b16 %v463, %v462
      %v563 = vpack.c.b16 %v465, %v464
      %v564 = vpack.c.b16 %v467, %v466
      %v565 = vpack.c.b16 %v469, %v468
      %v566 = vpack.c.b16 %v471, %v470
      %v567 = vpack.c.b16 %v473, %v472
      %v568 = vpack.c.b16 %v475, %v474
      %v569 = vpack.c.b16 %v477, %v476
      %v570 = vpack.c.b16 %v479, %v478
      %v571 = vpack.c.b16 %v481, %v480
      %v572 = vpack.c.b16 %v483, %v482
      %v573 = vpack.c.b16 %v485, %v484
      %v574 = vpack.c.b16 %v487, %v486
      %v575 = vpack.c.b16 %v489, %v488
      %v576 = vpack.c.b16 %v491, %v490
      %v577 = vpack.c.b16 %v493, %v492
      %v578 = vpack.c.b16 %v495, %v494
      %v579 = vpack.c.b16 %v497, %v496
      %v580 = vpack.c.b16 %v499, %v498
      %v581 = vpack.c.b16 %v501, %v500
      %v582 = vpack.c.b16 %v503, %v502
      %v583 = vpack.c.b16 %v505, %v504
      %v584 = vpack.c.b16 %v507, %v506
      %v585 = vpack.c.b16 %v509, %v508
      %v586 = vpack.c.b16 %v511, %v510
      %v587 = vpack.c.b16 %v513, %v512
      %v588 = vpack.c.b16 %v515, %v514
      %v589 = vpack.c.b16 %v517, %v516
      %v590 = vpack.c.b16 %v519, %v518
      %v591 = vpack.c.b16 %v521, %v520
      %v592 = vpack.c.b16 %v523, %v522
      %v593 = vpack.c.b16 %v525, %v524
      %v594 = vpack.c.b16 %v527, %v526
      %v595 = vpack.c.b16 %v529, %v528
      %v596 = vpack.c.b16 %v531, %v530
      %v597 = vpack.c.b16 %v533, %v532
      %v598 = vpack.c.b16 %v535, %v534
      %v599 = vpack.c.b16 %v537, %v536
      %v600 = vpack.c.b16 %v539, %v538
      %v601 = vpack.c.b16 %v541, %v540
      %v602 = vpack.c.b16 %v543, %v542
      %v603 = vpack.c.b16 %v545, %v544
      %v604 = vpack.c.b16 %v547, %v546
      %v605 = vpack.c.b16 %v549, %v548
      %v606 = vpack.c.b16 %v551, %v550
      %v607 = vpack.c.b16 %v553, %v552
      %v608 = vpack.c.b16 %v555, %v554
      %v609 = vpack.c.b16 %v557, %v556
      %v610 = vpack.c.b16 %v559, %v558
      %v611 = vpack.c.b16 %v561, %v560
      %v678 = vunpack.c.l.b16 %v340
      %v679 = vunpack.c.h.b16 %v340
      %v680 = vunpack.c.l.b16 %v341
      %v681 = vunpack.c.h.b16 %v341
      %v682 = vunpack.c.l.b16 %v342
      %v683 = vunpack.c.h.b16 %v342
      %v684 = vunpack.c.l.b16 %v343
      %v685 = vunpack.c.h.b16 %v343
      %v686 = vunpack.c.l.b16 %v344
      %v687 = vunpack.c.h.b16 %v344
      %v688 = vunpack.c.l.b16 %v345
      %v689 = vunpack.c.h.b16 %v345
      %v690 = vunpack.c.l.b16 %v346
      %v691 = vunpack.c.h.b16 %v346
      %v692 = vunpack.c.l.b16 %v347
      %v693 = vunpack.c.h.b16 %v347
      %v694 = vunpack.c.l.b16 %v348
      %v695 = vunpack.c.h.b16 %v348
      %v696 = vunpack.c.l.b16 %v349
      %v697 = vunpack.c.h.b16 %v349
      %v698 = vunpack.c.l.b16 %v350
      %v699 = vunpack.c.h.b16 %v350
      %v700 = vunpack.c.l.b16 %v351
      %v701 = vunpack.c.h.b16 %v351
      %v702 = vunpack.c.l.b16 %v352
      %v703 = vunpack.c.h.b16 %v352
      %v704 = vunpack.c.l.b16 %v353
      %v705 = vunpack.c.h.b16 %v353
      %v706 = vunpack.c.l.b16 %v354
      %v707 = vunpack.c.h.b16 %v354
      %v708 = vunpack.c.l.b16 %v355
      %v709 = vunpack.c.h.b16 %v355
      %v710 = vpack.c.b16 %v680, %v678
      %v711 = vpack.c.b16 %v681, %v679
      %v712 = vpack.c.b16 %v684, %v682
      %v713 = vpack.c.b16 %v685, %v683
      %v714 = vpack.c.b16 %v688, %v686
      %v715 = vpack.c.b16 %v689, %v687
      %v716 = vpack.c.b16 %v692, %v690
      %v717 = vpack.c.b16 %v693, %v691
      %v718 = vpack.c.b16 %v696, %v694
      %v719 = vpack.c.b16 %v697, %v695
      %v720 = vpack.c.b16 %v700, %v698
      %v721 = vpack.c.b16 %v701, %v699
      %v722 = vpack.c.b16 %v704, %v702
      %v723 = vpack.c.b16 %v705, %v703
      %v724 = vpack.c.b16 %v708, %v706
      %v725 = vpack.c.b16 %v709, %v707
      %742 = vmatpush.bf16.msra.mxu0 %v724
      %743 = vmatpush.bf16.msra.mxu0 %v722
      %744 = vmatpush.bf16.msra.mxu0 %v720
      %745 = vmatpush.bf16.msra.mxu0 %v718
      %746 = vmatpush.bf16.msra.mxu0 %v716
      %747 = vmatpush.bf16.msra.mxu0 %v714
      %748 = vmatpush.bf16.msra.mxu0 %v712
      %749 = vmatpush.bf16.msra.mxu0 %v710
      %750 = vmatmul.bf16.gmra.mxu0 %v562
      %v751 = vpop.f32.mrf.mxu0
      %v752 = vadd.f32 %v358, %v751
      %v753 = vpop.f32.mrf.mxu0
      %v754 = vadd.f32 %v358, %v753
      %755 = vmatmul.bf16.gmra.mxu0 %v563
      %v756 = vpop.f32.mrf.mxu0
      %v757 = vadd.f32 %v358, %v756
      %v758 = vpop.f32.mrf.mxu0
      %v759 = vadd.f32 %v358, %v758
      %760 = vmatmul.bf16.gmra.mxu0 %v564
      %v761 = vpop.f32.mrf.mxu0
      %v762 = vadd.f32 %v358, %v761
      %v763 = vpop.f32.mrf.mxu0
      %v764 = vadd.f32 %v358, %v763
      %765 = vmatmul.bf16.gmra.mxu0 %v565
      %v766 = vpop.f32.mrf.mxu0
      %v767 = vadd.f32 %v358, %v766
      %v768 = vpop.f32.mrf.mxu0
      %v769 = vadd.f32 %v358, %v768
      %770 = vmatmul.bf16.gmra.mxu0 %v566
      %v771 = vpop.f32.mrf.mxu0
      %v772 = vadd.f32 %v358, %v771
      %v773 = vpop.f32.mrf.mxu0
      %v774 = vadd.f32 %v358, %v773
      %775 = vmatmul.bf16.gmra.mxu0 %v567
      %v776 = vpop.f32.mrf.mxu0
      %v777 = vadd.f32 %v358, %v776
      %v778 = vpop.f32.mrf.mxu0
      %v779 = vadd.f32 %v358, %v778
      %780 = vmatmul.bf16.gmra.mxu0 %v568
      %v781 = vpop.f32.mrf.mxu0
      %v782 = vadd.f32 %v358, %v781
      %v783 = vpop.f32.mrf.mxu0
      %v784 = vadd.f32 %v358, %v783
      %785 = vmatmul.bf16.gmra.mxu0 %v569
      %v786 = vpop.f32.mrf.mxu0
      %v787 = vadd.f32 %v358, %v786
      %v788 = vpop.f32.mrf.mxu0
      %v789 = vadd.f32 %v358, %v788
      %790 = vmatmul.bf16.gmra.mxu0 %v570
      %v791 = vpop.f32.mrf.mxu0
      %v792 = vadd.f32 %v358, %v791
      %v793 = vpop.f32.mrf.mxu0
      %v794 = vadd.f32 %v358, %v793
      %795 = vmatmul.bf16.gmra.mxu0 %v571
      %v796 = vpop.f32.mrf.mxu0
      %v797 = vadd.f32 %v358, %v796
      %v798 = vpop.f32.mrf.mxu0
      %v799 = vadd.f32 %v358, %v798
      %800 = vmatmul.bf16.gmra.mxu0 %v572
      %v801 = vpop.f32.mrf.mxu0
      %v802 = vadd.f32 %v358, %v801
      %v803 = vpop.f32.mrf.mxu0
      %v804 = vadd.f32 %v358, %v803
      %805 = vmatmul.bf16.gmra.mxu0 %v573
      %v806 = vpop.f32.mrf.mxu0
      %v807 = vadd.f32 %v358, %v806
      %v808 = vpop.f32.mrf.mxu0
      %v809 = vadd.f32 %v358, %v808
      %810 = vmatmul.bf16.gmra.mxu0 %v574
      %v811 = vpop.f32.mrf.mxu0
      %v812 = vadd.f32 %v358, %v811
      %v813 = vpop.f32.mrf.mxu0
      %v814 = vadd.f32 %v358, %v813
      %815 = vmatmul.bf16.gmra.mxu0 %v575
      %v816 = vpop.f32.mrf.mxu0
      %v817 = vadd.f32 %v358, %v816
      %v818 = vpop.f32.mrf.mxu0
      %v819 = vadd.f32 %v358, %v818
      %820 = vmatmul.bf16.gmra.mxu0 %v576
      %v821 = vpop.f32.mrf.mxu0
      %v822 = vadd.f32 %v358, %v821
      %v823 = vpop.f32.mrf.mxu0
      %v824 = vadd.f32 %v358, %v823
      %825 = vmatmul.bf16.gmra.mxu0 %v577
      %v826 = vpop.f32.mrf.mxu0
      %v827 = vadd.f32 %v358, %v826
      %v828 = vpop.f32.mrf.mxu0
      %v829 = vadd.f32 %v358, %v828
      %830 = vmatmul.bf16.gmra.mxu0 %v578
      %v831 = vpop.f32.mrf.mxu0
      %v832 = vadd.f32 %v358, %v831
      %v833 = vpop.f32.mrf.mxu0
      %v834 = vadd.f32 %v358, %v833
      %835 = vmatmul.bf16.gmra.mxu0 %v579
      %v836 = vpop.f32.mrf.mxu0
      %v837 = vadd.f32 %v358, %v836
      %v838 = vpop.f32.mrf.mxu0
      %v839 = vadd.f32 %v358, %v838
      %840 = vmatmul.bf16.gmra.mxu0 %v580
      %v841 = vpop.f32.mrf.mxu0
      %v842 = vadd.f32 %v358, %v841
      %v843 = vpop.f32.mrf.mxu0
      %v844 = vadd.f32 %v358, %v843
      %845 = vmatmul.bf16.gmra.mxu0 %v581
      %v846 = vpop.f32.mrf.mxu0
      %v847 = vadd.f32 %v358, %v846
      %v848 = vpop.f32.mrf.mxu0
      %v849 = vadd.f32 %v358, %v848
      %850 = vmatmul.bf16.gmra.mxu0 %v582
      %v851 = vpop.f32.mrf.mxu0
      %v852 = vadd.f32 %v358, %v851
      %v853 = vpop.f32.mrf.mxu0
      %v854 = vadd.f32 %v358, %v853
      %855 = vmatmul.bf16.gmra.mxu0 %v583
      %v856 = vpop.f32.mrf.mxu0
      %v857 = vadd.f32 %v358, %v856
      %v858 = vpop.f32.mrf.mxu0
      %v859 = vadd.f32 %v358, %v858
      %860 = vmatmul.bf16.gmra.mxu0 %v584
      %v861 = vpop.f32.mrf.mxu0
      %v862 = vadd.f32 %v358, %v861
      %v863 = vpop.f32.mrf.mxu0
      %v864 = vadd.f32 %v358, %v863
      %865 = vmatmul.bf16.gmra.mxu0 %v585
      %v866 = vpop.f32.mrf.mxu0
      %v867 = vadd.f32 %v358, %v866
      %v868 = vpop.f32.mrf.mxu0
      %v869 = vadd.f32 %v358, %v868
      %870 = vmatmul.bf16.gmra.mxu0 %v586
      %v871 = vpop.f32.mrf.mxu0
      %v872 = vadd.f32 %v358, %v871
      %v873 = vpop.f32.mrf.mxu0
      %v874 = vadd.f32 %v358, %v873
      %875 = vmatmul.bf16.gmra.mxu0 %v587
      %v876 = vpop.f32.mrf.mxu0
      %v877 = vadd.f32 %v358, %v876
      %v878 = vpop.f32.mrf.mxu0
      %v879 = vadd.f32 %v358, %v878
      %880 = vmatmul.bf16.gmra.mxu0 %v588
      %v881 = vpop.f32.mrf.mxu0
      %v882 = vadd.f32 %v358, %v881
      %v883 = vpop.f32.mrf.mxu0
      %v884 = vadd.f32 %v358, %v883
      %885 = vmatmul.bf16.gmra.mxu0 %v589
      %v886 = vpop.f32.mrf.mxu0
      %v887 = vadd.f32 %v358, %v886
      %v888 = vpop.f32.mrf.mxu0
      %v889 = vadd.f32 %v358, %v888
      %890 = vmatmul.bf16.gmra.mxu0 %v590
      %v891 = vpop.f32.mrf.mxu0
      %v892 = vadd.f32 %v358, %v891
      %v893 = vpop.f32.mrf.mxu0
      %v894 = vadd.f32 %v358, %v893
      %895 = vmatmul.bf16.gmra.mxu0 %v591
      %v896 = vpop.f32.mrf.mxu0
      %v897 = vadd.f32 %v358, %v896
      %v898 = vpop.f32.mrf.mxu0
      %v899 = vadd.f32 %v358, %v898
      %900 = vmatmul.bf16.gmra.mxu0 %v592
      %v901 = vpop.f32.mrf.mxu0
      %v902 = vadd.f32 %v358, %v901
      %v903 = vpop.f32.mrf.mxu0
      %v904 = vadd.f32 %v358, %v903
      %905 = vmatmul.bf16.gmra.mxu0 %v593
      %v906 = vpop.f32.mrf.mxu0
      %v907 = vadd.f32 %v358, %v906
      %v908 = vpop.f32.mrf.mxu0
      %v909 = vadd.f32 %v358, %v908
      %910 = vmatmul.bf16.gmra.mxu0 %v594
      %v911 = vpop.f32.mrf.mxu0
      %v912 = vadd.f32 %v358, %v911
      %v913 = vpop.f32.mrf.mxu0
      %v914 = vadd.f32 %v358, %v913
      %915 = vmatmul.bf16.gmra.mxu0 %v595
      %v916 = vpop.f32.mrf.mxu0
      %v917 = vadd.f32 %v358, %v916
      %v918 = vpop.f32.mrf.mxu0
      %v919 = vadd.f32 %v358, %v918
      %920 = vmatmul.bf16.gmra.mxu0 %v596
      %v921 = vpop.f32.mrf.mxu0
      %v922 = vadd.f32 %v358, %v921
      %v923 = vpop.f32.mrf.mxu0
      %v924 = vadd.f32 %v358, %v923
      %925 = vmatmul.bf16.gmra.mxu0 %v597
      %v926 = vpop.f32.mrf.mxu0
      %v927 = vadd.f32 %v358, %v926
      %v928 = vpop.f32.mrf.mxu0
      %v929 = vadd.f32 %v358, %v928
      %930 = vmatmul.bf16.gmra.mxu0 %v598
      %v931 = vpop.f32.mrf.mxu0
      %v932 = vadd.f32 %v358, %v931
      %v933 = vpop.f32.mrf.mxu0
      %v934 = vadd.f32 %v358, %v933
      %935 = vmatmul.bf16.gmra.mxu0 %v599
      %v936 = vpop.f32.mrf.mxu0
      %v937 = vadd.f32 %v358, %v936
      %v938 = vpop.f32.mrf.mxu0
      %v939 = vadd.f32 %v358, %v938
      %940 = vmatmul.bf16.gmra.mxu0 %v600
      %v941 = vpop.f32.mrf.mxu0
      %v942 = vadd.f32 %v358, %v941
      %v943 = vpop.f32.mrf.mxu0
      %v944 = vadd.f32 %v358, %v943
      %945 = vmatmul.bf16.gmra.mxu0 %v601
      %v946 = vpop.f32.mrf.mxu0
      %v947 = vadd.f32 %v358, %v946
      %v948 = vpop.f32.mrf.mxu0
      %v949 = vadd.f32 %v358, %v948
      %950 = vmatmul.bf16.gmra.mxu0 %v602
      %v951 = vpop.f32.mrf.mxu0
      %v952 = vadd.f32 %v358, %v951
      %v953 = vpop.f32.mrf.mxu0
      %v954 = vadd.f32 %v358, %v953
      %955 = vmatmul.bf16.gmra.mxu0 %v603
      %v956 = vpop.f32.mrf.mxu0
      %v957 = vadd.f32 %v358, %v956
      %v958 = vpop.f32.mrf.mxu0
      %v959 = vadd.f32 %v358, %v958
      %960 = vmatmul.bf16.gmra.mxu0 %v604
      %v961 = vpop.f32.mrf.mxu0
      %v962 = vadd.f32 %v358, %v961
      %v963 = vpop.f32.mrf.mxu0
      %v964 = vadd.f32 %v358, %v963
      %965 = vmatmul.bf16.gmra.mxu0 %v605
      %v966 = vpop.f32.mrf.mxu0
      %v967 = vadd.f32 %v358, %v966
      %v968 = vpop.f32.mrf.mxu0
      %v969 = vadd.f32 %v358, %v968
      %970 = vmatmul.bf16.gmra.mxu0 %v606
      %v971 = vpop.f32.mrf.mxu0
      %v972 = vadd.f32 %v358, %v971
      %v973 = vpop.f32.mrf.mxu0
      %v974 = vadd.f32 %v358, %v973
      %975 = vmatmul.bf16.gmra.mxu0 %v607
      %v976 = vpop.f32.mrf.mxu0
      %v977 = vadd.f32 %v358, %v976
      %v978 = vpop.f32.mrf.mxu0
      %v979 = vadd.f32 %v358, %v978
      %980 = vmatmul.bf16.gmra.mxu0 %v608
      %v981 = vpop.f32.mrf.mxu0
      %v982 = vadd.f32 %v358, %v981
      %v983 = vpop.f32.mrf.mxu0
      %v984 = vadd.f32 %v358, %v983
      %985 = vmatmul.bf16.gmra.mxu0 %v609
      %v986 = vpop.f32.mrf.mxu0
      %v987 = vadd.f32 %v358, %v986
      %v988 = vpop.f32.mrf.mxu0
      %v989 = vadd.f32 %v358, %v988
      %990 = vmatmul.bf16.gmra.mxu0 %v610
      %v991 = vpop.f32.mrf.mxu0
      %v992 = vadd.f32 %v358, %v991
      %v993 = vpop.f32.mrf.mxu0
      %v994 = vadd.f32 %v358, %v993
      %995 = vmatmul.bf16.gmra.mxu0 %v611
      %v996 = vpop.f32.mrf.mxu0
      %v997 = vadd.f32 %v358, %v996
      %v998 = vpop.f32.mrf.mxu0
      %v999 = vadd.f32 %v358, %v998
      %1000 = vdwg.mxu0
      %1001 = vmatpush.bf16.msra.mxu0 %v725
      %1002 = vmatpush.bf16.msra.mxu0 %v723
      %1003 = vmatpush.bf16.msra.mxu0 %v721
      %1004 = vmatpush.bf16.msra.mxu0 %v719
      %1005 = vmatpush.bf16.msra.mxu0 %v717
      %1006 = vmatpush.bf16.msra.mxu0 %v715
      %1007 = vmatpush.bf16.msra.mxu0 %v713
      %1008 = vmatpush.bf16.msra.mxu0 %v711
      %1009 = vmatmul.bf16.gmra.mxu0 %v562
      %v1010 = vpop.f32.mrf.mxu0
      %v1011 = vadd.f32 %v359, %v1010
      %v1012 = vpop.f32.mrf.mxu0
      %v1013 = vadd.f32 %v359, %v1012
      %1014 = vmatmul.bf16.gmra.mxu0 %v563
      %v1015 = vpop.f32.mrf.mxu0
      %v1016 = vadd.f32 %v359, %v1015
      %v1017 = vpop.f32.mrf.mxu0
      %v1018 = vadd.f32 %v359, %v1017
      %1019 = vmatmul.bf16.gmra.mxu0 %v564
      %v1020 = vpop.f32.mrf.mxu0
      %v1021 = vadd.f32 %v359, %v1020
      %v1022 = vpop.f32.mrf.mxu0
      %v1023 = vadd.f32 %v359, %v1022
      %1024 = vmatmul.bf16.gmra.mxu0 %v565
      %v1025 = vpop.f32.mrf.mxu0
      %v1026 = vadd.f32 %v359, %v1025
      %v1027 = vpop.f32.mrf.mxu0
      %v1028 = vadd.f32 %v359, %v1027
      %1029 = vmatmul.bf16.gmra.mxu0 %v566
      %v1030 = vpop.f32.mrf.mxu0
      %v1031 = vadd.f32 %v359, %v1030
      %v1032 = vpop.f32.mrf.mxu0
      %v1033 = vadd.f32 %v359, %v1032
      %1034 = vmatmul.bf16.gmra.mxu0 %v567
      %v1035 = vpop.f32.mrf.mxu0
      %v1036 = vadd.f32 %v359, %v1035
      %v1037 = vpop.f32.mrf.mxu0
      %v1038 = vadd.f32 %v359, %v1037
      %1039 = vmatmul.bf16.gmra.mxu0 %v568
      %v1040 = vpop.f32.mrf.mxu0
      %v1041 = vadd.f32 %v359, %v1040
      %v1042 = vpop.f32.mrf.mxu0
      %v1043 = vadd.f32 %v359, %v1042
      %1044 = vmatmul.bf16.gmra.mxu0 %v569
      %v1045 = vpop.f32.mrf.mxu0
      %v1046 = vadd.f32 %v359, %v1045
      %v1047 = vpop.f32.mrf.mxu0
      %v1048 = vadd.f32 %v359, %v1047
      %1049 = vmatmul.bf16.gmra.mxu0 %v570
      %v1050 = vpop.f32.mrf.mxu0
      %v1051 = vadd.f32 %v359, %v1050
      %v1052 = vpop.f32.mrf.mxu0
      %v1053 = vadd.f32 %v359, %v1052
      %1054 = vmatmul.bf16.gmra.mxu0 %v571
      %v1055 = vpop.f32.mrf.mxu0
      %v1056 = vadd.f32 %v359, %v1055
      %v1057 = vpop.f32.mrf.mxu0
      %v1058 = vadd.f32 %v359, %v1057
      %1059 = vmatmul.bf16.gmra.mxu0 %v572
      %v1060 = vpop.f32.mrf.mxu0
      %v1061 = vadd.f32 %v359, %v1060
      %v1062 = vpop.f32.mrf.mxu0
      %v1063 = vadd.f32 %v359, %v1062
      %1064 = vmatmul.bf16.gmra.mxu0 %v573
      %v1065 = vpop.f32.mrf.mxu0
      %v1066 = vadd.f32 %v359, %v1065
      %v1067 = vpop.f32.mrf.mxu0
      %v1068 = vadd.f32 %v359, %v1067
      %1069 = vmatmul.bf16.gmra.mxu0 %v574
      %v1070 = vpop.f32.mrf.mxu0
      %v1071 = vadd.f32 %v359, %v1070
      %v1072 = vpop.f32.mrf.mxu0
      %v1073 = vadd.f32 %v359, %v1072
      %1074 = vmatmul.bf16.gmra.mxu0 %v575
      %v1075 = vpop.f32.mrf.mxu0
      %v1076 = vadd.f32 %v359, %v1075
      %v1077 = vpop.f32.mrf.mxu0
      %v1078 = vadd.f32 %v359, %v1077
      %1079 = vmatmul.bf16.gmra.mxu0 %v576
      %v1080 = vpop.f32.mrf.mxu0
      %v1081 = vadd.f32 %v359, %v1080
      %v1082 = vpop.f32.mrf.mxu0
      %v1083 = vadd.f32 %v359, %v1082
      %1084 = vmatmul.bf16.gmra.mxu0 %v577
      %v1085 = vpop.f32.mrf.mxu0
      %v1086 = vadd.f32 %v359, %v1085
      %v1087 = vpop.f32.mrf.mxu0
      %v1088 = vadd.f32 %v359, %v1087
      %1089 = vmatmul.bf16.gmra.mxu0 %v578
      %v1090 = vpop.f32.mrf.mxu0
      %v1091 = vadd.f32 %v359, %v1090
      %v1092 = vpop.f32.mrf.mxu0
      %v1093 = vadd.f32 %v359, %v1092
      %1094 = vmatmul.bf16.gmra.mxu0 %v579
      %v1095 = vpop.f32.mrf.mxu0
      %v1096 = vadd.f32 %v359, %v1095
      %v1097 = vpop.f32.mrf.mxu0
      %v1098 = vadd.f32 %v359, %v1097
      %1099 = vmatmul.bf16.gmra.mxu0 %v580
      %v1100 = vpop.f32.mrf.mxu0
      %v1101 = vadd.f32 %v359, %v1100
      %v1102 = vpop.f32.mrf.mxu0
      %v1103 = vadd.f32 %v359, %v1102
      %1104 = vmatmul.bf16.gmra.mxu0 %v581
      %v1105 = vpop.f32.mrf.mxu0
      %v1106 = vadd.f32 %v359, %v1105
      %v1107 = vpop.f32.mrf.mxu0
      %v1108 = vadd.f32 %v359, %v1107
      %1109 = vmatmul.bf16.gmra.mxu0 %v582
      %v1110 = vpop.f32.mrf.mxu0
      %v1111 = vadd.f32 %v359, %v1110
      %v1112 = vpop.f32.mrf.mxu0
      %v1113 = vadd.f32 %v359, %v1112
      %1114 = vmatmul.bf16.gmra.mxu0 %v583
      %v1115 = vpop.f32.mrf.mxu0
      %v1116 = vadd.f32 %v359, %v1115
      %v1117 = vpop.f32.mrf.mxu0
      %v1118 = vadd.f32 %v359, %v1117
      %1119 = vmatmul.bf16.gmra.mxu0 %v584
      %v1120 = vpop.f32.mrf.mxu0
      %v1121 = vadd.f32 %v359, %v1120
      %v1122 = vpop.f32.mrf.mxu0
      %v1123 = vadd.f32 %v359, %v1122
      %1124 = vmatmul.bf16.gmra.mxu0 %v585
      %v1125 = vpop.f32.mrf.mxu0
      %v1126 = vadd.f32 %v359, %v1125
      %v1127 = vpop.f32.mrf.mxu0
      %v1128 = vadd.f32 %v359, %v1127
      %1129 = vmatmul.bf16.gmra.mxu0 %v586
      %v1130 = vpop.f32.mrf.mxu0
      %v1131 = vadd.f32 %v359, %v1130
      %v1132 = vpop.f32.mrf.mxu0
      %v1133 = vadd.f32 %v359, %v1132
      %1134 = vmatmul.bf16.gmra.mxu0 %v587
      %v1135 = vpop.f32.mrf.mxu0
      %v1136 = vadd.f32 %v359, %v1135
      %v1137 = vpop.f32.mrf.mxu0
      %v1138 = vadd.f32 %v359, %v1137
      %1139 = vmatmul.bf16.gmra.mxu0 %v588
      %v1140 = vpop.f32.mrf.mxu0
      %v1141 = vadd.f32 %v359, %v1140
      %v1142 = vpop.f32.mrf.mxu0
      %v1143 = vadd.f32 %v359, %v1142
      %1144 = vmatmul.bf16.gmra.mxu0 %v589
      %v1145 = vpop.f32.mrf.mxu0
      %v1146 = vadd.f32 %v359, %v1145
      %v1147 = vpop.f32.mrf.mxu0
      %v1148 = vadd.f32 %v359, %v1147
      %1149 = vmatmul.bf16.gmra.mxu0 %v590
      %v1150 = vpop.f32.mrf.mxu0
      %v1151 = vadd.f32 %v359, %v1150
      %v1152 = vpop.f32.mrf.mxu0
      %v1153 = vadd.f32 %v359, %v1152
      %1154 = vmatmul.bf16.gmra.mxu0 %v591
      %v1155 = vpop.f32.mrf.mxu0
      %v1156 = vadd.f32 %v359, %v1155
      %v1157 = vpop.f32.mrf.mxu0
      %v1158 = vadd.f32 %v359, %v1157
      %1159 = vmatmul.bf16.gmra.mxu0 %v592
      %v1160 = vpop.f32.mrf.mxu0
      %v1161 = vadd.f32 %v359, %v1160
      %v1162 = vpop.f32.mrf.mxu0
      %v1163 = vadd.f32 %v359, %v1162
      %1164 = vmatmul.bf16.gmra.mxu0 %v593
      %v1165 = vpop.f32.mrf.mxu0
      %v1166 = vadd.f32 %v359, %v1165
      %v1167 = vpop.f32.mrf.mxu0
      %v1168 = vadd.f32 %v359, %v1167
      %1169 = vmatmul.bf16.gmra.mxu0 %v594
      %v1170 = vpop.f32.mrf.mxu0
      %v1171 = vadd.f32 %v359, %v1170
      %v1172 = vpop.f32.mrf.mxu0
      %v1173 = vadd.f32 %v359, %v1172
      %1174 = vmatmul.bf16.gmra.mxu0 %v595
      %v1175 = vpop.f32.mrf.mxu0
      %v1176 = vadd.f32 %v359, %v1175
      %v1177 = vpop.f32.mrf.mxu0
      %v1178 = vadd.f32 %v359, %v1177
      %1179 = vmatmul.bf16.gmra.mxu0 %v596
      %v1180 = vpop.f32.mrf.mxu0
      %v1181 = vadd.f32 %v359, %v1180
      %v1182 = vpop.f32.mrf.mxu0
      %v1183 = vadd.f32 %v359, %v1182
      %1184 = vmatmul.bf16.gmra.mxu0 %v597
      %v1185 = vpop.f32.mrf.mxu0
      %v1186 = vadd.f32 %v359, %v1185
      %v1187 = vpop.f32.mrf.mxu0
      %v1188 = vadd.f32 %v359, %v1187
      %1189 = vmatmul.bf16.gmra.mxu0 %v598
      %v1190 = vpop.f32.mrf.mxu0
      %v1191 = vadd.f32 %v359, %v1190
      %v1192 = vpop.f32.mrf.mxu0
      %v1193 = vadd.f32 %v359, %v1192
      %1194 = vmatmul.bf16.gmra.mxu0 %v599
      %v1195 = vpop.f32.mrf.mxu0
      %v1196 = vadd.f32 %v359, %v1195
      %v1197 = vpop.f32.mrf.mxu0
      %v1198 = vadd.f32 %v359, %v1197
      %1199 = vmatmul.bf16.gmra.mxu0 %v600
      %v1200 = vpop.f32.mrf.mxu0
      %v1201 = vadd.f32 %v359, %v1200
      %v1202 = vpop.f32.mrf.mxu0
      %v1203 = vadd.f32 %v359, %v1202
      %1204 = vmatmul.bf16.gmra.mxu0 %v601
      %v1205 = vpop.f32.mrf.mxu0
      %v1206 = vadd.f32 %v359, %v1205
      %v1207 = vpop.f32.mrf.mxu0
      %v1208 = vadd.f32 %v359, %v1207
      %1209 = vmatmul.bf16.gmra.mxu0 %v602
      %v1210 = vpop.f32.mrf.mxu0
      %v1211 = vadd.f32 %v359, %v1210
      %v1212 = vpop.f32.mrf.mxu0
      %v1213 = vadd.f32 %v359, %v1212
      %1214 = vmatmul.bf16.gmra.mxu0 %v603
      %v1215 = vpop.f32.mrf.mxu0
      %v1216 = vadd.f32 %v359, %v1215
      %v1217 = vpop.f32.mrf.mxu0
      %v1218 = vadd.f32 %v359, %v1217
      %1219 = vmatmul.bf16.gmra.mxu0 %v604
      %v1220 = vpop.f32.mrf.mxu0
      %v1221 = vadd.f32 %v359, %v1220
      %v1222 = vpop.f32.mrf.mxu0
      %v1223 = vadd.f32 %v359, %v1222
      %1224 = vmatmul.bf16.gmra.mxu0 %v605
      %v1225 = vpop.f32.mrf.mxu0
      %v1226 = vadd.f32 %v359, %v1225
      %v1227 = vpop.f32.mrf.mxu0
      %v1228 = vadd.f32 %v359, %v1227
      %1229 = vmatmul.bf16.gmra.mxu0 %v606
      %v1230 = vpop.f32.mrf.mxu0
      %v1231 = vadd.f32 %v359, %v1230
      %v1232 = vpop.f32.mrf.mxu0
      %v1233 = vadd.f32 %v359, %v1232
      %1234 = vmatmul.bf16.gmra.mxu0 %v607
      %v1235 = vpop.f32.mrf.mxu0
      %v1236 = vadd.f32 %v359, %v1235
      %v1237 = vpop.f32.mrf.mxu0
      %v1238 = vadd.f32 %v359, %v1237
      %1239 = vmatmul.bf16.gmra.mxu0 %v608
      %v1240 = vpop.f32.mrf.mxu0
      %v1241 = vadd.f32 %v359, %v1240
      %v1242 = vpop.f32.mrf.mxu0
      %v1243 = vadd.f32 %v359, %v1242
      %1244 = vmatmul.bf16.gmra.mxu0 %v609
      %v1245 = vpop.f32.mrf.mxu0
      %v1246 = vadd.f32 %v359, %v1245
      %v1247 = vpop.f32.mrf.mxu0
      %v1248 = vadd.f32 %v359, %v1247
      %1249 = vmatmul.bf16.gmra.mxu0 %v610
      %v1250 = vpop.f32.mrf.mxu0
      %v1251 = vadd.f32 %v359, %v1250
      %v1252 = vpop.f32.mrf.mxu0
      %v1253 = vadd.f32 %v359, %v1252
      %1254 = vmatmul.bf16.gmra.mxu0 %v611
      %v1255 = vpop.f32.mrf.mxu0
      %v1256 = vadd.f32 %v359, %v1255
      %v1257 = vpop.f32.mrf.mxu0
      %v1258 = vadd.f32 %v359, %v1257
      %1259 = vdwg.mxu0
      %v1260 = vmax.f32 %v752, 0.0
      %v1261 = vmax.f32 %v1011, 0.0
      %v1262 = vmax.f32 %v754, 0.0
      %v1263 = vmax.f32 %v1013, 0.0
      %v1264 = vmax.f32 %v757, 0.0
      %v1265 = vmax.f32 %v1016, 0.0
      %v1266 = vmax.f32 %v759, 0.0
      %v1267 = vmax.f32 %v1018, 0.0
      %v1268 = vmax.f32 %v762, 0.0
      %v1269 = vmax.f32 %v1021, 0.0
      %v1270 = vmax.f32 %v764, 0.0
      %v1271 = vmax.f32 %v1023, 0.0
      %v1272 = vmax.f32 %v767, 0.0
      %v1273 = vmax.f32 %v1026, 0.0
      %v1274 = vmax.f32 %v769, 0.0
      %v1275 = vmax.f32 %v1028, 0.0
      %v1276 = vmax.f32 %v772, 0.0
      %v1277 = vmax.f32 %v1031, 0.0
      %v1278 = vmax.f32 %v774, 0.0
      %v1279 = vmax.f32 %v1033, 0.0
      %v1280 = vmax.f32 %v777, 0.0
      %v1281 = vmax.f32 %v1036, 0.0
      %v1282 = vmax.f32 %v779, 0.0
      %v1283 = vmax.f32 %v1038, 0.0
      %v1284 = vmax.f32 %v782, 0.0
      %v1285 = vmax.f32 %v1041, 0.0
      %v1286 = vmax.f32 %v784, 0.0
      %v1287 = vmax.f32 %v1043, 0.0
      %v1288 = vmax.f32 %v787, 0.0
      %v1289 = vmax.f32 %v1046, 0.0
      %v1290 = vmax.f32 %v789, 0.0
      %v1291 = vmax.f32 %v1048, 0.0
      %v1292 = vmax.f32 %v792, 0.0
      %v1293 = vmax.f32 %v1051, 0.0
      %v1294 = vmax.f32 %v794, 0.0
      %v1295 = vmax.f32 %v1053, 0.0
      %v1296 = vmax.f32 %v797, 0.0
      %v1297 = vmax.f32 %v1056, 0.0
      %v1298 = vmax.f32 %v799, 0.0
      %v1299 = vmax.f32 %v1058, 0.0
      %v1300 = vmax.f32 %v802, 0.0
      %v1301 = vmax.f32 %v1061, 0.0
      %v1302 = vmax.f32 %v804, 0.0
      %v1303 = vmax.f32 %v1063, 0.0
      %v1304 = vmax.f32 %v807, 0.0
      %v1305 = vmax.f32 %v1066, 0.0
      %v1306 = vmax.f32 %v809, 0.0
      %v1307 = vmax.f32 %v1068, 0.0
      %v1308 = vmax.f32 %v812, 0.0
      %v1309 = vmax.f32 %v1071, 0.0
      %v1310 = vmax.f32 %v814, 0.0
      %v1311 = vmax.f32 %v1073, 0.0
      %v1312 = vmax.f32 %v817, 0.0
      %v1313 = vmax.f32 %v1076, 0.0
      %v1314 = vmax.f32 %v819, 0.0
      %v1315 = vmax.f32 %v1078, 0.0
      %v1316 = vmax.f32 %v822, 0.0
      %v1317 = vmax.f32 %v1081, 0.0
      %v1318 = vmax.f32 %v824, 0.0
      %v1319 = vmax.f32 %v1083, 0.0
      %v1320 = vmax.f32 %v827, 0.0
      %v1321 = vmax.f32 %v1086, 0.0
      %v1322 = vmax.f32 %v829, 0.0
      %v1323 = vmax.f32 %v1088, 0.0
      %v1324 = vmax.f32 %v832, 0.0
      %v1325 = vmax.f32 %v1091, 0.0
      %v1326 = vmax.f32 %v834, 0.0
      %v1327 = vmax.f32 %v1093, 0.0
      %v1328 = vmax.f32 %v837, 0.0
      %v1329 = vmax.f32 %v1096, 0.0
      %v1330 = vmax.f32 %v839, 0.0
      %v1331 = vmax.f32 %v1098, 0.0
      %v1332 = vmax.f32 %v842, 0.0
      %v1333 = vmax.f32 %v1101, 0.0
      %v1334 = vmax.f32 %v844, 0.0
      %v1335 = vmax.f32 %v1103, 0.0
      %v1336 = vmax.f32 %v847, 0.0
      %v1337 = vmax.f32 %v1106, 0.0
      %v1338 = vmax.f32 %v849, 0.0
      %v1339 = vmax.f32 %v1108, 0.0
      %v1340 = vmax.f32 %v852, 0.0
      %v1341 = vmax.f32 %v1111, 0.0
      %v1342 = vmax.f32 %v854, 0.0
      %v1343 = vmax.f32 %v1113, 0.0
      %v1344 = vmax.f32 %v857, 0.0
      %v1345 = vmax.f32 %v1116, 0.0
      %v1346 = vmax.f32 %v859, 0.0
      %v1347 = vmax.f32 %v1118, 0.0
      %v1348 = vmax.f32 %v862, 0.0
      %v1349 = vmax.f32 %v1121, 0.0
      %v1350 = vmax.f32 %v864, 0.0
      %v1351 = vmax.f32 %v1123, 0.0
      %v1352 = vmax.f32 %v867, 0.0
      %v1353 = vmax.f32 %v1126, 0.0
      %v1354 = vmax.f32 %v869, 0.0
      %v1355 = vmax.f32 %v1128, 0.0
      %v1356 = vmax.f32 %v872, 0.0
      %v1357 = vmax.f32 %v1131, 0.0
      %v1358 = vmax.f32 %v874, 0.0
      %v1359 = vmax.f32 %v1133, 0.0
      %v1360 = vmax.f32 %v877, 0.0
      %v1361 = vmax.f32 %v1136, 0.0
      %v1362 = vmax.f32 %v879, 0.0
      %v1363 = vmax.f32 %v1138, 0.0
      %v1364 = vmax.f32 %v882, 0.0
      %v1365 = vmax.f32 %v1141, 0.0
      %v1366 = vmax.f32 %v884, 0.0
      %v1367 = vmax.f32 %v1143, 0.0
      %v1368 = vmax.f32 %v887, 0.0
      %v1369 = vmax.f32 %v1146, 0.0
      %v1370 = vmax.f32 %v889, 0.0
      %v1371 = vmax.f32 %v1148, 0.0
      %v1372 = vmax.f32 %v892, 0.0
      %v1373 = vmax.f32 %v1151, 0.0
      %v1374 = vmax.f32 %v894, 0.0
      %v1375 = vmax.f32 %v1153, 0.0
      %v1376 = vmax.f32 %v897, 0.0
      %v1377 = vmax.f32 %v1156, 0.0
      %v1378 = vmax.f32 %v899, 0.0
      %v1379 = vmax.f32 %v1158, 0.0
      %v1380 = vmax.f32 %v902, 0.0
      %v1381 = vmax.f32 %v1161, 0.0
      %v1382 = vmax.f32 %v904, 0.0
      %v1383 = vmax.f32 %v1163, 0.0
      %v1384 = vmax.f32 %v907, 0.0
      %v1385 = vmax.f32 %v1166, 0.0
      %v1386 = vmax.f32 %v909, 0.0
      %v1387 = vmax.f32 %v1168, 0.0
      %v1388 = vmax.f32 %v912, 0.0
      %v1389 = vmax.f32 %v1171, 0.0
      %v1390 = vmax.f32 %v914, 0.0
      %v1391 = vmax.f32 %v1173, 0.0
      %v1392 = vmax.f32 %v917, 0.0
      %v1393 = vmax.f32 %v1176, 0.0
      %v1394 = vmax.f32 %v919, 0.0
      %v1395 = vmax.f32 %v1178, 0.0
      %v1396 = vmax.f32 %v922, 0.0
      %v1397 = vmax.f32 %v1181, 0.0
      %v1398 = vmax.f32 %v924, 0.0
      %v1399 = vmax.f32 %v1183, 0.0
      %v1400 = vmax.f32 %v927, 0.0
      %v1401 = vmax.f32 %v1186, 0.0
      %v1402 = vmax.f32 %v929, 0.0
      %v1403 = vmax.f32 %v1188, 0.0
      %v1404 = vmax.f32 %v932, 0.0
      %v1405 = vmax.f32 %v1191, 0.0
      %v1406 = vmax.f32 %v934, 0.0
      %v1407 = vmax.f32 %v1193, 0.0
      %v1408 = vmax.f32 %v937, 0.0
      %v1409 = vmax.f32 %v1196, 0.0
      %v1410 = vmax.f32 %v939, 0.0
      %v1411 = vmax.f32 %v1198, 0.0
      %v1412 = vmax.f32 %v942, 0.0
      %v1413 = vmax.f32 %v1201, 0.0
      %v1414 = vmax.f32 %v944, 0.0
      %v1415 = vmax.f32 %v1203, 0.0
      %v1416 = vmax.f32 %v947, 0.0
      %v1417 = vmax.f32 %v1206, 0.0
      %v1418 = vmax.f32 %v949, 0.0
      %v1419 = vmax.f32 %v1208, 0.0
      %v1420 = vmax.f32 %v952, 0.0
      %v1421 = vmax.f32 %v1211, 0.0
      %v1422 = vmax.f32 %v954, 0.0
      %v1423 = vmax.f32 %v1213, 0.0
      %v1424 = vmax.f32 %v957, 0.0
      %v1425 = vmax.f32 %v1216, 0.0
      %v1426 = vmax.f32 %v959, 0.0
      %v1427 = vmax.f32 %v1218, 0.0
      %v1428 = vmax.f32 %v962, 0.0
      %v1429 = vmax.f32 %v1221, 0.0
      %v1430 = vmax.f32 %v964, 0.0
      %v1431 = vmax.f32 %v1223, 0.0
      %v1432 = vmax.f32 %v967, 0.0
      %v1433 = vmax.f32 %v1226, 0.0
      %v1434 = vmax.f32 %v969, 0.0
      %v1435 = vmax.f32 %v1228, 0.0
      %v1436 = vmax.f32 %v972, 0.0
      %v1437 = vmax.f32 %v1231, 0.0
      %v1438 = vmax.f32 %v974, 0.0
      %v1439 = vmax.f32 %v1233, 0.0
      %v1440 = vmax.f32 %v977, 0.0
      %v1441 = vmax.f32 %v1236, 0.0
      %v1442 = vmax.f32 %v979, 0.0
      %v1443 = vmax.f32 %v1238, 0.0
      %v1444 = vmax.f32 %v982, 0.0
      %v1445 = vmax.f32 %v1241, 0.0
      %v1446 = vmax.f32 %v984, 0.0
      %v1447 = vmax.f32 %v1243, 0.0
      %v1448 = vmax.f32 %v987, 0.0
      %v1449 = vmax.f32 %v1246, 0.0
      %v1450 = vmax.f32 %v989, 0.0
      %v1451 = vmax.f32 %v1248, 0.0
      %v1452 = vmax.f32 %v992, 0.0
      %v1453 = vmax.f32 %v1251, 0.0
      %v1454 = vmax.f32 %v994, 0.0
      %v1455 = vmax.f32 %v1253, 0.0
      %v1456 = vmax.f32 %v997, 0.0
      %v1457 = vmax.f32 %v1256, 0.0
      %v1458 = vmax.f32 %v999, 0.0
      %v1459 = vmax.f32 %v1258, 0.0
      %v1460 = vpack.c.bf16 %v1261, %v1260
      %v1461 = vpack.c.bf16 %v1263, %v1262
      %v1462 = vpack.c.bf16 %v1265, %v1264
      %v1463 = vpack.c.bf16 %v1267, %v1266
      %v1464 = vpack.c.bf16 %v1269, %v1268
      %v1465 = vpack.c.bf16 %v1271, %v1270
      %v1466 = vpack.c.bf16 %v1273, %v1272
      %v1467 = vpack.c.bf16 %v1275, %v1274
      %v1468 = vpack.c.bf16 %v1277, %v1276
      %v1469 = vpack.c.bf16 %v1279, %v1278
      %v1470 = vpack.c.bf16 %v1281, %v1280
      %v1471 = vpack.c.bf16 %v1283, %v1282
      %v1472 = vpack.c.bf16 %v1285, %v1284
      %v1473 = vpack.c.bf16 %v1287, %v1286
      %v1474 = vpack.c.bf16 %v1289, %v1288
      %v1475 = vpack.c.bf16 %v1291, %v1290
      %v1476 = vpack.c.bf16 %v1293, %v1292
      %v1477 = vpack.c.bf16 %v1295, %v1294
      %v1478 = vpack.c.bf16 %v1297, %v1296
      %v1479 = vpack.c.bf16 %v1299, %v1298
      %v1480 = vpack.c.bf16 %v1301, %v1300
      %v1481 = vpack.c.bf16 %v1303, %v1302
      %v1482 = vpack.c.bf16 %v1305, %v1304
      %v1483 = vpack.c.bf16 %v1307, %v1306
      %v1484 = vpack.c.bf16 %v1309, %v1308
      %v1485 = vpack.c.bf16 %v1311, %v1310
      %v1486 = vpack.c.bf16 %v1313, %v1312
      %v1487 = vpack.c.bf16 %v1315, %v1314
      %v1488 = vpack.c.bf16 %v1317, %v1316
      %v1489 = vpack.c.bf16 %v1319, %v1318
      %v1490 = vpack.c.bf16 %v1321, %v1320
      %v1491 = vpack.c.bf16 %v1323, %v1322
      %v1492 = vpack.c.bf16 %v1325, %v1324
      %v1493 = vpack.c.bf16 %v1327, %v1326
      %v1494 = vpack.c.bf16 %v1329, %v1328
      %v1495 = vpack.c.bf16 %v1331, %v1330
      %v1496 = vpack.c.bf16 %v1333, %v1332
      %v1497 = vpack.c.bf16 %v1335, %v1334
      %v1498 = vpack.c.bf16 %v1337, %v1336
      %v1499 = vpack.c.bf16 %v1339, %v1338
      %v1500 = vpack.c.bf16 %v1341, %v1340
      %v1501 = vpack.c.bf16 %v1343, %v1342
      %v1502 = vpack.c.bf16 %v1345, %v1344
      %v1503 = vpack.c.bf16 %v1347, %v1346
      %v1504 = vpack.c.bf16 %v1349, %v1348
      %v1505 = vpack.c.bf16 %v1351, %v1350
      %v1506 = vpack.c.bf16 %v1353, %v1352
      %v1507 = vpack.c.bf16 %v1355, %v1354
      %v1508 = vpack.c.bf16 %v1357, %v1356
      %v1509 = vpack.c.bf16 %v1359, %v1358
      %v1510 = vpack.c.bf16 %v1361, %v1360
      %v1511 = vpack.c.bf16 %v1363, %v1362
      %v1512 = vpack.c.bf16 %v1365, %v1364
      %v1513 = vpack.c.bf16 %v1367, %v1366
      %v1514 = vpack.c.bf16 %v1369, %v1368
      %v1515 = vpack.c.bf16 %v1371, %v1370
      %v1516 = vpack.c.bf16 %v1373, %v1372
      %v1517 = vpack.c.bf16 %v1375, %v1374
      %v1518 = vpack.c.bf16 %v1377, %v1376
      %v1519 = vpack.c.bf16 %v1379, %v1378
      %v1520 = vpack.c.bf16 %v1381, %v1380
      %v1521 = vpack.c.bf16 %v1383, %v1382
      %v1522 = vpack.c.bf16 %v1385, %v1384
      %v1523 = vpack.c.bf16 %v1387, %v1386
      %v1524 = vpack.c.bf16 %v1389, %v1388
      %v1525 = vpack.c.bf16 %v1391, %v1390
      %v1526 = vpack.c.bf16 %v1393, %v1392
      %v1527 = vpack.c.bf16 %v1395, %v1394
      %v1528 = vpack.c.bf16 %v1397, %v1396
      %v1529 = vpack.c.bf16 %v1399, %v1398
      %v1530 = vpack.c.bf16 %v1401, %v1400
      %v1531 = vpack.c.bf16 %v1403, %v1402
      %v1532 = vpack.c.bf16 %v1405, %v1404
      %v1533 = vpack.c.bf16 %v1407, %v1406
      %v1534 = vpack.c.bf16 %v1409, %v1408
      %v1535 = vpack.c.bf16 %v1411, %v1410
      %v1536 = vpack.c.bf16 %v1413, %v1412
      %v1537 = vpack.c.bf16 %v1415, %v1414
      %v1538 = vpack.c.bf16 %v1417, %v1416
      %v1539 = vpack.c.bf16 %v1419, %v1418
      %v1540 = vpack.c.bf16 %v1421, %v1420
      %v1541 = vpack.c.bf16 %v1423, %v1422
      %v1542 = vpack.c.bf16 %v1425, %v1424
      %v1543 = vpack.c.bf16 %v1427, %v1426
      %v1544 = vpack.c.bf16 %v1429, %v1428
      %v1545 = vpack.c.bf16 %v1431, %v1430
      %v1546 = vpack.c.bf16 %v1433, %v1432
      %v1547 = vpack.c.bf16 %v1435, %v1434
      %v1548 = vpack.c.bf16 %v1437, %v1436
      %v1549 = vpack.c.bf16 %v1439, %v1438
      %v1550 = vpack.c.bf16 %v1441, %v1440
      %v1551 = vpack.c.bf16 %v1443, %v1442
      %v1552 = vpack.c.bf16 %v1445, %v1444
      %v1553 = vpack.c.bf16 %v1447, %v1446
      %v1554 = vpack.c.bf16 %v1449, %v1448
      %v1555 = vpack.c.bf16 %v1451, %v1450
      %v1556 = vpack.c.bf16 %v1453, %v1452
      %v1557 = vpack.c.bf16 %v1455, %v1454
      %v1558 = vpack.c.bf16 %v1457, %v1456
      %v1559 = vpack.c.bf16 %v1459, %v1458
      %1560 = vst [vmem:[%s237] sm:$0xff] %v1460
      %1561 = vst [vmem:[%s237 + $0x8] sm:$0xff] %v1461
      %1562 = vst [vmem:[%s237 + $0x10] sm:$0xff] %v1462
      %1563 = vst [vmem:[%s237 + $0x18] sm:$0xff] %v1463
      %1564 = vst [vmem:[%s237 + $0x20] sm:$0xff] %v1464
      %1565 = vst [vmem:[%s237 + $0x28] sm:$0xff] %v1465
      %1566 = vst [vmem:[%s237 + $0x30] sm:$0xff] %v1466
      %1567 = vst [vmem:[%s237 + $0x38] sm:$0xff] %v1467
      %1568 = vst [vmem:[%s237 + $0x40] sm:$0xff] %v1468
      %1569 = vst [vmem:[%s237 + $0x48] sm:$0xff] %v1469
      %1570 = vst [vmem:[%s237 + $0x50] sm:$0xff] %v1470
      %1571 = vst [vmem:[%s237 + $0x58] sm:$0xff] %v1471
      %1572 = vst [vmem:[%s237 + $0x60] sm:$0xff] %v1472
      %1573 = vst [vmem:[%s237 + $0x68] sm:$0xff] %v1473
      %1574 = vst [vmem:[%s237 + $0x70] sm:$0xff] %v1474
      %1575 = vst [vmem:[%s237 + $0x78] sm:$0xff] %v1475
      %1576 = vst [vmem:[%s237 + $0x80] sm:$0xff] %v1476
      %1577 = vst [vmem:[%s237 + $0x88] sm:$0xff] %v1477
      %1578 = vst [vmem:[%s237 + $0x90] sm:$0xff] %v1478
      %1579 = vst [vmem:[%s237 + $0x98] sm:$0xff] %v1479
      %1580 = vst [vmem:[%s237 + $0xa0] sm:$0xff] %v1480
      %1581 = vst [vmem:[%s237 + $0xa8] sm:$0xff] %v1481
      %1582 = vst [vmem:[%s237 + $0xb0] sm:$0xff] %v1482
      %1583 = vst [vmem:[%s237 + $0xb8] sm:$0xff] %v1483
      %1584 = vst [vmem:[%s237 + $0xc0] sm:$0xff] %v1484
      %1585 = vst [vmem:[%s237 + $0xc8] sm:$0xff] %v1485
      %1586 = vst [vmem:[%s237 + $0xd0] sm:$0xff] %v1486
      %1587 = vst [vmem:[%s237 + $0xd8] sm:$0xff] %v1487
      %1588 = vst [vmem:[%s237 + $0xe0] sm:$0xff] %v1488
      %1589 = vst [vmem:[%s237 + $0xe8] sm:$0xff] %v1489
      %1590 = vst [vmem:[%s237 + $0xf0] sm:$0xff] %v1490
      %1591 = vst [vmem:[%s237 + $0xf8] sm:$0xff] %v1491
      %1592 = vst [vmem:[%s237 + $0x100] sm:$0xff] %v1492
      %1593 = vst [vmem:[%s237 + $0x108] sm:$0xff] %v1493
      %1594 = vst [vmem:[%s237 + $0x110] sm:$0xff] %v1494
      %1595 = vst [vmem:[%s237 + $0x118] sm:$0xff] %v1495
      %1596 = vst [vmem:[%s237 + $0x120] sm:$0xff] %v1496
      %1597 = vst [vmem:[%s237 + $0x128] sm:$0xff] %v1497
      %1598 = vst [vmem:[%s237 + $0x130] sm:$0xff] %v1498
      %1599 = vst [vmem:[%s237 + $0x138] sm:$0xff] %v1499
      %1600 = vst [vmem:[%s237 + $0x140] sm:$0xff] %v1500
      %1601 = vst [vmem:[%s237 + $0x148] sm:$0xff] %v1501
      %1602 = vst [vmem:[%s237 + $0x150] sm:$0xff] %v1502
      %1603 = vst [vmem:[%s237 + $0x158] sm:$0xff] %v1503
      %1604 = vst [vmem:[%s237 + $0x160] sm:$0xff] %v1504
      %1605 = vst [vmem:[%s237 + $0x168] sm:$0xff] %v1505
      %1606 = vst [vmem:[%s237 + $0x170] sm:$0xff] %v1506
      %1607 = vst [vmem:[%s237 + $0x178] sm:$0xff] %v1507
      %1608 = vst [vmem:[%s237 + $0x180] sm:$0xff] %v1508
      %1609 = vst [vmem:[%s237 + $0x188] sm:$0xff] %v1509
      %1610 = vst [vmem:[%s237 + $0x190] sm:$0xff] %v1510
      %1611 = vst [vmem:[%s237 + $0x198] sm:$0xff] %v1511
      %1612 = vst [vmem:[%s237 + $0x1a0] sm:$0xff] %v1512
      %1613 = vst [vmem:[%s237 + $0x1a8] sm:$0xff] %v1513
      %1614 = vst [vmem:[%s237 + $0x1b0] sm:$0xff] %v1514
      %1615 = vst [vmem:[%s237 + $0x1b8] sm:$0xff] %v1515
      %1616 = vst [vmem:[%s237 + $0x1c0] sm:$0xff] %v1516
      %1617 = vst [vmem:[%s237 + $0x1c8] sm:$0xff] %v1517
      %1618 = vst [vmem:[%s237 + $0x1d0] sm:$0xff] %v1518
      %1619 = vst [vmem:[%s237 + $0x1d8] sm:$0xff] %v1519
      %1620 = vst [vmem:[%s237 + $0x1e0] sm:$0xff] %v1520
      %1621 = vst [vmem:[%s237 + $0x1e8] sm:$0xff] %v1521
      %1622 = vst [vmem:[%s237 + $0x1f0] sm:$0xff] %v1522
      %1623 = vst [vmem:[%s237 + $0x1f8] sm:$0xff] %v1523
      %1624 = vst [vmem:[%s237 + $0x200] sm:$0xff] %v1524
      %1625 = vst [vmem:[%s237 + $0x208] sm:$0xff] %v1525
      %1626 = vst [vmem:[%s237 + $0x210] sm:$0xff] %v1526
      %1627 = vst [vmem:[%s237 + $0x218] sm:$0xff] %v1527
      %1628 = vst [vmem:[%s237 + $0x220] sm:$0xff] %v1528
      %1629 = vst [vmem:[%s237 + $0x228] sm:$0xff] %v1529
      %1630 = vst [vmem:[%s237 + $0x230] sm:$0xff] %v1530
      %1631 = vst [vmem:[%s237 + $0x238] sm:$0xff] %v1531
      %1632 = vst [vmem:[%s237 + $0x240] sm:$0xff] %v1532
      %1633 = vst [vmem:[%s237 + $0x248] sm:$0xff] %v1533
      %1634 = vst [vmem:[%s237 + $0x250] sm:$0xff] %v1534
      %1635 = vst [vmem:[%s237 + $0x258] sm:$0xff] %v1535
      %1636 = vst [vmem:[%s237 + $0x260] sm:$0xff] %v1536
      %1637 = vst [vmem:[%s237 + $0x268] sm:$0xff] %v1537
      %1638 = vst [vmem:[%s237 + $0x270] sm:$0xff] %v1538
      %1639 = vst [vmem:[%s237 + $0x278] sm:$0xff] %v1539
      %1640 = vst [vmem:[%s237 + $0x280] sm:$0xff] %v1540
      %1641 = vst [vmem:[%s237 + $0x288] sm:$0xff] %v1541
      %1642 = vst [vmem:[%s237 + $0x290] sm:$0xff] %v1542
      %1643 = vst [vmem:[%s237 + $0x298] sm:$0xff] %v1543
      %1644 = vst [vmem:[%s237 + $0x2a0] sm:$0xff] %v1544
      %1645 = vst [vmem:[%s237 + $0x2a8] sm:$0xff] %v1545
      %1646 = vst [vmem:[%s237 + $0x2b0] sm:$0xff] %v1546
      %1647 = vst [vmem:[%s237 + $0x2b8] sm:$0xff] %v1547
      %1648 = vst [vmem:[%s237 + $0x2c0] sm:$0xff] %v1548
      %1649 = vst [vmem:[%s237 + $0x2c8] sm:$0xff] %v1549
      %1650 = vst [vmem:[%s237 + $0x2d0] sm:$0xff] %v1550
      %1651 = vst [vmem:[%s237 + $0x2d8] sm:$0xff] %v1551
      %1652 = vst [vmem:[%s237 + $0x2e0] sm:$0xff] %v1552
      %1653 = vst [vmem:[%s237 + $0x2e8] sm:$0xff] %v1553
      %1654 = vst [vmem:[%s237 + $0x2f0] sm:$0xff] %v1554
      %1655 = vst [vmem:[%s237 + $0x2f8] sm:$0xff] %v1555
      %1656 = vst [vmem:[%s237 + $0x300] sm:$0xff] %v1556
      %1657 = vst [vmem:[%s237 + $0x308] sm:$0xff] %v1557
      %1658 = vst [vmem:[%s237 + $0x310] sm:$0xff] %v1558
      %1659 = vst [vmem:[%s237 + $0x318] sm:$0xff] %v1559
      %s1660 = smul.u32 100, %s18
      %s1661 = smul.u32 2, %s19
      %p1662 = scmp.lt.s32.totalorder %s1660, 399
      %s1663 = scalar_select %p1662, %s1660, 399
      %p1664 = scmp.lt.s32.totalorder %s1661, 1
      %s1665 = scalar_select %p1664, %s1661, 1
      %s1666 = smul.addr %s1663, 2
      %s1667 = sadd.s32 %s1665, %s1666
      %s1668 = smul.addr %s1667, 4
      %s1669 = scalar_lea.vmem %s3, %s1668
      // Predicated region
      $region33: #{conv_decoder_forward.12} parent=31 // pred_check
        %p1670 = pneg %p124
      $region34: #{conv_decoder_forward.12} parent=31 // pred_check_branch
        %1672 = sbr.rel (%p1670) target = $region36
      $region35: #{conv_decoder_forward.12} parent=31 // pred_region
        %s1673 = smul.u32 100, %s18
        %s1674 = smul.u32 2, %s19
      $region36: #{conv_decoder_forward.12} parent=31 // pred_fallthru
        _
    $region32: #{conv_decoder_forward.12} parent=5 // pred_fallthru
      _
    %p1675 = scmp.le.s32.totalorder 2, %s9
    // Predicated region
    $region37: #{conv_decoder_forward.12} parent=5 // pred_check
      %p1676 = pneg %p1675
    $region38: #{conv_decoder_forward.12} parent=5 // pred_check_branch
      %1678 = sbr.rel (%p1676) target = $region40
    $region39: #{conv_decoder_forward.12} parent=5 // pred_region
      %s1679 = ssub.s32 %s9, 2
      // Predicated region
      $region41: #{conv_decoder_forward.12} parent=39 // pred_check
        %p1680 = pneg %p130
      $region42: #{conv_decoder_forward.12} parent=39 // pred_check_branch
        %1682 = sbr.rel (%p1680) target = $region44
      $region43: #{conv_decoder_forward.12} parent=39 // pred_region
        %s1683 = smul.u32 100, %s20
        %s1684 = smul.u32 2, %s21
        %p1685 = scmp.lt.s32.totalorder %s1683, 399
        %s1686 = scalar_select %p1685, %s1683, 399
        %p1687 = scmp.lt.s32.totalorder %s1684, 1
        %s1688 = scalar_select %p1687, %s1684, 1
        %s1689 = smul.addr %s1686, 2
        %s1690 = sadd.s32 %s1688, %s1689
        %s1691 = smul.addr %s1690, 4
        %s1692 = scalar_lea.vmem %s3, %s1691
      $region44: #{conv_decoder_forward.12} parent=39 // pred_fallthru
        _
    $region40: #{conv_decoder_forward.12} parent=5 // pred_fallthru
      _
  $region6: #{conv_decoder_forward.12} parent=0 // loop_footer
    %s13 = sadd.s32 1, %s9
  $region7: #{conv_decoder_forward.12} parent=0 // loop_footer_branch
    %8 = sbr.rel target = $region3
  $region8: #{conv_decoder_forward.12} parent=0 // loop_exit
    _

// kernel: conv_decoder_forward.13
$region0: #{conv_decoder_forward.13}
  #allocation0 [shape = 'u32[]', space=smem, size = 0x4, offset = 0x4, fixed_abs, tag = 'smem constant byte address 0x4 - core index']
  #allocation1 [shape = 'u32[72,128]{1,0:T(1,128)}', space=vmem, size = 0x9000, scoped, tag = 'internal scratch']
  %s0 = inlined_call_operand.vmem [shape: bf16[12800,64], index: 0, kind: input, shape index: {}]
  %s1 = inlined_call_operand.vmem [shape: bf16[64,128], index: 1, kind: input, shape index: {}]
  %s2 = inlined_call_operand.vmem [shape: f32[1,128], index: 2, kind: input, shape index: {}]
  %s3 = inlined_call_operand.vmem [shape: f32[12800,128], index: 3, kind: output, shape index: {}]
  %s4 = sld [smem:[#allocation0]]
  $region45: #{conv_decoder_forward.13} parent=0
    _
  %s6 = ssub.s32 1, %s4
  %s7 = scalar_select 0, %s6, %s4
  loop: start=0, step=1, limit=18
  $region2: #{conv_decoder_forward.13} parent=0 // loop_pre_header
    _
  $region3: #{conv_decoder_forward.13} parent=0 // loop_header
    %s9 = sphi 0, %s13
    %p10 = scmp.ge.s32.totalorder %s9, 18
    %s16 = sphi 0, %s28
    %s17 = sphi 0, %s24
    %s18 = sphi 0, %s16
    %s19 = sphi 0, %s17
    %s20 = sphi 0, %s18
    %s21 = sphi 0, %s19
    %s31 = sphi 0, %s33
    %s34 = sphi 0, %s31
    %s35 = sphi 0, %s34
    %s51 = sphi 0, %s35
    %s57 = sphi 0, %s59
    %s60 = sphi 0, %s57
    %s61 = sphi 0, %s60
    %s77 = sphi 0, %s61
    %s83 = sphi 0, %s85
    %s86 = sphi 0, %s83
    %s87 = sphi 0, %s86
    %s103 = sphi 0, %s87
    %s111 = sphi 0, %s113
    %s114 = sphi 0, %s111
    %s115 = sphi 0, %s114
    %s131 = sphi 0, %s115
  $region4: #{conv_decoder_forward.13} parent=0 // loop_header_branch
    %12 = sbr.rel (%p10) target = $region8
  $region5: #{conv_decoder_forward.13} parent=0 // loop_body
    %s14 = ssub.s32 %s9, 1
    %s15 = ssub.s32 %s9, 2
    %s22 = sadd.s32 1, %s17
    %p23 = scmp.ge.s32.totalorder %s22, 1
    %s24 = scalar_select %p23, 0, %s22
    %s25 = sadd.s32 1, %s16
    %s26 = scalar_select %p23, %s25, %s16
    %p27 = scmp.ge.s32.totalorder %s26, 16
    %s28 = scalar_select %p27, 0, %s26
    %s29 = ssub.s32 %s16, %s28
    %p30 = scmp.eq.s32.totalorder %s29, 0
    %s32 = sadd.s32 %s31, 1
    %s33 = scalar_select %p30, %s31, %s32
    %p36 = pneg %p30
    %p37 = scmp.eq.s32.totalorder %s9, 15
    %p38 = por %p36, %p37
    %p39 = scmp.ne.s32.totalorder %s31, %s34
    %p40 = scmp.eq.s32.totalorder %s9, 0
    %p41 = por %p39, %p40
    %p42 = scmp.ne.s32.totalorder %s31, %s34
    %p43 = scmp.eq.s32.totalorder %s14, 15
    %p44 = por %p42, %p43
    %p45 = scmp.ne.s32.totalorder %s34, %s35
    %p46 = scmp.eq.s32.totalorder %s14, 0
    %p47 = por %p45, %p46
    %p48 = scmp.ne.s32.totalorder %s34, %s35
    %p49 = scmp.eq.s32.totalorder %s15, 15
    %p50 = por %p48, %p49
    %p52 = scmp.ne.s32.totalorder %s35, %s51
    %p53 = scmp.eq.s32.totalorder %s15, 0
    %p54 = por %p52, %p53
    %s55 = ssub.s32 %s17, %s24
    %p56 = scmp.eq.s32.totalorder %s55, 0
    %s58 = sadd.s32 %s57, 1
    %s59 = scalar_select %p56, %s57, %s58
    %p62 = pneg %p56
    %p63 = scmp.eq.s32.totalorder %s9, 15
    %p64 = por %p62, %p63
    %p65 = scmp.ne.s32.totalorder %s57, %s60
    %p66 = scmp.eq.s32.totalorder %s9, 0
    %p67 = por %p65, %p66
    %p68 = scmp.ne.s32.totalorder %s57, %s60
    %p69 = scmp.eq.s32.totalorder %s14, 15
    %p70 = por %p68, %p69
    %p71 = scmp.ne.s32.totalorder %s60, %s61
    %p72 = scmp.eq.s32.totalorder %s14, 0
    %p73 = por %p71, %p72
    %p74 = scmp.ne.s32.totalorder %s60, %s61
    %p75 = scmp.eq.s32.totalorder %s15, 15
    %p76 = por %p74, %p75
    %p78 = scmp.ne.s32.totalorder %s61, %s77
    %p79 = scmp.eq.s32.totalorder %s15, 0
    %p80 = por %p78, %p79
    %s81 = ssub.s32 %s17, %s24
    %p82 = scmp.eq.s32.totalorder %s81, 0
    %s84 = sadd.s32 %s83, 1
    %s85 = scalar_select %p82, %s83, %s84
    %p88 = pneg %p82
    %p89 = scmp.eq.s32.totalorder %s9, 15
    %p90 = por %p88, %p89
    %p91 = scmp.ne.s32.totalorder %s83, %s86
    %p92 = scmp.eq.s32.totalorder %s9, 0
    %p93 = por %p91, %p92
    %p94 = scmp.ne.s32.totalorder %s83, %s86
    %p95 = scmp.eq.s32.totalorder %s14, 15
    %p96 = por %p94, %p95
    %p97 = scmp.ne.s32.totalorder %s86, %s87
    %p98 = scmp.eq.s32.totalorder %s14, 0
    %p99 = por %p97, %p98
    %p100 = scmp.ne.s32.totalorder %s86, %s87
    %p101 = scmp.eq.s32.totalorder %s15, 15
    %p102 = por %p100, %p101
    %p104 = scmp.ne.s32.totalorder %s87, %s103
    %p105 = scmp.eq.s32.totalorder %s15, 0
    %p106 = por %p104, %p105
    %s107 = ssub.s32 %s16, %s28
    %s108 = ssub.s32 %s17, %s24
    %s109 = sor.u32 %s107, %s108
    %p110 = scmp.eq.s32.totalorder %s109, 0
    %s112 = sadd.s32 %s111, 1
    %s113 = scalar_select %p110, %s111, %s112
    %p116 = pneg %p110
    %p117 = scmp.eq.s32.totalorder %s9, 15
    %p118 = por %p116, %p117
    %p119 = scmp.ne.s32.totalorder %s111, %s114
    %p120 = scmp.eq.s32.totalorder %s9, 0
    %p121 = por %p119, %p120
    %p122 = scmp.ne.s32.totalorder %s111, %s114
    %p123 = scmp.eq.s32.totalorder %s14, 15
    %p124 = por %p122, %p123
    %p125 = scmp.ne.s32.totalorder %s114, %s115
    %p126 = scmp.eq.s32.totalorder %s14, 0
    %p127 = por %p125, %p126
    %p128 = scmp.ne.s32.totalorder %s114, %s115
    %p129 = scmp.eq.s32.totalorder %s15, 15
    %p130 = por %p128, %p129
    %p132 = scmp.ne.s32.totalorder %s115, %s131
    %p133 = scmp.eq.s32.totalorder %s15, 0
    %p134 = por %p132, %p133
    %p135 = scmp.le.s32.totalorder 1, %s9
    %p136 = scmp.lt.s32.totalorder %s9, 17
    %p137 = pnand %p135, %p136
    %p138 = pneg %p137
    // Predicated region
    $region9: #{conv_decoder_forward.13} parent=5 // pred_check
      _
    $region10: #{conv_decoder_forward.13} parent=5 // pred_check_branch
      %140 = sbr.rel (%p137) target = $region12
    $region11: #{conv_decoder_forward.13} parent=5 // pred_region
      %s141 = ssub.s32 %s9, 1
      // Predicated region
      $region13: #{conv_decoder_forward.13} parent=11 // pred_check
        %p142 = pneg %p73
      $region14: #{conv_decoder_forward.13} parent=11 // pred_check_branch
        %144 = sbr.rel (%p142) target = $region16
      $region15: #{conv_decoder_forward.13} parent=11 // pred_region
        %p145 = scmp.lt.s32.totalorder %s19, 0
        %s146 = scalar_select %p145, %s19, 0
        %s147 = smul.addr %s146, 4
        %s148 = scalar_lea.vmem %s1, %s147
      $region16: #{conv_decoder_forward.13} parent=11 // pred_fallthru
        _
      // Predicated region
      $region17: #{conv_decoder_forward.13} parent=11 // pred_check
        %p149 = pneg %p99
      $region18: #{conv_decoder_forward.13} parent=11 // pred_check_branch
        %151 = sbr.rel (%p149) target = $region20
      $region19: #{conv_decoder_forward.13} parent=11 // pred_region
        %p152 = scmp.lt.s32.totalorder %s19, 0
        %s153 = scalar_select %p152, %s19, 0
        %s154 = scalar_lea.vmem %s2, %s153
      $region20: #{conv_decoder_forward.13} parent=11 // pred_fallthru
        _
    $region12: #{conv_decoder_forward.13} parent=5 // pred_fallthru
      _
    %p155 = scmp.lt.s32.totalorder %s9, 16
    // Predicated region
    $region21: #{conv_decoder_forward.13} parent=5 // pred_check
      %p156 = pneg %p155
    $region22: #{conv_decoder_forward.13} parent=5 // pred_check_branch
      %158 = sbr.rel (%p156) target = $region24
    $region23: #{conv_decoder_forward.13} parent=5 // pred_region
      // Predicated region
      $region25: #{conv_decoder_forward.13} parent=23 // pred_check
        %p159 = pneg %p41
      $region26: #{conv_decoder_forward.13} parent=23 // pred_check_branch
        %161 = sbr.rel (%p159) target = $region28
      $region27: #{conv_decoder_forward.13} parent=23 // pred_region
        %s162 = smul.u32 100, %s16
        %p163 = scmp.lt.s32.totalorder %s162, 1599
        %s164 = scalar_select %p163, %s162, 1599
        %s165 = smul.addr %s164, 4
        %s166 = scalar_lea.vmem %s0, %s165
        %s167 = smul.u32 100, %s16
      $region28: #{conv_decoder_forward.13} parent=23 // pred_fallthru
        _
    $region24: #{conv_decoder_forward.13} parent=5 // pred_fallthru
      _
    %p168 = scmp.le.s32.totalorder 1, %s9
    %p169 = scmp.lt.s32.totalorder %s9, 17
    %p170 = pnand %p168, %p169
    %p171 = pneg %p170
    // Predicated region
    $region29: #{conv_decoder_forward.13} parent=5 // pred_check
      _
    $region30: #{conv_decoder_forward.13} parent=5 // pred_check_branch
      %173 = sbr.rel (%p170) target = $region32
    $region31: #{conv_decoder_forward.13} parent=5 // pred_region
      %s174 = ssub.s32 %s9, 1
      %s175 = smul.u32 100, %s18
      %p176 = scmp.lt.s32.totalorder %s175, 1599
      %s177 = scalar_select %p176, %s175, 1599
      %s178 = smul.addr %s177, 4
      %s179 = scalar_lea.vmem %s0, %s178
      %p180 = pneg %p47
      %p181 = pneg %p44
      %p182 = scmp.lt.s32.totalorder %s19, 0
      %s183 = scalar_select %p182, %s19, 0
      %s184 = smul.addr %s183, 4
      %s185 = scalar_lea.vmem %s1, %s184
      %p186 = pneg %p73
      %p187 = pneg %p70
      %p188 = scmp.lt.s32.totalorder %s19, 0
      %s189 = scalar_select %p188, %s19, 0
      %s190 = scalar_lea.vmem %s2, %s189
      %p191 = pneg %p99
      %p192 = pneg %p96
      %p193 = pneg %p127
      %p194 = pneg %p124
      %s195 = smul.u32 100, %s18
      %p196 = scmp.lt.s32.totalorder %s195, 1599
      %s197 = scalar_select %p196, %s195, 1599
      %p198 = scmp.lt.s32.totalorder %s19, 0
      %s199 = scalar_select %p198, %s19, 0
      %s200 = sadd.s32 %s199, %s197
      %s201 = smul.addr %s200, 8
      %s202 = scalar_lea.vmem %s3, %s201
      %s203 = smul.u32 100, %s18
      %p204 = scmp.lt.s32.totalorder %s203, 1599
      %s205 = scalar_select %p204, %s203, 1599
      %s206 = smul.addr %s205, 4
      %s207 = scalar_lea.vmem %s0, %s206
      %s208 = smul.u32 100, %s18
      %p209 = scmp.lt.s32.totalorder %s19, 0
      %s210 = scalar_select %p209, %s19, 0
      %s211 = smul.addr %s210, 4
      %s212 = scalar_lea.vmem %s1, %s211
      %p213 = scmp.lt.s32.totalorder %s19, 0
      %s214 = scalar_select %p213, %s19, 0
      %s215 = scalar_lea.vmem %s2, %s214
      %s216 = smul.u32 100, %s18
      %p217 = scmp.lt.s32.totalorder %s216, 1599
      %s218 = scalar_select %p217, %s216, 1599
      %p219 = scmp.lt.s32.totalorder %s19, 0
      %s220 = scalar_select %p219, %s19, 0
      %s221 = sadd.s32 %s220, %s218
      %s222 = smul.addr %s221, 8
      %s223 = scalar_lea.vmem %s3, %s222
      %s224 = smul.u32 100, %s18
      %v226 = vld [vmem:[%s207] sm:$0xf]
      %v227 = vld [vmem:[%s207 + $0x4] sm:$0xf]
      %v228 = vld [vmem:[%s207 + $0x8] sm:$0xf]
      %v229 = vld [vmem:[%s207 + $0xc] sm:$0xf]
      %v230 = vld [vmem:[%s207 + $0x10] sm:$0xf]
      %v231 = vld [vmem:[%s207 + $0x14] sm:$0xf]
      %v232 = vld [vmem:[%s207 + $0x18] sm:$0xf]
      %v233 = vld [vmem:[%s207 + $0x1c] sm:$0xf]
      %v234 = vld [vmem:[%s207 + $0x20] sm:$0xf]
      %v235 = vld [vmem:[%s207 + $0x24] sm:$0xf]
      %v236 = vld [vmem:[%s207 + $0x28] sm:$0xf]
      %v237 = vld [vmem:[%s207 + $0x2c] sm:$0xf]
      %v238 = vld [vmem:[%s207 + $0x30] sm:$0xf]
      %v239 = vld [vmem:[%s207 + $0x34] sm:$0xf]
      %v240 = vld [vmem:[%s207 + $0x38] sm:$0xf]
      %v241 = vld [vmem:[%s207 + $0x3c] sm:$0xf]
      %v242 = vld [vmem:[%s207 + $0x40] sm:$0xf]
      %v243 = vld [vmem:[%s207 + $0x44] sm:$0xf]
      %v244 = vld [vmem:[%s207 + $0x48] sm:$0xf]
      %v245 = vld [vmem:[%s207 + $0x4c] sm:$0xf]
      %v246 = vld [vmem:[%s207 + $0x50] sm:$0xf]
      %v247 = vld [vmem:[%s207 + $0x54] sm:$0xf]
      %v248 = vld [vmem:[%s207 + $0x58] sm:$0xf]
      %v249 = vld [vmem:[%s207 + $0x5c] sm:$0xf]
      %v250 = vld [vmem:[%s207 + $0x60] sm:$0xf]
      %v251 = vld [vmem:[%s207 + $0x64] sm:$0xf]
      %v252 = vld [vmem:[%s207 + $0x68] sm:$0xf]
      %v253 = vld [vmem:[%s207 + $0x6c] sm:$0xf]
      %v254 = vld [vmem:[%s207 + $0x70] sm:$0xf]
      %v255 = vld [vmem:[%s207 + $0x74] sm:$0xf]
      %v256 = vld [vmem:[%s207 + $0x78] sm:$0xf]
      %v257 = vld [vmem:[%s207 + $0x7c] sm:$0xf]
      %v258 = vld [vmem:[%s207 + $0x80] sm:$0xf]
      %v259 = vld [vmem:[%s207 + $0x84] sm:$0xf]
      %v260 = vld [vmem:[%s207 + $0x88] sm:$0xf]
      %v261 = vld [vmem:[%s207 + $0x8c] sm:$0xf]
      %v262 = vld [vmem:[%s207 + $0x90] sm:$0xf]
      %v263 = vld [vmem:[%s207 + $0x94] sm:$0xf]
      %v264 = vld [vmem:[%s207 + $0x98] sm:$0xf]
      %v265 = vld [vmem:[%s207 + $0x9c] sm:$0xf]
      %v266 = vld [vmem:[%s207 + $0xa0] sm:$0xf]
      %v267 = vld [vmem:[%s207 + $0xa4] sm:$0xf]
      %v268 = vld [vmem:[%s207 + $0xa8] sm:$0xf]
      %v269 = vld [vmem:[%s207 + $0xac] sm:$0xf]
      %v270 = vld [vmem:[%s207 + $0xb0] sm:$0xf]
      %v271 = vld [vmem:[%s207 + $0xb4] sm:$0xf]
      %v272 = vld [vmem:[%s207 + $0xb8] sm:$0xf]
      %v273 = vld [vmem:[%s207 + $0xbc] sm:$0xf]
      %v274 = vld [vmem:[%s207 + $0xc0] sm:$0xf]
      %v275 = vld [vmem:[%s207 + $0xc4] sm:$0xf]
      %v276 = vld [vmem:[%s207 + $0xc8] sm:$0xf]
      %v277 = vld [vmem:[%s207 + $0xcc] sm:$0xf]
      %v278 = vld [vmem:[%s207 + $0xd0] sm:$0xf]
      %v279 = vld [vmem:[%s207 + $0xd4] sm:$0xf]
      %v280 = vld [vmem:[%s207 + $0xd8] sm:$0xf]
      %v281 = vld [vmem:[%s207 + $0xdc] sm:$0xf]
      %v282 = vld [vmem:[%s207 + $0xe0] sm:$0xf]
      %v283 = vld [vmem:[%s207 + $0xe4] sm:$0xf]
      %v284 = vld [vmem:[%s207 + $0xe8] sm:$0xf]
      %v285 = vld [vmem:[%s207 + $0xec] sm:$0xf]
      %v286 = vld [vmem:[%s207 + $0xf0] sm:$0xf]
      %v287 = vld [vmem:[%s207 + $0xf4] sm:$0xf]
      %v288 = vld [vmem:[%s207 + $0xf8] sm:$0xf]
      %v289 = vld [vmem:[%s207 + $0xfc] sm:$0xf]
      %v290 = vld [vmem:[%s207 + $0x100] sm:$0xf]
      %v291 = vld [vmem:[%s207 + $0x104] sm:$0xf]
      %v292 = vld [vmem:[%s207 + $0x108] sm:$0xf]
      %v293 = vld [vmem:[%s207 + $0x10c] sm:$0xf]
      %v294 = vld [vmem:[%s207 + $0x110] sm:$0xf]
      %v295 = vld [vmem:[%s207 + $0x114] sm:$0xf]
      %v296 = vld [vmem:[%s207 + $0x118] sm:$0xf]
      %v297 = vld [vmem:[%s207 + $0x11c] sm:$0xf]
      %v298 = vld [vmem:[%s207 + $0x120] sm:$0xf]
      %v299 = vld [vmem:[%s207 + $0x124] sm:$0xf]
      %v300 = vld [vmem:[%s207 + $0x128] sm:$0xf]
      %v301 = vld [vmem:[%s207 + $0x12c] sm:$0xf]
      %v302 = vld [vmem:[%s207 + $0x130] sm:$0xf]
      %v303 = vld [vmem:[%s207 + $0x134] sm:$0xf]
      %v304 = vld [vmem:[%s207 + $0x138] sm:$0xf]
      %v305 = vld [vmem:[%s207 + $0x13c] sm:$0xf]
      %v306 = vld [vmem:[%s207 + $0x140] sm:$0xf]
      %v307 = vld [vmem:[%s207 + $0x144] sm:$0xf]
      %v308 = vld [vmem:[%s207 + $0x148] sm:$0xf]
      %v309 = vld [vmem:[%s207 + $0x14c] sm:$0xf]
      %v310 = vld [vmem:[%s207 + $0x150] sm:$0xf]
      %v311 = vld [vmem:[%s207 + $0x154] sm:$0xf]
      %v312 = vld [vmem:[%s207 + $0x158] sm:$0xf]
      %v313 = vld [vmem:[%s207 + $0x15c] sm:$0xf]
      %v314 = vld [vmem:[%s207 + $0x160] sm:$0xf]
      %v315 = vld [vmem:[%s207 + $0x164] sm:$0xf]
      %v316 = vld [vmem:[%s207 + $0x168] sm:$0xf]
      %v317 = vld [vmem:[%s207 + $0x16c] sm:$0xf]
      %v318 = vld [vmem:[%s207 + $0x170] sm:$0xf]
      %v319 = vld [vmem:[%s207 + $0x174] sm:$0xf]
      %v320 = vld [vmem:[%s207 + $0x178] sm:$0xf]
      %v321 = vld [vmem:[%s207 + $0x17c] sm:$0xf]
      %v322 = vld [vmem:[%s207 + $0x180] sm:$0xf]
      %v323 = vld [vmem:[%s207 + $0x184] sm:$0xf]
      %v324 = vld [vmem:[%s207 + $0x188] sm:$0xf]
      %v325 = vld [vmem:[%s207 + $0x18c] sm:$0xf]
      %v326 = vld [vmem:[%s212] sm:$0xf]
      %v327 = vld [vmem:[%s212 + $0x4] sm:$0xf]
      %v328 = vld [vmem:[%s212 + $0x8] sm:$0xf]
      %v329 = vld [vmem:[%s212 + $0xc] sm:$0xf]
      %v330 = vld [vmem:[%s212 + $0x10] sm:$0xf]
      %v331 = vld [vmem:[%s212 + $0x14] sm:$0xf]
      %v332 = vld [vmem:[%s212 + $0x18] sm:$0xf]
      %v333 = vld [vmem:[%s212 + $0x1c] sm:$0xf]
      %v334 = vld [vmem:[%s215] sm:$0x1]
      %v336 = vperm.slane %v334, 0
      %v438 = vunpack.c.l.b16 %v226
      %v439 = vunpack.c.l.b16 %v227
      %v440 = vunpack.c.l.b16 %v228
      %v441 = vunpack.c.l.b16 %v229
      %v442 = vunpack.c.l.b16 %v230
      %v443 = vunpack.c.l.b16 %v231
      %v444 = vunpack.c.l.b16 %v232
      %v445 = vunpack.c.l.b16 %v233
      %v446 = vunpack.c.l.b16 %v234
      %v447 = vunpack.c.l.b16 %v235
      %v448 = vunpack.c.l.b16 %v236
      %v449 = vunpack.c.l.b16 %v237
      %v450 = vunpack.c.l.b16 %v238
      %v451 = vunpack.c.l.b16 %v239
      %v452 = vunpack.c.l.b16 %v240
      %v453 = vunpack.c.l.b16 %v241
      %v454 = vunpack.c.l.b16 %v242
      %v455 = vunpack.c.l.b16 %v243
      %v456 = vunpack.c.l.b16 %v244
      %v457 = vunpack.c.l.b16 %v245
      %v458 = vunpack.c.l.b16 %v246
      %v459 = vunpack.c.l.b16 %v247
      %v460 = vunpack.c.l.b16 %v248
      %v461 = vunpack.c.l.b16 %v249
      %v462 = vunpack.c.l.b16 %v250
      %v463 = vunpack.c.l.b16 %v251
      %v464 = vunpack.c.l.b16 %v252
      %v465 = vunpack.c.l.b16 %v253
      %v466 = vunpack.c.l.b16 %v254
      %v467 = vunpack.c.l.b16 %v255
      %v468 = vunpack.c.l.b16 %v256
      %v469 = vunpack.c.l.b16 %v257
      %v470 = vunpack.c.l.b16 %v258
      %v471 = vunpack.c.l.b16 %v259
      %v472 = vunpack.c.l.b16 %v260
      %v473 = vunpack.c.l.b16 %v261
      %v474 = vunpack.c.l.b16 %v262
      %v475 = vunpack.c.l.b16 %v263
      %v476 = vunpack.c.l.b16 %v264
      %v477 = vunpack.c.l.b16 %v265
      %v478 = vunpack.c.l.b16 %v266
      %v479 = vunpack.c.l.b16 %v267
      %v480 = vunpack.c.l.b16 %v268
      %v481 = vunpack.c.l.b16 %v269
      %v482 = vunpack.c.l.b16 %v270
      %v483 = vunpack.c.l.b16 %v271
      %v484 = vunpack.c.l.b16 %v272
      %v485 = vunpack.c.l.b16 %v273
      %v486 = vunpack.c.l.b16 %v274
      %v487 = vunpack.c.l.b16 %v275
      %v488 = vunpack.c.l.b16 %v276
      %v489 = vunpack.c.l.b16 %v277
      %v490 = vunpack.c.l.b16 %v278
      %v491 = vunpack.c.l.b16 %v279
      %v492 = vunpack.c.l.b16 %v280
      %v493 = vunpack.c.l.b16 %v281
      %v494 = vunpack.c.l.b16 %v282
      %v495 = vunpack.c.l.b16 %v283
      %v496 = vunpack.c.l.b16 %v284
      %v497 = vunpack.c.l.b16 %v285
      %v498 = vunpack.c.l.b16 %v286
      %v499 = vunpack.c.l.b16 %v287
      %v500 = vunpack.c.l.b16 %v288
      %v501 = vunpack.c.l.b16 %v289
      %v502 = vunpack.c.l.b16 %v290
      %v503 = vunpack.c.l.b16 %v291
      %v504 = vunpack.c.l.b16 %v292
      %v505 = vunpack.c.l.b16 %v293
      %v506 = vunpack.c.l.b16 %v294
      %v507 = vunpack.c.l.b16 %v295
      %v508 = vunpack.c.l.b16 %v296
      %v509 = vunpack.c.l.b16 %v297
      %v510 = vunpack.c.l.b16 %v298
      %v511 = vunpack.c.l.b16 %v299
      %v512 = vunpack.c.l.b16 %v300
      %v513 = vunpack.c.l.b16 %v301
      %v514 = vunpack.c.l.b16 %v302
      %v515 = vunpack.c.l.b16 %v303
      %v516 = vunpack.c.l.b16 %v304
      %v517 = vunpack.c.l.b16 %v305
      %v518 = vunpack.c.l.b16 %v306
      %v519 = vunpack.c.l.b16 %v307
      %v520 = vunpack.c.l.b16 %v308
      %v521 = vunpack.c.l.b16 %v309
      %v522 = vunpack.c.l.b16 %v310
      %v523 = vunpack.c.l.b16 %v311
      %v524 = vunpack.c.l.b16 %v312
      %v525 = vunpack.c.l.b16 %v313
      %v526 = vunpack.c.l.b16 %v314
      %v527 = vunpack.c.l.b16 %v315
      %v528 = vunpack.c.l.b16 %v316
      %v529 = vunpack.c.l.b16 %v317
      %v530 = vunpack.c.l.b16 %v318
      %v531 = vunpack.c.l.b16 %v319
      %v532 = vunpack.c.l.b16 %v320
      %v533 = vunpack.c.l.b16 %v321
      %v534 = vunpack.c.l.b16 %v322
      %v535 = vunpack.c.l.b16 %v323
      %v536 = vunpack.c.l.b16 %v324
      %v537 = vunpack.c.l.b16 %v325
      %v538 = vpack.c.b16 %v439, %v438
      %v539 = vpack.c.b16 %v441, %v440
      %v540 = vpack.c.b16 %v443, %v442
      %v541 = vpack.c.b16 %v445, %v444
      %v542 = vpack.c.b16 %v447, %v446
      %v543 = vpack.c.b16 %v449, %v448
      %v544 = vpack.c.b16 %v451, %v450
      %v545 = vpack.c.b16 %v453, %v452
      %v546 = vpack.c.b16 %v455, %v454
      %v547 = vpack.c.b16 %v457, %v456
      %v548 = vpack.c.b16 %v459, %v458
      %v549 = vpack.c.b16 %v461, %v460
      %v550 = vpack.c.b16 %v463, %v462
      %v551 = vpack.c.b16 %v465, %v464
      %v552 = vpack.c.b16 %v467, %v466
      %v553 = vpack.c.b16 %v469, %v468
      %v554 = vpack.c.b16 %v471, %v470
      %v555 = vpack.c.b16 %v473, %v472
      %v556 = vpack.c.b16 %v475, %v474
      %v557 = vpack.c.b16 %v477, %v476
      %v558 = vpack.c.b16 %v479, %v478
      %v559 = vpack.c.b16 %v481, %v480
      %v560 = vpack.c.b16 %v483, %v482
      %v561 = vpack.c.b16 %v485, %v484
      %v562 = vpack.c.b16 %v487, %v486
      %v563 = vpack.c.b16 %v489, %v488
      %v564 = vpack.c.b16 %v491, %v490
      %v565 = vpack.c.b16 %v493, %v492
      %v566 = vpack.c.b16 %v495, %v494
      %v567 = vpack.c.b16 %v497, %v496
      %v568 = vpack.c.b16 %v499, %v498
      %v569 = vpack.c.b16 %v501, %v500
      %v570 = vpack.c.b16 %v503, %v502
      %v571 = vpack.c.b16 %v505, %v504
      %v572 = vpack.c.b16 %v507, %v506
      %v573 = vpack.c.b16 %v509, %v508
      %v574 = vpack.c.b16 %v511, %v510
      %v575 = vpack.c.b16 %v513, %v512
      %v576 = vpack.c.b16 %v515, %v514
      %v577 = vpack.c.b16 %v517, %v516
      %v578 = vpack.c.b16 %v519, %v518
      %v579 = vpack.c.b16 %v521, %v520
      %v580 = vpack.c.b16 %v523, %v522
      %v581 = vpack.c.b16 %v525, %v524
      %v582 = vpack.c.b16 %v527, %v526
      %v583 = vpack.c.b16 %v529, %v528
      %v584 = vpack.c.b16 %v531, %v530
      %v585 = vpack.c.b16 %v533, %v532
      %v586 = vpack.c.b16 %v535, %v534
      %v587 = vpack.c.b16 %v537, %v536
      %v596 = vunpack.c.l.b16 %v326
      %v597 = vunpack.c.l.b16 %v327
      %v598 = vunpack.c.l.b16 %v328
      %v599 = vunpack.c.l.b16 %v329
      %v600 = vunpack.c.l.b16 %v330
      %v601 = vunpack.c.l.b16 %v331
      %v602 = vunpack.c.l.b16 %v332
      %v603 = vunpack.c.l.b16 %v333
      %v604 = vpack.c.b16 %v597, %v596
      %v605 = vpack.c.b16 %v599, %v598
      %v606 = vpack.c.b16 %v601, %v600
      %v607 = vpack.c.b16 %v603, %v602
      %vm612 = vcmask 523264
      %v614 = vsel %vm612, %v538, 0
      %v617 = vsel %vm612, %v539, 0
      %v620 = vsel %vm612, %v540, 0
      %v623 = vsel %vm612, %v541, 0
      %v626 = vsel %vm612, %v542, 0
      %v629 = vsel %vm612, %v543, 0
      %v632 = vsel %vm612, %v544, 0
      %v635 = vsel %vm612, %v545, 0
      %v638 = vsel %vm612, %v546, 0
      %v641 = vsel %vm612, %v547, 0
      %v644 = vsel %vm612, %v548, 0
      %v647 = vsel %vm612, %v549, 0
      %v650 = vsel %vm612, %v550, 0
      %v653 = vsel %vm612, %v551, 0
      %v656 = vsel %vm612, %v552, 0
      %v659 = vsel %vm612, %v553, 0
      %v662 = vsel %vm612, %v554, 0
      %v665 = vsel %vm612, %v555, 0
      %v668 = vsel %vm612, %v556, 0
      %v671 = vsel %vm612, %v557, 0
      %v674 = vsel %vm612, %v558, 0
      %v677 = vsel %vm612, %v559, 0
      %v680 = vsel %vm612, %v560, 0
      %v683 = vsel %vm612, %v561, 0
      %v686 = vsel %vm612, %v562, 0
      %v689 = vsel %vm612, %v563, 0
      %v692 = vsel %vm612, %v564, 0
      %v695 = vsel %vm612, %v565, 0
      %v698 = vsel %vm612, %v566, 0
      %v701 = vsel %vm612, %v567, 0
      %v704 = vsel %vm612, %v568, 0
      %v707 = vsel %vm612, %v569, 0
      %v710 = vsel %vm612, %v570, 0
      %v713 = vsel %vm612, %v571, 0
      %v716 = vsel %vm612, %v572, 0
      %v719 = vsel %vm612, %v573, 0
      %v722 = vsel %vm612, %v574, 0
      %v725 = vsel %vm612, %v575, 0
      %v728 = vsel %vm612, %v576, 0
      %v731 = vsel %vm612, %v577, 0
      %v734 = vsel %vm612, %v578, 0
      %v737 = vsel %vm612, %v579, 0
      %v740 = vsel %vm612, %v580, 0
      %v743 = vsel %vm612, %v581, 0
      %v746 = vsel %vm612, %v582, 0
      %v749 = vsel %vm612, %v583, 0
      %v752 = vsel %vm612, %v584, 0
      %v755 = vsel %vm612, %v585, 0
      %v758 = vsel %vm612, %v586, 0
      %v761 = vsel %vm612, %v587, 0
      %763 = vmatpush.bf16.msra.mxu0 0
      %764 = vmatpush.bf16.msra.mxu0 0
      %765 = vmatpush.bf16.msra.mxu0 0
      %766 = vmatpush.bf16.msra.mxu0 0
      %767 = vmatpush.bf16.msra.mxu0 %v607
      %768 = vmatpush.bf16.msra.mxu0 %v606
      %769 = vmatpush.bf16.msra.mxu0 %v605
      %770 = vmatpush.bf16.msra.mxu0 %v604
      %771 = vmatmul.bf16.gmra.mxu0 %v614
      %v772 = vpop.f32.mrf.mxu0
      %v773 = vadd.f32 %v336, %v772
      %v774 = vpop.f32.mrf.mxu0
      %v775 = vadd.f32 %v336, %v774
      %776 = vmatmul.bf16.gmra.mxu0 %v617
      %v777 = vpop.f32.mrf.mxu0
      %v778 = vadd.f32 %v336, %v777
      %v779 = vpop.f32.mrf.mxu0
      %v780 = vadd.f32 %v336, %v779
      %781 = vmatmul.bf16.gmra.mxu0 %v620
      %v782 = vpop.f32.mrf.mxu0
      %v783 = vadd.f32 %v336, %v782
      %v784 = vpop.f32.mrf.mxu0
      %v785 = vadd.f32 %v336, %v784
      %786 = vmatmul.bf16.gmra.mxu0 %v623
      %v787 = vpop.f32.mrf.mxu0
      %v788 = vadd.f32 %v336, %v787
      %v789 = vpop.f32.mrf.mxu0
      %v790 = vadd.f32 %v336, %v789
      %791 = vmatmul.bf16.gmra.mxu0 %v626
      %v792 = vpop.f32.mrf.mxu0
      %v793 = vadd.f32 %v336, %v792
      %v794 = vpop.f32.mrf.mxu0
      %v795 = vadd.f32 %v336, %v794
      %796 = vmatmul.bf16.gmra.mxu0 %v629
      %v797 = vpop.f32.mrf.mxu0
      %v798 = vadd.f32 %v336, %v797
      %v799 = vpop.f32.mrf.mxu0
      %v800 = vadd.f32 %v336, %v799
      %801 = vmatmul.bf16.gmra.mxu0 %v632
      %v802 = vpop.f32.mrf.mxu0
      %v803 = vadd.f32 %v336, %v802
      %v804 = vpop.f32.mrf.mxu0
      %v805 = vadd.f32 %v336, %v804
      %806 = vmatmul.bf16.gmra.mxu0 %v635
      %v807 = vpop.f32.mrf.mxu0
      %v808 = vadd.f32 %v336, %v807
      %v809 = vpop.f32.mrf.mxu0
      %v810 = vadd.f32 %v336, %v809
      %811 = vmatmul.bf16.gmra.mxu0 %v638
      %v812 = vpop.f32.mrf.mxu0
      %v813 = vadd.f32 %v336, %v812
      %v814 = vpop.f32.mrf.mxu0
      %v815 = vadd.f32 %v336, %v814
      %816 = vmatmul.bf16.gmra.mxu0 %v641
      %v817 = vpop.f32.mrf.mxu0
      %v818 = vadd.f32 %v336, %v817
      %v819 = vpop.f32.mrf.mxu0
      %v820 = vadd.f32 %v336, %v819
      %821 = vmatmul.bf16.gmra.mxu0 %v644
      %v822 = vpop.f32.mrf.mxu0
      %v823 = vadd.f32 %v336, %v822
      %v824 = vpop.f32.mrf.mxu0
      %v825 = vadd.f32 %v336, %v824
      %826 = vmatmul.bf16.gmra.mxu0 %v647
      %v827 = vpop.f32.mrf.mxu0
      %v828 = vadd.f32 %v336, %v827
      %v829 = vpop.f32.mrf.mxu0
      %v830 = vadd.f32 %v336, %v829
      %831 = vmatmul.bf16.gmra.mxu0 %v650
      %v832 = vpop.f32.mrf.mxu0
      %v833 = vadd.f32 %v336, %v832
      %v834 = vpop.f32.mrf.mxu0
      %v835 = vadd.f32 %v336, %v834
      %836 = vmatmul.bf16.gmra.mxu0 %v653
      %v837 = vpop.f32.mrf.mxu0
      %v838 = vadd.f32 %v336, %v837
      %v839 = vpop.f32.mrf.mxu0
      %v840 = vadd.f32 %v336, %v839
      %841 = vmatmul.bf16.gmra.mxu0 %v656
      %v842 = vpop.f32.mrf.mxu0
      %v843 = vadd.f32 %v336, %v842
      %v844 = vpop.f32.mrf.mxu0
      %v845 = vadd.f32 %v336, %v844
      %846 = vmatmul.bf16.gmra.mxu0 %v659
      %v847 = vpop.f32.mrf.mxu0
      %v848 = vadd.f32 %v336, %v847
      %v849 = vpop.f32.mrf.mxu0
      %v850 = vadd.f32 %v336, %v849
      %851 = vmatmul.bf16.gmra.mxu0 %v662
      %v852 = vpop.f32.mrf.mxu0
      %v853 = vadd.f32 %v336, %v852
      %v854 = vpop.f32.mrf.mxu0
      %v855 = vadd.f32 %v336, %v854
      %856 = vmatmul.bf16.gmra.mxu0 %v665
      %v857 = vpop.f32.mrf.mxu0
      %v858 = vadd.f32 %v336, %v857
      %v859 = vpop.f32.mrf.mxu0
      %v860 = vadd.f32 %v336, %v859
      %861 = vmatmul.bf16.gmra.mxu0 %v668
      %v862 = vpop.f32.mrf.mxu0
      %v863 = vadd.f32 %v336, %v862
      %v864 = vpop.f32.mrf.mxu0
      %v865 = vadd.f32 %v336, %v864
      %866 = vmatmul.bf16.gmra.mxu0 %v671
      %v867 = vpop.f32.mrf.mxu0
      %v868 = vadd.f32 %v336, %v867
      %v869 = vpop.f32.mrf.mxu0
      %v870 = vadd.f32 %v336, %v869
      %871 = vmatmul.bf16.gmra.mxu0 %v674
      %v872 = vpop.f32.mrf.mxu0
      %v873 = vadd.f32 %v336, %v872
      %v874 = vpop.f32.mrf.mxu0
      %v875 = vadd.f32 %v336, %v874
      %876 = vmatmul.bf16.gmra.mxu0 %v677
      %v877 = vpop.f32.mrf.mxu0
      %v878 = vadd.f32 %v336, %v877
      %v879 = vpop.f32.mrf.mxu0
      %v880 = vadd.f32 %v336, %v879
      %881 = vmatmul.bf16.gmra.mxu0 %v680
      %v882 = vpop.f32.mrf.mxu0
      %v883 = vadd.f32 %v336, %v882
      %v884 = vpop.f32.mrf.mxu0
      %v885 = vadd.f32 %v336, %v884
      %886 = vmatmul.bf16.gmra.mxu0 %v683
      %v887 = vpop.f32.mrf.mxu0
      %v888 = vadd.f32 %v336, %v887
      %v889 = vpop.f32.mrf.mxu0
      %v890 = vadd.f32 %v336, %v889
      %891 = vmatmul.bf16.gmra.mxu0 %v686
      %v892 = vpop.f32.mrf.mxu0
      %v893 = vadd.f32 %v336, %v892
      %v894 = vpop.f32.mrf.mxu0
      %v895 = vadd.f32 %v336, %v894
      %896 = vmatmul.bf16.gmra.mxu0 %v689
      %v897 = vpop.f32.mrf.mxu0
      %v898 = vadd.f32 %v336, %v897
      %v899 = vpop.f32.mrf.mxu0
      %v900 = vadd.f32 %v336, %v899
      %901 = vmatmul.bf16.gmra.mxu0 %v692
      %v902 = vpop.f32.mrf.mxu0
      %v903 = vadd.f32 %v336, %v902
      %v904 = vpop.f32.mrf.mxu0
      %v905 = vadd.f32 %v336, %v904
      %906 = vmatmul.bf16.gmra.mxu0 %v695
      %v907 = vpop.f32.mrf.mxu0
      %v908 = vadd.f32 %v336, %v907
      %v909 = vpop.f32.mrf.mxu0
      %v910 = vadd.f32 %v336, %v909
      %911 = vmatmul.bf16.gmra.mxu0 %v698
      %v912 = vpop.f32.mrf.mxu0
      %v913 = vadd.f32 %v336, %v912
      %v914 = vpop.f32.mrf.mxu0
      %v915 = vadd.f32 %v336, %v914
      %916 = vmatmul.bf16.gmra.mxu0 %v701
      %v917 = vpop.f32.mrf.mxu0
      %v918 = vadd.f32 %v336, %v917
      %v919 = vpop.f32.mrf.mxu0
      %v920 = vadd.f32 %v336, %v919
      %921 = vmatmul.bf16.gmra.mxu0 %v704
      %v922 = vpop.f32.mrf.mxu0
      %v923 = vadd.f32 %v336, %v922
      %v924 = vpop.f32.mrf.mxu0
      %v925 = vadd.f32 %v336, %v924
      %926 = vmatmul.bf16.gmra.mxu0 %v707
      %v927 = vpop.f32.mrf.mxu0
      %v928 = vadd.f32 %v336, %v927
      %v929 = vpop.f32.mrf.mxu0
      %v930 = vadd.f32 %v336, %v929
      %931 = vmatmul.bf16.gmra.mxu0 %v710
      %v932 = vpop.f32.mrf.mxu0
      %v933 = vadd.f32 %v336, %v932
      %v934 = vpop.f32.mrf.mxu0
      %v935 = vadd.f32 %v336, %v934
      %936 = vmatmul.bf16.gmra.mxu0 %v713
      %v937 = vpop.f32.mrf.mxu0
      %v938 = vadd.f32 %v336, %v937
      %v939 = vpop.f32.mrf.mxu0
      %v940 = vadd.f32 %v336, %v939
      %941 = vmatmul.bf16.gmra.mxu0 %v716
      %v942 = vpop.f32.mrf.mxu0
      %v943 = vadd.f32 %v336, %v942
      %v944 = vpop.f32.mrf.mxu0
      %v945 = vadd.f32 %v336, %v944
      %946 = vmatmul.bf16.gmra.mxu0 %v719
      %v947 = vpop.f32.mrf.mxu0
      %v948 = vadd.f32 %v336, %v947
      %v949 = vpop.f32.mrf.mxu0
      %v950 = vadd.f32 %v336, %v949
      %951 = vmatmul.bf16.gmra.mxu0 %v722
      %v952 = vpop.f32.mrf.mxu0
      %v953 = vadd.f32 %v336, %v952
      %v954 = vpop.f32.mrf.mxu0
      %v955 = vadd.f32 %v336, %v954
      %956 = vmatmul.bf16.gmra.mxu0 %v725
      %v957 = vpop.f32.mrf.mxu0
      %v958 = vadd.f32 %v336, %v957
      %v959 = vpop.f32.mrf.mxu0
      %v960 = vadd.f32 %v336, %v959
      %961 = vmatmul.bf16.gmra.mxu0 %v728
      %v962 = vpop.f32.mrf.mxu0
      %v963 = vadd.f32 %v336, %v962
      %v964 = vpop.f32.mrf.mxu0
      %v965 = vadd.f32 %v336, %v964
      %966 = vmatmul.bf16.gmra.mxu0 %v731
      %v967 = vpop.f32.mrf.mxu0
      %v968 = vadd.f32 %v336, %v967
      %v969 = vpop.f32.mrf.mxu0
      %v970 = vadd.f32 %v336, %v969
      %971 = vmatmul.bf16.gmra.mxu0 %v734
      %v972 = vpop.f32.mrf.mxu0
      %v973 = vadd.f32 %v336, %v972
      %v974 = vpop.f32.mrf.mxu0
      %v975 = vadd.f32 %v336, %v974
      %976 = vmatmul.bf16.gmra.mxu0 %v737
      %v977 = vpop.f32.mrf.mxu0
      %v978 = vadd.f32 %v336, %v977
      %v979 = vpop.f32.mrf.mxu0
      %v980 = vadd.f32 %v336, %v979
      %981 = vmatmul.bf16.gmra.mxu0 %v740
      %v982 = vpop.f32.mrf.mxu0
      %v983 = vadd.f32 %v336, %v982
      %v984 = vpop.f32.mrf.mxu0
      %v985 = vadd.f32 %v336, %v984
      %986 = vmatmul.bf16.gmra.mxu0 %v743
      %v987 = vpop.f32.mrf.mxu0
      %v988 = vadd.f32 %v336, %v987
      %v989 = vpop.f32.mrf.mxu0
      %v990 = vadd.f32 %v336, %v989
      %991 = vmatmul.bf16.gmra.mxu0 %v746
      %v992 = vpop.f32.mrf.mxu0
      %v993 = vadd.f32 %v336, %v992
      %v994 = vpop.f32.mrf.mxu0
      %v995 = vadd.f32 %v336, %v994
      %996 = vmatmul.bf16.gmra.mxu0 %v749
      %v997 = vpop.f32.mrf.mxu0
      %v998 = vadd.f32 %v336, %v997
      %v999 = vpop.f32.mrf.mxu0
      %v1000 = vadd.f32 %v336, %v999
      %1001 = vmatmul.bf16.gmra.mxu0 %v752
      %v1002 = vpop.f32.mrf.mxu0
      %v1003 = vadd.f32 %v336, %v1002
      %v1004 = vpop.f32.mrf.mxu0
      %v1005 = vadd.f32 %v336, %v1004
      %1006 = vmatmul.bf16.gmra.mxu0 %v755
      %v1007 = vpop.f32.mrf.mxu0
      %v1008 = vadd.f32 %v336, %v1007
      %v1009 = vpop.f32.mrf.mxu0
      %v1010 = vadd.f32 %v336, %v1009
      %1011 = vmatmul.bf16.gmra.mxu0 %v758
      %v1012 = vpop.f32.mrf.mxu0
      %v1013 = vadd.f32 %v336, %v1012
      %v1014 = vpop.f32.mrf.mxu0
      %v1015 = vadd.f32 %v336, %v1014
      %1016 = vmatmul.bf16.gmra.mxu0 %v761
      %v1017 = vpop.f32.mrf.mxu0
      %v1018 = vadd.f32 %v336, %v1017
      %v1019 = vpop.f32.mrf.mxu0
      %v1020 = vadd.f32 %v336, %v1019
      %1021 = vdwg.mxu0
      %v1022 = vmax.f32 %v773, 0.0
      %v1023 = vmax.f32 %v775, 0.0
      %v1024 = vmax.f32 %v778, 0.0
      %v1025 = vmax.f32 %v780, 0.0
      %v1026 = vmax.f32 %v783, 0.0
      %v1027 = vmax.f32 %v785, 0.0
      %v1028 = vmax.f32 %v788, 0.0
      %v1029 = vmax.f32 %v790, 0.0
      %v1030 = vmax.f32 %v793, 0.0
      %v1031 = vmax.f32 %v795, 0.0
      %v1032 = vmax.f32 %v798, 0.0
      %v1033 = vmax.f32 %v800, 0.0
      %v1034 = vmax.f32 %v803, 0.0
      %v1035 = vmax.f32 %v805, 0.0
      %v1036 = vmax.f32 %v808, 0.0
      %v1037 = vmax.f32 %v810, 0.0
      %v1038 = vmax.f32 %v813, 0.0
      %v1039 = vmax.f32 %v815, 0.0
      %v1040 = vmax.f32 %v818, 0.0
      %v1041 = vmax.f32 %v820, 0.0
      %v1042 = vmax.f32 %v823, 0.0
      %v1043 = vmax.f32 %v825, 0.0
      %v1044 = vmax.f32 %v828, 0.0
      %v1045 = vmax.f32 %v830, 0.0
      %v1046 = vmax.f32 %v833, 0.0
      %v1047 = vmax.f32 %v835, 0.0
      %v1048 = vmax.f32 %v838, 0.0
      %v1049 = vmax.f32 %v840, 0.0
      %v1050 = vmax.f32 %v843, 0.0
      %v1051 = vmax.f32 %v845, 0.0
      %v1052 = vmax.f32 %v848, 0.0
      %v1053 = vmax.f32 %v850, 0.0
      %v1054 = vmax.f32 %v853, 0.0
      %v1055 = vmax.f32 %v855, 0.0
      %v1056 = vmax.f32 %v858, 0.0
      %v1057 = vmax.f32 %v860, 0.0
      %v1058 = vmax.f32 %v863, 0.0
      %v1059 = vmax.f32 %v865, 0.0
      %v1060 = vmax.f32 %v868, 0.0
      %v1061 = vmax.f32 %v870, 0.0
      %v1062 = vmax.f32 %v873, 0.0
      %v1063 = vmax.f32 %v875, 0.0
      %v1064 = vmax.f32 %v878, 0.0
      %v1065 = vmax.f32 %v880, 0.0
      %v1066 = vmax.f32 %v883, 0.0
      %v1067 = vmax.f32 %v885, 0.0
      %v1068 = vmax.f32 %v888, 0.0
      %v1069 = vmax.f32 %v890, 0.0
      %v1070 = vmax.f32 %v893, 0.0
      %v1071 = vmax.f32 %v895, 0.0
      %v1072 = vmax.f32 %v898, 0.0
      %v1073 = vmax.f32 %v900, 0.0
      %v1074 = vmax.f32 %v903, 0.0
      %v1075 = vmax.f32 %v905, 0.0
      %v1076 = vmax.f32 %v908, 0.0
      %v1077 = vmax.f32 %v910, 0.0
      %v1078 = vmax.f32 %v913, 0.0
      %v1079 = vmax.f32 %v915, 0.0
      %v1080 = vmax.f32 %v918, 0.0
      %v1081 = vmax.f32 %v920, 0.0
      %v1082 = vmax.f32 %v923, 0.0
      %v1083 = vmax.f32 %v925, 0.0
      %v1084 = vmax.f32 %v928, 0.0
      %v1085 = vmax.f32 %v930, 0.0
      %v1086 = vmax.f32 %v933, 0.0
      %v1087 = vmax.f32 %v935, 0.0
      %v1088 = vmax.f32 %v938, 0.0
      %v1089 = vmax.f32 %v940, 0.0
      %v1090 = vmax.f32 %v943, 0.0
      %v1091 = vmax.f32 %v945, 0.0
      %v1092 = vmax.f32 %v948, 0.0
      %v1093 = vmax.f32 %v950, 0.0
      %v1094 = vmax.f32 %v953, 0.0
      %v1095 = vmax.f32 %v955, 0.0
      %v1096 = vmax.f32 %v958, 0.0
      %v1097 = vmax.f32 %v960, 0.0
      %v1098 = vmax.f32 %v963, 0.0
      %v1099 = vmax.f32 %v965, 0.0
      %v1100 = vmax.f32 %v968, 0.0
      %v1101 = vmax.f32 %v970, 0.0
      %v1102 = vmax.f32 %v973, 0.0
      %v1103 = vmax.f32 %v975, 0.0
      %v1104 = vmax.f32 %v978, 0.0
      %v1105 = vmax.f32 %v980, 0.0
      %v1106 = vmax.f32 %v983, 0.0
      %v1107 = vmax.f32 %v985, 0.0
      %v1108 = vmax.f32 %v988, 0.0
      %v1109 = vmax.f32 %v990, 0.0
      %v1110 = vmax.f32 %v993, 0.0
      %v1111 = vmax.f32 %v995, 0.0
      %v1112 = vmax.f32 %v998, 0.0
      %v1113 = vmax.f32 %v1000, 0.0
      %v1114 = vmax.f32 %v1003, 0.0
      %v1115 = vmax.f32 %v1005, 0.0
      %v1116 = vmax.f32 %v1008, 0.0
      %v1117 = vmax.f32 %v1010, 0.0
      %v1118 = vmax.f32 %v1013, 0.0
      %v1119 = vmax.f32 %v1015, 0.0
      %v1120 = vmax.f32 %v1018, 0.0
      %v1121 = vmax.f32 %v1020, 0.0
      %1122 = vst [vmem:[%s223] sm:$0xff] %v1022
      %1123 = vst [vmem:[%s223 + $0x8] sm:$0xff] %v1023
      %1124 = vst [vmem:[%s223 + $0x10] sm:$0xff] %v1024
      %1125 = vst [vmem:[%s223 + $0x18] sm:$0xff] %v1025
      %1126 = vst [vmem:[%s223 + $0x20] sm:$0xff] %v1026
      %1127 = vst [vmem:[%s223 + $0x28] sm:$0xff] %v1027
      %1128 = vst [vmem:[%s223 + $0x30] sm:$0xff] %v1028
      %1129 = vst [vmem:[%s223 + $0x38] sm:$0xff] %v1029
      %1130 = vst [vmem:[%s223 + $0x40] sm:$0xff] %v1030
      %1131 = vst [vmem:[%s223 + $0x48] sm:$0xff] %v1031
      %1132 = vst [vmem:[%s223 + $0x50] sm:$0xff] %v1032
      %1133 = vst [vmem:[%s223 + $0x58] sm:$0xff] %v1033
      %1134 = vst [vmem:[%s223 + $0x60] sm:$0xff] %v1034
      %1135 = vst [vmem:[%s223 + $0x68] sm:$0xff] %v1035
      %1136 = vst [vmem:[%s223 + $0x70] sm:$0xff] %v1036
      %1137 = vst [vmem:[%s223 + $0x78] sm:$0xff] %v1037
      %1138 = vst [vmem:[%s223 + $0x80] sm:$0xff] %v1038
      %1139 = vst [vmem:[%s223 + $0x88] sm:$0xff] %v1039
      %1140 = vst [vmem:[%s223 + $0x90] sm:$0xff] %v1040
      %1141 = vst [vmem:[%s223 + $0x98] sm:$0xff] %v1041
      %1142 = vst [vmem:[%s223 + $0xa0] sm:$0xff] %v1042
      %1143 = vst [vmem:[%s223 + $0xa8] sm:$0xff] %v1043
      %1144 = vst [vmem:[%s223 + $0xb0] sm:$0xff] %v1044
      %1145 = vst [vmem:[%s223 + $0xb8] sm:$0xff] %v1045
      %1146 = vst [vmem:[%s223 + $0xc0] sm:$0xff] %v1046
      %1147 = vst [vmem:[%s223 + $0xc8] sm:$0xff] %v1047
      %1148 = vst [vmem:[%s223 + $0xd0] sm:$0xff] %v1048
      %1149 = vst [vmem:[%s223 + $0xd8] sm:$0xff] %v1049
      %1150 = vst [vmem:[%s223 + $0xe0] sm:$0xff] %v1050
      %1151 = vst [vmem:[%s223 + $0xe8] sm:$0xff] %v1051
      %1152 = vst [vmem:[%s223 + $0xf0] sm:$0xff] %v1052
      %1153 = vst [vmem:[%s223 + $0xf8] sm:$0xff] %v1053
      %1154 = vst [vmem:[%s223 + $0x100] sm:$0xff] %v1054
      %1155 = vst [vmem:[%s223 + $0x108] sm:$0xff] %v1055
      %1156 = vst [vmem:[%s223 + $0x110] sm:$0xff] %v1056
      %1157 = vst [vmem:[%s223 + $0x118] sm:$0xff] %v1057
      %1158 = vst [vmem:[%s223 + $0x120] sm:$0xff] %v1058
      %1159 = vst [vmem:[%s223 + $0x128] sm:$0xff] %v1059
      %1160 = vst [vmem:[%s223 + $0x130] sm:$0xff] %v1060
      %1161 = vst [vmem:[%s223 + $0x138] sm:$0xff] %v1061
      %1162 = vst [vmem:[%s223 + $0x140] sm:$0xff] %v1062
      %1163 = vst [vmem:[%s223 + $0x148] sm:$0xff] %v1063
      %1164 = vst [vmem:[%s223 + $0x150] sm:$0xff] %v1064
      %1165 = vst [vmem:[%s223 + $0x158] sm:$0xff] %v1065
      %1166 = vst [vmem:[%s223 + $0x160] sm:$0xff] %v1066
      %1167 = vst [vmem:[%s223 + $0x168] sm:$0xff] %v1067
      %1168 = vst [vmem:[%s223 + $0x170] sm:$0xff] %v1068
      %1169 = vst [vmem:[%s223 + $0x178] sm:$0xff] %v1069
      %1170 = vst [vmem:[%s223 + $0x180] sm:$0xff] %v1070
      %1171 = vst [vmem:[%s223 + $0x188] sm:$0xff] %v1071
      %1172 = vst [vmem:[%s223 + $0x190] sm:$0xff] %v1072
      %1173 = vst [vmem:[%s223 + $0x198] sm:$0xff] %v1073
      %1174 = vst [vmem:[%s223 + $0x1a0] sm:$0xff] %v1074
      %1175 = vst [vmem:[%s223 + $0x1a8] sm:$0xff] %v1075
      %1176 = vst [vmem:[%s223 + $0x1b0] sm:$0xff] %v1076
      %1177 = vst [vmem:[%s223 + $0x1b8] sm:$0xff] %v1077
      %1178 = vst [vmem:[%s223 + $0x1c0] sm:$0xff] %v1078
      %1179 = vst [vmem:[%s223 + $0x1c8] sm:$0xff] %v1079
      %1180 = vst [vmem:[%s223 + $0x1d0] sm:$0xff] %v1080
      %1181 = vst [vmem:[%s223 + $0x1d8] sm:$0xff] %v1081
      %1182 = vst [vmem:[%s223 + $0x1e0] sm:$0xff] %v1082
      %1183 = vst [vmem:[%s223 + $0x1e8] sm:$0xff] %v1083
      %1184 = vst [vmem:[%s223 + $0x1f0] sm:$0xff] %v1084
      %1185 = vst [vmem:[%s223 + $0x1f8] sm:$0xff] %v1085
      %1186 = vst [vmem:[%s223 + $0x200] sm:$0xff] %v1086
      %1187 = vst [vmem:[%s223 + $0x208] sm:$0xff] %v1087
      %1188 = vst [vmem:[%s223 + $0x210] sm:$0xff] %v1088
      %1189 = vst [vmem:[%s223 + $0x218] sm:$0xff] %v1089
      %1190 = vst [vmem:[%s223 + $0x220] sm:$0xff] %v1090
      %1191 = vst [vmem:[%s223 + $0x228] sm:$0xff] %v1091
      %1192 = vst [vmem:[%s223 + $0x230] sm:$0xff] %v1092
      %1193 = vst [vmem:[%s223 + $0x238] sm:$0xff] %v1093
      %1194 = vst [vmem:[%s223 + $0x240] sm:$0xff] %v1094
      %1195 = vst [vmem:[%s223 + $0x248] sm:$0xff] %v1095
      %1196 = vst [vmem:[%s223 + $0x250] sm:$0xff] %v1096
      %1197 = vst [vmem:[%s223 + $0x258] sm:$0xff] %v1097
      %1198 = vst [vmem:[%s223 + $0x260] sm:$0xff] %v1098
      %1199 = vst [vmem:[%s223 + $0x268] sm:$0xff] %v1099
      %1200 = vst [vmem:[%s223 + $0x270] sm:$0xff] %v1100
      %1201 = vst [vmem:[%s223 + $0x278] sm:$0xff] %v1101
      %1202 = vst [vmem:[%s223 + $0x280] sm:$0xff] %v1102
      %1203 = vst [vmem:[%s223 + $0x288] sm:$0xff] %v1103
      %1204 = vst [vmem:[%s223 + $0x290] sm:$0xff] %v1104
      %1205 = vst [vmem:[%s223 + $0x298] sm:$0xff] %v1105
      %1206 = vst [vmem:[%s223 + $0x2a0] sm:$0xff] %v1106
      %1207 = vst [vmem:[%s223 + $0x2a8] sm:$0xff] %v1107
      %1208 = vst [vmem:[%s223 + $0x2b0] sm:$0xff] %v1108
      %1209 = vst [vmem:[%s223 + $0x2b8] sm:$0xff] %v1109
      %1210 = vst [vmem:[%s223 + $0x2c0] sm:$0xff] %v1110
      %1211 = vst [vmem:[%s223 + $0x2c8] sm:$0xff] %v1111
      %1212 = vst [vmem:[%s223 + $0x2d0] sm:$0xff] %v1112
      %1213 = vst [vmem:[%s223 + $0x2d8] sm:$0xff] %v1113
      %1214 = vst [vmem:[%s223 + $0x2e0] sm:$0xff] %v1114
      %1215 = vst [vmem:[%s223 + $0x2e8] sm:$0xff] %v1115
      %1216 = vst [vmem:[%s223 + $0x2f0] sm:$0xff] %v1116
      %1217 = vst [vmem:[%s223 + $0x2f8] sm:$0xff] %v1117
      %1218 = vst [vmem:[%s223 + $0x300] sm:$0xff] %v1118
      %1219 = vst [vmem:[%s223 + $0x308] sm:$0xff] %v1119
      %1220 = vst [vmem:[%s223 + $0x310] sm:$0xff] %v1120
      %1221 = vst [vmem:[%s223 + $0x318] sm:$0xff] %v1121
      %s1222 = smul.u32 100, %s18
      %p1223 = scmp.lt.s32.totalorder %s1222, 1599
      %s1224 = scalar_select %p1223, %s1222, 1599
      %p1225 = scmp.lt.s32.totalorder %s19, 0
      %s1226 = scalar_select %p1225, %s19, 0
      %s1227 = sadd.s32 %s1226, %s1224
      %s1228 = smul.addr %s1227, 8
      %s1229 = scalar_lea.vmem %s3, %s1228
      // Predicated region
      $region33: #{conv_decoder_forward.13} parent=31 // pred_check
        %p1230 = pneg %p124
      $region34: #{conv_decoder_forward.13} parent=31 // pred_check_branch
        %1232 = sbr.rel (%p1230) target = $region36
      $region35: #{conv_decoder_forward.13} parent=31 // pred_region
        %s1233 = smul.u32 100, %s18
      $region36: #{conv_decoder_forward.13} parent=31 // pred_fallthru
        _
    $region32: #{conv_decoder_forward.13} parent=5 // pred_fallthru
      _
    %p1234 = scmp.le.s32.totalorder 2, %s9
    // Predicated region
    $region37: #{conv_decoder_forward.13} parent=5 // pred_check
      %p1235 = pneg %p1234
    $region38: #{conv_decoder_forward.13} parent=5 // pred_check_branch
      %1237 = sbr.rel (%p1235) target = $region40
    $region39: #{conv_decoder_forward.13} parent=5 // pred_region
      %s1238 = ssub.s32 %s9, 2
      // Predicated region
      $region41: #{conv_decoder_forward.13} parent=39 // pred_check
        %p1239 = pneg %p130
      $region42: #{conv_decoder_forward.13} parent=39 // pred_check_branch
        %1241 = sbr.rel (%p1239) target = $region44
      $region43: #{conv_decoder_forward.13} parent=39 // pred_region
        %s1242 = smul.u32 100, %s20
        %p1243 = scmp.lt.s32.totalorder %s1242, 1599
        %s1244 = scalar_select %p1243, %s1242, 1599
        %p1245 = scmp.lt.s32.totalorder %s21, 0
        %s1246 = scalar_select %p1245, %s21, 0
        %s1247 = sadd.s32 %s1246, %s1244
        %s1248 = smul.addr %s1247, 8
        %s1249 = scalar_lea.vmem %s3, %s1248
      $region44: #{conv_decoder_forward.13} parent=39 // pred_fallthru
        _
    $region40: #{conv_decoder_forward.13} parent=5 // pred_fallthru
      _
  $region6: #{conv_decoder_forward.13} parent=0 // loop_footer
    %s13 = sadd.s32 1, %s9
  $region7: #{conv_decoder_forward.13} parent=0 // loop_footer_branch
    %8 = sbr.rel target = $region3
  $region8: #{conv_decoder_forward.13} parent=0 // loop_exit
    _

</llo_original>
